<compile_context>
chip_gen: v5e
topology: v5e:2x2
jax: 0.10.0
libtpu: 0.0.40
codegen_flags: <defaults>
</compile_context>

<pallas_src>
import math
from functools import partial

import jax
import jax.numpy as jnp
from jax.experimental import pallas as pl
from jax.experimental.pallas import tpu as pltpu

EPS = 1e-5


def _ceil_to(x, m):
    return ((x + m - 1) // m) * m


# ---------------------------------------------------------------------------
# Pallas kernels
# ---------------------------------------------------------------------------

def _matmul_kernel(a_ref, b_ref, o_ref, acc_ref):
    @pl.when(pl.program_id(2) == 0)
    def _():
        acc_ref[...] = jnp.zeros_like(acc_ref)

    acc_ref[...] += jnp.dot(a_ref[...], b_ref[...],
                            preferred_element_type=jnp.float32)

    @pl.when(pl.program_id(2) == pl.num_programs(2) - 1)
    def _():
        o_ref[...] = acc_ref[...].astype(o_ref.dtype)


def _matmul_bias_kernel(a_ref, b_ref, bias_ref, o_ref, acc_ref):
    @pl.when(pl.program_id(2) == 0)
    def _():
        acc_ref[...] = jnp.zeros_like(acc_ref)

    acc_ref[...] += jnp.dot(a_ref[...], b_ref[...],
                            preferred_element_type=jnp.float32)

    @pl.when(pl.program_id(2) == pl.num_programs(2) - 1)
    def _():
        o_ref[...] = (acc_ref[...] + bias_ref[...]).astype(o_ref.dtype)


def _rangebn_stats_kernel(x_ref, mean_ref, scale_ref,
                          sum_ref, max_ref, min_ref,
                          *, total_rows, num_chunks, scale_fix):
    # Grid axis iterates over the range-statistic chunks; per-chunk min/max are
    # summed in VMEM scratch, mean/scale emitted at the last step.
    i = pl.program_id(0)
    blk = x_ref[...]                       # (1, chunk_len, C)
    c_sum = jnp.sum(blk, axis=1)           # (1, C)
    c_max = jnp.max(blk, axis=1)
    c_min = jnp.min(blk, axis=1)

    @pl.when(i == 0)
    def _():
        sum_ref[...] = jnp.zeros_like(sum_ref)
        max_ref[...] = jnp.zeros_like(max_ref)
        min_ref[...] = jnp.zeros_like(min_ref)

    sum_ref[...] += c_sum
    max_ref[...] += c_max
    min_ref[...] += c_min

    @pl.when(i == pl.num_programs(0) - 1)
    def _():
        mean_ref[...] = sum_ref[...] / total_rows
        rng = (max_ref[...] - min_ref[...]) / num_chunks
        scale_ref[...] = 1.0 / (rng * scale_fix + EPS)


def _bn_act_kernel(x_ref, mean_ref, scale_ref, gamma_ref, beta_ref, o_ref, *, relu):
    out = (x_ref[...] - mean_ref[...]) * (scale_ref[...] * gamma_ref[...]) + beta_ref[...]
    if relu:
        out = jnp.maximum(out, 0.0)
    o_ref[...] = out


def _bn_act_res_kernel(x_ref, mean_ref, scale_ref, gamma_ref, beta_ref, res_ref,
                       o_ref, *, relu):
    out = (x_ref[...] - mean_ref[...]) * (scale_ref[...] * gamma_ref[...]) + beta_ref[...]
    out = out + res_ref[...]
    if relu:
        out = jnp.maximum(out, 0.0)
    o_ref[...] = out


def _max9_kernel(w0, w1, w2, w3, w4, w5, w6, w7, w8, o_ref):
    m = w0[...]
    for w in (w1, w2, w3, w4, w5, w6, w7, w8):
        m = jnp.maximum(m, w[...])
    o_ref[...] = m


# ---------------------------------------------------------------------------
# Tiled matmul wrapper (bf16 operands, f32 accumulation)
# ---------------------------------------------------------------------------

def matmul(a, b, bias=None, *, tm=256, tn=128, tk=512):
    """a: [M, K], b: [K, N], bias: optional [N] -> [M, N] f32."""
    M, K = a.shape
    K2, N = b.shape
    assert K == K2

    tm = min(tm, _ceil_to(M, 16))          # 16-aligned sublanes for bf16 operands
    tn = min(tn, _ceil_to(N, 128))
    tk = min(tk, _ceil_to(K, 128))
    Mp, Kp, Np = _ceil_to(M, tm), _ceil_to(K, tk), _ceil_to(N, tn)

    a_p = jnp.pad(a.astype(jnp.bfloat16), ((0, Mp - M), (0, Kp - K)))
    b_p = jnp.pad(b.astype(jnp.bfloat16), ((0, Kp - K), (0, Np - N)))

    in_specs = [pl.BlockSpec((tm, tk), lambda i, j, k: (i, k)),
                pl.BlockSpec((tk, tn), lambda i, j, k: (k, j))]
    args = [a_p, b_p]
    if bias is not None:
        bias_p = jnp.pad(bias.astype(jnp.float32).reshape(1, N), ((0, 0), (0, Np - N)))
        in_specs.append(pl.BlockSpec((1, tn), lambda i, j, k: (0, j)))
        args.append(bias_p)
        kernel = _matmul_bias_kernel
    else:
        kernel = _matmul_kernel

    out = pl.pallas_call(
        kernel,
        out_shape=jax.ShapeDtypeStruct((Mp, Np), jnp.float32),
        grid=(Mp // tm, Np // tn, Kp // tk),
        in_specs=in_specs,
        out_specs=pl.BlockSpec((tm, tn), lambda i, j, k: (i, j)),
        scratch_shapes=[pltpu.VMEM((tm, tn), jnp.float32)],
        compiler_params=pltpu.CompilerParams(
            dimension_semantics=("parallel", "parallel", "arbitrary"),
            vmem_limit_bytes=32 * 1024 * 1024),
    )(*args)
    return out[:M, :N]


# ---------------------------------------------------------------------------
# Layer wrappers
# ---------------------------------------------------------------------------

def conv2d(x, w, stride, pad):
    """x: [N, H, W, Cin] NHWC, w: [kh, kw, Cin, Cout] HWIO -> [N, OH, OW, Cout] f32."""
    N, H, W, Cin = x.shape
    kh, kw, _, Cout = w.shape
    xp = jnp.pad(x.astype(jnp.bfloat16), ((0, 0), (pad, pad), (pad, pad), (0, 0)))
    OH = (H + 2 * pad - kh) // stride + 1
    OW = (W + 2 * pad - kw) // stride + 1
    cols = []
    for i in range(kh):
        for j in range(kw):
            cols.append(xp[:, i:i + stride * OH:stride, j:j + stride * OW:stride, :])
    # column order = (ki, kj, cin), matching the HWIO weight reshape below
    patches = jnp.stack(cols, axis=3).reshape(N * OH * OW, kh * kw * Cin)
    wm = w.reshape(kh * kw * Cin, Cout)
    out = matmul(patches, wm)                       # no bias -> bias-free kernel
    return out.reshape(N, OH, OW, Cout)


def _pick_num_chunks(M):
    upper = min(16, M // 2)
    for nc in range(upper, 0, -1):
        if M % nc == 0:
            return nc
    return 1


def _lane_dense_factor(M, C):
    if C < 128 and (128 % C == 0) and (M % (128 // C) == 0):
        return 128 // C
    return 1


def _bn_apply(x2d, mean, scale, gamma, beta, residual, relu, tile_rows=512):
    M, C = x2d.shape
    r = _lane_dense_factor(M, C)           # pack channels to a dense 128-lane axis
    Md, Cd = M // r, C * r

    tm = min(tile_rows, _ceil_to(Md, 8))
    Mp = _ceil_to(Md, tm)
    pad_rows = Mp - Md

    xd = jnp.pad(x2d.reshape(Md, Cd), ((0, pad_rows), (0, 0)))
    mean_d = jnp.tile(mean, (1, r))
    scale_d = jnp.tile(scale, (1, r))
    gamma_d = jnp.tile(gamma.reshape(1, C).astype(jnp.float32), (1, r))
    beta_d = jnp.tile(beta.reshape(1, C).astype(jnp.float32), (1, r))

    row_spec = pl.BlockSpec((tm, Cd), lambda i: (i, 0))
    par_spec = pl.BlockSpec((1, Cd), lambda i: (0, 0))
    args = [xd, mean_d, scale_d, gamma_d, beta_d]
    in_specs = [row_spec, par_spec, par_spec, par_spec, par_spec]
    if residual is not None:
        rd = jnp.pad(residual.reshape(Md, Cd), ((0, pad_rows), (0, 0)))
        args.append(rd)
        in_specs.append(row_spec)
        kernel = partial(_bn_act_res_kernel, relu=relu)
    else:
        kernel = partial(_bn_act_kernel, relu=relu)

    out = pl.pallas_call(
        kernel,
        out_shape=jax.ShapeDtypeStruct((Mp, Cd), jnp.float32),
        grid=(Mp // tm,),
        in_specs=in_specs,
        out_specs=row_spec,
        compiler_params=pltpu.CompilerParams(dimension_semantics=("parallel",)),
    )(*args)
    return out[:Md].reshape(M, C)


def range_bn(x2d, gamma, beta, residual=None, relu=True):
    """RangeBN (training-mode batch statistics) on a [M, C] slab, fused apply."""
    M, C = x2d.shape
    num_chunks = _pick_num_chunks(M)       # divides M exactly -> no dropped tail rows
    chunk_len = M // num_chunks
    scale_fix = (0.5 * 0.35) * (1 + (math.pi * math.log(4)) ** 0.5) / \
        ((2 * math.log(max(chunk_len, 2))) ** 0.5)

    x3 = x2d.astype(jnp.float32).reshape(num_chunks, chunk_len, C)
    mean, scale = pl.pallas_call(
        partial(_rangebn_stats_kernel, total_rows=float(M),
                num_chunks=float(num_chunks), scale_fix=scale_fix),
        out_shape=(jax.ShapeDtypeStruct((1, C), jnp.float32),
                   jax.ShapeDtypeStruct((1, C), jnp.float32)),
        grid=(num_chunks,),
        in_specs=[pl.BlockSpec((1, chunk_len, C), lambda i: (i, 0, 0))],
        out_specs=(pl.BlockSpec((1, C), lambda i: (0, 0)),
                   pl.BlockSpec((1, C), lambda i: (0, 0))),
        scratch_shapes=[pltpu.VMEM((1, C), jnp.float32),
                        pltpu.VMEM((1, C), jnp.float32),
                        pltpu.VMEM((1, C), jnp.float32)],
        compiler_params=pltpu.CompilerParams(dimension_semantics=("arbitrary",)),
    )(x3)

    return _bn_apply(x2d, mean, scale, gamma, beta, residual, relu)


def maxpool2d(x, k=3, stride=2, pad=1, tile_rows=512):
    """nn.MaxPool2d(3, stride=2, padding=1) on NHWC; chained max over the 9 views."""
    N, H, W, C = x.shape
    xp = jnp.pad(x, ((0, 0), (pad, pad), (pad, pad), (0, 0)),
                 constant_values=-jnp.inf)
    OH = (H + 2 * pad - k) // stride + 1
    OW = (W + 2 * pad - k) // stride + 1
    M = N * OH * OW

    wins = [xp[:, i:i + stride * OH:stride, j:j + stride * OW:stride, :].reshape(M, C)
            for i in range(k) for j in range(k)]

    r = _lane_dense_factor(M, C)
    Md, Cd = M // r, C * r
    tm = min(tile_rows, _ceil_to(Md, 8))
    Mp = _ceil_to(Md, tm)
    wins = [jnp.pad(w.reshape(Md, Cd), ((0, Mp - Md), (0, 0))) for w in wins]

    row_spec = pl.BlockSpec((tm, Cd), lambda i: (i, 0))
    out = pl.pallas_call(
        _max9_kernel,
        out_shape=jax.ShapeDtypeStruct((Mp, Cd), jnp.float32),
        grid=(Mp // tm,),
        in_specs=[row_spec] * 9,
        out_specs=row_spec,
        compiler_params=pltpu.CompilerParams(dimension_semantics=("parallel",)),
    )(*wins)
    return out[:Md].reshape(N, OH, OW, C)


def basic_block(x, p, stride):
    """ResNet BasicBlock (expansion=1): conv-bn-relu-conv-bn (+residual) -relu."""
    out = conv2d(x, p['w1'], stride, pad=1)
    N, OH, OW, C = out.shape
    out2d = range_bn(out.reshape(-1, C), p['g1'], p['b1'], relu=True)
    out = out2d.reshape(N, OH, OW, C)

    out = conv2d(out, p['w2'], 1, pad=1)
    out2d = out.reshape(-1, C)

    if 'dsw' in p:  # downsample = 1x1 QConv2d(stride) + RangeBN
        res = conv2d(x, p['dsw'], stride, pad=0)
        res2d = range_bn(res.reshape(-1, C), p['dsg'], p['dsb'], relu=False)
    else:
        res2d = x.reshape(-1, C)

    out2d = range_bn(out2d, p['g2'], p['b2'], residual=res2d, relu=True)
    return out2d.reshape(N, OH, OW, C)


# ---------------------------------------------------------------------------
# Model: small ResNet (BasicBlock, 1 block per stage, planes 16/32/64/128)
# ---------------------------------------------------------------------------

LAYER_PLANES = [16, 32, 64, 128]
LAYER_STRIDES = [1, 2, 2, 2]
NUM_CLASSES = 10


def init_params(key):
    def conv_w(k, kh, kw, cin, cout):
        n = kh * kw * cout
        std = math.sqrt(2.0 / n)
        return jax.random.normal(k, (kh, kw, cin, cout), jnp.float32) * std

    keys = iter(jax.random.split(key, 64))
    params = {}
    inplanes = 16
    params['conv1_w'] = conv_w(next(keys), 7, 7, 3, inplanes)
    params['bn1_g'] = jnp.ones((inplanes,), jnp.float32)
    params['bn1_b'] = jnp.zeros((inplanes,), jnp.float32)

    for li, (planes, stride) in enumerate(zip(LAYER_PLANES, LAYER_STRIDES), start=1):
        blk = {
            'w1': conv_w(next(keys), 3, 3, inplanes, planes),
            'g1': jnp.ones((planes,), jnp.float32),
            'b1': jnp.zeros((planes,), jnp.float32),
            'w2': conv_w(next(keys), 3, 3, planes, planes),
            'g2': jnp.ones((planes,), jnp.float32),
            'b2': jnp.zeros((planes,), jnp.float32),
        }
        if stride != 1 or inplanes != planes:
            blk['dsw'] = conv_w(next(keys), 1, 1, inplanes, planes)
            blk['dsg'] = jnp.ones((planes,), jnp.float32)
            blk['dsb'] = jnp.zeros((planes,), jnp.float32)
        params[f'layer{li}'] = [blk]
        inplanes = planes

    params['fc_w'] = (jax.random.normal(next(keys), (inplanes, NUM_CLASSES), jnp.float32)
                      * (1.0 / math.sqrt(inplanes)))
    params['fc_b'] = jnp.zeros((NUM_CLASSES,), jnp.float32)
    return params


def resnet_forward(params, x_nchw):
    # PyTorch-style NCHW input -> NHWC internally
    x = jnp.transpose(x_nchw.astype(jnp.float32), (0, 2, 3, 1))

    x = conv2d(x, params['conv1_w'], stride=2, pad=3)          # conv1
    N, H, W, C = x.shape
    x = range_bn(x.reshape(-1, C), params['bn1_g'], params['bn1_b'],
                 relu=True).reshape(N, H, W, C)                # bn1 + relu
    x = maxpool2d(x)                                           # maxpool 3x3/s2/p1

    for li in range(1, 5):                                     # layer1..layer4
        for bi, blk in enumerate(params[f'layer{li}']):
            s = LAYER_STRIDES[li - 1] if bi == 0 else 1
            x = basic_block(x, blk, s)

    feat = jnp.mean(x, axis=(1, 2))                            # global avgpool -> [N, C]
    logits = matmul(feat, params['fc_w'], params['fc_b'])      # fc (bias fused)
    return logits


# ---------------------------------------------------------------------------

if __name__ == "__main__":
    key = jax.random.PRNGKey(0)
    k_param, k_x = jax.random.split(key)
    params = init_params(k_param)
    x = jax.random.normal(k_x, (2, 3, 32, 32), jnp.float32)   # NCHW like PyTorch

    fwd = jax.jit(resnet_forward)
    out = fwd(params, x)
    out = jax.block_until_ready(out)

    assert out.shape == (2, NUM_CLASSES), out.shape
    assert bool(jnp.all(jnp.isfinite(out)))
    print("KERNEL_OK")
</pallas_src>

<mosaic_0001>
module attributes {stable_mosaic.version = 11 : i64} {
  func.func @_matmul_kernel(%arg0: i32, %arg1: i32, %arg2: i32, %arg3: memref<256x256xbf16, #tpu.memory_space<vmem>>, %arg4: memref<256x128xbf16, #tpu.memory_space<vmem>>, %arg5: memref<256x128xf32, #tpu.memory_space<vmem>>, %arg6: memref<256x128xf32, #tpu.memory_space<vmem>>) attributes {dimension_semantics = [#tpu.dimension_semantics<parallel>, #tpu.dimension_semantics<parallel>, #tpu.dimension_semantics<arbitrary>], iteration_bounds = array<i64: 2, 1, 1>, scalar_prefetch = 0 : i64, scratch_operands = 1 : i64, tpu.core_type = #tpu.core_type<tc>, window_params = [{transform_indices = @transform_0, window_bounds = array<i64: 256, 256>}, {transform_indices = @transform_1, window_bounds = array<i64: 256, 128>}, {transform_indices = @transform_2, window_bounds = array<i64: 256, 128>}]} {
    %c0_i32 = arith.constant 0 : i32
    %0 = arith.cmpi eq, %arg2, %c0_i32 : i32
    %1 = arith.extui %0 : i1 to i32
    %c0_i32_0 = arith.constant 0 : i32
    %2 = arith.cmpi ne, %1, %c0_i32_0 : i32
    scf.if %2 {
      %cst_10 = arith.constant 0.000000e+00 : f32
      %12 = vector.broadcast %cst_10 : f32 to vector<256x128xf32>
      %c0_11 = arith.constant 0 : index
      %c0_12 = arith.constant 0 : index
      %13 = vector.load %arg6[%c0_11, %c0_12] : memref<256x128xf32, #tpu.memory_space<vmem>>, vector<256x128xf32>
      tpu.vector_store %arg6[%c0_11, %c0_12], %12 {strides = array<i32>} : memref<256x128xf32, #tpu.memory_space<vmem>>, vector<256x128xf32>,
    } else {
    }
    %c0 = arith.constant 0 : index
    %c0_1 = arith.constant 0 : index
    %3 = vector.load %arg6[%c0, %c0_1] : memref<256x128xf32, #tpu.memory_space<vmem>>, vector<256x128xf32>
    %c0_2 = arith.constant 0 : index
    %c0_3 = arith.constant 0 : index
    %4 = vector.load %arg3[%c0_2, %c0_3] : memref<256x256xbf16, #tpu.memory_space<vmem>>, vector<256x256xbf16>
    %c0_4 = arith.constant 0 : index
    %c0_5 = arith.constant 0 : index
    %5 = vector.load %arg4[%c0_4, %c0_5] : memref<256x128xbf16, #tpu.memory_space<vmem>>, vector<256x128xbf16>
    %cst = arith.constant dense<0.000000e+00> : vector<256x128xf32>
    %6 = tpu.matmul %4, %5, %cst {dimension_numbers = #tpu.dot_dimension_numbers<[1], [0], [0], [1], [0, 0, 1, 1], [], []>} : vector<256x256xbf16>, vector<256x128xbf16>, vector<256x128xf32> -> vector<256x128xf32>
    %7 = arith.addf %3, %6 : vector<256x128xf32>
    %c0_6 = arith.constant 0 : index
    %c0_7 = arith.constant 0 : index
    %8 = vector.load %arg6[%c0_6, %c0_7] : memref<256x128xf32, #tpu.memory_space<vmem>>, vector<256x128xf32>
    tpu.vector_store %arg6[%c0_6, %c0_7], %7 {strides = array<i32>} : memref<256x128xf32, #tpu.memory_space<vmem>>, vector<256x128xf32>,
    %c0_i32_8 = arith.constant 0 : i32
    %9 = arith.cmpi eq, %arg2, %c0_i32_8 : i32
    %10 = arith.extui %9 : i1 to i32
    %c0_i32_9 = arith.constant 0 : i32
    %11 = arith.cmpi ne, %10, %c0_i32_9 : i32
    scf.if %11 {
      %c0_10 = arith.constant 0 : index
      %c0_11 = arith.constant 0 : index
      %12 = vector.load %arg6[%c0_10, %c0_11] : memref<256x128xf32, #tpu.memory_space<vmem>>, vector<256x128xf32>
      %c0_12 = arith.constant 0 : index
      %c0_13 = arith.constant 0 : index
      %13 = vector.load %arg5[%c0_12, %c0_13] : memref<256x128xf32, #tpu.memory_space<vmem>>, vector<256x128xf32>
      tpu.vector_store %arg5[%c0_12, %c0_13], %12 {strides = array<i32>} : memref<256x128xf32, #tpu.memory_space<vmem>>, vector<256x128xf32>,
    } else {
    }
    return
  }
  func.func @transform_0(%arg0: i32, %arg1: i32, %arg2: i32) -> (i32, i32) {
    %c0_i32 = arith.constant 0 : i32
    return %arg0, %arg2 : i32, i32
  }
  func.func @transform_1(%arg0: i32, %arg1: i32, %arg2: i32) -> (i32, i32) {
    %c0_i32 = arith.constant 0 : i32
    return %arg2, %arg1 : i32, i32
  }
  func.func @transform_2(%arg0: i32, %arg1: i32, %arg2: i32) -> (i32, i32) {
    %c0_i32 = arith.constant 0 : i32
    return %arg0, %arg1 : i32, i32
  }
}

module attributes {stable_mosaic.version = 11 : i64} {
  func.func @_rangebn_stats_kernel(%arg0: i32, %arg1: memref<1x32x16xf32, #tpu.memory_space<vmem>>, %arg2: memref<1x16xf32, #tpu.memory_space<vmem>>, %arg3: memref<1x16xf32, #tpu.memory_space<vmem>>, %arg4: memref<1x16xf32, #tpu.memory_space<vmem>>, %arg5: memref<1x16xf32, #tpu.memory_space<vmem>>, %arg6: memref<1x16xf32, #tpu.memory_space<vmem>>) attributes {dimension_semantics = [#tpu.dimension_semantics<arbitrary>], iteration_bounds = array<i64: 16>, scalar_prefetch = 0 : i64, scratch_operands = 3 : i64, tpu.core_type = #tpu.core_type<tc>, window_params = [{transform_indices = @transform_0, window_bounds = array<i64: 1, 32, 16>}, {pipeline_mode = #tpu.pipeline_mode<synchronous>, transform_indices = @transform_1, window_bounds = array<i64: 1, 16>}, {pipeline_mode = #tpu.pipeline_mode<synchronous>, transform_indices = @transform_2, window_bounds = array<i64: 1, 16>}]} {
    %c0 = arith.constant 0 : index
    %c0_0 = arith.constant 0 : index
    %c0_1 = arith.constant 0 : index
    %0 = vector.load %arg1[%c0, %c0_0, %c0_1] : memref<1x32x16xf32, #tpu.memory_space<vmem>>, vector<1x32x16xf32>
    %cst = arith.constant dense<0.000000e+00> : vector<1x16xf32>
    %1 = vector.multi_reduction <add>, %0, %cst [1] : vector<1x32x16xf32> to vector<1x16xf32>
    %cst_2 = arith.constant dense<0xFF800000> : vector<1x16xf32>
    %2 = vector.multi_reduction <maximumf>, %0, %cst_2 [1] : vector<1x32x16xf32> to vector<1x16xf32>
    %cst_3 = arith.constant dense<0x7F800000> : vector<1x16xf32>
    %3 = vector.multi_reduction <minimumf>, %0, %cst_3 [1] : vector<1x32x16xf32> to vector<1x16xf32>
    %c0_i32 = arith.constant 0 : i32
    %4 = arith.cmpi eq, %arg0, %c0_i32 : i32
    %5 = arith.extui %4 : i1 to i32
    %c0_i32_4 = arith.constant 0 : i32
    %6 = arith.cmpi ne, %5, %c0_i32_4 : i32
    scf.if %6 {
      %cst_18 = arith.constant 0.000000e+00 : f32
      %19 = vector.broadcast %cst_18 : f32 to vector<1x16xf32>
      %c0_19 = arith.constant 0 : index
      %c0_20 = arith.constant 0 : index
      %20 = vector.load %arg4[%c0_19, %c0_20] : memref<1x16xf32, #tpu.memory_space<vmem>>, vector<1x16xf32>
      tpu.vector_store %arg4[%c0_19, %c0_20], %19 {strides = array<i32>} : memref<1x16xf32, #tpu.memory_space<vmem>>, vector<1x16xf32>,
      %cst_21 = arith.constant 0.000000e+00 : f32
      %21 = vector.broadcast %cst_21 : f32 to vector<1x16xf32>
      %c0_22 = arith.constant 0 : index
      %c0_23 = arith.constant 0 : index
      %22 = vector.load %arg5[%c0_22, %c0_23] : memref<1x16xf32, #tpu.memory_space<vmem>>, vector<1x16xf32>
      tpu.vector_store %arg5[%c0_22, %c0_23], %21 {strides = array<i32>} : memref<1x16xf32, #tpu.memory_space<vmem>>, vector<1x16xf32>,
      %cst_24 = arith.constant 0.000000e+00 : f32
      %23 = vector.broadcast %cst_24 : f32 to vector<1x16xf32>
      %c0_25 = arith.constant 0 : index
      %c0_26 = arith.constant 0 : index
      %24 = vector.load %arg6[%c0_25, %c0_26] : memref<1x16xf32, #tpu.memory_space<vmem>>, vector<1x16xf32>
      tpu.vector_store %arg6[%c0_25, %c0_26], %23 {strides = array<i32>} : memref<1x16xf32, #tpu.memory_space<vmem>>, vector<1x16xf32>,
    } else {
    }
    %c0_5 = arith.constant 0 : index
    %c0_6 = arith.constant 0 : index
    %7 = vector.load %arg4[%c0_5, %c0_6] : memref<1x16xf32, #tpu.memory_space<vmem>>, vector<1x16xf32>
    %8 = arith.addf %7, %1 : vector<1x16xf32>
    %c0_7 = arith.constant 0 : index
    %c0_8 = arith.constant 0 : index
    %9 = vector.load %arg4[%c0_7, %c0_8] : memref<1x16xf32, #tpu.memory_space<vmem>>, vector<1x16xf32>
    tpu.vector_store %arg4[%c0_7, %c0_8], %8 {strides = array<i32>} : memref<1x16xf32, #tpu.memory_space<vmem>>, vector<1x16xf32>,
    %c0_9 = arith.constant 0 : index
    %c0_10 = arith.constant 0 : index
    %10 = vector.load %arg5[%c0_9, %c0_10] : memref<1x16xf32, #tpu.memory_space<vmem>>, vector<1x16xf32>
    %11 = arith.addf %10, %2 : vector<1x16xf32>
    %c0_11 = arith.constant 0 : index
    %c0_12 = arith.constant 0 : index
    %12 = vector.load %arg5[%c0_11, %c0_12] : memref<1x16xf32, #tpu.memory_space<vmem>>, vector<1x16xf32>
    tpu.vector_store %arg5[%c0_11, %c0_12], %11 {strides = array<i32>} : memref<1x16xf32, #tpu.memory_space<vmem>>, vector<1x16xf32>,
    %c0_13 = arith.constant 0 : index
    %c0_14 = arith.constant 0 : index
    %13 = vector.load %arg6[%c0_13, %c0_14] : memref<1x16xf32, #tpu.memory_space<vmem>>, vector<1x16xf32>
    %14 = arith.addf %13, %3 : vector<1x16xf32>
    %c0_15 = arith.constant 0 : index
    %c0_16 = arith.constant 0 : index
    %15 = vector.load %arg6[%c0_15, %c0_16] : memref<1x16xf32, #tpu.memory_space<vmem>>, vector<1x16xf32>
    tpu.vector_store %arg6[%c0_15, %c0_16], %14 {strides = array<i32>} : memref<1x16xf32, #tpu.memory_space<vmem>>, vector<1x16xf32>,
    %c15_i32 = arith.constant 15 : i32
    %16 = arith.cmpi eq, %arg0, %c15_i32 : i32
    %17 = arith.extui %16 : i1 to i32
    %c0_i32_17 = arith.constant 0 : i32
    %18 = arith.cmpi ne, %17, %c0_i32_17 : i32
    scf.if %18 {
      %c0_18 = arith.constant 0 : index
      %c0_19 = arith.constant 0 : index
      %19 = vector.load %arg4[%c0_18, %c0_19] : memref<1x16xf32, #tpu.memory_space<vmem>>, vector<1x16xf32>
      %cst_20 = arith.constant 5.120000e+02 : f32
      %20 = vector.broadcast %cst_20 : f32 to vector<1x16xf32>
      %21 = arith.divf %19, %20 : vector<1x16xf32>
      %c0_21 = arith.constant 0 : index
      %c0_22 = arith.constant 0 : index
      %22 = vector.load %arg2[%c0_21, %c0_22] : memref<1x16xf32, #tpu.memory_space<vmem>>, vector<1x16xf32>
      tpu.vector_store %arg2[%c0_21, %c0_22], %21 {strides = array<i32>} : memref<1x16xf32, #tpu.memory_space<vmem>>, vector<1x16xf32>,
      %c0_23 = arith.constant 0 : index
      %c0_24 = arith.constant 0 : index
      %23 = vector.load %arg5[%c0_23, %c0_24] : memref<1x16xf32, #tpu.memory_space<vmem>>, vector<1x16xf32>
      %c0_25 = arith.constant 0 : index
      %c0_26 = arith.constant 0 : index
      %24 = vector.load %arg6[%c0_25, %c0_26] : memref<1x16xf32, #tpu.memory_space<vmem>>, vector<1x16xf32>
      %25 = arith.subf %23, %24 : vector<1x16xf32>
      %cst_27 = arith.constant 1.600000e+01 : f32
      %26 = vector.broadcast %cst_27 : f32 to vector<1x16xf32>
      %27 = arith.divf %25, %26 : vector<1x16xf32>
      %cst_28 = arith.constant 0.205186397 : f32
      %28 = vector.broadcast %cst_28 : f32 to vector<1x16xf32>
      %29 = arith.mulf %27, %28 : vector<1x16xf32>
      %cst_29 = arith.constant 9.99999974E-6 : f32
      %30 = vector.broadcast %cst_29 : f32 to vector<1x16xf32>
      %31 = arith.addf %29, %30 : vector<1x16xf32>
      %cst_30 = arith.constant 1.000000e+00 : f32
      %32 = vector.broadcast %cst_30 : f32 to vector<1x16xf32>
      %33 = arith.divf %32, %31 : vector<1x16xf32>
      %c0_31 = arith.constant 0 : index
      %c0_32 = arith.constant 0 : index
      %34 = vector.load %arg3[%c0_31, %c0_32] : memref<1x16xf32, #tpu.memory_space<vmem>>, vector<1x16xf32>
      tpu.vector_store %arg3[%c0_31, %c0_32], %33 {strides = array<i32>} : memref<1x16xf32, #tpu.memory_space<vmem>>, vector<1x16xf32>,
    } else {
    }
    return
  }
  func.func @transform_0(%arg0: i32) -> (i32, i32, i32) {
    %c0_i32 = arith.constant 0 : i32
    %c0_i32_0 = arith.constant 0 : i32
    %c0_i32_1 = arith.constant 0 : i32
    return %arg0, %c0_i32, %c0_i32_0 : i32, i32, i32
  }
  func.func @transform_1(%arg0: i32) -> (i32, i32) {
    %c0_i32 = arith.constant 0 : i32
    %c0_i32_0 = arith.constant 0 : i32
    %c0_i32_1 = arith.constant 0 : i32
    return %c0_i32, %c0_i32_0 : i32, i32
  }
  func.func @transform_2(%arg0: i32) -> (i32, i32) {
    %c0_i32 = arith.constant 0 : i32
    %c0_i32_0 = arith.constant 0 : i32
    %c0_i32_1 = arith.constant 0 : i32
    return %c0_i32, %c0_i32_0 : i32, i32
  }
}

module attributes {stable_mosaic.version = 11 : i64} {
  func.func @_bn_act_kernel(%arg0: i32, %arg1: memref<64x128xf32, #tpu.memory_space<vmem>>, %arg2: memref<1x128xf32, #tpu.memory_space<vmem>>, %arg3: memref<1x128xf32, #tpu.memory_space<vmem>>, %arg4: memref<1x128xf32, #tpu.memory_space<vmem>>, %arg5: memref<1x128xf32, #tpu.memory_space<vmem>>, %arg6: memref<64x128xf32, #tpu.memory_space<vmem>>) attributes {dimension_semantics = [#tpu.dimension_semantics<parallel>], iteration_bounds = array<i64: 1>, scalar_prefetch = 0 : i64, scratch_operands = 0 : i64, tpu.core_type = #tpu.core_type<tc>, window_params = [{transform_indices = @transform_0, window_bounds = array<i64: 64, 128>}, {pipeline_mode = #tpu.pipeline_mode<synchronous>, transform_indices = @transform_1, window_bounds = array<i64: 1, 128>}, {pipeline_mode = #tpu.pipeline_mode<synchronous>, transform_indices = @transform_2, window_bounds = array<i64: 1, 128>}, {pipeline_mode = #tpu.pipeline_mode<synchronous>, transform_indices = @transform_3, window_bounds = array<i64: 1, 128>}, {pipeline_mode = #tpu.pipeline_mode<synchronous>, transform_indices = @transform_4, window_bounds = array<i64: 1, 128>}, {transform_indices = @transform_5, window_bounds = array<i64: 64, 128>}]} {
    %c0 = arith.constant 0 : index
    %c0_0 = arith.constant 0 : index
    %0 = vector.load %arg1[%c0, %c0_0] : memref<64x128xf32, #tpu.memory_space<vmem>>, vector<64x128xf32>
    %c0_1 = arith.constant 0 : index
    %c0_2 = arith.constant 0 : index
    %1 = vector.load %arg2[%c0_1, %c0_2] : memref<1x128xf32, #tpu.memory_space<vmem>>, vector<1x128xf32>
    %2 = vector.broadcast %1 : vector<1x128xf32> to vector<64x128xf32>
    %3 = arith.subf %0, %2 : vector<64x128xf32>
    %c0_3 = arith.constant 0 : index
    %c0_4 = arith.constant 0 : index
    %4 = vector.load %arg3[%c0_3, %c0_4] : memref<1x128xf32, #tpu.memory_space<vmem>>, vector<1x128xf32>
    %c0_5 = arith.constant 0 : index
    %c0_6 = arith.constant 0 : index
    %5 = vector.load %arg4[%c0_5, %c0_6] : memref<1x128xf32, #tpu.memory_space<vmem>>, vector<1x128xf32>
    %6 = arith.mulf %4, %5 : vector<1x128xf32>
    %7 = vector.broadcast %6 : vector<1x128xf32> to vector<64x128xf32>
    %8 = arith.mulf %3, %7 : vector<64x128xf32>
    %c0_7 = arith.constant 0 : index
    %c0_8 = arith.constant 0 : index
    %9 = vector.load %arg5[%c0_7, %c0_8] : memref<1x128xf32, #tpu.memory_space<vmem>>, vector<1x128xf32>
    %10 = vector.broadcast %9 : vector<1x128xf32> to vector<64x128xf32>
    %11 = arith.addf %8, %10 : vector<64x128xf32>
    %cst = arith.constant 0.000000e+00 : f32
    %12 = vector.broadcast %cst : f32 to vector<64x128xf32>
    %13 = arith.maximumf %11, %12 : vector<64x128xf32>
    %c0_9 = arith.constant 0 : index
    %c0_10 = arith.constant 0 : index
    %14 = vector.load %arg6[%c0_9, %c0_10] : memref<64x128xf32, #tpu.memory_space<vmem>>, vector<64x128xf32>
    tpu.vector_store %arg6[%c0_9, %c0_10], %13 {strides = array<i32>} : memref<64x128xf32, #tpu.memory_space<vmem>>, vector<64x128xf32>,
    return
  }
  func.func @transform_0(%arg0: i32) -> (i32, i32) {
    %c0_i32 = arith.constant 0 : i32
    %c0_i32_0 = arith.constant 0 : i32
    return %arg0, %c0_i32 : i32, i32
  }
  func.func @transform_1(%arg0: i32) -> (i32, i32) {
    %c0_i32 = arith.constant 0 : i32
    %c0_i32_0 = arith.constant 0 : i32
    %c0_i32_1 = arith.constant 0 : i32
    return %c0_i32, %c0_i32_0 : i32, i32
  }
  func.func @transform_2(%arg0: i32) -> (i32, i32) {
    %c0_i32 = arith.constant 0 : i32
    %c0_i32_0 = arith.constant 0 : i32
    %c0_i32_1 = arith.constant 0 : i32
    return %c0_i32, %c0_i32_0 : i32, i32
  }
  func.func @transform_3(%arg0: i32) -> (i32, i32) {
    %c0_i32 = arith.constant 0 : i32
    %c0_i32_0 = arith.constant 0 : i32
    %c0_i32_1 = arith.constant 0 : i32
    return %c0_i32, %c0_i32_0 : i32, i32
  }
  func.func @transform_4(%arg0: i32) -> (i32, i32) {
    %c0_i32 = arith.constant 0 : i32
    %c0_i32_0 = arith.constant 0 : i32
    %c0_i32_1 = arith.constant 0 : i32
    return %c0_i32, %c0_i32_0 : i32, i32
  }
  func.func @transform_5(%arg0: i32) -> (i32, i32) {
    %c0_i32 = arith.constant 0 : i32
    %c0_i32_0 = arith.constant 0 : i32
    return %arg0, %c0_i32 : i32, i32
  }
}

module attributes {stable_mosaic.version = 11 : i64} {
  func.func @_max9_kernel(%arg0: i32, %arg1: memref<16x128xf32, #tpu.memory_space<vmem>>, %arg2: memref<16x128xf32, #tpu.memory_space<vmem>>, %arg3: memref<16x128xf32, #tpu.memory_space<vmem>>, %arg4: memref<16x128xf32, #tpu.memory_space<vmem>>, %arg5: memref<16x128xf32, #tpu.memory_space<vmem>>, %arg6: memref<16x128xf32, #tpu.memory_space<vmem>>, %arg7: memref<16x128xf32, #tpu.memory_space<vmem>>, %arg8: memref<16x128xf32, #tpu.memory_space<vmem>>, %arg9: memref<16x128xf32, #tpu.memory_space<vmem>>, %arg10: memref<16x128xf32, #tpu.memory_space<vmem>>) attributes {dimension_semantics = [#tpu.dimension_semantics<parallel>], iteration_bounds = array<i64: 1>, scalar_prefetch = 0 : i64, scratch_operands = 0 : i64, tpu.core_type = #tpu.core_type<tc>, window_params = [{transform_indices = @transform_0, window_bounds = array<i64: 16, 128>}, {transform_indices = @transform_1, window_bounds = array<i64: 16, 128>}, {transform_indices = @transform_2, window_bounds = array<i64: 16, 128>}, {transform_indices = @transform_3, window_bounds = array<i64: 16, 128>}, {transform_indices = @transform_4, window_bounds = array<i64: 16, 128>}, {transform_indices = @transform_5, window_bounds = array<i64: 16, 128>}, {transform_indices = @transform_6, window_bounds = array<i64: 16, 128>}, {transform_indices = @transform_7, window_bounds = array<i64: 16, 128>}, {transform_indices = @transform_8, window_bounds = array<i64: 16, 128>}, {transform_indices = @transform_9, window_bounds = array<i64: 16, 128>}]} {
    %c0 = arith.constant 0 : index
    %c0_0 = arith.constant 0 : index
    %0 = vector.load %arg1[%c0, %c0_0] : memref<16x128xf32, #tpu.memory_space<vmem>>, vector<16x128xf32>
    %c0_1 = arith.constant 0 : index
    %c0_2 = arith.constant 0 : index
    %1 = vector.load %arg2[%c0_1, %c0_2] : memref<16x128xf32, #tpu.memory_space<vmem>>, vector<16x128xf32>
    %2 = arith.maximumf %0, %1 : vector<16x128xf32>
    %c0_3 = arith.constant 0 : index
    %c0_4 = arith.constant 0 : index
    %3 = vector.load %arg3[%c0_3, %c0_4] : memref<16x128xf32, #tpu.memory_space<vmem>>, vector<16x128xf32>
    %4 = arith.maximumf %2, %3 : vector<16x128xf32>
    %c0_5 = arith.constant 0 : index
    %c0_6 = arith.constant 0 : index
    %5 = vector.load %arg4[%c0_5, %c0_6] : memref<16x128xf32, #tpu.memory_space<vmem>>, vector<16x128xf32>
    %6 = arith.maximumf %4, %5 : vector<16x128xf32>
    %c0_7 = arith.constant 0 : index
    %c0_8 = arith.constant 0 : index
    %7 = vector.load %arg5[%c0_7, %c0_8] : memref<16x128xf32, #tpu.memory_space<vmem>>, vector<16x128xf32>
    %8 = arith.maximumf %6, %7 : vector<16x128xf32>
    %c0_9 = arith.constant 0 : index
    %c0_10 = arith.constant 0 : index
    %9 = vector.load %arg6[%c0_9, %c0_10] : memref<16x128xf32, #tpu.memory_space<vmem>>, vector<16x128xf32>
    %10 = arith.maximumf %8, %9 : vector<16x128xf32>
    %c0_11 = arith.constant 0 : index
    %c0_12 = arith.constant 0 : index
    %11 = vector.load %arg7[%c0_11, %c0_12] : memref<16x128xf32, #tpu.memory_space<vmem>>, vector<16x128xf32>
    %12 = arith.maximumf %10, %11 : vector<16x128xf32>
    %c0_13 = arith.constant 0 : index
    %c0_14 = arith.constant 0 : index
    %13 = vector.load %arg8[%c0_13, %c0_14] : memref<16x128xf32, #tpu.memory_space<vmem>>, vector<16x128xf32>
    %14 = arith.maximumf %12, %13 : vector<16x128xf32>
    %c0_15 = arith.constant 0 : index
    %c0_16 = arith.constant 0 : index
    %15 = vector.load %arg9[%c0_15, %c0_16] : memref<16x128xf32, #tpu.memory_space<vmem>>, vector<16x128xf32>
    %16 = arith.maximumf %14, %15 : vector<16x128xf32>
    %c0_17 = arith.constant 0 : index
    %c0_18 = arith.constant 0 : index
    %17 = vector.load %arg10[%c0_17, %c0_18] : memref<16x128xf32, #tpu.memory_space<vmem>>, vector<16x128xf32>
    tpu.vector_store %arg10[%c0_17, %c0_18], %16 {strides = array<i32>} : memref<16x128xf32, #tpu.memory_space<vmem>>, vector<16x128xf32>,
    return
  }
  func.func @transform_0(%arg0: i32) -> (i32, i32) {
    %c0_i32 = arith.constant 0 : i32
    %c0_i32_0 = arith.constant 0 : i32
    return %arg0, %c0_i32 : i32, i32
  }
  func.func @transform_1(%arg0: i32) -> (i32, i32) {
    %c0_i32 = arith.constant 0 : i32
    %c0_i32_0 = arith.constant 0 : i32
    return %arg0, %c0_i32 : i32, i32
  }
  func.func @transform_2(%arg0: i32) -> (i32, i32) {
    %c0_i32 = arith.constant 0 : i32
    %c0_i32_0 = arith.constant 0 : i32
    return %arg0, %c0_i32 : i32, i32
  }
  func.func @transform_3(%arg0: i32) -> (i32, i32) {
    %c0_i32 = arith.constant 0 : i32
    %c0_i32_0 = arith.constant 0 : i32
    return %arg0, %c0_i32 : i32, i32
  }
  func.func @transform_4(%arg0: i32) -> (i32, i32) {
    %c0_i32 = arith.constant 0 : i32
    %c0_i32_0 = arith.constant 0 : i32
    return %arg0, %c0_i32 : i32, i32
  }
  func.func @transform_5(%arg0: i32) -> (i32, i32) {
    %c0_i32 = arith.constant 0 : i32
    %c0_i32_0 = arith.constant 0 : i32
    return %arg0, %c0_i32 : i32, i32
  }
  func.func @transform_6(%arg0: i32) -> (i32, i32) {
    %c0_i32 = arith.constant 0 : i32
    %c0_i32_0 = arith.constant 0 : i32
    return %arg0, %c0_i32 : i32, i32
  }
  func.func @transform_7(%arg0: i32) -> (i32, i32) {
    %c0_i32 = arith.constant 0 : i32
    %c0_i32_0 = arith.constant 0 : i32
    return %arg0, %c0_i32 : i32, i32
  }
  func.func @transform_8(%arg0: i32) -> (i32, i32) {
    %c0_i32 = arith.constant 0 : i32
    %c0_i32_0 = arith.constant 0 : i32
    return %arg0, %c0_i32 : i32, i32
  }
  func.func @transform_9(%arg0: i32) -> (i32, i32) {
    %c0_i32 = arith.constant 0 : i32
    %c0_i32_0 = arith.constant 0 : i32
    return %arg0, %c0_i32 : i32, i32
  }
}

module attributes {stable_mosaic.version = 11 : i64} {
  func.func @_matmul_kernel(%arg0: i32, %arg1: i32, %arg2: i32, %arg3: memref<128x256xbf16, #tpu.memory_space<vmem>>, %arg4: memref<256x128xbf16, #tpu.memory_space<vmem>>, %arg5: memref<128x128xf32, #tpu.memory_space<vmem>>, %arg6: memref<128x128xf32, #tpu.memory_space<vmem>>) attributes {dimension_semantics = [#tpu.dimension_semantics<parallel>, #tpu.dimension_semantics<parallel>, #tpu.dimension_semantics<arbitrary>], iteration_bounds = array<i64: 1, 1, 1>, scalar_prefetch = 0 : i64, scratch_operands = 1 : i64, tpu.core_type = #tpu.core_type<tc>, window_params = [{transform_indices = @transform_0, window_bounds = array<i64: 128, 256>}, {transform_indices = @transform_1, window_bounds = array<i64: 256, 128>}, {transform_indices = @transform_2, window_bounds = array<i64: 128, 128>}]} {
    %c0_i32 = arith.constant 0 : i32
    %0 = arith.cmpi eq, %arg2, %c0_i32 : i32
    %1 = arith.extui %0 : i1 to i32
    %c0_i32_0 = arith.constant 0 : i32
    %2 = arith.cmpi ne, %1, %c0_i32_0 : i32
    scf.if %2 {
      %cst_10 = arith.constant 0.000000e+00 : f32
      %12 = vector.broadcast %cst_10 : f32 to vector<128x128xf32>
      %c0_11 = arith.constant 0 : index
      %c0_12 = arith.constant 0 : index
      %13 = vector.load %arg6[%c0_11, %c0_12] : memref<128x128xf32, #tpu.memory_space<vmem>>, vector<128x128xf32>
      tpu.vector_store %arg6[%c0_11, %c0_12], %12 {strides = array<i32>} : memref<128x128xf32, #tpu.memory_space<vmem>>, vector<128x128xf32>,
    } else {
    }
    %c0 = arith.constant 0 : index
    %c0_1 = arith.constant 0 : index
    %3 = vector.load %arg6[%c0, %c0_1] : memref<128x128xf32, #tpu.memory_space<vmem>>, vector<128x128xf32>
    %c0_2 = arith.constant 0 : index
    %c0_3 = arith.constant 0 : index
    %4 = vector.load %arg3[%c0_2, %c0_3] : memref<128x256xbf16, #tpu.memory_space<vmem>>, vector<128x256xbf16>
    %c0_4 = arith.constant 0 : index
    %c0_5 = arith.constant 0 : index
    %5 = vector.load %arg4[%c0_4, %c0_5] : memref<256x128xbf16, #tpu.memory_space<vmem>>, vector<256x128xbf16>
    %cst = arith.constant dense<0.000000e+00> : vector<128x128xf32>
    %6 = tpu.matmul %4, %5, %cst {dimension_numbers = #tpu.dot_dimension_numbers<[1], [0], [0], [1], [0, 0, 1, 1], [], []>} : vector<128x256xbf16>, vector<256x128xbf16>, vector<128x128xf32> -> vector<128x128xf32>
    %7 = arith.addf %3, %6 : vector<128x128xf32>
    %c0_6 = arith.constant 0 : index
    %c0_7 = arith.constant 0 : index
    %8 = vector.load %arg6[%c0_6, %c0_7] : memref<128x128xf32, #tpu.memory_space<vmem>>, vector<128x128xf32>
    tpu.vector_store %arg6[%c0_6, %c0_7], %7 {strides = array<i32>} : memref<128x128xf32, #tpu.memory_space<vmem>>, vector<128x128xf32>,
    %c0_i32_8 = arith.constant 0 : i32
    %9 = arith.cmpi eq, %arg2, %c0_i32_8 : i32
    %10 = arith.extui %9 : i1 to i32
    %c0_i32_9 = arith.constant 0 : i32
    %11 = arith.cmpi ne, %10, %c0_i32_9 : i32
    scf.if %11 {
      %c0_10 = arith.constant 0 : index
      %c0_11 = arith.constant 0 : index
      %12 = vector.load %arg6[%c0_10, %c0_11] : memref<128x128xf32, #tpu.memory_space<vmem>>, vector<128x128xf32>
      %c0_12 = arith.constant 0 : index
      %c0_13 = arith.constant 0 : index
      %13 = vector.load %arg5[%c0_12, %c0_13] : memref<128x128xf32, #tpu.memory_space<vmem>>, vector<128x128xf32>
      tpu.vector_store %arg5[%c0_12, %c0_13], %12 {strides = array<i32>} : memref<128x128xf32, #tpu.memory_space<vmem>>, vector<128x128xf32>,
    } else {
    }
    return
  }
  func.func @transform_0(%arg0: i32, %arg1: i32, %arg2: i32) -> (i32, i32) {
    %c0_i32 = arith.constant 0 : i32
    return %arg0, %arg2 : i32, i32
  }
  func.func @transform_1(%arg0: i32, %arg1: i32, %arg2: i32) -> (i32, i32) {
    %c0_i32 = arith.constant 0 : i32
    return %arg2, %arg1 : i32, i32
  }
  func.func @transform_2(%arg0: i32, %arg1: i32, %arg2: i32) -> (i32, i32) {
    %c0_i32 = arith.constant 0 : i32
    return %arg0, %arg1 : i32, i32
  }
}

module attributes {stable_mosaic.version = 11 : i64} {
  func.func @_rangebn_stats_kernel(%arg0: i32, %arg1: memref<1x8x16xf32, #tpu.memory_space<vmem>>, %arg2: memref<1x16xf32, #tpu.memory_space<vmem>>, %arg3: memref<1x16xf32, #tpu.memory_space<vmem>>, %arg4: memref<1x16xf32, #tpu.memory_space<vmem>>, %arg5: memref<1x16xf32, #tpu.memory_space<vmem>>, %arg6: memref<1x16xf32, #tpu.memory_space<vmem>>) attributes {dimension_semantics = [#tpu.dimension_semantics<arbitrary>], iteration_bounds = array<i64: 16>, scalar_prefetch = 0 : i64, scratch_operands = 3 : i64, tpu.core_type = #tpu.core_type<tc>, window_params = [{transform_indices = @transform_0, window_bounds = array<i64: 1, 8, 16>}, {pipeline_mode = #tpu.pipeline_mode<synchronous>, transform_indices = @transform_1, window_bounds = array<i64: 1, 16>}, {pipeline_mode = #tpu.pipeline_mode<synchronous>, transform_indices = @transform_2, window_bounds = array<i64: 1, 16>}]} {
    %c0 = arith.constant 0 : index
    %c0_0 = arith.constant 0 : index
    %c0_1 = arith.constant 0 : index
    %0 = vector.load %arg1[%c0, %c0_0, %c0_1] : memref<1x8x16xf32, #tpu.memory_space<vmem>>, vector<1x8x16xf32>
    %cst = arith.constant dense<0.000000e+00> : vector<1x16xf32>
    %1 = vector.multi_reduction <add>, %0, %cst [1] : vector<1x8x16xf32> to vector<1x16xf32>
    %cst_2 = arith.constant dense<0xFF800000> : vector<1x16xf32>
    %2 = vector.multi_reduction <maximumf>, %0, %cst_2 [1] : vector<1x8x16xf32> to vector<1x16xf32>
    %cst_3 = arith.constant dense<0x7F800000> : vector<1x16xf32>
    %3 = vector.multi_reduction <minimumf>, %0, %cst_3 [1] : vector<1x8x16xf32> to vector<1x16xf32>
    %c0_i32 = arith.constant 0 : i32
    %4 = arith.cmpi eq, %arg0, %c0_i32 : i32
    %5 = arith.extui %4 : i1 to i32
    %c0_i32_4 = arith.constant 0 : i32
    %6 = arith.cmpi ne, %5, %c0_i32_4 : i32
    scf.if %6 {
      %cst_18 = arith.constant 0.000000e+00 : f32
      %19 = vector.broadcast %cst_18 : f32 to vector<1x16xf32>
      %c0_19 = arith.constant 0 : index
      %c0_20 = arith.constant 0 : index
      %20 = vector.load %arg4[%c0_19, %c0_20] : memref<1x16xf32, #tpu.memory_space<vmem>>, vector<1x16xf32>
      tpu.vector_store %arg4[%c0_19, %c0_20], %19 {strides = array<i32>} : memref<1x16xf32, #tpu.memory_space<vmem>>, vector<1x16xf32>,
      %cst_21 = arith.constant 0.000000e+00 : f32
      %21 = vector.broadcast %cst_21 : f32 to vector<1x16xf32>
      %c0_22 = arith.constant 0 : index
      %c0_23 = arith.constant 0 : index
      %22 = vector.load %arg5[%c0_22, %c0_23] : memref<1x16xf32, #tpu.memory_space<vmem>>, vector<1x16xf32>
      tpu.vector_store %arg5[%c0_22, %c0_23], %21 {strides = array<i32>} : memref<1x16xf32, #tpu.memory_space<vmem>>, vector<1x16xf32>,
      %cst_24 = arith.constant 0.000000e+00 : f32
      %23 = vector.broadcast %cst_24 : f32 to vector<1x16xf32>
      %c0_25 = arith.constant 0 : index
      %c0_26 = arith.constant 0 : index
      %24 = vector.load %arg6[%c0_25, %c0_26] : memref<1x16xf32, #tpu.memory_space<vmem>>, vector<1x16xf32>
      tpu.vector_store %arg6[%c0_25, %c0_26], %23 {strides = array<i32>} : memref<1x16xf32, #tpu.memory_space<vmem>>, vector<1x16xf32>,
    } else {
    }
    %c0_5 = arith.constant 0 : index
    %c0_6 = arith.constant 0 : index
    %7 = vector.load %arg4[%c0_5, %c0_6] : memref<1x16xf32, #tpu.memory_space<vmem>>, vector<1x16xf32>
    %8 = arith.addf %7, %1 : vector<1x16xf32>
    %c0_7 = arith.constant 0 : index
    %c0_8 = arith.constant 0 : index
    %9 = vector.load %arg4[%c0_7, %c0_8] : memref<1x16xf32, #tpu.memory_space<vmem>>, vector<1x16xf32>
    tpu.vector_store %arg4[%c0_7, %c0_8], %8 {strides = array<i32>} : memref<1x16xf32, #tpu.memory_space<vmem>>, vector<1x16xf32>,
    %c0_9 = arith.constant 0 : index
    %c0_10 = arith.constant 0 : index
    %10 = vector.load %arg5[%c0_9, %c0_10] : memref<1x16xf32, #tpu.memory_space<vmem>>, vector<1x16xf32>
    %11 = arith.addf %10, %2 : vector<1x16xf32>
    %c0_11 = arith.constant 0 : index
    %c0_12 = arith.constant 0 : index
    %12 = vector.load %arg5[%c0_11, %c0_12] : memref<1x16xf32, #tpu.memory_space<vmem>>, vector<1x16xf32>
    tpu.vector_store %arg5[%c0_11, %c0_12], %11 {strides = array<i32>} : memref<1x16xf32, #tpu.memory_space<vmem>>, vector<1x16xf32>,
    %c0_13 = arith.constant 0 : index
    %c0_14 = arith.constant 0 : index
    %13 = vector.load %arg6[%c0_13, %c0_14] : memref<1x16xf32, #tpu.memory_space<vmem>>, vector<1x16xf32>
    %14 = arith.addf %13, %3 : vector<1x16xf32>
    %c0_15 = arith.constant 0 : index
    %c0_16 = arith.constant 0 : index
    %15 = vector.load %arg6[%c0_15, %c0_16] : memref<1x16xf32, #tpu.memory_space<vmem>>, vector<1x16xf32>
    tpu.vector_store %arg6[%c0_15, %c0_16], %14 {strides = array<i32>} : memref<1x16xf32, #tpu.memory_space<vmem>>, vector<1x16xf32>,
    %c15_i32 = arith.constant 15 : i32
    %16 = arith.cmpi eq, %arg0, %c15_i32 : i32
    %17 = arith.extui %16 : i1 to i32
    %c0_i32_17 = arith.constant 0 : i32
    %18 = arith.cmpi ne, %17, %c0_i32_17 : i32
    scf.if %18 {
      %c0_18 = arith.constant 0 : index
      %c0_19 = arith.constant 0 : index
      %19 = vector.load %arg4[%c0_18, %c0_19] : memref<1x16xf32, #tpu.memory_space<vmem>>, vector<1x16xf32>
      %cst_20 = arith.constant 1.280000e+02 : f32
      %20 = vector.broadcast %cst_20 : f32 to vector<1x16xf32>
      %21 = arith.divf %19, %20 : vector<1x16xf32>
      %c0_21 = arith.constant 0 : index
      %c0_22 = arith.constant 0 : index
      %22 = vector.load %arg2[%c0_21, %c0_22] : memref<1x16xf32, #tpu.memory_space<vmem>>, vector<1x16xf32>
      tpu.vector_store %arg2[%c0_21, %c0_22], %21 {strides = array<i32>} : memref<1x16xf32, #tpu.memory_space<vmem>>, vector<1x16xf32>,
      %c0_23 = arith.constant 0 : index
      %c0_24 = arith.constant 0 : index
      %23 = vector.load %arg5[%c0_23, %c0_24] : memref<1x16xf32, #tpu.memory_space<vmem>>, vector<1x16xf32>
      %c0_25 = arith.constant 0 : index
      %c0_26 = arith.constant 0 : index
      %24 = vector.load %arg6[%c0_25, %c0_26] : memref<1x16xf32, #tpu.memory_space<vmem>>, vector<1x16xf32>
      %25 = arith.subf %23, %24 : vector<1x16xf32>
      %cst_27 = arith.constant 1.600000e+01 : f32
      %26 = vector.broadcast %cst_27 : f32 to vector<1x16xf32>
      %27 = arith.divf %25, %26 : vector<1x16xf32>
      %cst_28 = arith.constant 0.264894515 : f32
      %28 = vector.broadcast %cst_28 : f32 to vector<1x16xf32>
      %29 = arith.mulf %27, %28 : vector<1x16xf32>
      %cst_29 = arith.constant 9.99999974E-6 : f32
      %30 = vector.broadcast %cst_29 : f32 to vector<1x16xf32>
      %31 = arith.addf %29, %30 : vector<1x16xf32>
      %cst_30 = arith.constant 1.000000e+00 : f32
      %32 = vector.broadcast %cst_30 : f32 to vector<1x16xf32>
      %33 = arith.divf %32, %31 : vector<1x16xf32>
      %c0_31 = arith.constant 0 : index
      %c0_32 = arith.constant 0 : index
      %34 = vector.load %arg3[%c0_31, %c0_32] : memref<1x16xf32, #tpu.memory_space<vmem>>, vector<1x16xf32>
      tpu.vector_store %arg3[%c0_31, %c0_32], %33 {strides = array<i32>} : memref<1x16xf32, #tpu.memory_space<vmem>>, vector<1x16xf32>,
    } else {
    }
    return
  }
  func.func @transform_0(%arg0: i32) -> (i32, i32, i32) {
    %c0_i32 = arith.constant 0 : i32
    %c0_i32_0 = arith.constant 0 : i32
    %c0_i32_1 = arith.constant 0 : i32
    return %arg0, %c0_i32, %c0_i32_0 : i32, i32, i32
  }
  func.func @transform_1(%arg0: i32) -> (i32, i32) {
    %c0_i32 = arith.constant 0 : i32
    %c0_i32_0 = arith.constant 0 : i32
    %c0_i32_1 = arith.constant 0 : i32
    return %c0_i32, %c0_i32_0 : i32, i32
  }
  func.func @transform_2(%arg0: i32) -> (i32, i32) {
    %c0_i32 = arith.constant 0 : i32
    %c0_i32_0 = arith.constant 0 : i32
    %c0_i32_1 = arith.constant 0 : i32
    return %c0_i32, %c0_i32_0 : i32, i32
  }
}

module attributes {stable_mosaic.version = 11 : i64} {
  func.func @_bn_act_kernel(%arg0: i32, %arg1: memref<16x128xf32, #tpu.memory_space<vmem>>, %arg2: memref<1x128xf32, #tpu.memory_space<vmem>>, %arg3: memref<1x128xf32, #tpu.memory_space<vmem>>, %arg4: memref<1x128xf32, #tpu.memory_space<vmem>>, %arg5: memref<1x128xf32, #tpu.memory_space<vmem>>, %arg6: memref<16x128xf32, #tpu.memory_space<vmem>>) attributes {dimension_semantics = [#tpu.dimension_semantics<parallel>], iteration_bounds = array<i64: 1>, scalar_prefetch = 0 : i64, scratch_operands = 0 : i64, tpu.core_type = #tpu.core_type<tc>, window_params = [{transform_indices = @transform_0, window_bounds = array<i64: 16, 128>}, {pipeline_mode = #tpu.pipeline_mode<synchronous>, transform_indices = @transform_1, window_bounds = array<i64: 1, 128>}, {pipeline_mode = #tpu.pipeline_mode<synchronous>, transform_indices = @transform_2, window_bounds = array<i64: 1, 128>}, {pipeline_mode = #tpu.pipeline_mode<synchronous>, transform_indices = @transform_3, window_bounds = array<i64: 1, 128>}, {pipeline_mode = #tpu.pipeline_mode<synchronous>, transform_indices = @transform_4, window_bounds = array<i64: 1, 128>}, {transform_indices = @transform_5, window_bounds = array<i64: 16, 128>}]} {
    %c0 = arith.constant 0 : index
    %c0_0 = arith.constant 0 : index
    %0 = vector.load %arg1[%c0, %c0_0] : memref<16x128xf32, #tpu.memory_space<vmem>>, vector<16x128xf32>
    %c0_1 = arith.constant 0 : index
    %c0_2 = arith.constant 0 : index
    %1 = vector.load %arg2[%c0_1, %c0_2] : memref<1x128xf32, #tpu.memory_space<vmem>>, vector<1x128xf32>
    %2 = vector.broadcast %1 : vector<1x128xf32> to vector<16x128xf32>
    %3 = arith.subf %0, %2 : vector<16x128xf32>
    %c0_3 = arith.constant 0 : index
    %c0_4 = arith.constant 0 : index
    %4 = vector.load %arg3[%c0_3, %c0_4] : memref<1x128xf32, #tpu.memory_space<vmem>>, vector<1x128xf32>
    %c0_5 = arith.constant 0 : index
    %c0_6 = arith.constant 0 : index
    %5 = vector.load %arg4[%c0_5, %c0_6] : memref<1x128xf32, #tpu.memory_space<vmem>>, vector<1x128xf32>
    %6 = arith.mulf %4, %5 : vector<1x128xf32>
    %7 = vector.broadcast %6 : vector<1x128xf32> to vector<16x128xf32>
    %8 = arith.mulf %3, %7 : vector<16x128xf32>
    %c0_7 = arith.constant 0 : index
    %c0_8 = arith.constant 0 : index
    %9 = vector.load %arg5[%c0_7, %c0_8] : memref<1x128xf32, #tpu.memory_space<vmem>>, vector<1x128xf32>
    %10 = vector.broadcast %9 : vector<1x128xf32> to vector<16x128xf32>
    %11 = arith.addf %8, %10 : vector<16x128xf32>
    %cst = arith.constant 0.000000e+00 : f32
    %12 = vector.broadcast %cst : f32 to vector<16x128xf32>
    %13 = arith.maximumf %11, %12 : vector<16x128xf32>
    %c0_9 = arith.constant 0 : index
    %c0_10 = arith.constant 0 : index
    %14 = vector.load %arg6[%c0_9, %c0_10] : memref<16x128xf32, #tpu.memory_space<vmem>>, vector<16x128xf32>
    tpu.vector_store %arg6[%c0_9, %c0_10], %13 {strides = array<i32>} : memref<16x128xf32, #tpu.memory_space<vmem>>, vector<16x128xf32>,
    return
  }
  func.func @transform_0(%arg0: i32) -> (i32, i32) {
    %c0_i32 = arith.constant 0 : i32
    %c0_i32_0 = arith.constant 0 : i32
    return %arg0, %c0_i32 : i32, i32
  }
  func.func @transform_1(%arg0: i32) -> (i32, i32) {
    %c0_i32 = arith.constant 0 : i32
    %c0_i32_0 = arith.constant 0 : i32
    %c0_i32_1 = arith.constant 0 : i32
    return %c0_i32, %c0_i32_0 : i32, i32
  }
  func.func @transform_2(%arg0: i32) -> (i32, i32) {
    %c0_i32 = arith.constant 0 : i32
    %c0_i32_0 = arith.constant 0 : i32
    %c0_i32_1 = arith.constant 0 : i32
    return %c0_i32, %c0_i32_0 : i32, i32
  }
  func.func @transform_3(%arg0: i32) -> (i32, i32) {
    %c0_i32 = arith.constant 0 : i32
    %c0_i32_0 = arith.constant 0 : i32
    %c0_i32_1 = arith.constant 0 : i32
    return %c0_i32, %c0_i32_0 : i32, i32
  }
  func.func @transform_4(%arg0: i32) -> (i32, i32) {
    %c0_i32 = arith.constant 0 : i32
    %c0_i32_0 = arith.constant 0 : i32
    %c0_i32_1 = arith.constant 0 : i32
    return %c0_i32, %c0_i32_0 : i32, i32
  }
  func.func @transform_5(%arg0: i32) -> (i32, i32) {
    %c0_i32 = arith.constant 0 : i32
    %c0_i32_0 = arith.constant 0 : i32
    return %arg0, %c0_i32 : i32, i32
  }
}

module attributes {stable_mosaic.version = 11 : i64} {
  func.func @_bn_act_res_kernel(%arg0: i32, %arg1: memref<16x128xf32, #tpu.memory_space<vmem>>, %arg2: memref<1x128xf32, #tpu.memory_space<vmem>>, %arg3: memref<1x128xf32, #tpu.memory_space<vmem>>, %arg4: memref<1x128xf32, #tpu.memory_space<vmem>>, %arg5: memref<1x128xf32, #tpu.memory_space<vmem>>, %arg6: memref<16x128xf32, #tpu.memory_space<vmem>>, %arg7: memref<16x128xf32, #tpu.memory_space<vmem>>) attributes {dimension_semantics = [#tpu.dimension_semantics<parallel>], iteration_bounds = array<i64: 1>, scalar_prefetch = 0 : i64, scratch_operands = 0 : i64, tpu.core_type = #tpu.core_type<tc>, window_params = [{transform_indices = @transform_0, window_bounds = array<i64: 16, 128>}, {pipeline_mode = #tpu.pipeline_mode<synchronous>, transform_indices = @transform_1, window_bounds = array<i64: 1, 128>}, {pipeline_mode = #tpu.pipeline_mode<synchronous>, transform_indices = @transform_2, window_bounds = array<i64: 1, 128>}, {pipeline_mode = #tpu.pipeline_mode<synchronous>, transform_indices = @transform_3, window_bounds = array<i64: 1, 128>}, {pipeline_mode = #tpu.pipeline_mode<synchronous>, transform_indices = @transform_4, window_bounds = array<i64: 1, 128>}, {transform_indices = @transform_5, window_bounds = array<i64: 16, 128>}, {transform_indices = @transform_6, window_bounds = array<i64: 16, 128>}]} {
    %c0 = arith.constant 0 : index
    %c0_0 = arith.constant 0 : index
    %0 = vector.load %arg1[%c0, %c0_0] : memref<16x128xf32, #tpu.memory_space<vmem>>, vector<16x128xf32>
    %c0_1 = arith.constant 0 : index
    %c0_2 = arith.constant 0 : index
    %1 = vector.load %arg2[%c0_1, %c0_2] : memref<1x128xf32, #tpu.memory_space<vmem>>, vector<1x128xf32>
    %2 = vector.broadcast %1 : vector<1x128xf32> to vector<16x128xf32>
    %3 = arith.subf %0, %2 : vector<16x128xf32>
    %c0_3 = arith.constant 0 : index
    %c0_4 = arith.constant 0 : index
    %4 = vector.load %arg3[%c0_3, %c0_4] : memref<1x128xf32, #tpu.memory_space<vmem>>, vector<1x128xf32>
    %c0_5 = arith.constant 0 : index
    %c0_6 = arith.constant 0 : index
    %5 = vector.load %arg4[%c0_5, %c0_6] : memref<1x128xf32, #tpu.memory_space<vmem>>, vector<1x128xf32>
    %6 = arith.mulf %4, %5 : vector<1x128xf32>
    %7 = vector.broadcast %6 : vector<1x128xf32> to vector<16x128xf32>
    %8 = arith.mulf %3, %7 : vector<16x128xf32>
    %c0_7 = arith.constant 0 : index
    %c0_8 = arith.constant 0 : index
    %9 = vector.load %arg5[%c0_7, %c0_8] : memref<1x128xf32, #tpu.memory_space<vmem>>, vector<1x128xf32>
    %10 = vector.broadcast %9 : vector<1x128xf32> to vector<16x128xf32>
    %11 = arith.addf %8, %10 : vector<16x128xf32>
    %c0_9 = arith.constant 0 : index
    %c0_10 = arith.constant 0 : index
    %12 = vector.load %arg6[%c0_9, %c0_10] : memref<16x128xf32, #tpu.memory_space<vmem>>, vector<16x128xf32>
    %13 = arith.addf %11, %12 : vector<16x128xf32>
    %cst = arith.constant 0.000000e+00 : f32
    %14 = vector.broadcast %cst : f32 to vector<16x128xf32>
    %15 = arith.maximumf %13, %14 : vector<16x128xf32>
    %c0_11 = arith.constant 0 : index
    %c0_12 = arith.constant 0 : index
    %16 = vector.load %arg7[%c0_11, %c0_12] : memref<16x128xf32, #tpu.memory_space<vmem>>, vector<16x128xf32>
    tpu.vector_store %arg7[%c0_11, %c0_12], %15 {strides = array<i32>} : memref<16x128xf32, #tpu.memory_space<vmem>>, vector<16x128xf32>,
    return
  }
  func.func @transform_0(%arg0: i32) -> (i32, i32) {
    %c0_i32 = arith.constant 0 : i32
    %c0_i32_0 = arith.constant 0 : i32
    return %arg0, %c0_i32 : i32, i32
  }
  func.func @transform_1(%arg0: i32) -> (i32, i32) {
    %c0_i32 = arith.constant 0 : i32
    %c0_i32_0 = arith.constant 0 : i32
    %c0_i32_1 = arith.constant 0 : i32
    return %c0_i32, %c0_i32_0 : i32, i32
  }
  func.func @transform_2(%arg0: i32) -> (i32, i32) {
    %c0_i32 = arith.constant 0 : i32
    %c0_i32_0 = arith.constant 0 : i32
    %c0_i32_1 = arith.constant 0 : i32
    return %c0_i32, %c0_i32_0 : i32, i32
  }
  func.func @transform_3(%arg0: i32) -> (i32, i32) {
    %c0_i32 = arith.constant 0 : i32
    %c0_i32_0 = arith.constant 0 : i32
    %c0_i32_1 = arith.constant 0 : i32
    return %c0_i32, %c0_i32_0 : i32, i32
  }
  func.func @transform_4(%arg0: i32) -> (i32, i32) {
    %c0_i32 = arith.constant 0 : i32
    %c0_i32_0 = arith.constant 0 : i32
    %c0_i32_1 = arith.constant 0 : i32
    return %c0_i32, %c0_i32_0 : i32, i32
  }
  func.func @transform_5(%arg0: i32) -> (i32, i32) {
    %c0_i32 = arith.constant 0 : i32
    %c0_i32_0 = arith.constant 0 : i32
    return %arg0, %c0_i32 : i32, i32
  }
  func.func @transform_6(%arg0: i32) -> (i32, i32) {
    %c0_i32 = arith.constant 0 : i32
    %c0_i32_0 = arith.constant 0 : i32
    return %arg0, %c0_i32 : i32, i32
  }
}

module attributes {stable_mosaic.version = 11 : i64} {
  func.func @_matmul_kernel(%arg0: i32, %arg1: i32, %arg2: i32, %arg3: memref<32x128xbf16, #tpu.memory_space<vmem>>, %arg4: memref<128x128xbf16, #tpu.memory_space<vmem>>, %arg5: memref<32x128xf32, #tpu.memory_space<vmem>>, %arg6: memref<32x128xf32, #tpu.memory_space<vmem>>) attributes {dimension_semantics = [#tpu.dimension_semantics<parallel>, #tpu.dimension_semantics<parallel>, #tpu.dimension_semantics<arbitrary>], iteration_bounds = array<i64: 1, 1, 1>, scalar_prefetch = 0 : i64, scratch_operands = 1 : i64, tpu.core_type = #tpu.core_type<tc>, window_params = [{transform_indices = @transform_0, window_bounds = array<i64: 32, 128>}, {transform_indices = @transform_1, window_bounds = array<i64: 128, 128>}, {transform_indices = @transform_2, window_bounds = array<i64: 32, 128>}]} {
    %c0_i32 = arith.constant 0 : i32
    %0 = arith.cmpi eq, %arg2, %c0_i32 : i32
    %1 = arith.extui %0 : i1 to i32
    %c0_i32_0 = arith.constant 0 : i32
    %2 = arith.cmpi ne, %1, %c0_i32_0 : i32
    scf.if %2 {
      %cst_10 = arith.constant 0.000000e+00 : f32
      %12 = vector.broadcast %cst_10 : f32 to vector<32x128xf32>
      %c0_11 = arith.constant 0 : index
      %c0_12 = arith.constant 0 : index
      %13 = vector.load %arg6[%c0_11, %c0_12] : memref<32x128xf32, #tpu.memory_space<vmem>>, vector<32x128xf32>
      tpu.vector_store %arg6[%c0_11, %c0_12], %12 {strides = array<i32>} : memref<32x128xf32, #tpu.memory_space<vmem>>, vector<32x128xf32>,
    } else {
    }
    %c0 = arith.constant 0 : index
    %c0_1 = arith.constant 0 : index
    %3 = vector.load %arg6[%c0, %c0_1] : memref<32x128xf32, #tpu.memory_space<vmem>>, vector<32x128xf32>
    %c0_2 = arith.constant 0 : index
    %c0_3 = arith.constant 0 : index
    %4 = vector.load %arg3[%c0_2, %c0_3] : memref<32x128xbf16, #tpu.memory_space<vmem>>, vector<32x128xbf16>
    %c0_4 = arith.constant 0 : index
    %c0_5 = arith.constant 0 : index
    %5 = vector.load %arg4[%c0_4, %c0_5] : memref<128x128xbf16, #tpu.memory_space<vmem>>, vector<128x128xbf16>
    %cst = arith.constant dense<0.000000e+00> : vector<32x128xf32>
    %6 = tpu.matmul %4, %5, %cst {dimension_numbers = #tpu.dot_dimension_numbers<[1], [0], [0], [1], [0, 0, 1, 1], [], []>} : vector<32x128xbf16>, vector<128x128xbf16>, vector<32x128xf32> -> vector<32x128xf32>
    %7 = arith.addf %3, %6 : vector<32x128xf32>
    %c0_6 = arith.constant 0 : index
    %c0_7 = arith.constant 0 : index
    %8 = vector.load %arg6[%c0_6, %c0_7] : memref<32x128xf32, #tpu.memory_space<vmem>>, vector<32x128xf32>
    tpu.vector_store %arg6[%c0_6, %c0_7], %7 {strides = array<i32>} : memref<32x128xf32, #tpu.memory_space<vmem>>, vector<32x128xf32>,
    %c0_i32_8 = arith.constant 0 : i32
    %9 = arith.cmpi eq, %arg2, %c0_i32_8 : i32
    %10 = arith.extui %9 : i1 to i32
    %c0_i32_9 = arith.constant 0 : i32
    %11 = arith.cmpi ne, %10, %c0_i32_9 : i32
    scf.if %11 {
      %c0_10 = arith.constant 0 : index
      %c0_11 = arith.constant 0 : index
      %12 = vector.load %arg6[%c0_10, %c0_11] : memref<32x128xf32, #tpu.memory_space<vmem>>, vector<32x128xf32>
      %c0_12 = arith.constant 0 : index
      %c0_13 = arith.constant 0 : index
      %13 = vector.load %arg5[%c0_12, %c0_13] : memref<32x128xf32, #tpu.memory_space<vmem>>, vector<32x128xf32>
      tpu.vector_store %arg5[%c0_12, %c0_13], %12 {strides = array<i32>} : memref<32x128xf32, #tpu.memory_space<vmem>>, vector<32x128xf32>,
    } else {
    }
    return
  }
  func.func @transform_0(%arg0: i32, %arg1: i32, %arg2: i32) -> (i32, i32) {
    %c0_i32 = arith.constant 0 : i32
    return %arg0, %arg2 : i32, i32
  }
  func.func @transform_1(%arg0: i32, %arg1: i32, %arg2: i32) -> (i32, i32) {
    %c0_i32 = arith.constant 0 : i32
    return %arg2, %arg1 : i32, i32
  }
  func.func @transform_2(%arg0: i32, %arg1: i32, %arg2: i32) -> (i32, i32) {
    %c0_i32 = arith.constant 0 : i32
    return %arg0, %arg1 : i32, i32
  }
}

module attributes {stable_mosaic.version = 11 : i64} {
  func.func @_rangebn_stats_kernel(%arg0: i32, %arg1: memref<1x2x32xf32, #tpu.memory_space<vmem>>, %arg2: memref<1x32xf32, #tpu.memory_space<vmem>>, %arg3: memref<1x32xf32, #tpu.memory_space<vmem>>, %arg4: memref<1x32xf32, #tpu.memory_space<vmem>>, %arg5: memref<1x32xf32, #tpu.memory_space<vmem>>, %arg6: memref<1x32xf32, #tpu.memory_space<vmem>>) attributes {dimension_semantics = [#tpu.dimension_semantics<arbitrary>], iteration_bounds = array<i64: 16>, scalar_prefetch = 0 : i64, scratch_operands = 3 : i64, tpu.core_type = #tpu.core_type<tc>, window_params = [{transform_indices = @transform_0, window_bounds = array<i64: 1, 2, 32>}, {pipeline_mode = #tpu.pipeline_mode<synchronous>, transform_indices = @transform_1, window_bounds = array<i64: 1, 32>}, {pipeline_mode = #tpu.pipeline_mode<synchronous>, transform_indices = @transform_2, window_bounds = array<i64: 1, 32>}]} {
    %c0 = arith.constant 0 : index
    %c0_0 = arith.constant 0 : index
    %c0_1 = arith.constant 0 : index
    %0 = vector.load %arg1[%c0, %c0_0, %c0_1] : memref<1x2x32xf32, #tpu.memory_space<vmem>>, vector<1x2x32xf32>
    %cst = arith.constant dense<0.000000e+00> : vector<1x32xf32>
    %1 = vector.multi_reduction <add>, %0, %cst [1] : vector<1x2x32xf32> to vector<1x32xf32>
    %cst_2 = arith.constant dense<0xFF800000> : vector<1x32xf32>
    %2 = vector.multi_reduction <maximumf>, %0, %cst_2 [1] : vector<1x2x32xf32> to vector<1x32xf32>
    %cst_3 = arith.constant dense<0x7F800000> : vector<1x32xf32>
    %3 = vector.multi_reduction <minimumf>, %0, %cst_3 [1] : vector<1x2x32xf32> to vector<1x32xf32>
    %c0_i32 = arith.constant 0 : i32
    %4 = arith.cmpi eq, %arg0, %c0_i32 : i32
    %5 = arith.extui %4 : i1 to i32
    %c0_i32_4 = arith.constant 0 : i32
    %6 = arith.cmpi ne, %5, %c0_i32_4 : i32
    scf.if %6 {
      %cst_18 = arith.constant 0.000000e+00 : f32
      %19 = vector.broadcast %cst_18 : f32 to vector<1x32xf32>
      %c0_19 = arith.constant 0 : index
      %c0_20 = arith.constant 0 : index
      %20 = vector.load %arg4[%c0_19, %c0_20] : memref<1x32xf32, #tpu.memory_space<vmem>>, vector<1x32xf32>
      tpu.vector_store %arg4[%c0_19, %c0_20], %19 {strides = array<i32>} : memref<1x32xf32, #tpu.memory_space<vmem>>, vector<1x32xf32>,
      %cst_21 = arith.constant 0.000000e+00 : f32
      %21 = vector.broadcast %cst_21 : f32 to vector<1x32xf32>
      %c0_22 = arith.constant 0 : index
      %c0_23 = arith.constant 0 : index
      %22 = vector.load %arg5[%c0_22, %c0_23] : memref<1x32xf32, #tpu.memory_space<vmem>>, vector<1x32xf32>
      tpu.vector_store %arg5[%c0_22, %c0_23], %21 {strides = array<i32>} : memref<1x32xf32, #tpu.memory_space<vmem>>, vector<1x32xf32>,
      %cst_24 = arith.constant 0.000000e+00 : f32
      %23 = vector.broadcast %cst_24 : f32 to vector<1x32xf32>
      %c0_25 = arith.constant 0 : index
      %c0_26 = arith.constant 0 : index
      %24 = vector.load %arg6[%c0_25, %c0_26] : memref<1x32xf32, #tpu.memory_space<vmem>>, vector<1x32xf32>
      tpu.vector_store %arg6[%c0_25, %c0_26], %23 {strides = array<i32>} : memref<1x32xf32, #tpu.memory_space<vmem>>, vector<1x32xf32>,
    } else {
    }
    %c0_5 = arith.constant 0 : index
    %c0_6 = arith.constant 0 : index
    %7 = vector.load %arg4[%c0_5, %c0_6] : memref<1x32xf32, #tpu.memory_space<vmem>>, vector<1x32xf32>
    %8 = arith.addf %7, %1 : vector<1x32xf32>
    %c0_7 = arith.constant 0 : index
    %c0_8 = arith.constant 0 : index
    %9 = vector.load %arg4[%c0_7, %c0_8] : memref<1x32xf32, #tpu.memory_space<vmem>>, vector<1x32xf32>
    tpu.vector_store %arg4[%c0_7, %c0_8], %8 {strides = array<i32>} : memref<1x32xf32, #tpu.memory_space<vmem>>, vector<1x32xf32>,
    %c0_9 = arith.constant 0 : index
    %c0_10 = arith.constant 0 : index
    %10 = vector.load %arg5[%c0_9, %c0_10] : memref<1x32xf32, #tpu.memory_space<vmem>>, vector<1x32xf32>
    %11 = arith.addf %10, %2 : vector<1x32xf32>
    %c0_11 = arith.constant 0 : index
    %c0_12 = arith.constant 0 : index
    %12 = vector.load %arg5[%c0_11, %c0_12] : memref<1x32xf32, #tpu.memory_space<vmem>>, vector<1x32xf32>
    tpu.vector_store %arg5[%c0_11, %c0_12], %11 {strides = array<i32>} : memref<1x32xf32, #tpu.memory_space<vmem>>, vector<1x32xf32>,
    %c0_13 = arith.constant 0 : index
    %c0_14 = arith.constant 0 : index
    %13 = vector.load %arg6[%c0_13, %c0_14] : memref<1x32xf32, #tpu.memory_space<vmem>>, vector<1x32xf32>
    %14 = arith.addf %13, %3 : vector<1x32xf32>
    %c0_15 = arith.constant 0 : index
    %c0_16 = arith.constant 0 : index
    %15 = vector.load %arg6[%c0_15, %c0_16] : memref<1x32xf32, #tpu.memory_space<vmem>>, vector<1x32xf32>
    tpu.vector_store %arg6[%c0_15, %c0_16], %14 {strides = array<i32>} : memref<1x32xf32, #tpu.memory_space<vmem>>, vector<1x32xf32>,
    %c15_i32 = arith.constant 15 : i32
    %16 = arith.cmpi eq, %arg0, %c15_i32 : i32
    %17 = arith.extui %16 : i1 to i32
    %c0_i32_17 = arith.constant 0 : i32
    %18 = arith.cmpi ne, %17, %c0_i32_17 : i32
    scf.if %18 {
      %c0_18 = arith.constant 0 : index
      %c0_19 = arith.constant 0 : index
      %19 = vector.load %arg4[%c0_18, %c0_19] : memref<1x32xf32, #tpu.memory_space<vmem>>, vector<1x32xf32>
      %cst_20 = arith.constant 3.200000e+01 : f32
      %20 = vector.broadcast %cst_20 : f32 to vector<1x32xf32>
      %21 = arith.divf %19, %20 : vector<1x32xf32>
      %c0_21 = arith.constant 0 : index
      %c0_22 = arith.constant 0 : index
      %22 = vector.load %arg2[%c0_21, %c0_22] : memref<1x32xf32, #tpu.memory_space<vmem>>, vector<1x32xf32>
      tpu.vector_store %arg2[%c0_21, %c0_22], %21 {strides = array<i32>} : memref<1x32xf32, #tpu.memory_space<vmem>>, vector<1x32xf32>,
      %c0_23 = arith.constant 0 : index
      %c0_24 = arith.constant 0 : index
      %23 = vector.load %arg5[%c0_23, %c0_24] : memref<1x32xf32, #tpu.memory_space<vmem>>, vector<1x32xf32>
      %c0_25 = arith.constant 0 : index
      %c0_26 = arith.constant 0 : index
      %24 = vector.load %arg6[%c0_25, %c0_26] : memref<1x32xf32, #tpu.memory_space<vmem>>, vector<1x32xf32>
      %25 = arith.subf %23, %24 : vector<1x32xf32>
      %cst_27 = arith.constant 1.600000e+01 : f32
      %26 = vector.broadcast %cst_27 : f32 to vector<1x32xf32>
      %27 = arith.divf %25, %26 : vector<1x32xf32>
      %cst_28 = arith.constant 0.458810747 : f32
      %28 = vector.broadcast %cst_28 : f32 to vector<1x32xf32>
      %29 = arith.mulf %27, %28 : vector<1x32xf32>
      %cst_29 = arith.constant 9.99999974E-6 : f32
      %30 = vector.broadcast %cst_29 : f32 to vector<1x32xf32>
      %31 = arith.addf %29, %30 : vector<1x32xf32>
      %cst_30 = arith.constant 1.000000e+00 : f32
      %32 = vector.broadcast %cst_30 : f32 to vector<1x32xf32>
      %33 = arith.divf %32, %31 : vector<1x32xf32>
      %c0_31 = arith.constant 0 : index
      %c0_32 = arith.constant 0 : index
      %34 = vector.load %arg3[%c0_31, %c0_32] : memref<1x32xf32, #tpu.memory_space<vmem>>, vector<1x32xf32>
      tpu.vector_store %arg3[%c0_31, %c0_32], %33 {strides = array<i32>} : memref<1x32xf32, #tpu.memory_space<vmem>>, vector<1x32xf32>,
    } else {
    }
    return
  }
  func.func @transform_0(%arg0: i32) -> (i32, i32, i32) {
    %c0_i32 = arith.constant 0 : i32
    %c0_i32_0 = arith.constant 0 : i32
    %c0_i32_1 = arith.constant 0 : i32
    return %arg0, %c0_i32, %c0_i32_0 : i32, i32, i32
  }
  func.func @transform_1(%arg0: i32) -> (i32, i32) {
    %c0_i32 = arith.constant 0 : i32
    %c0_i32_0 = arith.constant 0 : i32
    %c0_i32_1 = arith.constant 0 : i32
    return %c0_i32, %c0_i32_0 : i32, i32
  }
  func.func @transform_2(%arg0: i32) -> (i32, i32) {
    %c0_i32 = arith.constant 0 : i32
    %c0_i32_0 = arith.constant 0 : i32
    %c0_i32_1 = arith.constant 0 : i32
    return %c0_i32, %c0_i32_0 : i32, i32
  }
}

module attributes {stable_mosaic.version = 11 : i64} {
  func.func @_bn_act_kernel(%arg0: i32, %arg1: memref<8x128xf32, #tpu.memory_space<vmem>>, %arg2: memref<1x128xf32, #tpu.memory_space<vmem>>, %arg3: memref<1x128xf32, #tpu.memory_space<vmem>>, %arg4: memref<1x128xf32, #tpu.memory_space<vmem>>, %arg5: memref<1x128xf32, #tpu.memory_space<vmem>>, %arg6: memref<8x128xf32, #tpu.memory_space<vmem>>) attributes {dimension_semantics = [#tpu.dimension_semantics<parallel>], iteration_bounds = array<i64: 1>, scalar_prefetch = 0 : i64, scratch_operands = 0 : i64, tpu.core_type = #tpu.core_type<tc>, window_params = [{transform_indices = @transform_0, window_bounds = array<i64: 8, 128>}, {pipeline_mode = #tpu.pipeline_mode<synchronous>, transform_indices = @transform_1, window_bounds = array<i64: 1, 128>}, {pipeline_mode = #tpu.pipeline_mode<synchronous>, transform_indices = @transform_2, window_bounds = array<i64: 1, 128>}, {pipeline_mode = #tpu.pipeline_mode<synchronous>, transform_indices = @transform_3, window_bounds = array<i64: 1, 128>}, {pipeline_mode = #tpu.pipeline_mode<synchronous>, transform_indices = @transform_4, window_bounds = array<i64: 1, 128>}, {transform_indices = @transform_5, window_bounds = array<i64: 8, 128>}]} {
    %c0 = arith.constant 0 : index
    %c0_0 = arith.constant 0 : index
    %0 = vector.load %arg1[%c0, %c0_0] : memref<8x128xf32, #tpu.memory_space<vmem>>, vector<8x128xf32>
    %c0_1 = arith.constant 0 : index
    %c0_2 = arith.constant 0 : index
    %1 = vector.load %arg2[%c0_1, %c0_2] : memref<1x128xf32, #tpu.memory_space<vmem>>, vector<1x128xf32>
    %2 = vector.broadcast %1 : vector<1x128xf32> to vector<8x128xf32>
    %3 = arith.subf %0, %2 : vector<8x128xf32>
    %c0_3 = arith.constant 0 : index
    %c0_4 = arith.constant 0 : index
    %4 = vector.load %arg3[%c0_3, %c0_4] : memref<1x128xf32, #tpu.memory_space<vmem>>, vector<1x128xf32>
    %c0_5 = arith.constant 0 : index
    %c0_6 = arith.constant 0 : index
    %5 = vector.load %arg4[%c0_5, %c0_6] : memref<1x128xf32, #tpu.memory_space<vmem>>, vector<1x128xf32>
    %6 = arith.mulf %4, %5 : vector<1x128xf32>
    %7 = vector.broadcast %6 : vector<1x128xf32> to vector<8x128xf32>
    %8 = arith.mulf %3, %7 : vector<8x128xf32>
    %c0_7 = arith.constant 0 : index
    %c0_8 = arith.constant 0 : index
    %9 = vector.load %arg5[%c0_7, %c0_8] : memref<1x128xf32, #tpu.memory_space<vmem>>, vector<1x128xf32>
    %10 = vector.broadcast %9 : vector<1x128xf32> to vector<8x128xf32>
    %11 = arith.addf %8, %10 : vector<8x128xf32>
    %c0_9 = arith.constant 0 : index
    %c0_10 = arith.constant 0 : index
    %12 = vector.load %arg6[%c0_9, %c0_10] : memref<8x128xf32, #tpu.memory_space<vmem>>, vector<8x128xf32>
    tpu.vector_store %arg6[%c0_9, %c0_10], %11 {strides = array<i32>} : memref<8x128xf32, #tpu.memory_space<vmem>>, vector<8x128xf32>,
    return
  }
  func.func @transform_0(%arg0: i32) -> (i32, i32) {
    %c0_i32 = arith.constant 0 : i32
    %c0_i32_0 = arith.constant 0 : i32
    return %arg0, %c0_i32 : i32, i32
  }
  func.func @transform_1(%arg0: i32) -> (i32, i32) {
    %c0_i32 = arith.constant 0 : i32
    %c0_i32_0 = arith.constant 0 : i32
    %c0_i32_1 = arith.constant 0 : i32
    return %c0_i32, %c0_i32_0 : i32, i32
  }
  func.func @transform_2(%arg0: i32) -> (i32, i32) {
    %c0_i32 = arith.constant 0 : i32
    %c0_i32_0 = arith.constant 0 : i32
    %c0_i32_1 = arith.constant 0 : i32
    return %c0_i32, %c0_i32_0 : i32, i32
  }
  func.func @transform_3(%arg0: i32) -> (i32, i32) {
    %c0_i32 = arith.constant 0 : i32
    %c0_i32_0 = arith.constant 0 : i32
    %c0_i32_1 = arith.constant 0 : i32
    return %c0_i32, %c0_i32_0 : i32, i32
  }
  func.func @transform_4(%arg0: i32) -> (i32, i32) {
    %c0_i32 = arith.constant 0 : i32
    %c0_i32_0 = arith.constant 0 : i32
    %c0_i32_1 = arith.constant 0 : i32
    return %c0_i32, %c0_i32_0 : i32, i32
  }
  func.func @transform_5(%arg0: i32) -> (i32, i32) {
    %c0_i32 = arith.constant 0 : i32
    %c0_i32_0 = arith.constant 0 : i32
    return %arg0, %c0_i32 : i32, i32
  }
}

module attributes {stable_mosaic.version = 11 : i64} {
  func.func @_matmul_kernel(%arg0: i32, %arg1: i32, %arg2: i32, %arg3: memref<32x256xbf16, #tpu.memory_space<vmem>>, %arg4: memref<256x128xbf16, #tpu.memory_space<vmem>>, %arg5: memref<32x128xf32, #tpu.memory_space<vmem>>, %arg6: memref<32x128xf32, #tpu.memory_space<vmem>>) attributes {dimension_semantics = [#tpu.dimension_semantics<parallel>, #tpu.dimension_semantics<parallel>, #tpu.dimension_semantics<arbitrary>], iteration_bounds = array<i64: 1, 1, 1>, scalar_prefetch = 0 : i64, scratch_operands = 1 : i64, tpu.core_type = #tpu.core_type<tc>, window_params = [{transform_indices = @transform_0, window_bounds = array<i64: 32, 256>}, {transform_indices = @transform_1, window_bounds = array<i64: 256, 128>}, {transform_indices = @transform_2, window_bounds = array<i64: 32, 128>}]} {
    %c0_i32 = arith.constant 0 : i32
    %0 = arith.cmpi eq, %arg2, %c0_i32 : i32
    %1 = arith.extui %0 : i1 to i32
    %c0_i32_0 = arith.constant 0 : i32
    %2 = arith.cmpi ne, %1, %c0_i32_0 : i32
    scf.if %2 {
      %cst_10 = arith.constant 0.000000e+00 : f32
      %12 = vector.broadcast %cst_10 : f32 to vector<32x128xf32>
      %c0_11 = arith.constant 0 : index
      %c0_12 = arith.constant 0 : index
      %13 = vector.load %arg6[%c0_11, %c0_12] : memref<32x128xf32, #tpu.memory_space<vmem>>, vector<32x128xf32>
      tpu.vector_store %arg6[%c0_11, %c0_12], %12 {strides = array<i32>} : memref<32x128xf32, #tpu.memory_space<vmem>>, vector<32x128xf32>,
    } else {
    }
    %c0 = arith.constant 0 : index
    %c0_1 = arith.constant 0 : index
    %3 = vector.load %arg6[%c0, %c0_1] : memref<32x128xf32, #tpu.memory_space<vmem>>, vector<32x128xf32>
    %c0_2 = arith.constant 0 : index
    %c0_3 = arith.constant 0 : index
    %4 = vector.load %arg3[%c0_2, %c0_3] : memref<32x256xbf16, #tpu.memory_space<vmem>>, vector<32x256xbf16>
    %c0_4 = arith.constant 0 : index
    %c0_5 = arith.constant 0 : index
    %5 = vector.load %arg4[%c0_4, %c0_5] : memref<256x128xbf16, #tpu.memory_space<vmem>>, vector<256x128xbf16>
    %cst = arith.constant dense<0.000000e+00> : vector<32x128xf32>
    %6 = tpu.matmul %4, %5, %cst {dimension_numbers = #tpu.dot_dimension_numbers<[1], [0], [0], [1], [0, 0, 1, 1], [], []>} : vector<32x256xbf16>, vector<256x128xbf16>, vector<32x128xf32> -> vector<32x128xf32>
    %7 = arith.addf %3, %6 : vector<32x128xf32>
    %c0_6 = arith.constant 0 : index
    %c0_7 = arith.constant 0 : index
    %8 = vector.load %arg6[%c0_6, %c0_7] : memref<32x128xf32, #tpu.memory_space<vmem>>, vector<32x128xf32>
    tpu.vector_store %arg6[%c0_6, %c0_7], %7 {strides = array<i32>} : memref<32x128xf32, #tpu.memory_space<vmem>>, vector<32x128xf32>,
    %c0_i32_8 = arith.constant 0 : i32
    %9 = arith.cmpi eq, %arg2, %c0_i32_8 : i32
    %10 = arith.extui %9 : i1 to i32
    %c0_i32_9 = arith.constant 0 : i32
    %11 = arith.cmpi ne, %10, %c0_i32_9 : i32
    scf.if %11 {
      %c0_10 = arith.constant 0 : index
      %c0_11 = arith.constant 0 : index
      %12 = vector.load %arg6[%c0_10, %c0_11] : memref<32x128xf32, #tpu.memory_space<vmem>>, vector<32x128xf32>
      %c0_12 = arith.constant 0 : index
      %c0_13 = arith.constant 0 : index
      %13 = vector.load %arg5[%c0_12, %c0_13] : memref<32x128xf32, #tpu.memory_space<vmem>>, vector<32x128xf32>
      tpu.vector_store %arg5[%c0_12, %c0_13], %12 {strides = array<i32>} : memref<32x128xf32, #tpu.memory_space<vmem>>, vector<32x128xf32>,
    } else {
    }
    return
  }
  func.func @transform_0(%arg0: i32, %arg1: i32, %arg2: i32) -> (i32, i32) {
    %c0_i32 = arith.constant 0 : i32
    return %arg0, %arg2 : i32, i32
  }
  func.func @transform_1(%arg0: i32, %arg1: i32, %arg2: i32) -> (i32, i32) {
    %c0_i32 = arith.constant 0 : i32
    return %arg2, %arg1 : i32, i32
  }
  func.func @transform_2(%arg0: i32, %arg1: i32, %arg2: i32) -> (i32, i32) {
    %c0_i32 = arith.constant 0 : i32
    return %arg0, %arg1 : i32, i32
  }
}

module attributes {stable_mosaic.version = 11 : i64} {
  func.func @_bn_act_kernel(%arg0: i32, %arg1: memref<8x128xf32, #tpu.memory_space<vmem>>, %arg2: memref<1x128xf32, #tpu.memory_space<vmem>>, %arg3: memref<1x128xf32, #tpu.memory_space<vmem>>, %arg4: memref<1x128xf32, #tpu.memory_space<vmem>>, %arg5: memref<1x128xf32, #tpu.memory_space<vmem>>, %arg6: memref<8x128xf32, #tpu.memory_space<vmem>>) attributes {dimension_semantics = [#tpu.dimension_semantics<parallel>], iteration_bounds = array<i64: 1>, scalar_prefetch = 0 : i64, scratch_operands = 0 : i64, tpu.core_type = #tpu.core_type<tc>, window_params = [{transform_indices = @transform_0, window_bounds = array<i64: 8, 128>}, {pipeline_mode = #tpu.pipeline_mode<synchronous>, transform_indices = @transform_1, window_bounds = array<i64: 1, 128>}, {pipeline_mode = #tpu.pipeline_mode<synchronous>, transform_indices = @transform_2, window_bounds = array<i64: 1, 128>}, {pipeline_mode = #tpu.pipeline_mode<synchronous>, transform_indices = @transform_3, window_bounds = array<i64: 1, 128>}, {pipeline_mode = #tpu.pipeline_mode<synchronous>, transform_indices = @transform_4, window_bounds = array<i64: 1, 128>}, {transform_indices = @transform_5, window_bounds = array<i64: 8, 128>}]} {
    %c0 = arith.constant 0 : index
    %c0_0 = arith.constant 0 : index
    %0 = vector.load %arg1[%c0, %c0_0] : memref<8x128xf32, #tpu.memory_space<vmem>>, vector<8x128xf32>
    %c0_1 = arith.constant 0 : index
    %c0_2 = arith.constant 0 : index
    %1 = vector.load %arg2[%c0_1, %c0_2] : memref<1x128xf32, #tpu.memory_space<vmem>>, vector<1x128xf32>
    %2 = vector.broadcast %1 : vector<1x128xf32> to vector<8x128xf32>
    %3 = arith.subf %0, %2 : vector<8x128xf32>
    %c0_3 = arith.constant 0 : index
    %c0_4 = arith.constant 0 : index
    %4 = vector.load %arg3[%c0_3, %c0_4] : memref<1x128xf32, #tpu.memory_space<vmem>>, vector<1x128xf32>
    %c0_5 = arith.constant 0 : index
    %c0_6 = arith.constant 0 : index
    %5 = vector.load %arg4[%c0_5, %c0_6] : memref<1x128xf32, #tpu.memory_space<vmem>>, vector<1x128xf32>
    %6 = arith.mulf %4, %5 : vector<1x128xf32>
    %7 = vector.broadcast %6 : vector<1x128xf32> to vector<8x128xf32>
    %8 = arith.mulf %3, %7 : vector<8x128xf32>
    %c0_7 = arith.constant 0 : index
    %c0_8 = arith.constant 0 : index
    %9 = vector.load %arg5[%c0_7, %c0_8] : memref<1x128xf32, #tpu.memory_space<vmem>>, vector<1x128xf32>
    %10 = vector.broadcast %9 : vector<1x128xf32> to vector<8x128xf32>
    %11 = arith.addf %8, %10 : vector<8x128xf32>
    %cst = arith.constant 0.000000e+00 : f32
    %12 = vector.broadcast %cst : f32 to vector<8x128xf32>
    %13 = arith.maximumf %11, %12 : vector<8x128xf32>
    %c0_9 = arith.constant 0 : index
    %c0_10 = arith.constant 0 : index
    %14 = vector.load %arg6[%c0_9, %c0_10] : memref<8x128xf32, #tpu.memory_space<vmem>>, vector<8x128xf32>
    tpu.vector_store %arg6[%c0_9, %c0_10], %13 {strides = array<i32>} : memref<8x128xf32, #tpu.memory_space<vmem>>, vector<8x128xf32>,
    return
  }
  func.func @transform_0(%arg0: i32) -> (i32, i32) {
    %c0_i32 = arith.constant 0 : i32
    %c0_i32_0 = arith.constant 0 : i32
    return %arg0, %c0_i32 : i32, i32
  }
  func.func @transform_1(%arg0: i32) -> (i32, i32) {
    %c0_i32 = arith.constant 0 : i32
    %c0_i32_0 = arith.constant 0 : i32
    %c0_i32_1 = arith.constant 0 : i32
    return %c0_i32, %c0_i32_0 : i32, i32
  }
  func.func @transform_2(%arg0: i32) -> (i32, i32) {
    %c0_i32 = arith.constant 0 : i32
    %c0_i32_0 = arith.constant 0 : i32
    %c0_i32_1 = arith.constant 0 : i32
    return %c0_i32, %c0_i32_0 : i32, i32
  }
  func.func @transform_3(%arg0: i32) -> (i32, i32) {
    %c0_i32 = arith.constant 0 : i32
    %c0_i32_0 = arith.constant 0 : i32
    %c0_i32_1 = arith.constant 0 : i32
    return %c0_i32, %c0_i32_0 : i32, i32
  }
  func.func @transform_4(%arg0: i32) -> (i32, i32) {
    %c0_i32 = arith.constant 0 : i32
    %c0_i32_0 = arith.constant 0 : i32
    %c0_i32_1 = arith.constant 0 : i32
    return %c0_i32, %c0_i32_0 : i32, i32
  }
  func.func @transform_5(%arg0: i32) -> (i32, i32) {
    %c0_i32 = arith.constant 0 : i32
    %c0_i32_0 = arith.constant 0 : i32
    return %arg0, %c0_i32 : i32, i32
  }
}

module attributes {stable_mosaic.version = 11 : i64} {
  func.func @_matmul_kernel(%arg0: i32, %arg1: i32, %arg2: i32, %arg3: memref<32x384xbf16, #tpu.memory_space<vmem>>, %arg4: memref<384x128xbf16, #tpu.memory_space<vmem>>, %arg5: memref<32x128xf32, #tpu.memory_space<vmem>>, %arg6: memref<32x128xf32, #tpu.memory_space<vmem>>) attributes {dimension_semantics = [#tpu.dimension_semantics<parallel>, #tpu.dimension_semantics<parallel>, #tpu.dimension_semantics<arbitrary>], iteration_bounds = array<i64: 1, 1, 1>, scalar_prefetch = 0 : i64, scratch_operands = 1 : i64, tpu.core_type = #tpu.core_type<tc>, window_params = [{transform_indices = @transform_0, window_bounds = array<i64: 32, 384>}, {transform_indices = @transform_1, window_bounds = array<i64: 384, 128>}, {transform_indices = @transform_2, window_bounds = array<i64: 32, 128>}]} {
    %c0_i32 = arith.constant 0 : i32
    %0 = arith.cmpi eq, %arg2, %c0_i32 : i32
    %1 = arith.extui %0 : i1 to i32
    %c0_i32_0 = arith.constant 0 : i32
    %2 = arith.cmpi ne, %1, %c0_i32_0 : i32
    scf.if %2 {
      %cst_10 = arith.constant 0.000000e+00 : f32
      %12 = vector.broadcast %cst_10 : f32 to vector<32x128xf32>
      %c0_11 = arith.constant 0 : index
      %c0_12 = arith.constant 0 : index
      %13 = vector.load %arg6[%c0_11, %c0_12] : memref<32x128xf32, #tpu.memory_space<vmem>>, vector<32x128xf32>
      tpu.vector_store %arg6[%c0_11, %c0_12], %12 {strides = array<i32>} : memref<32x128xf32, #tpu.memory_space<vmem>>, vector<32x128xf32>,
    } else {
    }
    %c0 = arith.constant 0 : index
    %c0_1 = arith.constant 0 : index
    %3 = vector.load %arg6[%c0, %c0_1] : memref<32x128xf32, #tpu.memory_space<vmem>>, vector<32x128xf32>
    %c0_2 = arith.constant 0 : index
    %c0_3 = arith.constant 0 : index
    %4 = vector.load %arg3[%c0_2, %c0_3] : memref<32x384xbf16, #tpu.memory_space<vmem>>, vector<32x384xbf16>
    %c0_4 = arith.constant 0 : index
    %c0_5 = arith.constant 0 : index
    %5 = vector.load %arg4[%c0_4, %c0_5] : memref<384x128xbf16, #tpu.memory_space<vmem>>, vector<384x128xbf16>
    %cst = arith.constant dense<0.000000e+00> : vector<32x128xf32>
    %6 = tpu.matmul %4, %5, %cst {dimension_numbers = #tpu.dot_dimension_numbers<[1], [0], [0], [1], [0, 0, 1, 1], [], []>} : vector<32x384xbf16>, vector<384x128xbf16>, vector<32x128xf32> -> vector<32x128xf32>
    %7 = arith.addf %3, %6 : vector<32x128xf32>
    %c0_6 = arith.constant 0 : index
    %c0_7 = arith.constant 0 : index
    %8 = vector.load %arg6[%c0_6, %c0_7] : memref<32x128xf32, #tpu.memory_space<vmem>>, vector<32x128xf32>
    tpu.vector_store %arg6[%c0_6, %c0_7], %7 {strides = array<i32>} : memref<32x128xf32, #tpu.memory_space<vmem>>, vector<32x128xf32>,
    %c0_i32_8 = arith.constant 0 : i32
    %9 = arith.cmpi eq, %arg2, %c0_i32_8 : i32
    %10 = arith.extui %9 : i1 to i32
    %c0_i32_9 = arith.constant 0 : i32
    %11 = arith.cmpi ne, %10, %c0_i32_9 : i32
    scf.if %11 {
      %c0_10 = arith.constant 0 : index
      %c0_11 = arith.constant 0 : index
      %12 = vector.load %arg6[%c0_10, %c0_11] : memref<32x128xf32, #tpu.memory_space<vmem>>, vector<32x128xf32>
      %c0_12 = arith.constant 0 : index
      %c0_13 = arith.constant 0 : index
      %13 = vector.load %arg5[%c0_12, %c0_13] : memref<32x128xf32, #tpu.memory_space<vmem>>, vector<32x128xf32>
      tpu.vector_store %arg5[%c0_12, %c0_13], %12 {strides = array<i32>} : memref<32x128xf32, #tpu.memory_space<vmem>>, vector<32x128xf32>,
    } else {
    }
    return
  }
  func.func @transform_0(%arg0: i32, %arg1: i32, %arg2: i32) -> (i32, i32) {
    %c0_i32 = arith.constant 0 : i32
    return %arg0, %arg2 : i32, i32
  }
  func.func @transform_1(%arg0: i32, %arg1: i32, %arg2: i32) -> (i32, i32) {
    %c0_i32 = arith.constant 0 : i32
    return %arg2, %arg1 : i32, i32
  }
  func.func @transform_2(%arg0: i32, %arg1: i32, %arg2: i32) -> (i32, i32) {
    %c0_i32 = arith.constant 0 : i32
    return %arg0, %arg1 : i32, i32
  }
}

module attributes {stable_mosaic.version = 11 : i64} {
  func.func @_bn_act_res_kernel(%arg0: i32, %arg1: memref<8x128xf32, #tpu.memory_space<vmem>>, %arg2: memref<1x128xf32, #tpu.memory_space<vmem>>, %arg3: memref<1x128xf32, #tpu.memory_space<vmem>>, %arg4: memref<1x128xf32, #tpu.memory_space<vmem>>, %arg5: memref<1x128xf32, #tpu.memory_space<vmem>>, %arg6: memref<8x128xf32, #tpu.memory_space<vmem>>, %arg7: memref<8x128xf32, #tpu.memory_space<vmem>>) attributes {dimension_semantics = [#tpu.dimension_semantics<parallel>], iteration_bounds = array<i64: 1>, scalar_prefetch = 0 : i64, scratch_operands = 0 : i64, tpu.core_type = #tpu.core_type<tc>, window_params = [{transform_indices = @transform_0, window_bounds = array<i64: 8, 128>}, {pipeline_mode = #tpu.pipeline_mode<synchronous>, transform_indices = @transform_1, window_bounds = array<i64: 1, 128>}, {pipeline_mode = #tpu.pipeline_mode<synchronous>, transform_indices = @transform_2, window_bounds = array<i64: 1, 128>}, {pipeline_mode = #tpu.pipeline_mode<synchronous>, transform_indices = @transform_3, window_bounds = array<i64: 1, 128>}, {pipeline_mode = #tpu.pipeline_mode<synchronous>, transform_indices = @transform_4, window_bounds = array<i64: 1, 128>}, {transform_indices = @transform_5, window_bounds = array<i64: 8, 128>}, {transform_indices = @transform_6, window_bounds = array<i64: 8, 128>}]} {
    %c0 = arith.constant 0 : index
    %c0_0 = arith.constant 0 : index
    %0 = vector.load %arg1[%c0, %c0_0] : memref<8x128xf32, #tpu.memory_space<vmem>>, vector<8x128xf32>
    %c0_1 = arith.constant 0 : index
    %c0_2 = arith.constant 0 : index
    %1 = vector.load %arg2[%c0_1, %c0_2] : memref<1x128xf32, #tpu.memory_space<vmem>>, vector<1x128xf32>
    %2 = vector.broadcast %1 : vector<1x128xf32> to vector<8x128xf32>
    %3 = arith.subf %0, %2 : vector<8x128xf32>
    %c0_3 = arith.constant 0 : index
    %c0_4 = arith.constant 0 : index
    %4 = vector.load %arg3[%c0_3, %c0_4] : memref<1x128xf32, #tpu.memory_space<vmem>>, vector<1x128xf32>
    %c0_5 = arith.constant 0 : index
    %c0_6 = arith.constant 0 : index
    %5 = vector.load %arg4[%c0_5, %c0_6] : memref<1x128xf32, #tpu.memory_space<vmem>>, vector<1x128xf32>
    %6 = arith.mulf %4, %5 : vector<1x128xf32>
    %7 = vector.broadcast %6 : vector<1x128xf32> to vector<8x128xf32>
    %8 = arith.mulf %3, %7 : vector<8x128xf32>
    %c0_7 = arith.constant 0 : index
    %c0_8 = arith.constant 0 : index
    %9 = vector.load %arg5[%c0_7, %c0_8] : memref<1x128xf32, #tpu.memory_space<vmem>>, vector<1x128xf32>
    %10 = vector.broadcast %9 : vector<1x128xf32> to vector<8x128xf32>
    %11 = arith.addf %8, %10 : vector<8x128xf32>
    %c0_9 = arith.constant 0 : index
    %c0_10 = arith.constant 0 : index
    %12 = vector.load %arg6[%c0_9, %c0_10] : memref<8x128xf32, #tpu.memory_space<vmem>>, vector<8x128xf32>
    %13 = arith.addf %11, %12 : vector<8x128xf32>
    %cst = arith.constant 0.000000e+00 : f32
    %14 = vector.broadcast %cst : f32 to vector<8x128xf32>
    %15 = arith.maximumf %13, %14 : vector<8x128xf32>
    %c0_11 = arith.constant 0 : index
    %c0_12 = arith.constant 0 : index
    %16 = vector.load %arg7[%c0_11, %c0_12] : memref<8x128xf32, #tpu.memory_space<vmem>>, vector<8x128xf32>
    tpu.vector_store %arg7[%c0_11, %c0_12], %15 {strides = array<i32>} : memref<8x128xf32, #tpu.memory_space<vmem>>, vector<8x128xf32>,
    return
  }
  func.func @transform_0(%arg0: i32) -> (i32, i32) {
    %c0_i32 = arith.constant 0 : i32
    %c0_i32_0 = arith.constant 0 : i32
    return %arg0, %c0_i32 : i32, i32
  }
  func.func @transform_1(%arg0: i32) -> (i32, i32) {
    %c0_i32 = arith.constant 0 : i32
    %c0_i32_0 = arith.constant 0 : i32
    %c0_i32_1 = arith.constant 0 : i32
    return %c0_i32, %c0_i32_0 : i32, i32
  }
  func.func @transform_2(%arg0: i32) -> (i32, i32) {
    %c0_i32 = arith.constant 0 : i32
    %c0_i32_0 = arith.constant 0 : i32
    %c0_i32_1 = arith.constant 0 : i32
    return %c0_i32, %c0_i32_0 : i32, i32
  }
  func.func @transform_3(%arg0: i32) -> (i32, i32) {
    %c0_i32 = arith.constant 0 : i32
    %c0_i32_0 = arith.constant 0 : i32
    %c0_i32_1 = arith.constant 0 : i32
    return %c0_i32, %c0_i32_0 : i32, i32
  }
  func.func @transform_4(%arg0: i32) -> (i32, i32) {
    %c0_i32 = arith.constant 0 : i32
    %c0_i32_0 = arith.constant 0 : i32
    %c0_i32_1 = arith.constant 0 : i32
    return %c0_i32, %c0_i32_0 : i32, i32
  }
  func.func @transform_5(%arg0: i32) -> (i32, i32) {
    %c0_i32 = arith.constant 0 : i32
    %c0_i32_0 = arith.constant 0 : i32
    return %arg0, %c0_i32 : i32, i32
  }
  func.func @transform_6(%arg0: i32) -> (i32, i32) {
    %c0_i32 = arith.constant 0 : i32
    %c0_i32_0 = arith.constant 0 : i32
    return %arg0, %c0_i32 : i32, i32
  }
}

module attributes {stable_mosaic.version = 11 : i64} {
  func.func @_matmul_kernel(%arg0: i32, %arg1: i32, %arg2: i32, %arg3: memref<16x128xbf16, #tpu.memory_space<vmem>>, %arg4: memref<128x128xbf16, #tpu.memory_space<vmem>>, %arg5: memref<16x128xf32, #tpu.memory_space<vmem>>, %arg6: memref<16x128xf32, #tpu.memory_space<vmem>>) attributes {dimension_semantics = [#tpu.dimension_semantics<parallel>, #tpu.dimension_semantics<parallel>, #tpu.dimension_semantics<arbitrary>], iteration_bounds = array<i64: 1, 1, 1>, scalar_prefetch = 0 : i64, scratch_operands = 1 : i64, tpu.core_type = #tpu.core_type<tc>, window_params = [{transform_indices = @transform_0, window_bounds = array<i64: 16, 128>}, {transform_indices = @transform_1, window_bounds = array<i64: 128, 128>}, {transform_indices = @transform_2, window_bounds = array<i64: 16, 128>}]} {
    %c0_i32 = arith.constant 0 : i32
    %0 = arith.cmpi eq, %arg2, %c0_i32 : i32
    %1 = arith.extui %0 : i1 to i32
    %c0_i32_0 = arith.constant 0 : i32
    %2 = arith.cmpi ne, %1, %c0_i32_0 : i32
    scf.if %2 {
      %cst_10 = arith.constant 0.000000e+00 : f32
      %12 = vector.broadcast %cst_10 : f32 to vector<16x128xf32>
      %c0_11 = arith.constant 0 : index
      %c0_12 = arith.constant 0 : index
      %13 = vector.load %arg6[%c0_11, %c0_12] : memref<16x128xf32, #tpu.memory_space<vmem>>, vector<16x128xf32>
      tpu.vector_store %arg6[%c0_11, %c0_12], %12 {strides = array<i32>} : memref<16x128xf32, #tpu.memory_space<vmem>>, vector<16x128xf32>,
    } else {
    }
    %c0 = arith.constant 0 : index
    %c0_1 = arith.constant 0 : index
    %3 = vector.load %arg6[%c0, %c0_1] : memref<16x128xf32, #tpu.memory_space<vmem>>, vector<16x128xf32>
    %c0_2 = arith.constant 0 : index
    %c0_3 = arith.constant 0 : index
    %4 = vector.load %arg3[%c0_2, %c0_3] : memref<16x128xbf16, #tpu.memory_space<vmem>>, vector<16x128xbf16>
    %c0_4 = arith.constant 0 : index
    %c0_5 = arith.constant 0 : index
    %5 = vector.load %arg4[%c0_4, %c0_5] : memref<128x128xbf16, #tpu.memory_space<vmem>>, vector<128x128xbf16>
    %cst = arith.constant dense<0.000000e+00> : vector<16x128xf32>
    %6 = tpu.matmul %4, %5, %cst {dimension_numbers = #tpu.dot_dimension_numbers<[1], [0], [0], [1], [0, 0, 1, 1], [], []>} : vector<16x128xbf16>, vector<128x128xbf16>, vector<16x128xf32> -> vector<16x128xf32>
    %7 = arith.addf %3, %6 : vector<16x128xf32>
    %c0_6 = arith.constant 0 : index
    %c0_7 = arith.constant 0 : index
    %8 = vector.load %arg6[%c0_6, %c0_7] : memref<16x128xf32, #tpu.memory_space<vmem>>, vector<16x128xf32>
    tpu.vector_store %arg6[%c0_6, %c0_7], %7 {strides = array<i32>} : memref<16x128xf32, #tpu.memory_space<vmem>>, vector<16x128xf32>,
    %c0_i32_8 = arith.constant 0 : i32
    %9 = arith.cmpi eq, %arg2, %c0_i32_8 : i32
    %10 = arith.extui %9 : i1 to i32
    %c0_i32_9 = arith.constant 0 : i32
    %11 = arith.cmpi ne, %10, %c0_i32_9 : i32
    scf.if %11 {
      %c0_10 = arith.constant 0 : index
      %c0_11 = arith.constant 0 : index
      %12 = vector.load %arg6[%c0_10, %c0_11] : memref<16x128xf32, #tpu.memory_space<vmem>>, vector<16x128xf32>
      %c0_12 = arith.constant 0 : index
      %c0_13 = arith.constant 0 : index
      %13 = vector.load %arg5[%c0_12, %c0_13] : memref<16x128xf32, #tpu.memory_space<vmem>>, vector<16x128xf32>
      tpu.vector_store %arg5[%c0_12, %c0_13], %12 {strides = array<i32>} : memref<16x128xf32, #tpu.memory_space<vmem>>, vector<16x128xf32>,
    } else {
    }
    return
  }
  func.func @transform_0(%arg0: i32, %arg1: i32, %arg2: i32) -> (i32, i32) {
    %c0_i32 = arith.constant 0 : i32
    return %arg0, %arg2 : i32, i32
  }
  func.func @transform_1(%arg0: i32, %arg1: i32, %arg2: i32) -> (i32, i32) {
    %c0_i32 = arith.constant 0 : i32
    return %arg2, %arg1 : i32, i32
  }
  func.func @transform_2(%arg0: i32, %arg1: i32, %arg2: i32) -> (i32, i32) {
    %c0_i32 = arith.constant 0 : i32
    return %arg0, %arg1 : i32, i32
  }
}

module attributes {stable_mosaic.version = 11 : i64} {
  func.func @_rangebn_stats_kernel(%arg0: i32, %arg1: memref<1x2x64xf32, #tpu.memory_space<vmem>>, %arg2: memref<1x64xf32, #tpu.memory_space<vmem>>, %arg3: memref<1x64xf32, #tpu.memory_space<vmem>>, %arg4: memref<1x64xf32, #tpu.memory_space<vmem>>, %arg5: memref<1x64xf32, #tpu.memory_space<vmem>>, %arg6: memref<1x64xf32, #tpu.memory_space<vmem>>) attributes {dimension_semantics = [#tpu.dimension_semantics<arbitrary>], iteration_bounds = array<i64: 4>, scalar_prefetch = 0 : i64, scratch_operands = 3 : i64, tpu.core_type = #tpu.core_type<tc>, window_params = [{transform_indices = @transform_0, window_bounds = array<i64: 1, 2, 64>}, {pipeline_mode = #tpu.pipeline_mode<synchronous>, transform_indices = @transform_1, window_bounds = array<i64: 1, 64>}, {pipeline_mode = #tpu.pipeline_mode<synchronous>, transform_indices = @transform_2, window_bounds = array<i64: 1, 64>}]} {
    %c0 = arith.constant 0 : index
    %c0_0 = arith.constant 0 : index
    %c0_1 = arith.constant 0 : index
    %0 = vector.load %arg1[%c0, %c0_0, %c0_1] : memref<1x2x64xf32, #tpu.memory_space<vmem>>, vector<1x2x64xf32>
    %cst = arith.constant dense<0.000000e+00> : vector<1x64xf32>
    %1 = vector.multi_reduction <add>, %0, %cst [1] : vector<1x2x64xf32> to vector<1x64xf32>
    %cst_2 = arith.constant dense<0xFF800000> : vector<1x64xf32>
    %2 = vector.multi_reduction <maximumf>, %0, %cst_2 [1] : vector<1x2x64xf32> to vector<1x64xf32>
    %cst_3 = arith.constant dense<0x7F800000> : vector<1x64xf32>
    %3 = vector.multi_reduction <minimumf>, %0, %cst_3 [1] : vector<1x2x64xf32> to vector<1x64xf32>
    %c0_i32 = arith.constant 0 : i32
    %4 = arith.cmpi eq, %arg0, %c0_i32 : i32
    %5 = arith.extui %4 : i1 to i32
    %c0_i32_4 = arith.constant 0 : i32
    %6 = arith.cmpi ne, %5, %c0_i32_4 : i32
    scf.if %6 {
      %cst_18 = arith.constant 0.000000e+00 : f32
      %19 = vector.broadcast %cst_18 : f32 to vector<1x64xf32>
      %c0_19 = arith.constant 0 : index
      %c0_20 = arith.constant 0 : index
      %20 = vector.load %arg4[%c0_19, %c0_20] : memref<1x64xf32, #tpu.memory_space<vmem>>, vector<1x64xf32>
      tpu.vector_store %arg4[%c0_19, %c0_20], %19 {strides = array<i32>} : memref<1x64xf32, #tpu.memory_space<vmem>>, vector<1x64xf32>,
      %cst_21 = arith.constant 0.000000e+00 : f32
      %21 = vector.broadcast %cst_21 : f32 to vector<1x64xf32>
      %c0_22 = arith.constant 0 : index
      %c0_23 = arith.constant 0 : index
      %22 = vector.load %arg5[%c0_22, %c0_23] : memref<1x64xf32, #tpu.memory_space<vmem>>, vector<1x64xf32>
      tpu.vector_store %arg5[%c0_22, %c0_23], %21 {strides = array<i32>} : memref<1x64xf32, #tpu.memory_space<vmem>>, vector<1x64xf32>,
      %cst_24 = arith.constant 0.000000e+00 : f32
      %23 = vector.broadcast %cst_24 : f32 to vector<1x64xf32>
      %c0_25 = arith.constant 0 : index
      %c0_26 = arith.constant 0 : index
      %24 = vector.load %arg6[%c0_25, %c0_26] : memref<1x64xf32, #tpu.memory_space<vmem>>, vector<1x64xf32>
      tpu.vector_store %arg6[%c0_25, %c0_26], %23 {strides = array<i32>} : memref<1x64xf32, #tpu.memory_space<vmem>>, vector<1x64xf32>,
    } else {
    }
    %c0_5 = arith.constant 0 : index
    %c0_6 = arith.constant 0 : index
    %7 = vector.load %arg4[%c0_5, %c0_6] : memref<1x64xf32, #tpu.memory_space<vmem>>, vector<1x64xf32>
    %8 = arith.addf %7, %1 : vector<1x64xf32>
    %c0_7 = arith.constant 0 : index
    %c0_8 = arith.constant 0 : index
    %9 = vector.load %arg4[%c0_7, %c0_8] : memref<1x64xf32, #tpu.memory_space<vmem>>, vector<1x64xf32>
    tpu.vector_store %arg4[%c0_7, %c0_8], %8 {strides = array<i32>} : memref<1x64xf32, #tpu.memory_space<vmem>>, vector<1x64xf32>,
    %c0_9 = arith.constant 0 : index
    %c0_10 = arith.constant 0 : index
    %10 = vector.load %arg5[%c0_9, %c0_10] : memref<1x64xf32, #tpu.memory_space<vmem>>, vector<1x64xf32>
    %11 = arith.addf %10, %2 : vector<1x64xf32>
    %c0_11 = arith.constant 0 : index
    %c0_12 = arith.constant 0 : index
    %12 = vector.load %arg5[%c0_11, %c0_12] : memref<1x64xf32, #tpu.memory_space<vmem>>, vector<1x64xf32>
    tpu.vector_store %arg5[%c0_11, %c0_12], %11 {strides = array<i32>} : memref<1x64xf32, #tpu.memory_space<vmem>>, vector<1x64xf32>,
    %c0_13 = arith.constant 0 : index
    %c0_14 = arith.constant 0 : index
    %13 = vector.load %arg6[%c0_13, %c0_14] : memref<1x64xf32, #tpu.memory_space<vmem>>, vector<1x64xf32>
    %14 = arith.addf %13, %3 : vector<1x64xf32>
    %c0_15 = arith.constant 0 : index
    %c0_16 = arith.constant 0 : index
    %15 = vector.load %arg6[%c0_15, %c0_16] : memref<1x64xf32, #tpu.memory_space<vmem>>, vector<1x64xf32>
    tpu.vector_store %arg6[%c0_15, %c0_16], %14 {strides = array<i32>} : memref<1x64xf32, #tpu.memory_space<vmem>>, vector<1x64xf32>,
    %c3_i32 = arith.constant 3 : i32
    %16 = arith.cmpi eq, %arg0, %c3_i32 : i32
    %17 = arith.extui %16 : i1 to i32
    %c0_i32_17 = arith.constant 0 : i32
    %18 = arith.cmpi ne, %17, %c0_i32_17 : i32
    scf.if %18 {
      %c0_18 = arith.constant 0 : index
      %c0_19 = arith.constant 0 : index
      %19 = vector.load %arg4[%c0_18, %c0_19] : memref<1x64xf32, #tpu.memory_space<vmem>>, vector<1x64xf32>
      %cst_20 = arith.constant 8.000000e+00 : f32
      %20 = vector.broadcast %cst_20 : f32 to vector<1x64xf32>
      %21 = arith.divf %19, %20 : vector<1x64xf32>
      %c0_21 = arith.constant 0 : index
      %c0_22 = arith.constant 0 : index
      %22 = vector.load %arg2[%c0_21, %c0_22] : memref<1x64xf32, #tpu.memory_space<vmem>>, vector<1x64xf32>
      tpu.vector_store %arg2[%c0_21, %c0_22], %21 {strides = array<i32>} : memref<1x64xf32, #tpu.memory_space<vmem>>, vector<1x64xf32>,
      %c0_23 = arith.constant 0 : index
      %c0_24 = arith.constant 0 : index
      %23 = vector.load %arg5[%c0_23, %c0_24] : memref<1x64xf32, #tpu.memory_space<vmem>>, vector<1x64xf32>
      %c0_25 = arith.constant 0 : index
      %c0_26 = arith.constant 0 : index
      %24 = vector.load %arg6[%c0_25, %c0_26] : memref<1x64xf32, #tpu.memory_space<vmem>>, vector<1x64xf32>
      %25 = arith.subf %23, %24 : vector<1x64xf32>
      %cst_27 = arith.constant 4.000000e+00 : f32
      %26 = vector.broadcast %cst_27 : f32 to vector<1x64xf32>
      %27 = arith.divf %25, %26 : vector<1x64xf32>
      %cst_28 = arith.constant 0.458810747 : f32
      %28 = vector.broadcast %cst_28 : f32 to vector<1x64xf32>
      %29 = arith.mulf %27, %28 : vector<1x64xf32>
      %cst_29 = arith.constant 9.99999974E-6 : f32
      %30 = vector.broadcast %cst_29 : f32 to vector<1x64xf32>
      %31 = arith.addf %29, %30 : vector<1x64xf32>
      %cst_30 = arith.constant 1.000000e+00 : f32
      %32 = vector.broadcast %cst_30 : f32 to vector<1x64xf32>
      %33 = arith.divf %32, %31 : vector<1x64xf32>
      %c0_31 = arith.constant 0 : index
      %c0_32 = arith.constant 0 : index
      %34 = vector.load %arg3[%c0_31, %c0_32] : memref<1x64xf32, #tpu.memory_space<vmem>>, vector<1x64xf32>
      tpu.vector_store %arg3[%c0_31, %c0_32], %33 {strides = array<i32>} : memref<1x64xf32, #tpu.memory_space<vmem>>, vector<1x64xf32>,
    } else {
    }
    return
  }
  func.func @transform_0(%arg0: i32) -> (i32, i32, i32) {
    %c0_i32 = arith.constant 0 : i32
    %c0_i32_0 = arith.constant 0 : i32
    %c0_i32_1 = arith.constant 0 : i32
    return %arg0, %c0_i32, %c0_i32_0 : i32, i32, i32
  }
  func.func @transform_1(%arg0: i32) -> (i32, i32) {
    %c0_i32 = arith.constant 0 : i32
    %c0_i32_0 = arith.constant 0 : i32
    %c0_i32_1 = arith.constant 0 : i32
    return %c0_i32, %c0_i32_0 : i32, i32
  }
  func.func @transform_2(%arg0: i32) -> (i32, i32) {
    %c0_i32 = arith.constant 0 : i32
    %c0_i32_0 = arith.constant 0 : i32
    %c0_i32_1 = arith.constant 0 : i32
    return %c0_i32, %c0_i32_0 : i32, i32
  }
}

module attributes {stable_mosaic.version = 11 : i64} {
  func.func @_matmul_kernel(%arg0: i32, %arg1: i32, %arg2: i32, %arg3: memref<16x384xbf16, #tpu.memory_space<vmem>>, %arg4: memref<384x128xbf16, #tpu.memory_space<vmem>>, %arg5: memref<16x128xf32, #tpu.memory_space<vmem>>, %arg6: memref<16x128xf32, #tpu.memory_space<vmem>>) attributes {dimension_semantics = [#tpu.dimension_semantics<parallel>, #tpu.dimension_semantics<parallel>, #tpu.dimension_semantics<arbitrary>], iteration_bounds = array<i64: 1, 1, 1>, scalar_prefetch = 0 : i64, scratch_operands = 1 : i64, tpu.core_type = #tpu.core_type<tc>, window_params = [{transform_indices = @transform_0, window_bounds = array<i64: 16, 384>}, {transform_indices = @transform_1, window_bounds = array<i64: 384, 128>}, {transform_indices = @transform_2, window_bounds = array<i64: 16, 128>}]} {
    %c0_i32 = arith.constant 0 : i32
    %0 = arith.cmpi eq, %arg2, %c0_i32 : i32
    %1 = arith.extui %0 : i1 to i32
    %c0_i32_0 = arith.constant 0 : i32
    %2 = arith.cmpi ne, %1, %c0_i32_0 : i32
    scf.if %2 {
      %cst_10 = arith.constant 0.000000e+00 : f32
      %12 = vector.broadcast %cst_10 : f32 to vector<16x128xf32>
      %c0_11 = arith.constant 0 : index
      %c0_12 = arith.constant 0 : index
      %13 = vector.load %arg6[%c0_11, %c0_12] : memref<16x128xf32, #tpu.memory_space<vmem>>, vector<16x128xf32>
      tpu.vector_store %arg6[%c0_11, %c0_12], %12 {strides = array<i32>} : memref<16x128xf32, #tpu.memory_space<vmem>>, vector<16x128xf32>,
    } else {
    }
    %c0 = arith.constant 0 : index
    %c0_1 = arith.constant 0 : index
    %3 = vector.load %arg6[%c0, %c0_1] : memref<16x128xf32, #tpu.memory_space<vmem>>, vector<16x128xf32>
    %c0_2 = arith.constant 0 : index
    %c0_3 = arith.constant 0 : index
    %4 = vector.load %arg3[%c0_2, %c0_3] : memref<16x384xbf16, #tpu.memory_space<vmem>>, vector<16x384xbf16>
    %c0_4 = arith.constant 0 : index
    %c0_5 = arith.constant 0 : index
    %5 = vector.load %arg4[%c0_4, %c0_5] : memref<384x128xbf16, #tpu.memory_space<vmem>>, vector<384x128xbf16>
    %cst = arith.constant dense<0.000000e+00> : vector<16x128xf32>
    %6 = tpu.matmul %4, %5, %cst {dimension_numbers = #tpu.dot_dimension_numbers<[1], [0], [0], [1], [0, 0, 1, 1], [], []>} : vector<16x384xbf16>, vector<384x128xbf16>, vector<16x128xf32> -> vector<16x128xf32>
    %7 = arith.addf %3, %6 : vector<16x128xf32>
    %c0_6 = arith.constant 0 : index
    %c0_7 = arith.constant 0 : index
    %8 = vector.load %arg6[%c0_6, %c0_7] : memref<16x128xf32, #tpu.memory_space<vmem>>, vector<16x128xf32>
    tpu.vector_store %arg6[%c0_6, %c0_7], %7 {strides = array<i32>} : memref<16x128xf32, #tpu.memory_space<vmem>>, vector<16x128xf32>,
    %c0_i32_8 = arith.constant 0 : i32
    %9 = arith.cmpi eq, %arg2, %c0_i32_8 : i32
    %10 = arith.extui %9 : i1 to i32
    %c0_i32_9 = arith.constant 0 : i32
    %11 = arith.cmpi ne, %10, %c0_i32_9 : i32
    scf.if %11 {
      %c0_10 = arith.constant 0 : index
      %c0_11 = arith.constant 0 : index
      %12 = vector.load %arg6[%c0_10, %c0_11] : memref<16x128xf32, #tpu.memory_space<vmem>>, vector<16x128xf32>
      %c0_12 = arith.constant 0 : index
      %c0_13 = arith.constant 0 : index
      %13 = vector.load %arg5[%c0_12, %c0_13] : memref<16x128xf32, #tpu.memory_space<vmem>>, vector<16x128xf32>
      tpu.vector_store %arg5[%c0_12, %c0_13], %12 {strides = array<i32>} : memref<16x128xf32, #tpu.memory_space<vmem>>, vector<16x128xf32>,
    } else {
    }
    return
  }
  func.func @transform_0(%arg0: i32, %arg1: i32, %arg2: i32) -> (i32, i32) {
    %c0_i32 = arith.constant 0 : i32
    return %arg0, %arg2 : i32, i32
  }
  func.func @transform_1(%arg0: i32, %arg1: i32, %arg2: i32) -> (i32, i32) {
    %c0_i32 = arith.constant 0 : i32
    return %arg2, %arg1 : i32, i32
  }
  func.func @transform_2(%arg0: i32, %arg1: i32, %arg2: i32) -> (i32, i32) {
    %c0_i32 = arith.constant 0 : i32
    return %arg0, %arg1 : i32, i32
  }
}

module attributes {stable_mosaic.version = 11 : i64} {
  func.func @_matmul_kernel(%arg0: i32, %arg1: i32, %arg2: i32, %arg3: memref<16x512xbf16, #tpu.memory_space<vmem>>, %arg4: memref<512x128xbf16, #tpu.memory_space<vmem>>, %arg5: memref<16x128xf32, #tpu.memory_space<vmem>>, %arg6: memref<16x128xf32, #tpu.memory_space<vmem>>) attributes {dimension_semantics = [#tpu.dimension_semantics<parallel>, #tpu.dimension_semantics<parallel>, #tpu.dimension_semantics<arbitrary>], iteration_bounds = array<i64: 1, 1, 2>, scalar_prefetch = 0 : i64, scratch_operands = 1 : i64, tpu.core_type = #tpu.core_type<tc>, window_params = [{transform_indices = @transform_0, window_bounds = array<i64: 16, 512>}, {transform_indices = @transform_1, window_bounds = array<i64: 512, 128>}, {transform_indices = @transform_2, window_bounds = array<i64: 16, 128>}]} {
    %c0_i32 = arith.constant 0 : i32
    %0 = arith.cmpi eq, %arg2, %c0_i32 : i32
    %1 = arith.extui %0 : i1 to i32
    %c0_i32_0 = arith.constant 0 : i32
    %2 = arith.cmpi ne, %1, %c0_i32_0 : i32
    scf.if %2 {
      %cst_9 = arith.constant 0.000000e+00 : f32
      %12 = vector.broadcast %cst_9 : f32 to vector<16x128xf32>
      %c0_10 = arith.constant 0 : index
      %c0_11 = arith.constant 0 : index
      %13 = vector.load %arg6[%c0_10, %c0_11] : memref<16x128xf32, #tpu.memory_space<vmem>>, vector<16x128xf32>
      tpu.vector_store %arg6[%c0_10, %c0_11], %12 {strides = array<i32>} : memref<16x128xf32, #tpu.memory_space<vmem>>, vector<16x128xf32>,
    } else {
    }
    %c0 = arith.constant 0 : index
    %c0_1 = arith.constant 0 : index
    %3 = vector.load %arg6[%c0, %c0_1] : memref<16x128xf32, #tpu.memory_space<vmem>>, vector<16x128xf32>
    %c0_2 = arith.constant 0 : index
    %c0_3 = arith.constant 0 : index
    %4 = vector.load %arg3[%c0_2, %c0_3] : memref<16x512xbf16, #tpu.memory_space<vmem>>, vector<16x512xbf16>
    %c0_4 = arith.constant 0 : index
    %c0_5 = arith.constant 0 : index
    %5 = vector.load %arg4[%c0_4, %c0_5] : memref<512x128xbf16, #tpu.memory_space<vmem>>, vector<512x128xbf16>
    %cst = arith.constant dense<0.000000e+00> : vector<16x128xf32>
    %6 = tpu.matmul %4, %5, %cst {dimension_numbers = #tpu.dot_dimension_numbers<[1], [0], [0], [1], [0, 0, 1, 1], [], []>} : vector<16x512xbf16>, vector<512x128xbf16>, vector<16x128xf32> -> vector<16x128xf32>
    %7 = arith.addf %3, %6 : vector<16x128xf32>
    %c0_6 = arith.constant 0 : index
    %c0_7 = arith.constant 0 : index
    %8 = vector.load %arg6[%c0_6, %c0_7] : memref<16x128xf32, #tpu.memory_space<vmem>>, vector<16x128xf32>
    tpu.vector_store %arg6[%c0_6, %c0_7], %7 {strides = array<i32>} : memref<16x128xf32, #tpu.memory_space<vmem>>, vector<16x128xf32>,
    %c1_i32 = arith.constant 1 : i32
    %9 = arith.cmpi eq, %arg2, %c1_i32 : i32
    %10 = arith.extui %9 : i1 to i32
    %c0_i32_8 = arith.constant 0 : i32
    %11 = arith.cmpi ne, %10, %c0_i32_8 : i32
    scf.if %11 {
      %c0_9 = arith.constant 0 : index
      %c0_10 = arith.constant 0 : index
      %12 = vector.load %arg6[%c0_9, %c0_10] : memref<16x128xf32, #tpu.memory_space<vmem>>, vector<16x128xf32>
      %c0_11 = arith.constant 0 : index
      %c0_12 = arith.constant 0 : index
      %13 = vector.load %arg5[%c0_11, %c0_12] : memref<16x128xf32, #tpu.memory_space<vmem>>, vector<16x128xf32>
      tpu.vector_store %arg5[%c0_11, %c0_12], %12 {strides = array<i32>} : memref<16x128xf32, #tpu.memory_space<vmem>>, vector<16x128xf32>,
    } else {
    }
    return
  }
  func.func @transform_0(%arg0: i32, %arg1: i32, %arg2: i32) -> (i32, i32) {
    %c0_i32 = arith.constant 0 : i32
    return %arg0, %arg2 : i32, i32
  }
  func.func @transform_1(%arg0: i32, %arg1: i32, %arg2: i32) -> (i32, i32) {
    %c0_i32 = arith.constant 0 : i32
    return %arg2, %arg1 : i32, i32
  }
  func.func @transform_2(%arg0: i32, %arg1: i32, %arg2: i32) -> (i32, i32) {
    %c0_i32 = arith.constant 0 : i32
    return %arg0, %arg1 : i32, i32
  }
}

module attributes {stable_mosaic.version = 11 : i64} {
  func.func @_rangebn_stats_kernel(%arg0: i32, %arg1: memref<1x2x128xf32, #tpu.memory_space<vmem>>, %arg2: memref<1x128xf32, #tpu.memory_space<vmem>>, %arg3: memref<1x128xf32, #tpu.memory_space<vmem>>, %arg4: memref<1x128xf32, #tpu.memory_space<vmem>>, %arg5: memref<1x128xf32, #tpu.memory_space<vmem>>, %arg6: memref<1x128xf32, #tpu.memory_space<vmem>>) attributes {dimension_semantics = [#tpu.dimension_semantics<arbitrary>], iteration_bounds = array<i64: 1>, scalar_prefetch = 0 : i64, scratch_operands = 3 : i64, tpu.core_type = #tpu.core_type<tc>, window_params = [{transform_indices = @transform_0, window_bounds = array<i64: 1, 2, 128>}, {pipeline_mode = #tpu.pipeline_mode<synchronous>, transform_indices = @transform_1, window_bounds = array<i64: 1, 128>}, {pipeline_mode = #tpu.pipeline_mode<synchronous>, transform_indices = @transform_2, window_bounds = array<i64: 1, 128>}]} {
    %c0 = arith.constant 0 : index
    %c0_0 = arith.constant 0 : index
    %c0_1 = arith.constant 0 : index
    %0 = vector.load %arg1[%c0, %c0_0, %c0_1] : memref<1x2x128xf32, #tpu.memory_space<vmem>>, vector<1x2x128xf32>
    %cst = arith.constant dense<0.000000e+00> : vector<1x128xf32>
    %1 = vector.multi_reduction <add>, %0, %cst [1] : vector<1x2x128xf32> to vector<1x128xf32>
    %cst_2 = arith.constant dense<0xFF800000> : vector<1x128xf32>
    %2 = vector.multi_reduction <maximumf>, %0, %cst_2 [1] : vector<1x2x128xf32> to vector<1x128xf32>
    %cst_3 = arith.constant dense<0x7F800000> : vector<1x128xf32>
    %3 = vector.multi_reduction <minimumf>, %0, %cst_3 [1] : vector<1x2x128xf32> to vector<1x128xf32>
    %c0_i32 = arith.constant 0 : i32
    %4 = arith.cmpi eq, %arg0, %c0_i32 : i32
    %5 = arith.extui %4 : i1 to i32
    %c0_i32_4 = arith.constant 0 : i32
    %6 = arith.cmpi ne, %5, %c0_i32_4 : i32
    scf.if %6 {
      %cst_19 = arith.constant 0.000000e+00 : f32
      %19 = vector.broadcast %cst_19 : f32 to vector<1x128xf32>
      %c0_20 = arith.constant 0 : index
      %c0_21 = arith.constant 0 : index
      %20 = vector.load %arg4[%c0_20, %c0_21] : memref<1x128xf32, #tpu.memory_space<vmem>>, vector<1x128xf32>
      tpu.vector_store %arg4[%c0_20, %c0_21], %19 {strides = array<i32>} : memref<1x128xf32, #tpu.memory_space<vmem>>, vector<1x128xf32>,
      %cst_22 = arith.constant 0.000000e+00 : f32
      %21 = vector.broadcast %cst_22 : f32 to vector<1x128xf32>
      %c0_23 = arith.constant 0 : index
      %c0_24 = arith.constant 0 : index
      %22 = vector.load %arg5[%c0_23, %c0_24] : memref<1x128xf32, #tpu.memory_space<vmem>>, vector<1x128xf32>
      tpu.vector_store %arg5[%c0_23, %c0_24], %21 {strides = array<i32>} : memref<1x128xf32, #tpu.memory_space<vmem>>, vector<1x128xf32>,
      %cst_25 = arith.constant 0.000000e+00 : f32
      %23 = vector.broadcast %cst_25 : f32 to vector<1x128xf32>
      %c0_26 = arith.constant 0 : index
      %c0_27 = arith.constant 0 : index
      %24 = vector.load %arg6[%c0_26, %c0_27] : memref<1x128xf32, #tpu.memory_space<vmem>>, vector<1x128xf32>
      tpu.vector_store %arg6[%c0_26, %c0_27], %23 {strides = array<i32>} : memref<1x128xf32, #tpu.memory_space<vmem>>, vector<1x128xf32>,
    } else {
    }
    %c0_5 = arith.constant 0 : index
    %c0_6 = arith.constant 0 : index
    %7 = vector.load %arg4[%c0_5, %c0_6] : memref<1x128xf32, #tpu.memory_space<vmem>>, vector<1x128xf32>
    %8 = arith.addf %7, %1 : vector<1x128xf32>
    %c0_7 = arith.constant 0 : index
    %c0_8 = arith.constant 0 : index
    %9 = vector.load %arg4[%c0_7, %c0_8] : memref<1x128xf32, #tpu.memory_space<vmem>>, vector<1x128xf32>
    tpu.vector_store %arg4[%c0_7, %c0_8], %8 {strides = array<i32>} : memref<1x128xf32, #tpu.memory_space<vmem>>, vector<1x128xf32>,
    %c0_9 = arith.constant 0 : index
    %c0_10 = arith.constant 0 : index
    %10 = vector.load %arg5[%c0_9, %c0_10] : memref<1x128xf32, #tpu.memory_space<vmem>>, vector<1x128xf32>
    %11 = arith.addf %10, %2 : vector<1x128xf32>
    %c0_11 = arith.constant 0 : index
    %c0_12 = arith.constant 0 : index
    %12 = vector.load %arg5[%c0_11, %c0_12] : memref<1x128xf32, #tpu.memory_space<vmem>>, vector<1x128xf32>
    tpu.vector_store %arg5[%c0_11, %c0_12], %11 {strides = array<i32>} : memref<1x128xf32, #tpu.memory_space<vmem>>, vector<1x128xf32>,
    %c0_13 = arith.constant 0 : index
    %c0_14 = arith.constant 0 : index
    %13 = vector.load %arg6[%c0_13, %c0_14] : memref<1x128xf32, #tpu.memory_space<vmem>>, vector<1x128xf32>
    %14 = arith.addf %13, %3 : vector<1x128xf32>
    %c0_15 = arith.constant 0 : index
    %c0_16 = arith.constant 0 : index
    %15 = vector.load %arg6[%c0_15, %c0_16] : memref<1x128xf32, #tpu.memory_space<vmem>>, vector<1x128xf32>
    tpu.vector_store %arg6[%c0_15, %c0_16], %14 {strides = array<i32>} : memref<1x128xf32, #tpu.memory_space<vmem>>, vector<1x128xf32>,
    %c0_i32_17 = arith.constant 0 : i32
    %16 = arith.cmpi eq, %arg0, %c0_i32_17 : i32
    %17 = arith.extui %16 : i1 to i32
    %c0_i32_18 = arith.constant 0 : i32
    %18 = arith.cmpi ne, %17, %c0_i32_18 : i32
    scf.if %18 {
      %c0_19 = arith.constant 0 : index
      %c0_20 = arith.constant 0 : index
      %19 = vector.load %arg4[%c0_19, %c0_20] : memref<1x128xf32, #tpu.memory_space<vmem>>, vector<1x128xf32>
      %cst_21 = arith.constant 2.000000e+00 : f32
      %20 = vector.broadcast %cst_21 : f32 to vector<1x128xf32>
      %21 = arith.divf %19, %20 : vector<1x128xf32>
      %c0_22 = arith.constant 0 : index
      %c0_23 = arith.constant 0 : index
      %22 = vector.load %arg2[%c0_22, %c0_23] : memref<1x128xf32, #tpu.memory_space<vmem>>, vector<1x128xf32>
      tpu.vector_store %arg2[%c0_22, %c0_23], %21 {strides = array<i32>} : memref<1x128xf32, #tpu.memory_space<vmem>>, vector<1x128xf32>,
      %c0_24 = arith.constant 0 : index
      %c0_25 = arith.constant 0 : index
      %23 = vector.load %arg5[%c0_24, %c0_25] : memref<1x128xf32, #tpu.memory_space<vmem>>, vector<1x128xf32>
      %c0_26 = arith.constant 0 : index
      %c0_27 = arith.constant 0 : index
      %24 = vector.load %arg6[%c0_26, %c0_27] : memref<1x128xf32, #tpu.memory_space<vmem>>, vector<1x128xf32>
      %25 = arith.subf %23, %24 : vector<1x128xf32>
      %cst_28 = arith.constant 1.000000e+00 : f32
      %26 = vector.broadcast %cst_28 : f32 to vector<1x128xf32>
      %27 = arith.divf %25, %26 : vector<1x128xf32>
      %cst_29 = arith.constant 0.458810747 : f32
      %28 = vector.broadcast %cst_29 : f32 to vector<1x128xf32>
      %29 = arith.mulf %27, %28 : vector<1x128xf32>
      %cst_30 = arith.constant 9.99999974E-6 : f32
      %30 = vector.broadcast %cst_30 : f32 to vector<1x128xf32>
      %31 = arith.addf %29, %30 : vector<1x128xf32>
      %cst_31 = arith.constant 1.000000e+00 : f32
      %32 = vector.broadcast %cst_31 : f32 to vector<1x128xf32>
      %33 = arith.divf %32, %31 : vector<1x128xf32>
      %c0_32 = arith.constant 0 : index
      %c0_33 = arith.constant 0 : index
      %34 = vector.load %arg3[%c0_32, %c0_33] : memref<1x128xf32, #tpu.memory_space<vmem>>, vector<1x128xf32>
      tpu.vector_store %arg3[%c0_32, %c0_33], %33 {strides = array<i32>} : memref<1x128xf32, #tpu.memory_space<vmem>>, vector<1x128xf32>,
    } else {
    }
    return
  }
  func.func @transform_0(%arg0: i32) -> (i32, i32, i32) {
    %c0_i32 = arith.constant 0 : i32
    %c0_i32_0 = arith.constant 0 : i32
    %c0_i32_1 = arith.constant 0 : i32
    return %arg0, %c0_i32, %c0_i32_0 : i32, i32, i32
  }
  func.func @transform_1(%arg0: i32) -> (i32, i32) {
    %c0_i32 = arith.constant 0 : i32
    %c0_i32_0 = arith.constant 0 : i32
    %c0_i32_1 = arith.constant 0 : i32
    return %c0_i32, %c0_i32_0 : i32, i32
  }
  func.func @transform_2(%arg0: i32) -> (i32, i32) {
    %c0_i32 = arith.constant 0 : i32
    %c0_i32_0 = arith.constant 0 : i32
    %c0_i32_1 = arith.constant 0 : i32
    return %c0_i32, %c0_i32_0 : i32, i32
  }
}

module attributes {stable_mosaic.version = 11 : i64} {
  func.func @_matmul_kernel(%arg0: i32, %arg1: i32, %arg2: i32, %arg3: memref<16x512xbf16, #tpu.memory_space<vmem>>, %arg4: memref<512x128xbf16, #tpu.memory_space<vmem>>, %arg5: memref<16x128xf32, #tpu.memory_space<vmem>>, %arg6: memref<16x128xf32, #tpu.memory_space<vmem>>) attributes {dimension_semantics = [#tpu.dimension_semantics<parallel>, #tpu.dimension_semantics<parallel>, #tpu.dimension_semantics<arbitrary>], iteration_bounds = array<i64: 1, 1, 3>, scalar_prefetch = 0 : i64, scratch_operands = 1 : i64, tpu.core_type = #tpu.core_type<tc>, window_params = [{transform_indices = @transform_0, window_bounds = array<i64: 16, 512>}, {transform_indices = @transform_1, window_bounds = array<i64: 512, 128>}, {transform_indices = @transform_2, window_bounds = array<i64: 16, 128>}]} {
    %c0_i32 = arith.constant 0 : i32
    %0 = arith.cmpi eq, %arg2, %c0_i32 : i32
    %1 = arith.extui %0 : i1 to i32
    %c0_i32_0 = arith.constant 0 : i32
    %2 = arith.cmpi ne, %1, %c0_i32_0 : i32
    scf.if %2 {
      %cst_9 = arith.constant 0.000000e+00 : f32
      %12 = vector.broadcast %cst_9 : f32 to vector<16x128xf32>
      %c0_10 = arith.constant 0 : index
      %c0_11 = arith.constant 0 : index
      %13 = vector.load %arg6[%c0_10, %c0_11] : memref<16x128xf32, #tpu.memory_space<vmem>>, vector<16x128xf32>
      tpu.vector_store %arg6[%c0_10, %c0_11], %12 {strides = array<i32>} : memref<16x128xf32, #tpu.memory_space<vmem>>, vector<16x128xf32>,
    } else {
    }
    %c0 = arith.constant 0 : index
    %c0_1 = arith.constant 0 : index
    %3 = vector.load %arg6[%c0, %c0_1] : memref<16x128xf32, #tpu.memory_space<vmem>>, vector<16x128xf32>
    %c0_2 = arith.constant 0 : index
    %c0_3 = arith.constant 0 : index
    %4 = vector.load %arg3[%c0_2, %c0_3] : memref<16x512xbf16, #tpu.memory_space<vmem>>, vector<16x512xbf16>
    %c0_4 = arith.constant 0 : index
    %c0_5 = arith.constant 0 : index
    %5 = vector.load %arg4[%c0_4, %c0_5] : memref<512x128xbf16, #tpu.memory_space<vmem>>, vector<512x128xbf16>
    %cst = arith.constant dense<0.000000e+00> : vector<16x128xf32>
    %6 = tpu.matmul %4, %5, %cst {dimension_numbers = #tpu.dot_dimension_numbers<[1], [0], [0], [1], [0, 0, 1, 1], [], []>} : vector<16x512xbf16>, vector<512x128xbf16>, vector<16x128xf32> -> vector<16x128xf32>
    %7 = arith.addf %3, %6 : vector<16x128xf32>
    %c0_6 = arith.constant 0 : index
    %c0_7 = arith.constant 0 : index
    %8 = vector.load %arg6[%c0_6, %c0_7] : memref<16x128xf32, #tpu.memory_space<vmem>>, vector<16x128xf32>
    tpu.vector_store %arg6[%c0_6, %c0_7], %7 {strides = array<i32>} : memref<16x128xf32, #tpu.memory_space<vmem>>, vector<16x128xf32>,
    %c2_i32 = arith.constant 2 : i32
    %9 = arith.cmpi eq, %arg2, %c2_i32 : i32
    %10 = arith.extui %9 : i1 to i32
    %c0_i32_8 = arith.constant 0 : i32
    %11 = arith.cmpi ne, %10, %c0_i32_8 : i32
    scf.if %11 {
      %c0_9 = arith.constant 0 : index
      %c0_10 = arith.constant 0 : index
      %12 = vector.load %arg6[%c0_9, %c0_10] : memref<16x128xf32, #tpu.memory_space<vmem>>, vector<16x128xf32>
      %c0_11 = arith.constant 0 : index
      %c0_12 = arith.constant 0 : index
      %13 = vector.load %arg5[%c0_11, %c0_12] : memref<16x128xf32, #tpu.memory_space<vmem>>, vector<16x128xf32>
      tpu.vector_store %arg5[%c0_11, %c0_12], %12 {strides = array<i32>} : memref<16x128xf32, #tpu.memory_space<vmem>>, vector<16x128xf32>,
    } else {
    }
    return
  }
  func.func @transform_0(%arg0: i32, %arg1: i32, %arg2: i32) -> (i32, i32) {
    %c0_i32 = arith.constant 0 : i32
    return %arg0, %arg2 : i32, i32
  }
  func.func @transform_1(%arg0: i32, %arg1: i32, %arg2: i32) -> (i32, i32) {
    %c0_i32 = arith.constant 0 : i32
    return %arg2, %arg1 : i32, i32
  }
  func.func @transform_2(%arg0: i32, %arg1: i32, %arg2: i32) -> (i32, i32) {
    %c0_i32 = arith.constant 0 : i32
    return %arg0, %arg1 : i32, i32
  }
}

module attributes {stable_mosaic.version = 11 : i64} {
  func.func @_matmul_bias_kernel(%arg0: i32, %arg1: i32, %arg2: i32, %arg3: memref<16x128xbf16, #tpu.memory_space<vmem>>, %arg4: memref<128x128xbf16, #tpu.memory_space<vmem>>, %arg5: memref<1x128xf32, #tpu.memory_space<vmem>>, %arg6: memref<16x128xf32, #tpu.memory_space<vmem>>, %arg7: memref<16x128xf32, #tpu.memory_space<vmem>>) attributes {dimension_semantics = [#tpu.dimension_semantics<parallel>, #tpu.dimension_semantics<parallel>, #tpu.dimension_semantics<arbitrary>], iteration_bounds = array<i64: 1, 1, 1>, scalar_prefetch = 0 : i64, scratch_operands = 1 : i64, tpu.core_type = #tpu.core_type<tc>, window_params = [{transform_indices = @transform_0, window_bounds = array<i64: 16, 128>}, {transform_indices = @transform_1, window_bounds = array<i64: 128, 128>}, {transform_indices = @transform_2, window_bounds = array<i64: 1, 128>}, {transform_indices = @transform_3, window_bounds = array<i64: 16, 128>}]} {
    %c0_i32 = arith.constant 0 : i32
    %0 = arith.cmpi eq, %arg2, %c0_i32 : i32
    %1 = arith.extui %0 : i1 to i32
    %c0_i32_0 = arith.constant 0 : i32
    %2 = arith.cmpi ne, %1, %c0_i32_0 : i32
    scf.if %2 {
      %cst_10 = arith.constant 0.000000e+00 : f32
      %12 = vector.broadcast %cst_10 : f32 to vector<16x128xf32>
      %c0_11 = arith.constant 0 : index
      %c0_12 = arith.constant 0 : index
      %13 = vector.load %arg7[%c0_11, %c0_12] : memref<16x128xf32, #tpu.memory_space<vmem>>, vector<16x128xf32>
      tpu.vector_store %arg7[%c0_11, %c0_12], %12 {strides = array<i32>} : memref<16x128xf32, #tpu.memory_space<vmem>>, vector<16x128xf32>,
    } else {
    }
    %c0 = arith.constant 0 : index
    %c0_1 = arith.constant 0 : index
    %3 = vector.load %arg7[%c0, %c0_1] : memref<16x128xf32, #tpu.memory_space<vmem>>, vector<16x128xf32>
    %c0_2 = arith.constant 0 : index
    %c0_3 = arith.constant 0 : index
    %4 = vector.load %arg3[%c0_2, %c0_3] : memref<16x128xbf16, #tpu.memory_space<vmem>>, vector<16x128xbf16>
    %c0_4 = arith.constant 0 : index
    %c0_5 = arith.constant 0 : index
    %5 = vector.load %arg4[%c0_4, %c0_5] : memref<128x128xbf16, #tpu.memory_space<vmem>>, vector<128x128xbf16>
    %cst = arith.constant dense<0.000000e+00> : vector<16x128xf32>
    %6 = tpu.matmul %4, %5, %cst {dimension_numbers = #tpu.dot_dimension_numbers<[1], [0], [0], [1], [0, 0, 1, 1], [], []>} : vector<16x128xbf16>, vector<128x128xbf16>, vector<16x128xf32> -> vector<16x128xf32>
    %7 = arith.addf %3, %6 : vector<16x128xf32>
    %c0_6 = arith.constant 0 : index
    %c0_7 = arith.constant 0 : index
    %8 = vector.load %arg7[%c0_6, %c0_7] : memref<16x128xf32, #tpu.memory_space<vmem>>, vector<16x128xf32>
    tpu.vector_store %arg7[%c0_6, %c0_7], %7 {strides = array<i32>} : memref<16x128xf32, #tpu.memory_space<vmem>>, vector<16x128xf32>,
    %c0_i32_8 = arith.constant 0 : i32
    %9 = arith.cmpi eq, %arg2, %c0_i32_8 : i32
    %10 = arith.extui %9 : i1 to i32
    %c0_i32_9 = arith.constant 0 : i32
    %11 = arith.cmpi ne, %10, %c0_i32_9 : i32
    scf.if %11 {
      %c0_10 = arith.constant 0 : index
      %c0_11 = arith.constant 0 : index
      %12 = vector.load %arg7[%c0_10, %c0_11] : memref<16x128xf32, #tpu.memory_space<vmem>>, vector<16x128xf32>
      %c0_12 = arith.constant 0 : index
      %c0_13 = arith.constant 0 : index
      %13 = vector.load %arg5[%c0_12, %c0_13] : memref<1x128xf32, #tpu.memory_space<vmem>>, vector<1x128xf32>
      %14 = vector.broadcast %13 : vector<1x128xf32> to vector<16x128xf32>
      %15 = arith.addf %12, %14 : vector<16x128xf32>
      %c0_14 = arith.constant 0 : index
      %c0_15 = arith.constant 0 : index
      %16 = vector.load %arg6[%c0_14, %c0_15] : memref<16x128xf32, #tpu.memory_space<vmem>>, vector<16x128xf32>
      tpu.vector_store %arg6[%c0_14, %c0_15], %15 {strides = array<i32>} : memref<16x128xf32, #tpu.memory_space<vmem>>, vector<16x128xf32>,
    } else {
    }
    return
  }
  func.func @transform_0(%arg0: i32, %arg1: i32, %arg2: i32) -> (i32, i32) {
    %c0_i32 = arith.constant 0 : i32
    return %arg0, %arg2 : i32, i32
  }
  func.func @transform_1(%arg0: i32, %arg1: i32, %arg2: i32) -> (i32, i32) {
    %c0_i32 = arith.constant 0 : i32
    return %arg2, %arg1 : i32, i32
  }
  func.func @transform_2(%arg0: i32, %arg1: i32, %arg2: i32) -> (i32, i32) {
    %c0_i32 = arith.constant 0 : i32
    %c0_i32_0 = arith.constant 0 : i32
    return %c0_i32, %arg1 : i32, i32
  }
  func.func @transform_3(%arg0: i32, %arg1: i32, %arg2: i32) -> (i32, i32) {
    %c0_i32 = arith.constant 0 : i32
    return %arg0, %arg1 : i32, i32
  }
}

</mosaic_0001>

<llo_original>
// kernel: resnet_forward.39
$region0: #{resnet_forward.39}
  #allocation0 [shape = 'u32[]', space=smem, size = 0x4, offset = 0x4, fixed_abs, tag = 'smem constant byte address 0x4 - core index']
  #allocation1 [shape = 'u32[72,128]{1,0:T(1,128)}', space=vmem, size = 0x9000, scoped, tag = 'internal scratch']
  #allocation2 [shape = 'f32[1,16]{1,0:T(1,128)}', space=vmem, size = 0x200, scoped, tag = 'scratch operand']
  #allocation3 [shape = 'f32[1,16]{1,0:T(1,128)}', space=vmem, size = 0x200, scoped, tag = 'scratch operand']
  #allocation4 [shape = 'f32[1,16]{1,0:T(1,128)}', space=vmem, size = 0x200, scoped, tag = 'scratch operand']
  %s0 = inlined_call_operand.vmem [shape: f32[16,32,16], index: 0, kind: input, shape index: {}]
  %s1 = inlined_call_operand.vmem [shape: f32[1,16], index: 1, kind: output, shape index: {0}]
  %s2 = inlined_call_operand.vmem [shape: f32[1,16], index: 2, kind: output, shape index: {1}]
  %3 = xla_tuple %s1, %s2
  %s4 = sld [smem:[#allocation0]]
  $region53: #{resnet_forward.39} parent=0
    _
  %s6 = ssub.s32 1, %s4
  %s7 = scalar_select 0, %s6, %s4
  loop: start=0, step=1, limit=18
  $region2: #{resnet_forward.39} parent=0 // loop_pre_header
    _
  $region3: #{resnet_forward.39} parent=0 // loop_header
    %s9 = sphi 0, %s13
    %p10 = scmp.ge.s32.totalorder %s9, 18
    %s19 = sphi 0, %s21
    %s22 = sphi 0, %s19
    %s23 = sphi 0, %s22
    %s39 = sphi 0, %s23
    %s43 = sphi 0, %s43
    %s45 = sphi 0, %s43
    %s46 = sphi 0, %s45
    %s60 = sphi 0, %s46
    %s64 = sphi 0, %s64
    %s66 = sphi 0, %s64
    %s67 = sphi 0, %s66
    %s81 = sphi 0, %s67
  $region4: #{resnet_forward.39} parent=0 // loop_header_branch
    %12 = sbr.rel (%p10) target = $region8
  $region5: #{resnet_forward.39} parent=0 // loop_body
    %s14 = ssub.s32 %s9, 1
    %s15 = ssub.s32 %s9, 2
    %s16 = sadd.s32 %s9, 1
    %s17 = ssub.s32 %s9, %s16
    %p18 = scmp.eq.s32.totalorder %s17, 0
    %s20 = sadd.s32 %s19, 1
    %s21 = scalar_select %p18, %s19, %s20
    %p24 = pneg %p18
    %p25 = scmp.eq.s32.totalorder %s9, 15
    %p26 = por %p24, %p25
    %p27 = scmp.ne.s32.totalorder %s19, %s22
    %p28 = scmp.eq.s32.totalorder %s9, 0
    %p29 = por %p27, %p28
    %p30 = scmp.ne.s32.totalorder %s19, %s22
    %p31 = scmp.eq.s32.totalorder %s14, 15
    %p32 = por %p30, %p31
    %p33 = scmp.ne.s32.totalorder %s22, %s23
    %p34 = scmp.eq.s32.totalorder %s14, 0
    %p35 = por %p33, %p34
    %p36 = scmp.ne.s32.totalorder %s22, %s23
    %p37 = scmp.eq.s32.totalorder %s15, 15
    %p38 = por %p36, %p37
    %p40 = scmp.ne.s32.totalorder %s23, %s39
    %p41 = scmp.eq.s32.totalorder %s15, 0
    %p42 = por %p40, %p41
    %s44 = sadd.s32 %s43, 1
    %p47 = scmp.eq.s32.totalorder %s9, 15
    %p48 = scmp.ne.s32.totalorder %s43, %s45
    %p49 = scmp.eq.s32.totalorder %s9, 0
    %p50 = por %p48, %p49
    %p51 = scmp.ne.s32.totalorder %s43, %s45
    %p52 = scmp.eq.s32.totalorder %s14, 15
    %p53 = por %p51, %p52
    %p54 = scmp.ne.s32.totalorder %s45, %s46
    %p55 = scmp.eq.s32.totalorder %s14, 0
    %p56 = por %p54, %p55
    %p57 = scmp.ne.s32.totalorder %s45, %s46
    %p58 = scmp.eq.s32.totalorder %s15, 15
    %p59 = por %p57, %p58
    %p61 = scmp.ne.s32.totalorder %s46, %s60
    %p62 = scmp.eq.s32.totalorder %s15, 0
    %p63 = por %p61, %p62
    %s65 = sadd.s32 %s64, 1
    %p68 = scmp.eq.s32.totalorder %s9, 15
    %p69 = scmp.ne.s32.totalorder %s64, %s66
    %p70 = scmp.eq.s32.totalorder %s9, 0
    %p71 = por %p69, %p70
    %p72 = scmp.ne.s32.totalorder %s64, %s66
    %p73 = scmp.eq.s32.totalorder %s14, 15
    %p74 = por %p72, %p73
    %p75 = scmp.ne.s32.totalorder %s66, %s67
    %p76 = scmp.eq.s32.totalorder %s14, 0
    %p77 = por %p75, %p76
    %p78 = scmp.ne.s32.totalorder %s66, %s67
    %p79 = scmp.eq.s32.totalorder %s15, 15
    %p80 = por %p78, %p79
    %p82 = scmp.ne.s32.totalorder %s67, %s81
    %p83 = scmp.eq.s32.totalorder %s15, 0
    %p84 = por %p82, %p83
    %p85 = scmp.le.s32.totalorder 1, %s9
    %p86 = scmp.lt.s32.totalorder %s9, 17
    %p87 = pnand %p85, %p86
    %p88 = pneg %p87
    // Predicated region
    $region9: #{resnet_forward.39} parent=5 // pred_check
      _
    $region10: #{resnet_forward.39} parent=5 // pred_check_branch
      %90 = sbr.rel (%p87) target = $region12
    $region11: #{resnet_forward.39} parent=5 // pred_region
      %s91 = ssub.s32 %s9, 1
    $region12: #{resnet_forward.39} parent=5 // pred_fallthru
      _
    %p92 = scmp.lt.s32.totalorder %s9, 16
    // Predicated region
    $region13: #{resnet_forward.39} parent=5 // pred_check
      %p93 = pneg %p92
    $region14: #{resnet_forward.39} parent=5 // pred_check_branch
      %95 = sbr.rel (%p93) target = $region16
    $region15: #{resnet_forward.39} parent=5 // pred_region
      // Predicated region
      $region17: #{resnet_forward.39} parent=15 // pred_check
        %p96 = pneg %p29
      $region18: #{resnet_forward.39} parent=15 // pred_check_branch
        %98 = sbr.rel (%p96) target = $region20
      $region19: #{resnet_forward.39} parent=15 // pred_region
        %p99 = scmp.lt.s32.totalorder %s9, 15
        %s100 = scalar_select %p99, %s9, 15
        %s101 = smul.addr %s100, 4
        %s102 = smul.addr %s101, 8
        %s103 = scalar_lea.vmem %s0, %s102
      $region20: #{resnet_forward.39} parent=15 // pred_fallthru
        _
    $region16: #{resnet_forward.39} parent=5 // pred_fallthru
      _
    %p104 = scmp.le.s32.totalorder 1, %s9
    %p105 = scmp.lt.s32.totalorder %s9, 17
    %p106 = pnand %p104, %p105
    %p107 = pneg %p106
    // Predicated region
    $region21: #{resnet_forward.39} parent=5 // pred_check
      _
    $region22: #{resnet_forward.39} parent=5 // pred_check_branch
      %109 = sbr.rel (%p106) target = $region24
    $region23: #{resnet_forward.39} parent=5 // pred_region
      %s110 = ssub.s32 %s9, 1
      %p111 = scmp.lt.s32.totalorder %s14, 15
      %s112 = scalar_select %p111, %s14, 15
      %s113 = smul.addr %s112, 4
      %s114 = smul.addr %s113, 8
      %s115 = scalar_lea.vmem %s0, %s114
      %p116 = pneg %p35
      %p117 = pneg %p32
      %p118 = pneg %p56
      %p119 = pneg %p53
      %p120 = pneg %p77
      %p121 = pneg %p74
      %p122 = scmp.lt.s32.totalorder %s14, 15
      %s123 = scalar_select %p122, %s14, 15
      %s124 = smul.addr %s123, 4
      %s125 = smul.addr %s124, 8
      %s126 = scalar_lea.vmem %s0, %s125
      %v127 = vld [vmem:[%s126] sm:$0xff]
      %v128 = vld [vmem:[%s126 + $0x8] sm:$0xff]
      %v129 = vld [vmem:[%s126 + $0x10] sm:$0xff]
      %v130 = vld [vmem:[%s126 + $0x18] sm:$0xff]
      %vm131 = vcmask 130048
      %v132 = vsel %vm131, %v127, 0.0
      %v133 = vsel %vm131, %v128, 0.0
      %v134 = vadd.f32 %v132, %v133
      %v135 = vsel %vm131, %v129, 0.0
      %v136 = vadd.f32 %v134, %v135
      %v137 = vsel %vm131, %v130, 0.0
      %v138 = vadd.f32 %v136, %v137
      %v139 = vrot.slane %v138, 4
      %v140 = vadd.f32 %v138, %v139
      %v141 = vrot.slane %v140, 2
      %v142 = vadd.f32 %v140, %v141
      %v143 = vrot.slane %v142, 1
      %v144 = vadd.f32 %v142, %v143
      %v145 = vsel %vm131, %v127, -inf
      %v146 = vsel %vm131, %v128, -inf
      %v147 = vsel %vm131, %v129, -inf
      %v148 = vsel %vm131, %v130, -inf
      %v149 = vmax.f32 %v145, %v146
      %v150 = vmax.f32 %v147, %v148
      %v151 = vmax.f32 %v149, %v150
      %v152 = vrot.slane %v151, 4
      %v153 = vmax.f32 %v151, %v152
      %v154 = vrot.slane %v153, 2
      %v155 = vmax.f32 %v153, %v154
      %v156 = vrot.slane %v155, 1
      %v157 = vmax.f32 %v155, %v156
      %v158 = vsel %vm131, %v127, inf
      %v159 = vsel %vm131, %v128, inf
      %v160 = vsel %vm131, %v129, inf
      %v161 = vsel %vm131, %v130, inf
      %v162 = vmin.f32 %v158, %v159
      %v163 = vmin.f32 %v160, %v161
      %v164 = vmin.f32 %v162, %v163
      %v165 = vrot.slane %v164, 4
      %v166 = vmin.f32 %v164, %v165
      %v167 = vrot.slane %v166, 2
      %v168 = vmin.f32 %v166, %v167
      %v169 = vrot.slane %v168, 1
      %v170 = vmin.f32 %v168, %v169
      %p171 = scmp.eq.s32.totalorder %s14, 0
      // Predicated region
      $region25: #{resnet_forward.39} parent=23 // pred_check
        %p172 = pneg %p171
      $region26: #{resnet_forward.39} parent=23 // pred_check_branch
        %174 = sbr.rel (%p172) target = $region28
      $region27: #{resnet_forward.39} parent=23 // pred_region
        %vm175 = vcmask 122880
        %176 = vst.msk [vmem:[#allocation2] sm:$0x1] %vm175, 0.0
        %177 = vst.msk [vmem:[#allocation3] sm:$0x1] %vm175, 0.0
        %178 = vst.msk [vmem:[#allocation4] sm:$0x1] %vm175, 0.0
      $region28: #{resnet_forward.39} parent=23 // pred_fallthru
        _
      %v179 = vld [vmem:[#allocation2] sm:$0x1]
      %v180 = vadd.f32 %v179, %v144
      %vm181 = vcmask 122880
      %182 = vst.msk [vmem:[#allocation2] sm:$0x1] %vm181, %v180
      %v183 = vld [vmem:[#allocation3] sm:$0x1]
      %v184 = vadd.f32 %v183, %v157
      %185 = vst.msk [vmem:[#allocation3] sm:$0x1] %vm181, %v184
      %v186 = vld [vmem:[#allocation4] sm:$0x1]
      %v187 = vadd.f32 %v186, %v170
      %188 = vst.msk [vmem:[#allocation4] sm:$0x1] %vm181, %v187
      %p189 = scmp.eq.s32.totalorder %s14, 15
      // Predicated region
      $region29: #{resnet_forward.39} parent=23 // pred_check
        %p190 = pneg %p189
      $region30: #{resnet_forward.39} parent=23 // pred_check_branch
        %192 = sbr.rel (%p190) target = $region32
      $region31: #{resnet_forward.39} parent=23 // pred_region
        %v193 = vld [vmem:[#allocation2] sm:$0x1]
        %v194 = vrcp.pop 512.0
        %v195 = vmul.f32 512.0, %v194
        %v196 = vsub.f32 1.0, %v195
        %v197 = vmul.f32 %v194, %v196
        %v198 = vadd.f32 %v194, %v197
        %vm199 = vweird.f32 %v194
        %v200 = vsel %vm199, %v194, %v198
        %v201 = vmul.f32 %v193, %v200
        %202 = vst.msk [vmem:[%s1] sm:$0x1] %vm181, %v201
        %v203 = vld [vmem:[#allocation3] sm:$0x1]
        %v204 = vld [vmem:[#allocation4] sm:$0x1]
        %v205 = vsub.f32 %v203, %v204
        %v206 = vrcp.pop 16.0
        %v207 = vmul.f32 16.0, %v206
        %v208 = vsub.f32 1.0, %v207
        %v209 = vmul.f32 %v206, %v208
        %v210 = vadd.f32 %v206, %v209
        %vm211 = vweird.f32 %v206
        %v212 = vsel %vm211, %v206, %v210
        %v213 = vmul.f32 %v205, %v212
        %v214 = vmul.f32 %v213, 0.2051864
        %v215 = vadd.f32 %v214, 1e-05
        %v216 = vrcp.pop %v215
        %v217 = vmul.f32 %v215, %v216
        %v218 = vsub.f32 1.0, %v217
        %v219 = vmul.f32 %v216, %v218
        %v220 = vadd.f32 %v216, %v219
        %vm221 = vweird.f32 %v215
        %vm222 = vweird.f32 %v216
        %vm223 = vmor %vm221, %vm222
        %v224 = vsel %vm223, %v216, %v220
        %v225 = vand.u32 2147483647, %v215
        %vm226 = vcmp.eq.f32.partialorder %v225, 8.507059e+37
        %v227 = vand.u32 %v215, 2147483648
        %v228 = vor.u32 1.1754944e-38, %v227
        %v229 = vsel %vm226, %v228, %v224
        %v230 = vmul.f32 1.0, %v229
        %231 = vst.msk [vmem:[%s2] sm:$0x1] %vm181, %v230
      $region32: #{resnet_forward.39} parent=23 // pred_fallthru
        _
      // Predicated region
      $region33: #{resnet_forward.39} parent=23 // pred_check
        %p232 = pneg %p53
      $region34: #{resnet_forward.39} parent=23 // pred_check_branch
        %234 = sbr.rel (%p232) target = $region36
      $region35: #{resnet_forward.39} parent=23 // pred_region
        _
      $region36: #{resnet_forward.39} parent=23 // pred_fallthru
        _
      // Predicated region
      $region37: #{resnet_forward.39} parent=23 // pred_check
        %p235 = pneg %p74
      $region38: #{resnet_forward.39} parent=23 // pred_check_branch
        %237 = sbr.rel (%p235) target = $region40
      $region39: #{resnet_forward.39} parent=23 // pred_region
        _
      $region40: #{resnet_forward.39} parent=23 // pred_fallthru
        _
      // Predicated region
      $region41: #{resnet_forward.39} parent=23 // pred_check
        %p238 = pneg %p53
      $region42: #{resnet_forward.39} parent=23 // pred_check_branch
        %240 = sbr.rel (%p238) target = $region44
      $region43: #{resnet_forward.39} parent=23 // pred_region
        _
      $region44: #{resnet_forward.39} parent=23 // pred_fallthru
        _
      // Predicated region
      $region45: #{resnet_forward.39} parent=23 // pred_check
        %p241 = pneg %p74
      $region46: #{resnet_forward.39} parent=23 // pred_check_branch
        %243 = sbr.rel (%p241) target = $region48
      $region47: #{resnet_forward.39} parent=23 // pred_region
        _
      $region48: #{resnet_forward.39} parent=23 // pred_fallthru
        _
    $region24: #{resnet_forward.39} parent=5 // pred_fallthru
      _
    %p244 = scmp.le.s32.totalorder 2, %s9
    // Predicated region
    $region49: #{resnet_forward.39} parent=5 // pred_check
      %p245 = pneg %p244
    $region50: #{resnet_forward.39} parent=5 // pred_check_branch
      %247 = sbr.rel (%p245) target = $region52
    $region51: #{resnet_forward.39} parent=5 // pred_region
      %s248 = ssub.s32 %s9, 2
    $region52: #{resnet_forward.39} parent=5 // pred_fallthru
      _
  $region6: #{resnet_forward.39} parent=0 // loop_footer
    %s13 = sadd.s32 1, %s9
  $region7: #{resnet_forward.39} parent=0 // loop_footer_branch
    %8 = sbr.rel target = $region3
  $region8: #{resnet_forward.39} parent=0 // loop_exit
    _

// kernel: resnet_forward.40
$region0: #{resnet_forward.40}
  #allocation0 [shape = 'u32[]', space=smem, size = 0x4, offset = 0x4, fixed_abs, tag = 'smem constant byte address 0x4 - core index']
  #allocation1 [shape = 'u32[72,128]{1,0:T(1,128)}', space=vmem, size = 0x9000, scoped, tag = 'internal scratch']
  %s0 = inlined_call_operand.vmem [shape: f32[64,128], index: 0, kind: input, shape index: {}]
  %s1 = inlined_call_operand.vmem [shape: f32[1,128], index: 1, kind: input, shape index: {}]
  %s2 = inlined_call_operand.vmem [shape: f32[1,128], index: 2, kind: input, shape index: {}]
  %s3 = inlined_call_operand.vmem [shape: f32[1,128], index: 3, kind: input, shape index: {}]
  %s4 = inlined_call_operand.vmem [shape: f32[1,128], index: 4, kind: input, shape index: {}]
  %s5 = inlined_call_operand.vmem [shape: f32[64,128], index: 5, kind: output, shape index: {}]
  %s6 = sld [smem:[#allocation0]]
  $region30: #{resnet_forward.40} parent=0
    _
  %s8 = ssub.s32 1, %s6
  %s9 = scalar_select 0, %s8, %s6
  // Predicated region
  $region2: #{resnet_forward.40} parent=0 // pred_check
    _
  $region3: #{resnet_forward.40} parent=0 // pred_check_branch
    %11 = sbr.rel (0) target = $region5
  $region4: #{resnet_forward.40} parent=0 // pred_region
    _
  $region5: #{resnet_forward.40} parent=0 // pred_fallthru
    _
  // Predicated region
  $region6: #{resnet_forward.40} parent=0 // pred_check
    _
  $region7: #{resnet_forward.40} parent=0 // pred_check_branch
    %13 = sbr.rel (0) target = $region9
  $region8: #{resnet_forward.40} parent=0 // pred_region
    _
  $region9: #{resnet_forward.40} parent=0 // pred_fallthru
    _
  // Predicated region
  $region10: #{resnet_forward.40} parent=0 // pred_check
    _
  $region11: #{resnet_forward.40} parent=0 // pred_check_branch
    %15 = sbr.rel (0) target = $region13
  $region12: #{resnet_forward.40} parent=0 // pred_region
    _
  $region13: #{resnet_forward.40} parent=0 // pred_fallthru
    _
  // Predicated region
  $region14: #{resnet_forward.40} parent=0 // pred_check
    _
  $region15: #{resnet_forward.40} parent=0 // pred_check_branch
    %17 = sbr.rel (0) target = $region17
  $region16: #{resnet_forward.40} parent=0 // pred_region
    _
  $region17: #{resnet_forward.40} parent=0 // pred_fallthru
    _
  // Predicated region
  $region18: #{resnet_forward.40} parent=0 // pred_check
    _
  $region19: #{resnet_forward.40} parent=0 // pred_check_branch
    %19 = sbr.rel (0) target = $region21
  $region20: #{resnet_forward.40} parent=0 // pred_region
    _
  $region21: #{resnet_forward.40} parent=0 // pred_fallthru
    _
  %v20 = vld [vmem:[%s0] sm:$0xff]
  %v21 = vld [vmem:[%s0 + $0x8] sm:$0xff]
  %v22 = vld [vmem:[%s0 + $0x10] sm:$0xff]
  %v23 = vld [vmem:[%s0 + $0x18] sm:$0xff]
  %v24 = vld [vmem:[%s0 + $0x20] sm:$0xff]
  %v25 = vld [vmem:[%s0 + $0x28] sm:$0xff]
  %v26 = vld [vmem:[%s0 + $0x30] sm:$0xff]
  %v27 = vld [vmem:[%s0 + $0x38] sm:$0xff]
  %v28 = vld [vmem:[%s1] sm:$0x1]
  %v30 = vperm.slane %v28, 0
  %v32 = vsub.f32 %v20, %v30
  %v33 = vsub.f32 %v21, %v30
  %v34 = vsub.f32 %v22, %v30
  %v35 = vsub.f32 %v23, %v30
  %v36 = vsub.f32 %v24, %v30
  %v37 = vsub.f32 %v25, %v30
  %v38 = vsub.f32 %v26, %v30
  %v39 = vsub.f32 %v27, %v30
  %v40 = vld [vmem:[%s2] sm:$0x1]
  %v41 = vld [vmem:[%s3] sm:$0x1]
  %v42 = vmul.f32 %v40, %v41
  %v44 = vperm.slane %v42, 0
  %v46 = vmul.f32 %v32, %v44
  %v47 = vmul.f32 %v33, %v44
  %v48 = vmul.f32 %v34, %v44
  %v49 = vmul.f32 %v35, %v44
  %v50 = vmul.f32 %v36, %v44
  %v51 = vmul.f32 %v37, %v44
  %v52 = vmul.f32 %v38, %v44
  %v53 = vmul.f32 %v39, %v44
  %v54 = vld [vmem:[%s4] sm:$0x1]
  %v56 = vperm.slane %v54, 0
  %v58 = vadd.f32 %v46, %v56
  %v59 = vadd.f32 %v47, %v56
  %v60 = vadd.f32 %v48, %v56
  %v61 = vadd.f32 %v49, %v56
  %v62 = vadd.f32 %v50, %v56
  %v63 = vadd.f32 %v51, %v56
  %v64 = vadd.f32 %v52, %v56
  %v65 = vadd.f32 %v53, %v56
  %v66 = vmax.f32 %v58, 0.0
  %v67 = vmax.f32 %v59, 0.0
  %v68 = vmax.f32 %v60, 0.0
  %v69 = vmax.f32 %v61, 0.0
  %v70 = vmax.f32 %v62, 0.0
  %v71 = vmax.f32 %v63, 0.0
  %v72 = vmax.f32 %v64, 0.0
  %v73 = vmax.f32 %v65, 0.0
  %74 = vst [vmem:[%s5] sm:$0xff] %v66
  %75 = vst [vmem:[%s5 + $0x8] sm:$0xff] %v67
  %76 = vst [vmem:[%s5 + $0x10] sm:$0xff] %v68
  %77 = vst [vmem:[%s5 + $0x18] sm:$0xff] %v69
  %78 = vst [vmem:[%s5 + $0x20] sm:$0xff] %v70
  %79 = vst [vmem:[%s5 + $0x28] sm:$0xff] %v71
  %80 = vst [vmem:[%s5 + $0x30] sm:$0xff] %v72
  %81 = vst [vmem:[%s5 + $0x38] sm:$0xff] %v73
  // Predicated region
  $region22: #{resnet_forward.40} parent=0 // pred_check
    _
  $region23: #{resnet_forward.40} parent=0 // pred_check_branch
    %83 = sbr.rel (0) target = $region25
  $region24: #{resnet_forward.40} parent=0 // pred_region
    _
  $region25: #{resnet_forward.40} parent=0 // pred_fallthru
    _
  // Predicated region
  $region26: #{resnet_forward.40} parent=0 // pred_check
    _
  $region27: #{resnet_forward.40} parent=0 // pred_check_branch
    %85 = sbr.rel (0) target = $region29
  $region28: #{resnet_forward.40} parent=0 // pred_region
    _
  $region29: #{resnet_forward.40} parent=0 // pred_fallthru
    _

// kernel: resnet_forward.38
$region0: #{resnet_forward.38}
  #allocation0 [shape = 'u32[]', space=smem, size = 0x4, offset = 0x4, fixed_abs, tag = 'smem constant byte address 0x4 - core index']
  #allocation1 [shape = 'u32[72,128]{1,0:T(1,128)}', space=vmem, size = 0x9000, scoped, tag = 'internal scratch']
  #allocation2 [shape = 'f32[256,128]{1,0:T(8,128)}', space=vmem, size = 0x20000, scoped, tag = 'scratch operand']
  %s0 = inlined_call_operand.vmem [shape: bf16[512,256], index: 0, kind: input, shape index: {}]
  %s1 = inlined_call_operand.vmem [shape: bf16[256,128], index: 1, kind: input, shape index: {}]
  %s2 = inlined_call_operand.vmem [shape: f32[512,128], index: 2, kind: output, shape index: {}]
  %s3 = sld [smem:[#allocation0]]
  $region49: #{resnet_forward.38} parent=0
    _
  %s5 = ssub.s32 1, %s3
  %s6 = scalar_select 0, %s5, %s3
  loop: start=0, step=1, limit=4
  $region2: #{resnet_forward.38} parent=0 // loop_pre_header
    _
  $region3: #{resnet_forward.38} parent=0 // loop_header
    %s8 = sphi 0, %s12
    %p9 = scmp.ge.s32.totalorder %s8, 4
    %s15 = sphi 0, %s34
    %s16 = sphi 0, %s30
    %s17 = sphi 0, %s26
    %s18 = sphi 0, %s15
    %s19 = sphi 0, %s16
    %s20 = sphi 0, %s17
    %s21 = sphi 0, %s18
    %s22 = sphi 0, %s19
    %s23 = sphi 0, %s20
    %s39 = sphi 0, %s41
    %s42 = sphi 0, %s39
    %s43 = sphi 0, %s42
    %s59 = sphi 0, %s43
    %s67 = sphi 0, %s69
    %s70 = sphi 0, %s67
    %s71 = sphi 0, %s70
    %s87 = sphi 0, %s71
    %s95 = sphi 0, %s97
    %s98 = sphi 0, %s95
    %s99 = sphi 0, %s98
    %s115 = sphi 0, %s99
  $region4: #{resnet_forward.38} parent=0 // loop_header_branch
    %11 = sbr.rel (%p9) target = $region8
  $region5: #{resnet_forward.38} parent=0 // loop_body
    %s13 = ssub.s32 %s8, 1
    %s14 = ssub.s32 %s8, 2
    %s24 = sadd.s32 1, %s17
    %p25 = scmp.ge.s32.totalorder %s24, 1
    %s26 = scalar_select %p25, 0, %s24
    %s27 = sadd.s32 1, %s16
    %s28 = scalar_select %p25, %s27, %s16
    %p29 = scmp.ge.s32.totalorder %s28, 1
    %s30 = scalar_select %p29, 0, %s28
    %s31 = sadd.s32 1, %s15
    %s32 = scalar_select %p29, %s31, %s15
    %p33 = scmp.ge.s32.totalorder %s32, 2
    %s34 = scalar_select %p33, 0, %s32
    %s35 = ssub.s32 %s15, %s34
    %s36 = ssub.s32 %s17, %s26
    %s37 = sor.u32 %s35, %s36
    %p38 = scmp.eq.s32.totalorder %s37, 0
    %s40 = sadd.s32 %s39, 1
    %s41 = scalar_select %p38, %s39, %s40
    %p44 = pneg %p38
    %p45 = scmp.eq.s32.totalorder %s8, 1
    %p46 = por %p44, %p45
    %p47 = scmp.ne.s32.totalorder %s39, %s42
    %p48 = scmp.eq.s32.totalorder %s8, 0
    %p49 = por %p47, %p48
    %p50 = scmp.ne.s32.totalorder %s39, %s42
    %p51 = scmp.eq.s32.totalorder %s13, 1
    %p52 = por %p50, %p51
    %p53 = scmp.ne.s32.totalorder %s42, %s43
    %p54 = scmp.eq.s32.totalorder %s13, 0
    %p55 = por %p53, %p54
    %p56 = scmp.ne.s32.totalorder %s42, %s43
    %p57 = scmp.eq.s32.totalorder %s14, 1
    %p58 = por %p56, %p57
    %p60 = scmp.ne.s32.totalorder %s43, %s59
    %p61 = scmp.eq.s32.totalorder %s14, 0
    %p62 = por %p60, %p61
    %s63 = ssub.s32 %s17, %s26
    %s64 = ssub.s32 %s16, %s30
    %s65 = sor.u32 %s63, %s64
    %p66 = scmp.eq.s32.totalorder %s65, 0
    %s68 = sadd.s32 %s67, 1
    %s69 = scalar_select %p66, %s67, %s68
    %p72 = pneg %p66
    %p73 = scmp.eq.s32.totalorder %s8, 1
    %p74 = por %p72, %p73
    %p75 = scmp.ne.s32.totalorder %s67, %s70
    %p76 = scmp.eq.s32.totalorder %s8, 0
    %p77 = por %p75, %p76
    %p78 = scmp.ne.s32.totalorder %s67, %s70
    %p79 = scmp.eq.s32.totalorder %s13, 1
    %p80 = por %p78, %p79
    %p81 = scmp.ne.s32.totalorder %s70, %s71
    %p82 = scmp.eq.s32.totalorder %s13, 0
    %p83 = por %p81, %p82
    %p84 = scmp.ne.s32.totalorder %s70, %s71
    %p85 = scmp.eq.s32.totalorder %s14, 1
    %p86 = por %p84, %p85
    %p88 = scmp.ne.s32.totalorder %s71, %s87
    %p89 = scmp.eq.s32.totalorder %s14, 0
    %p90 = por %p88, %p89
    %s91 = ssub.s32 %s15, %s34
    %s92 = ssub.s32 %s16, %s30
    %s93 = sor.u32 %s91, %s92
    %p94 = scmp.eq.s32.totalorder %s93, 0
    %s96 = sadd.s32 %s95, 1
    %s97 = scalar_select %p94, %s95, %s96
    %p100 = pneg %p94
    %p101 = scmp.eq.s32.totalorder %s8, 1
    %p102 = por %p100, %p101
    %p103 = scmp.ne.s32.totalorder %s95, %s98
    %p104 = scmp.eq.s32.totalorder %s8, 0
    %p105 = por %p103, %p104
    %p106 = scmp.ne.s32.totalorder %s95, %s98
    %p107 = scmp.eq.s32.totalorder %s13, 1
    %p108 = por %p106, %p107
    %p109 = scmp.ne.s32.totalorder %s98, %s99
    %p110 = scmp.eq.s32.totalorder %s13, 0
    %p111 = por %p109, %p110
    %p112 = scmp.ne.s32.totalorder %s98, %s99
    %p113 = scmp.eq.s32.totalorder %s14, 1
    %p114 = por %p112, %p113
    %p116 = scmp.ne.s32.totalorder %s99, %s115
    %p117 = scmp.eq.s32.totalorder %s14, 0
    %p118 = por %p116, %p117
    %p119 = scmp.le.s32.totalorder 1, %s8
    %p120 = scmp.lt.s32.totalorder %s8, 3
    %p121 = pnand %p119, %p120
    %p122 = pneg %p121
    // Predicated region
    $region9: #{resnet_forward.38} parent=5 // pred_check
      _
    $region10: #{resnet_forward.38} parent=5 // pred_check_branch
      %124 = sbr.rel (%p121) target = $region12
    $region11: #{resnet_forward.38} parent=5 // pred_region
      %s125 = ssub.s32 %s8, 1
      // Predicated region
      $region13: #{resnet_forward.38} parent=11 // pred_check
        %p126 = pneg %p83
      $region14: #{resnet_forward.38} parent=11 // pred_check_branch
        %128 = sbr.rel (%p126) target = $region16
      $region15: #{resnet_forward.38} parent=11 // pred_region
        %s129 = smul.u32 32, %s20
        %p130 = scmp.lt.s32.totalorder %s129, 31
        %s131 = scalar_select %p130, %s129, 31
        %p132 = scmp.lt.s32.totalorder %s19, 0
        %s133 = scalar_select %p132, %s19, 0
        %s134 = sadd.s32 %s133, %s131
        %s135 = smul.addr %s134, 4
        %s136 = scalar_lea.vmem %s1, %s135
        %s137 = smul.u32 32, %s20
      $region16: #{resnet_forward.38} parent=11 // pred_fallthru
        _
    $region12: #{resnet_forward.38} parent=5 // pred_fallthru
      _
    %p138 = scmp.lt.s32.totalorder %s8, 2
    // Predicated region
    $region17: #{resnet_forward.38} parent=5 // pred_check
      %p139 = pneg %p138
    $region18: #{resnet_forward.38} parent=5 // pred_check_branch
      %141 = sbr.rel (%p139) target = $region20
    $region19: #{resnet_forward.38} parent=5 // pred_region
      // Predicated region
      $region21: #{resnet_forward.38} parent=19 // pred_check
        %p142 = pneg %p49
      $region22: #{resnet_forward.38} parent=19 // pred_check_branch
        %144 = sbr.rel (%p142) target = $region24
      $region23: #{resnet_forward.38} parent=19 // pred_region
        %s145 = smul.u32 32, %s15
        %s146 = smul.u32 2, %s17
        %p147 = scmp.lt.s32.totalorder %s145, 63
        %s148 = scalar_select %p147, %s145, 63
        %p149 = scmp.lt.s32.totalorder %s146, 1
        %s150 = scalar_select %p149, %s146, 1
        %s151 = smul.addr %s148, 2
        %s152 = sadd.s32 %s150, %s151
        %s153 = smul.addr %s152, 4
        %s154 = scalar_lea.vmem %s0, %s153
        %s155 = smul.u32 32, %s15
        %s156 = smul.u32 2, %s17
      $region24: #{resnet_forward.38} parent=19 // pred_fallthru
        _
    $region20: #{resnet_forward.38} parent=5 // pred_fallthru
      _
    %p157 = scmp.le.s32.totalorder 1, %s8
    %p158 = scmp.lt.s32.totalorder %s8, 3
    %p159 = pnand %p157, %p158
    %p160 = pneg %p159
    // Predicated region
    $region25: #{resnet_forward.38} parent=5 // pred_check
      _
    $region26: #{resnet_forward.38} parent=5 // pred_check_branch
      %162 = sbr.rel (%p159) target = $region28
    $region27: #{resnet_forward.38} parent=5 // pred_region
      %s163 = ssub.s32 %s8, 1
      %s164 = smul.u32 32, %s18
      %s165 = smul.u32 2, %s20
      %p166 = scmp.lt.s32.totalorder %s164, 63
      %s167 = scalar_select %p166, %s164, 63
      %p168 = scmp.lt.s32.totalorder %s165, 1
      %s169 = scalar_select %p168, %s165, 1
      %s170 = smul.addr %s167, 2
      %s171 = sadd.s32 %s169, %s170
      %s172 = smul.addr %s171, 4
      %s173 = scalar_lea.vmem %s0, %s172
      %p174 = pneg %p55
      %p175 = pneg %p52
      %s176 = smul.u32 32, %s20
      %p177 = scmp.lt.s32.totalorder %s176, 31
      %s178 = scalar_select %p177, %s176, 31
      %p179 = scmp.lt.s32.totalorder %s19, 0
      %s180 = scalar_select %p179, %s19, 0
      %s181 = sadd.s32 %s180, %s178
      %s182 = smul.addr %s181, 4
      %s183 = scalar_lea.vmem %s1, %s182
      %p184 = pneg %p83
      %p185 = pneg %p80
      %p186 = pneg %p111
      %p187 = pneg %p108
      %s188 = smul.u32 32, %s18
      %p189 = scmp.lt.s32.totalorder %s188, 63
      %s190 = scalar_select %p189, %s188, 63
      %p191 = scmp.lt.s32.totalorder %s19, 0
      %s192 = scalar_select %p191, %s19, 0
      %s193 = sadd.s32 %s192, %s190
      %s194 = smul.addr %s193, 8
      %s195 = scalar_lea.vmem %s2, %s194
      %s196 = smul.u32 32, %s18
      %s197 = smul.u32 2, %s20
      %p198 = scmp.lt.s32.totalorder %s196, 63
      %s199 = scalar_select %p198, %s196, 63
      %p200 = scmp.lt.s32.totalorder %s197, 1
      %s201 = scalar_select %p200, %s197, 1
      %s202 = smul.addr %s199, 2
      %s203 = sadd.s32 %s201, %s202
      %s204 = smul.addr %s203, 4
      %s205 = scalar_lea.vmem %s0, %s204
      %s206 = smul.u32 32, %s18
      %s207 = smul.u32 2, %s20
      %s208 = smul.u32 32, %s20
      %p209 = scmp.lt.s32.totalorder %s208, 31
      %s210 = scalar_select %p209, %s208, 31
      %p211 = scmp.lt.s32.totalorder %s19, 0
      %s212 = scalar_select %p211, %s19, 0
      %s213 = sadd.s32 %s212, %s210
      %s214 = smul.addr %s213, 4
      %s215 = scalar_lea.vmem %s1, %s214
      %s216 = smul.u32 32, %s20
      %s217 = smul.u32 32, %s18
      %p218 = scmp.lt.s32.totalorder %s217, 63
      %s219 = scalar_select %p218, %s217, 63
      %p220 = scmp.lt.s32.totalorder %s19, 0
      %s221 = scalar_select %p220, %s19, 0
      %s222 = sadd.s32 %s221, %s219
      %s223 = smul.addr %s222, 8
      %s224 = scalar_lea.vmem %s2, %s223
      %s225 = smul.u32 32, %s18
      %p226 = scmp.eq.s32.totalorder %s20, 0
      // Predicated region
      $region29: #{resnet_forward.38} parent=27 // pred_check
        %p227 = pneg %p226
      $region30: #{resnet_forward.38} parent=27 // pred_check_branch
        %229 = sbr.rel (%p227) target = $region32
      $region31: #{resnet_forward.38} parent=27 // pred_region
        %230 = vst [vmem:[#allocation2] sm:$0xff] 0.0
        %231 = vst [vmem:[#allocation2 + $0x8] sm:$0xff] 0.0
        %232 = vst [vmem:[#allocation2 + $0x10] sm:$0xff] 0.0
        %233 = vst [vmem:[#allocation2 + $0x18] sm:$0xff] 0.0
        %234 = vst [vmem:[#allocation2 + $0x20] sm:$0xff] 0.0
        %235 = vst [vmem:[#allocation2 + $0x28] sm:$0xff] 0.0
        %236 = vst [vmem:[#allocation2 + $0x30] sm:$0xff] 0.0
        %237 = vst [vmem:[#allocation2 + $0x38] sm:$0xff] 0.0
        %238 = vst [vmem:[#allocation2 + $0x40] sm:$0xff] 0.0
        %239 = vst [vmem:[#allocation2 + $0x48] sm:$0xff] 0.0
        %240 = vst [vmem:[#allocation2 + $0x50] sm:$0xff] 0.0
        %241 = vst [vmem:[#allocation2 + $0x58] sm:$0xff] 0.0
        %242 = vst [vmem:[#allocation2 + $0x60] sm:$0xff] 0.0
        %243 = vst [vmem:[#allocation2 + $0x68] sm:$0xff] 0.0
        %244 = vst [vmem:[#allocation2 + $0x70] sm:$0xff] 0.0
        %245 = vst [vmem:[#allocation2 + $0x78] sm:$0xff] 0.0
        %246 = vst [vmem:[#allocation2 + $0x80] sm:$0xff] 0.0
        %247 = vst [vmem:[#allocation2 + $0x88] sm:$0xff] 0.0
        %248 = vst [vmem:[#allocation2 + $0x90] sm:$0xff] 0.0
        %249 = vst [vmem:[#allocation2 + $0x98] sm:$0xff] 0.0
        %250 = vst [vmem:[#allocation2 + $0xa0] sm:$0xff] 0.0
        %251 = vst [vmem:[#allocation2 + $0xa8] sm:$0xff] 0.0
        %252 = vst [vmem:[#allocation2 + $0xb0] sm:$0xff] 0.0
        %253 = vst [vmem:[#allocation2 + $0xb8] sm:$0xff] 0.0
        %254 = vst [vmem:[#allocation2 + $0xc0] sm:$0xff] 0.0
        %255 = vst [vmem:[#allocation2 + $0xc8] sm:$0xff] 0.0
        %256 = vst [vmem:[#allocation2 + $0xd0] sm:$0xff] 0.0
        %257 = vst [vmem:[#allocation2 + $0xd8] sm:$0xff] 0.0
        %258 = vst [vmem:[#allocation2 + $0xe0] sm:$0xff] 0.0
        %259 = vst [vmem:[#allocation2 + $0xe8] sm:$0xff] 0.0
        %260 = vst [vmem:[#allocation2 + $0xf0] sm:$0xff] 0.0
        %261 = vst [vmem:[#allocation2 + $0xf8] sm:$0xff] 0.0
      $region32: #{resnet_forward.38} parent=27 // pred_fallthru
        _
      %v262 = vld [vmem:[#allocation2] sm:$0xff]
      %v263 = vld [vmem:[#allocation2 + $0x8] sm:$0xff]
      %v264 = vld [vmem:[#allocation2 + $0x10] sm:$0xff]
      %v265 = vld [vmem:[#allocation2 + $0x18] sm:$0xff]
      %v266 = vld [vmem:[#allocation2 + $0x20] sm:$0xff]
      %v267 = vld [vmem:[#allocation2 + $0x28] sm:$0xff]
      %v268 = vld [vmem:[#allocation2 + $0x30] sm:$0xff]
      %v269 = vld [vmem:[#allocation2 + $0x38] sm:$0xff]
      %v270 = vld [vmem:[#allocation2 + $0x40] sm:$0xff]
      %v271 = vld [vmem:[#allocation2 + $0x48] sm:$0xff]
      %v272 = vld [vmem:[#allocation2 + $0x50] sm:$0xff]
      %v273 = vld [vmem:[#allocation2 + $0x58] sm:$0xff]
      %v274 = vld [vmem:[#allocation2 + $0x60] sm:$0xff]
      %v275 = vld [vmem:[#allocation2 + $0x68] sm:$0xff]
      %v276 = vld [vmem:[#allocation2 + $0x70] sm:$0xff]
      %v277 = vld [vmem:[#allocation2 + $0x78] sm:$0xff]
      %v278 = vld [vmem:[#allocation2 + $0x80] sm:$0xff]
      %v279 = vld [vmem:[#allocation2 + $0x88] sm:$0xff]
      %v280 = vld [vmem:[#allocation2 + $0x90] sm:$0xff]
      %v281 = vld [vmem:[#allocation2 + $0x98] sm:$0xff]
      %v282 = vld [vmem:[#allocation2 + $0xa0] sm:$0xff]
      %v283 = vld [vmem:[#allocation2 + $0xa8] sm:$0xff]
      %v284 = vld [vmem:[#allocation2 + $0xb0] sm:$0xff]
      %v285 = vld [vmem:[#allocation2 + $0xb8] sm:$0xff]
      %v286 = vld [vmem:[#allocation2 + $0xc0] sm:$0xff]
      %v287 = vld [vmem:[#allocation2 + $0xc8] sm:$0xff]
      %v288 = vld [vmem:[#allocation2 + $0xd0] sm:$0xff]
      %v289 = vld [vmem:[#allocation2 + $0xd8] sm:$0xff]
      %v290 = vld [vmem:[#allocation2 + $0xe0] sm:$0xff]
      %v291 = vld [vmem:[#allocation2 + $0xe8] sm:$0xff]
      %v292 = vld [vmem:[#allocation2 + $0xf0] sm:$0xff]
      %v293 = vld [vmem:[#allocation2 + $0xf8] sm:$0xff]
      %v294 = vld [vmem:[%s205] sm:$0xff]
      %v295 = vld [vmem:[%s205 + $0x8] sm:$0xff]
      %v296 = vld [vmem:[%s205 + $0x10] sm:$0xff]
      %v297 = vld [vmem:[%s205 + $0x18] sm:$0xff]
      %v298 = vld [vmem:[%s205 + $0x20] sm:$0xff]
      %v299 = vld [vmem:[%s205 + $0x28] sm:$0xff]
      %v300 = vld [vmem:[%s205 + $0x30] sm:$0xff]
      %v301 = vld [vmem:[%s205 + $0x38] sm:$0xff]
      %v302 = vld [vmem:[%s205 + $0x40] sm:$0xff]
      %v303 = vld [vmem:[%s205 + $0x48] sm:$0xff]
      %v304 = vld [vmem:[%s205 + $0x50] sm:$0xff]
      %v305 = vld [vmem:[%s205 + $0x58] sm:$0xff]
      %v306 = vld [vmem:[%s205 + $0x60] sm:$0xff]
      %v307 = vld [vmem:[%s205 + $0x68] sm:$0xff]
      %v308 = vld [vmem:[%s205 + $0x70] sm:$0xff]
      %v309 = vld [vmem:[%s205 + $0x78] sm:$0xff]
      %v310 = vld [vmem:[%s205 + $0x80] sm:$0xff]
      %v311 = vld [vmem:[%s205 + $0x88] sm:$0xff]
      %v312 = vld [vmem:[%s205 + $0x90] sm:$0xff]
      %v313 = vld [vmem:[%s205 + $0x98] sm:$0xff]
      %v314 = vld [vmem:[%s205 + $0xa0] sm:$0xff]
      %v315 = vld [vmem:[%s205 + $0xa8] sm:$0xff]
      %v316 = vld [vmem:[%s205 + $0xb0] sm:$0xff]
      %v317 = vld [vmem:[%s205 + $0xb8] sm:$0xff]
      %v318 = vld [vmem:[%s205 + $0xc0] sm:$0xff]
      %v319 = vld [vmem:[%s205 + $0xc8] sm:$0xff]
      %v320 = vld [vmem:[%s205 + $0xd0] sm:$0xff]
      %v321 = vld [vmem:[%s205 + $0xd8] sm:$0xff]
      %v322 = vld [vmem:[%s205 + $0xe0] sm:$0xff]
      %v323 = vld [vmem:[%s205 + $0xe8] sm:$0xff]
      %v324 = vld [vmem:[%s205 + $0xf0] sm:$0xff]
      %v325 = vld [vmem:[%s205 + $0xf8] sm:$0xff]
      %v326 = vld [vmem:[%s215] sm:$0xf]
      %v327 = vld [vmem:[%s215 + $0x4] sm:$0xf]
      %v328 = vld [vmem:[%s215 + $0x8] sm:$0xf]
      %v329 = vld [vmem:[%s215 + $0xc] sm:$0xf]
      %v330 = vld [vmem:[%s215 + $0x10] sm:$0xf]
      %v331 = vld [vmem:[%s215 + $0x14] sm:$0xf]
      %v332 = vld [vmem:[%s215 + $0x18] sm:$0xf]
      %v333 = vld [vmem:[%s215 + $0x1c] sm:$0xf]
      %v334 = vld [vmem:[%s215 + $0x20] sm:$0xf]
      %v335 = vld [vmem:[%s215 + $0x24] sm:$0xf]
      %v336 = vld [vmem:[%s215 + $0x28] sm:$0xf]
      %v337 = vld [vmem:[%s215 + $0x2c] sm:$0xf]
      %v338 = vld [vmem:[%s215 + $0x30] sm:$0xf]
      %v339 = vld [vmem:[%s215 + $0x34] sm:$0xf]
      %v340 = vld [vmem:[%s215 + $0x38] sm:$0xf]
      %v341 = vld [vmem:[%s215 + $0x3c] sm:$0xf]
      %v342 = vld [vmem:[%s215 + $0x40] sm:$0xf]
      %v343 = vld [vmem:[%s215 + $0x44] sm:$0xf]
      %v344 = vld [vmem:[%s215 + $0x48] sm:$0xf]
      %v345 = vld [vmem:[%s215 + $0x4c] sm:$0xf]
      %v346 = vld [vmem:[%s215 + $0x50] sm:$0xf]
      %v347 = vld [vmem:[%s215 + $0x54] sm:$0xf]
      %v348 = vld [vmem:[%s215 + $0x58] sm:$0xf]
      %v349 = vld [vmem:[%s215 + $0x5c] sm:$0xf]
      %v350 = vld [vmem:[%s215 + $0x60] sm:$0xf]
      %v351 = vld [vmem:[%s215 + $0x64] sm:$0xf]
      %v352 = vld [vmem:[%s215 + $0x68] sm:$0xf]
      %v353 = vld [vmem:[%s215 + $0x6c] sm:$0xf]
      %v354 = vld [vmem:[%s215 + $0x70] sm:$0xf]
      %v355 = vld [vmem:[%s215 + $0x74] sm:$0xf]
      %v356 = vld [vmem:[%s215 + $0x78] sm:$0xf]
      %v357 = vld [vmem:[%s215 + $0x7c] sm:$0xf]
      %v390 = vunpack.c.l.b16 %v294
      %v391 = vunpack.c.h.b16 %v294
      %v392 = vunpack.c.l.b16 %v295
      %v393 = vunpack.c.h.b16 %v295
      %v394 = vunpack.c.l.b16 %v296
      %v395 = vunpack.c.h.b16 %v296
      %v396 = vunpack.c.l.b16 %v297
      %v397 = vunpack.c.h.b16 %v297
      %v398 = vunpack.c.l.b16 %v298
      %v399 = vunpack.c.h.b16 %v298
      %v400 = vunpack.c.l.b16 %v299
      %v401 = vunpack.c.h.b16 %v299
      %v402 = vunpack.c.l.b16 %v300
      %v403 = vunpack.c.h.b16 %v300
      %v404 = vunpack.c.l.b16 %v301
      %v405 = vunpack.c.h.b16 %v301
      %v406 = vunpack.c.l.b16 %v302
      %v407 = vunpack.c.h.b16 %v302
      %v408 = vunpack.c.l.b16 %v303
      %v409 = vunpack.c.h.b16 %v303
      %v410 = vunpack.c.l.b16 %v304
      %v411 = vunpack.c.h.b16 %v304
      %v412 = vunpack.c.l.b16 %v305
      %v413 = vunpack.c.h.b16 %v305
      %v414 = vunpack.c.l.b16 %v306
      %v415 = vunpack.c.h.b16 %v306
      %v416 = vunpack.c.l.b16 %v307
      %v417 = vunpack.c.h.b16 %v307
      %v418 = vunpack.c.l.b16 %v308
      %v419 = vunpack.c.h.b16 %v308
      %v420 = vunpack.c.l.b16 %v309
      %v421 = vunpack.c.h.b16 %v309
      %v422 = vunpack.c.l.b16 %v310
      %v423 = vunpack.c.h.b16 %v310
      %v424 = vunpack.c.l.b16 %v311
      %v425 = vunpack.c.h.b16 %v311
      %v426 = vunpack.c.l.b16 %v312
      %v427 = vunpack.c.h.b16 %v312
      %v428 = vunpack.c.l.b16 %v313
      %v429 = vunpack.c.h.b16 %v313
      %v430 = vunpack.c.l.b16 %v314
      %v431 = vunpack.c.h.b16 %v314
      %v432 = vunpack.c.l.b16 %v315
      %v433 = vunpack.c.h.b16 %v315
      %v434 = vunpack.c.l.b16 %v316
      %v435 = vunpack.c.h.b16 %v316
      %v436 = vunpack.c.l.b16 %v317
      %v437 = vunpack.c.h.b16 %v317
      %v438 = vunpack.c.l.b16 %v318
      %v439 = vunpack.c.h.b16 %v318
      %v440 = vunpack.c.l.b16 %v319
      %v441 = vunpack.c.h.b16 %v319
      %v442 = vunpack.c.l.b16 %v320
      %v443 = vunpack.c.h.b16 %v320
      %v444 = vunpack.c.l.b16 %v321
      %v445 = vunpack.c.h.b16 %v321
      %v446 = vunpack.c.l.b16 %v322
      %v447 = vunpack.c.h.b16 %v322
      %v448 = vunpack.c.l.b16 %v323
      %v449 = vunpack.c.h.b16 %v323
      %v450 = vunpack.c.l.b16 %v324
      %v451 = vunpack.c.h.b16 %v324
      %v452 = vunpack.c.l.b16 %v325
      %v453 = vunpack.c.h.b16 %v325
      %v454 = vpack.c.b16 %v392, %v390
      %v455 = vpack.c.b16 %v393, %v391
      %v456 = vpack.c.b16 %v396, %v394
      %v457 = vpack.c.b16 %v397, %v395
      %v458 = vpack.c.b16 %v400, %v398
      %v459 = vpack.c.b16 %v401, %v399
      %v460 = vpack.c.b16 %v404, %v402
      %v461 = vpack.c.b16 %v405, %v403
      %v462 = vpack.c.b16 %v408, %v406
      %v463 = vpack.c.b16 %v409, %v407
      %v464 = vpack.c.b16 %v412, %v410
      %v465 = vpack.c.b16 %v413, %v411
      %v466 = vpack.c.b16 %v416, %v414
      %v467 = vpack.c.b16 %v417, %v415
      %v468 = vpack.c.b16 %v420, %v418
      %v469 = vpack.c.b16 %v421, %v419
      %v470 = vpack.c.b16 %v424, %v422
      %v471 = vpack.c.b16 %v425, %v423
      %v472 = vpack.c.b16 %v428, %v426
      %v473 = vpack.c.b16 %v429, %v427
      %v474 = vpack.c.b16 %v432, %v430
      %v475 = vpack.c.b16 %v433, %v431
      %v476 = vpack.c.b16 %v436, %v434
      %v477 = vpack.c.b16 %v437, %v435
      %v478 = vpack.c.b16 %v440, %v438
      %v479 = vpack.c.b16 %v441, %v439
      %v480 = vpack.c.b16 %v444, %v442
      %v481 = vpack.c.b16 %v445, %v443
      %v482 = vpack.c.b16 %v448, %v446
      %v483 = vpack.c.b16 %v449, %v447
      %v484 = vpack.c.b16 %v452, %v450
      %v485 = vpack.c.b16 %v453, %v451
      %v550 = vunpack.c.l.b16 %v326
      %v551 = vunpack.c.l.b16 %v327
      %v552 = vunpack.c.l.b16 %v328
      %v553 = vunpack.c.l.b16 %v329
      %v554 = vunpack.c.l.b16 %v330
      %v555 = vunpack.c.l.b16 %v331
      %v556 = vunpack.c.l.b16 %v332
      %v557 = vunpack.c.l.b16 %v333
      %v558 = vunpack.c.l.b16 %v334
      %v559 = vunpack.c.l.b16 %v335
      %v560 = vunpack.c.l.b16 %v336
      %v561 = vunpack.c.l.b16 %v337
      %v562 = vunpack.c.l.b16 %v338
      %v563 = vunpack.c.l.b16 %v339
      %v564 = vunpack.c.l.b16 %v340
      %v565 = vunpack.c.l.b16 %v341
      %v566 = vunpack.c.l.b16 %v342
      %v567 = vunpack.c.l.b16 %v343
      %v568 = vunpack.c.l.b16 %v344
      %v569 = vunpack.c.l.b16 %v345
      %v570 = vunpack.c.l.b16 %v346
      %v571 = vunpack.c.l.b16 %v347
      %v572 = vunpack.c.l.b16 %v348
      %v573 = vunpack.c.l.b16 %v349
      %v574 = vunpack.c.l.b16 %v350
      %v575 = vunpack.c.l.b16 %v351
      %v576 = vunpack.c.l.b16 %v352
      %v577 = vunpack.c.l.b16 %v353
      %v578 = vunpack.c.l.b16 %v354
      %v579 = vunpack.c.l.b16 %v355
      %v580 = vunpack.c.l.b16 %v356
      %v581 = vunpack.c.l.b16 %v357
      %v582 = vpack.c.b16 %v551, %v550
      %v583 = vpack.c.b16 %v553, %v552
      %v584 = vpack.c.b16 %v555, %v554
      %v585 = vpack.c.b16 %v557, %v556
      %v586 = vpack.c.b16 %v559, %v558
      %v587 = vpack.c.b16 %v561, %v560
      %v588 = vpack.c.b16 %v563, %v562
      %v589 = vpack.c.b16 %v565, %v564
      %v590 = vpack.c.b16 %v567, %v566
      %v591 = vpack.c.b16 %v569, %v568
      %v592 = vpack.c.b16 %v571, %v570
      %v593 = vpack.c.b16 %v573, %v572
      %v594 = vpack.c.b16 %v575, %v574
      %v595 = vpack.c.b16 %v577, %v576
      %v596 = vpack.c.b16 %v579, %v578
      %v597 = vpack.c.b16 %v581, %v580
      %614 = vmatpush.bf16.msra.mxu0 %v589
      %615 = vmatpush.bf16.msra.mxu0 %v588
      %616 = vmatpush.bf16.msra.mxu0 %v587
      %617 = vmatpush.bf16.msra.mxu0 %v586
      %618 = vmatpush.bf16.msra.mxu0 %v585
      %619 = vmatpush.bf16.msra.mxu0 %v584
      %620 = vmatpush.bf16.msra.mxu0 %v583
      %621 = vmatpush.bf16.msra.mxu0 %v582
      %622 = vmatmul.bf16.gmra.mxu0 %v454
      %v623 = vpop.f32.mrf.mxu0
      %v624 = vadd.f32 0.0, %v623
      %v625 = vpop.f32.mrf.mxu0
      %v626 = vadd.f32 0.0, %v625
      %627 = vmatmul.bf16.gmra.mxu0 %v456
      %v628 = vpop.f32.mrf.mxu0
      %v629 = vadd.f32 0.0, %v628
      %v630 = vpop.f32.mrf.mxu0
      %v631 = vadd.f32 0.0, %v630
      %632 = vmatmul.bf16.gmra.mxu0 %v458
      %v633 = vpop.f32.mrf.mxu0
      %v634 = vadd.f32 0.0, %v633
      %v635 = vpop.f32.mrf.mxu0
      %v636 = vadd.f32 0.0, %v635
      %637 = vmatmul.bf16.gmra.mxu0 %v460
      %v638 = vpop.f32.mrf.mxu0
      %v639 = vadd.f32 0.0, %v638
      %v640 = vpop.f32.mrf.mxu0
      %v641 = vadd.f32 0.0, %v640
      %642 = vmatmul.bf16.gmra.mxu0 %v462
      %v643 = vpop.f32.mrf.mxu0
      %v644 = vadd.f32 0.0, %v643
      %v645 = vpop.f32.mrf.mxu0
      %v646 = vadd.f32 0.0, %v645
      %647 = vmatmul.bf16.gmra.mxu0 %v464
      %v648 = vpop.f32.mrf.mxu0
      %v649 = vadd.f32 0.0, %v648
      %v650 = vpop.f32.mrf.mxu0
      %v651 = vadd.f32 0.0, %v650
      %652 = vmatmul.bf16.gmra.mxu0 %v466
      %v653 = vpop.f32.mrf.mxu0
      %v654 = vadd.f32 0.0, %v653
      %v655 = vpop.f32.mrf.mxu0
      %v656 = vadd.f32 0.0, %v655
      %657 = vmatmul.bf16.gmra.mxu0 %v468
      %v658 = vpop.f32.mrf.mxu0
      %v659 = vadd.f32 0.0, %v658
      %v660 = vpop.f32.mrf.mxu0
      %v661 = vadd.f32 0.0, %v660
      %662 = vmatmul.bf16.gmra.mxu0 %v470
      %v663 = vpop.f32.mrf.mxu0
      %v664 = vadd.f32 0.0, %v663
      %v665 = vpop.f32.mrf.mxu0
      %v666 = vadd.f32 0.0, %v665
      %667 = vmatmul.bf16.gmra.mxu0 %v472
      %v668 = vpop.f32.mrf.mxu0
      %v669 = vadd.f32 0.0, %v668
      %v670 = vpop.f32.mrf.mxu0
      %v671 = vadd.f32 0.0, %v670
      %672 = vmatmul.bf16.gmra.mxu0 %v474
      %v673 = vpop.f32.mrf.mxu0
      %v674 = vadd.f32 0.0, %v673
      %v675 = vpop.f32.mrf.mxu0
      %v676 = vadd.f32 0.0, %v675
      %677 = vmatmul.bf16.gmra.mxu0 %v476
      %v678 = vpop.f32.mrf.mxu0
      %v679 = vadd.f32 0.0, %v678
      %v680 = vpop.f32.mrf.mxu0
      %v681 = vadd.f32 0.0, %v680
      %682 = vmatmul.bf16.gmra.mxu0 %v478
      %v683 = vpop.f32.mrf.mxu0
      %v684 = vadd.f32 0.0, %v683
      %v685 = vpop.f32.mrf.mxu0
      %v686 = vadd.f32 0.0, %v685
      %687 = vmatmul.bf16.gmra.mxu0 %v480
      %v688 = vpop.f32.mrf.mxu0
      %v689 = vadd.f32 0.0, %v688
      %v690 = vpop.f32.mrf.mxu0
      %v691 = vadd.f32 0.0, %v690
      %692 = vmatmul.bf16.gmra.mxu0 %v482
      %v693 = vpop.f32.mrf.mxu0
      %v694 = vadd.f32 0.0, %v693
      %v695 = vpop.f32.mrf.mxu0
      %v696 = vadd.f32 0.0, %v695
      %697 = vmatmul.bf16.gmra.mxu0 %v484
      %v698 = vpop.f32.mrf.mxu0
      %v699 = vadd.f32 0.0, %v698
      %v700 = vpop.f32.mrf.mxu0
      %v701 = vadd.f32 0.0, %v700
      %702 = vdwg.mxu0
      %703 = vmatpush.bf16.msra.mxu0 %v597
      %704 = vmatpush.bf16.msra.mxu0 %v596
      %705 = vmatpush.bf16.msra.mxu0 %v595
      %706 = vmatpush.bf16.msra.mxu0 %v594
      %707 = vmatpush.bf16.msra.mxu0 %v593
      %708 = vmatpush.bf16.msra.mxu0 %v592
      %709 = vmatpush.bf16.msra.mxu0 %v591
      %710 = vmatpush.bf16.msra.mxu0 %v590
      %711 = vmatmul.bf16.gmra.mxu0 %v455
      %v712 = vpop.f32.mrf.mxu0
      %v713 = vadd.f32 %v624, %v712
      %v714 = vpop.f32.mrf.mxu0
      %v715 = vadd.f32 %v626, %v714
      %716 = vmatmul.bf16.gmra.mxu0 %v457
      %v717 = vpop.f32.mrf.mxu0
      %v718 = vadd.f32 %v629, %v717
      %v719 = vpop.f32.mrf.mxu0
      %v720 = vadd.f32 %v631, %v719
      %721 = vmatmul.bf16.gmra.mxu0 %v459
      %v722 = vpop.f32.mrf.mxu0
      %v723 = vadd.f32 %v634, %v722
      %v724 = vpop.f32.mrf.mxu0
      %v725 = vadd.f32 %v636, %v724
      %726 = vmatmul.bf16.gmra.mxu0 %v461
      %v727 = vpop.f32.mrf.mxu0
      %v728 = vadd.f32 %v639, %v727
      %v729 = vpop.f32.mrf.mxu0
      %v730 = vadd.f32 %v641, %v729
      %731 = vmatmul.bf16.gmra.mxu0 %v463
      %v732 = vpop.f32.mrf.mxu0
      %v733 = vadd.f32 %v644, %v732
      %v734 = vpop.f32.mrf.mxu0
      %v735 = vadd.f32 %v646, %v734
      %736 = vmatmul.bf16.gmra.mxu0 %v465
      %v737 = vpop.f32.mrf.mxu0
      %v738 = vadd.f32 %v649, %v737
      %v739 = vpop.f32.mrf.mxu0
      %v740 = vadd.f32 %v651, %v739
      %741 = vmatmul.bf16.gmra.mxu0 %v467
      %v742 = vpop.f32.mrf.mxu0
      %v743 = vadd.f32 %v654, %v742
      %v744 = vpop.f32.mrf.mxu0
      %v745 = vadd.f32 %v656, %v744
      %746 = vmatmul.bf16.gmra.mxu0 %v469
      %v747 = vpop.f32.mrf.mxu0
      %v748 = vadd.f32 %v659, %v747
      %v749 = vpop.f32.mrf.mxu0
      %v750 = vadd.f32 %v661, %v749
      %751 = vmatmul.bf16.gmra.mxu0 %v471
      %v752 = vpop.f32.mrf.mxu0
      %v753 = vadd.f32 %v664, %v752
      %v754 = vpop.f32.mrf.mxu0
      %v755 = vadd.f32 %v666, %v754
      %756 = vmatmul.bf16.gmra.mxu0 %v473
      %v757 = vpop.f32.mrf.mxu0
      %v758 = vadd.f32 %v669, %v757
      %v759 = vpop.f32.mrf.mxu0
      %v760 = vadd.f32 %v671, %v759
      %761 = vmatmul.bf16.gmra.mxu0 %v475
      %v762 = vpop.f32.mrf.mxu0
      %v763 = vadd.f32 %v674, %v762
      %v764 = vpop.f32.mrf.mxu0
      %v765 = vadd.f32 %v676, %v764
      %766 = vmatmul.bf16.gmra.mxu0 %v477
      %v767 = vpop.f32.mrf.mxu0
      %v768 = vadd.f32 %v679, %v767
      %v769 = vpop.f32.mrf.mxu0
      %v770 = vadd.f32 %v681, %v769
      %771 = vmatmul.bf16.gmra.mxu0 %v479
      %v772 = vpop.f32.mrf.mxu0
      %v773 = vadd.f32 %v684, %v772
      %v774 = vpop.f32.mrf.mxu0
      %v775 = vadd.f32 %v686, %v774
      %776 = vmatmul.bf16.gmra.mxu0 %v481
      %v777 = vpop.f32.mrf.mxu0
      %v778 = vadd.f32 %v689, %v777
      %v779 = vpop.f32.mrf.mxu0
      %v780 = vadd.f32 %v691, %v779
      %781 = vmatmul.bf16.gmra.mxu0 %v483
      %v782 = vpop.f32.mrf.mxu0
      %v783 = vadd.f32 %v694, %v782
      %v784 = vpop.f32.mrf.mxu0
      %v785 = vadd.f32 %v696, %v784
      %786 = vmatmul.bf16.gmra.mxu0 %v485
      %v787 = vpop.f32.mrf.mxu0
      %v788 = vadd.f32 %v699, %v787
      %v789 = vpop.f32.mrf.mxu0
      %v790 = vadd.f32 %v701, %v789
      %791 = vdwg.mxu0
      %v792 = vadd.f32 %v262, %v713
      %v793 = vadd.f32 %v263, %v715
      %v794 = vadd.f32 %v264, %v718
      %v795 = vadd.f32 %v265, %v720
      %v796 = vadd.f32 %v266, %v723
      %v797 = vadd.f32 %v267, %v725
      %v798 = vadd.f32 %v268, %v728
      %v799 = vadd.f32 %v269, %v730
      %v800 = vadd.f32 %v270, %v733
      %v801 = vadd.f32 %v271, %v735
      %v802 = vadd.f32 %v272, %v738
      %v803 = vadd.f32 %v273, %v740
      %v804 = vadd.f32 %v274, %v743
      %v805 = vadd.f32 %v275, %v745
      %v806 = vadd.f32 %v276, %v748
      %v807 = vadd.f32 %v277, %v750
      %v808 = vadd.f32 %v278, %v753
      %v809 = vadd.f32 %v279, %v755
      %v810 = vadd.f32 %v280, %v758
      %v811 = vadd.f32 %v281, %v760
      %v812 = vadd.f32 %v282, %v763
      %v813 = vadd.f32 %v283, %v765
      %v814 = vadd.f32 %v284, %v768
      %v815 = vadd.f32 %v285, %v770
      %v816 = vadd.f32 %v286, %v773
      %v817 = vadd.f32 %v287, %v775
      %v818 = vadd.f32 %v288, %v778
      %v819 = vadd.f32 %v289, %v780
      %v820 = vadd.f32 %v290, %v783
      %v821 = vadd.f32 %v291, %v785
      %v822 = vadd.f32 %v292, %v788
      %v823 = vadd.f32 %v293, %v790
      %824 = vst [vmem:[#allocation2] sm:$0xff] %v792
      %825 = vst [vmem:[#allocation2 + $0x8] sm:$0xff] %v793
      %826 = vst [vmem:[#allocation2 + $0x10] sm:$0xff] %v794
      %827 = vst [vmem:[#allocation2 + $0x18] sm:$0xff] %v795
      %828 = vst [vmem:[#allocation2 + $0x20] sm:$0xff] %v796
      %829 = vst [vmem:[#allocation2 + $0x28] sm:$0xff] %v797
      %830 = vst [vmem:[#allocation2 + $0x30] sm:$0xff] %v798
      %831 = vst [vmem:[#allocation2 + $0x38] sm:$0xff] %v799
      %832 = vst [vmem:[#allocation2 + $0x40] sm:$0xff] %v800
      %833 = vst [vmem:[#allocation2 + $0x48] sm:$0xff] %v801
      %834 = vst [vmem:[#allocation2 + $0x50] sm:$0xff] %v802
      %835 = vst [vmem:[#allocation2 + $0x58] sm:$0xff] %v803
      %836 = vst [vmem:[#allocation2 + $0x60] sm:$0xff] %v804
      %837 = vst [vmem:[#allocation2 + $0x68] sm:$0xff] %v805
      %838 = vst [vmem:[#allocation2 + $0x70] sm:$0xff] %v806
      %839 = vst [vmem:[#allocation2 + $0x78] sm:$0xff] %v807
      %840 = vst [vmem:[#allocation2 + $0x80] sm:$0xff] %v808
      %841 = vst [vmem:[#allocation2 + $0x88] sm:$0xff] %v809
      %842 = vst [vmem:[#allocation2 + $0x90] sm:$0xff] %v810
      %843 = vst [vmem:[#allocation2 + $0x98] sm:$0xff] %v811
      %844 = vst [vmem:[#allocation2 + $0xa0] sm:$0xff] %v812
      %845 = vst [vmem:[#allocation2 + $0xa8] sm:$0xff] %v813
      %846 = vst [vmem:[#allocation2 + $0xb0] sm:$0xff] %v814
      %847 = vst [vmem:[#allocation2 + $0xb8] sm:$0xff] %v815
      %848 = vst [vmem:[#allocation2 + $0xc0] sm:$0xff] %v816
      %849 = vst [vmem:[#allocation2 + $0xc8] sm:$0xff] %v817
      %850 = vst [vmem:[#allocation2 + $0xd0] sm:$0xff] %v818
      %851 = vst [vmem:[#allocation2 + $0xd8] sm:$0xff] %v819
      %852 = vst [vmem:[#allocation2 + $0xe0] sm:$0xff] %v820
      %853 = vst [vmem:[#allocation2 + $0xe8] sm:$0xff] %v821
      %854 = vst [vmem:[#allocation2 + $0xf0] sm:$0xff] %v822
      %855 = vst [vmem:[#allocation2 + $0xf8] sm:$0xff] %v823
      // Predicated region
      $region33: #{resnet_forward.38} parent=27 // pred_check
        %p856 = pneg %p226
      $region34: #{resnet_forward.38} parent=27 // pred_check_branch
        %858 = sbr.rel (%p856) target = $region36
      $region35: #{resnet_forward.38} parent=27 // pred_region
        %v859 = vld [vmem:[#allocation2] sm:$0xff]
        %v860 = vld [vmem:[#allocation2 + $0x8] sm:$0xff]
        %v861 = vld [vmem:[#allocation2 + $0x10] sm:$0xff]
        %v862 = vld [vmem:[#allocation2 + $0x18] sm:$0xff]
        %v863 = vld [vmem:[#allocation2 + $0x20] sm:$0xff]
        %v864 = vld [vmem:[#allocation2 + $0x28] sm:$0xff]
        %v865 = vld [vmem:[#allocation2 + $0x30] sm:$0xff]
        %v866 = vld [vmem:[#allocation2 + $0x38] sm:$0xff]
        %v867 = vld [vmem:[#allocation2 + $0x40] sm:$0xff]
        %v868 = vld [vmem:[#allocation2 + $0x48] sm:$0xff]
        %v869 = vld [vmem:[#allocation2 + $0x50] sm:$0xff]
        %v870 = vld [vmem:[#allocation2 + $0x58] sm:$0xff]
        %v871 = vld [vmem:[#allocation2 + $0x60] sm:$0xff]
        %v872 = vld [vmem:[#allocation2 + $0x68] sm:$0xff]
        %v873 = vld [vmem:[#allocation2 + $0x70] sm:$0xff]
        %v874 = vld [vmem:[#allocation2 + $0x78] sm:$0xff]
        %v875 = vld [vmem:[#allocation2 + $0x80] sm:$0xff]
        %v876 = vld [vmem:[#allocation2 + $0x88] sm:$0xff]
        %v877 = vld [vmem:[#allocation2 + $0x90] sm:$0xff]
        %v878 = vld [vmem:[#allocation2 + $0x98] sm:$0xff]
        %v879 = vld [vmem:[#allocation2 + $0xa0] sm:$0xff]
        %v880 = vld [vmem:[#allocation2 + $0xa8] sm:$0xff]
        %v881 = vld [vmem:[#allocation2 + $0xb0] sm:$0xff]
        %v882 = vld [vmem:[#allocation2 + $0xb8] sm:$0xff]
        %v883 = vld [vmem:[#allocation2 + $0xc0] sm:$0xff]
        %v884 = vld [vmem:[#allocation2 + $0xc8] sm:$0xff]
        %v885 = vld [vmem:[#allocation2 + $0xd0] sm:$0xff]
        %v886 = vld [vmem:[#allocation2 + $0xd8] sm:$0xff]
        %v887 = vld [vmem:[#allocation2 + $0xe0] sm:$0xff]
        %v888 = vld [vmem:[#allocation2 + $0xe8] sm:$0xff]
        %v889 = vld [vmem:[#allocation2 + $0xf0] sm:$0xff]
        %v890 = vld [vmem:[#allocation2 + $0xf8] sm:$0xff]
        %891 = vst [vmem:[%s224] sm:$0xff] %v859
        %892 = vst [vmem:[%s224 + $0x8] sm:$0xff] %v860
        %893 = vst [vmem:[%s224 + $0x10] sm:$0xff] %v861
        %894 = vst [vmem:[%s224 + $0x18] sm:$0xff] %v862
        %895 = vst [vmem:[%s224 + $0x20] sm:$0xff] %v863
        %896 = vst [vmem:[%s224 + $0x28] sm:$0xff] %v864
        %897 = vst [vmem:[%s224 + $0x30] sm:$0xff] %v865
        %898 = vst [vmem:[%s224 + $0x38] sm:$0xff] %v866
        %899 = vst [vmem:[%s224 + $0x40] sm:$0xff] %v867
        %900 = vst [vmem:[%s224 + $0x48] sm:$0xff] %v868
        %901 = vst [vmem:[%s224 + $0x50] sm:$0xff] %v869
        %902 = vst [vmem:[%s224 + $0x58] sm:$0xff] %v870
        %903 = vst [vmem:[%s224 + $0x60] sm:$0xff] %v871
        %904 = vst [vmem:[%s224 + $0x68] sm:$0xff] %v872
        %905 = vst [vmem:[%s224 + $0x70] sm:$0xff] %v873
        %906 = vst [vmem:[%s224 + $0x78] sm:$0xff] %v874
        %907 = vst [vmem:[%s224 + $0x80] sm:$0xff] %v875
        %908 = vst [vmem:[%s224 + $0x88] sm:$0xff] %v876
        %909 = vst [vmem:[%s224 + $0x90] sm:$0xff] %v877
        %910 = vst [vmem:[%s224 + $0x98] sm:$0xff] %v878
        %911 = vst [vmem:[%s224 + $0xa0] sm:$0xff] %v879
        %912 = vst [vmem:[%s224 + $0xa8] sm:$0xff] %v880
        %913 = vst [vmem:[%s224 + $0xb0] sm:$0xff] %v881
        %914 = vst [vmem:[%s224 + $0xb8] sm:$0xff] %v882
        %915 = vst [vmem:[%s224 + $0xc0] sm:$0xff] %v883
        %916 = vst [vmem:[%s224 + $0xc8] sm:$0xff] %v884
        %917 = vst [vmem:[%s224 + $0xd0] sm:$0xff] %v885
        %918 = vst [vmem:[%s224 + $0xd8] sm:$0xff] %v886
        %919 = vst [vmem:[%s224 + $0xe0] sm:$0xff] %v887
        %920 = vst [vmem:[%s224 + $0xe8] sm:$0xff] %v888
        %921 = vst [vmem:[%s224 + $0xf0] sm:$0xff] %v889
        %922 = vst [vmem:[%s224 + $0xf8] sm:$0xff] %v890
      $region36: #{resnet_forward.38} parent=27 // pred_fallthru
        _
      %s923 = smul.u32 32, %s18
      %p924 = scmp.lt.s32.totalorder %s923, 63
      %s925 = scalar_select %p924, %s923, 63
      %p926 = scmp.lt.s32.totalorder %s19, 0
      %s927 = scalar_select %p926, %s19, 0
      %s928 = sadd.s32 %s927, %s925
      %s929 = smul.addr %s928, 8
      %s930 = scalar_lea.vmem %s2, %s929
      // Predicated region
      $region37: #{resnet_forward.38} parent=27 // pred_check
        %p931 = pneg %p108
      $region38: #{resnet_forward.38} parent=27 // pred_check_branch
        %933 = sbr.rel (%p931) target = $region40
      $region39: #{resnet_forward.38} parent=27 // pred_region
        %s934 = smul.u32 32, %s18
      $region40: #{resnet_forward.38} parent=27 // pred_fallthru
        _
    $region28: #{resnet_forward.38} parent=5 // pred_fallthru
      _
    %p935 = scmp.le.s32.totalorder 2, %s8
    // Predicated region
    $region41: #{resnet_forward.38} parent=5 // pred_check
      %p936 = pneg %p935
    $region42: #{resnet_forward.38} parent=5 // pred_check_branch
      %938 = sbr.rel (%p936) target = $region44
    $region43: #{resnet_forward.38} parent=5 // pred_region
      %s939 = ssub.s32 %s8, 2
      // Predicated region
      $region45: #{resnet_forward.38} parent=43 // pred_check
        %p940 = pneg %p114
      $region46: #{resnet_forward.38} parent=43 // pred_check_branch
        %942 = sbr.rel (%p940) target = $region48
      $region47: #{resnet_forward.38} parent=43 // pred_region
        %s943 = smul.u32 32, %s21
        %p944 = scmp.lt.s32.totalorder %s943, 63
        %s945 = scalar_select %p944, %s943, 63
        %p946 = scmp.lt.s32.totalorder %s22, 0
        %s947 = scalar_select %p946, %s22, 0
        %s948 = sadd.s32 %s947, %s945
        %s949 = smul.addr %s948, 8
        %s950 = scalar_lea.vmem %s2, %s949
      $region48: #{resnet_forward.38} parent=43 // pred_fallthru
        _
    $region44: #{resnet_forward.38} parent=5 // pred_fallthru
      _
  $region6: #{resnet_forward.38} parent=0 // loop_footer
    %s12 = sadd.s32 1, %s8
  $region7: #{resnet_forward.38} parent=0 // loop_footer_branch
    %7 = sbr.rel target = $region3
  $region8: #{resnet_forward.38} parent=0 // loop_exit
    _

// kernel: resnet_forward.41
$region0: #{resnet_forward.41}
  #allocation0 [shape = 'u32[]', space=smem, size = 0x4, offset = 0x4, fixed_abs, tag = 'smem constant byte address 0x4 - core index']
  #allocation1 [shape = 'u32[72,128]{1,0:T(1,128)}', space=vmem, size = 0x9000, scoped, tag = 'internal scratch']
  %s0 = inlined_call_operand.vmem [shape: f32[16,128], index: 0, kind: input, shape index: {}]
  %s1 = inlined_call_operand.vmem [shape: f32[16,128], index: 1, kind: input, shape index: {}]
  %s2 = inlined_call_operand.vmem [shape: f32[16,128], index: 2, kind: input, shape index: {}]
  %s3 = inlined_call_operand.vmem [shape: f32[16,128], index: 3, kind: input, shape index: {}]
  %s4 = inlined_call_operand.vmem [shape: f32[16,128], index: 4, kind: input, shape index: {}]
  %s5 = inlined_call_operand.vmem [shape: f32[16,128], index: 5, kind: input, shape index: {}]
  %s6 = inlined_call_operand.vmem [shape: f32[16,128], index: 6, kind: input, shape index: {}]
  %s7 = inlined_call_operand.vmem [shape: f32[16,128], index: 7, kind: input, shape index: {}]
  %s8 = inlined_call_operand.vmem [shape: f32[16,128], index: 8, kind: input, shape index: {}]
  %s9 = inlined_call_operand.vmem [shape: f32[16,128], index: 9, kind: output, shape index: {}]
  %s10 = sld [smem:[#allocation0]]
  $region46: #{resnet_forward.41} parent=0
    _
  %s12 = ssub.s32 1, %s10
  %s13 = scalar_select 0, %s12, %s10
  // Predicated region
  $region2: #{resnet_forward.41} parent=0 // pred_check
    _
  $region3: #{resnet_forward.41} parent=0 // pred_check_branch
    %15 = sbr.rel (0) target = $region5
  $region4: #{resnet_forward.41} parent=0 // pred_region
    _
  $region5: #{resnet_forward.41} parent=0 // pred_fallthru
    _
  // Predicated region
  $region6: #{resnet_forward.41} parent=0 // pred_check
    _
  $region7: #{resnet_forward.41} parent=0 // pred_check_branch
    %17 = sbr.rel (0) target = $region9
  $region8: #{resnet_forward.41} parent=0 // pred_region
    _
  $region9: #{resnet_forward.41} parent=0 // pred_fallthru
    _
  // Predicated region
  $region10: #{resnet_forward.41} parent=0 // pred_check
    _
  $region11: #{resnet_forward.41} parent=0 // pred_check_branch
    %19 = sbr.rel (0) target = $region13
  $region12: #{resnet_forward.41} parent=0 // pred_region
    _
  $region13: #{resnet_forward.41} parent=0 // pred_fallthru
    _
  // Predicated region
  $region14: #{resnet_forward.41} parent=0 // pred_check
    _
  $region15: #{resnet_forward.41} parent=0 // pred_check_branch
    %21 = sbr.rel (0) target = $region17
  $region16: #{resnet_forward.41} parent=0 // pred_region
    _
  $region17: #{resnet_forward.41} parent=0 // pred_fallthru
    _
  // Predicated region
  $region18: #{resnet_forward.41} parent=0 // pred_check
    _
  $region19: #{resnet_forward.41} parent=0 // pred_check_branch
    %23 = sbr.rel (0) target = $region21
  $region20: #{resnet_forward.41} parent=0 // pred_region
    _
  $region21: #{resnet_forward.41} parent=0 // pred_fallthru
    _
  // Predicated region
  $region22: #{resnet_forward.41} parent=0 // pred_check
    _
  $region23: #{resnet_forward.41} parent=0 // pred_check_branch
    %25 = sbr.rel (0) target = $region25
  $region24: #{resnet_forward.41} parent=0 // pred_region
    _
  $region25: #{resnet_forward.41} parent=0 // pred_fallthru
    _
  // Predicated region
  $region26: #{resnet_forward.41} parent=0 // pred_check
    _
  $region27: #{resnet_forward.41} parent=0 // pred_check_branch
    %27 = sbr.rel (0) target = $region29
  $region28: #{resnet_forward.41} parent=0 // pred_region
    _
  $region29: #{resnet_forward.41} parent=0 // pred_fallthru
    _
  // Predicated region
  $region30: #{resnet_forward.41} parent=0 // pred_check
    _
  $region31: #{resnet_forward.41} parent=0 // pred_check_branch
    %29 = sbr.rel (0) target = $region33
  $region32: #{resnet_forward.41} parent=0 // pred_region
    _
  $region33: #{resnet_forward.41} parent=0 // pred_fallthru
    _
  // Predicated region
  $region34: #{resnet_forward.41} parent=0 // pred_check
    _
  $region35: #{resnet_forward.41} parent=0 // pred_check_branch
    %31 = sbr.rel (0) target = $region37
  $region36: #{resnet_forward.41} parent=0 // pred_region
    _
  $region37: #{resnet_forward.41} parent=0 // pred_fallthru
    _
  %v32 = vld [vmem:[%s0] sm:$0xff]
  %v33 = vld [vmem:[%s0 + $0x8] sm:$0xff]
  %v34 = vld [vmem:[%s1] sm:$0xff]
  %v35 = vld [vmem:[%s1 + $0x8] sm:$0xff]
  %v36 = vmax.f32 %v32, %v34
  %v37 = vmax.f32 %v33, %v35
  %v38 = vld [vmem:[%s2] sm:$0xff]
  %v39 = vld [vmem:[%s2 + $0x8] sm:$0xff]
  %v40 = vmax.f32 %v36, %v38
  %v41 = vmax.f32 %v37, %v39
  %v42 = vld [vmem:[%s3] sm:$0xff]
  %v43 = vld [vmem:[%s3 + $0x8] sm:$0xff]
  %v44 = vmax.f32 %v40, %v42
  %v45 = vmax.f32 %v41, %v43
  %v46 = vld [vmem:[%s4] sm:$0xff]
  %v47 = vld [vmem:[%s4 + $0x8] sm:$0xff]
  %v48 = vmax.f32 %v44, %v46
  %v49 = vmax.f32 %v45, %v47
  %v50 = vld [vmem:[%s5] sm:$0xff]
  %v51 = vld [vmem:[%s5 + $0x8] sm:$0xff]
  %v52 = vmax.f32 %v48, %v50
  %v53 = vmax.f32 %v49, %v51
  %v54 = vld [vmem:[%s6] sm:$0xff]
  %v55 = vld [vmem:[%s6 + $0x8] sm:$0xff]
  %v56 = vmax.f32 %v52, %v54
  %v57 = vmax.f32 %v53, %v55
  %v58 = vld [vmem:[%s7] sm:$0xff]
  %v59 = vld [vmem:[%s7 + $0x8] sm:$0xff]
  %v60 = vmax.f32 %v56, %v58
  %v61 = vmax.f32 %v57, %v59
  %v62 = vld [vmem:[%s8] sm:$0xff]
  %v63 = vld [vmem:[%s8 + $0x8] sm:$0xff]
  %v64 = vmax.f32 %v60, %v62
  %v65 = vmax.f32 %v61, %v63
  %66 = vst [vmem:[%s9] sm:$0xff] %v64
  %67 = vst [vmem:[%s9 + $0x8] sm:$0xff] %v65
  // Predicated region
  $region38: #{resnet_forward.41} parent=0 // pred_check
    _
  $region39: #{resnet_forward.41} parent=0 // pred_check_branch
    %69 = sbr.rel (0) target = $region41
  $region40: #{resnet_forward.41} parent=0 // pred_region
    _
  $region41: #{resnet_forward.41} parent=0 // pred_fallthru
    _
  // Predicated region
  $region42: #{resnet_forward.41} parent=0 // pred_check
    _
  $region43: #{resnet_forward.41} parent=0 // pred_check_branch
    %71 = sbr.rel (0) target = $region45
  $region44: #{resnet_forward.41} parent=0 // pred_region
    _
  $region45: #{resnet_forward.41} parent=0 // pred_fallthru
    _

// kernel: resnet_forward.42
$region0: #{resnet_forward.42}
  #allocation0 [shape = 'u32[]', space=smem, size = 0x4, offset = 0x4, fixed_abs, tag = 'smem constant byte address 0x4 - core index']
  #allocation1 [shape = 'u32[72,128]{1,0:T(1,128)}', space=vmem, size = 0x9000, scoped, tag = 'internal scratch']
  #allocation2 [shape = 'f32[128,128]{1,0:T(8,128)}', space=vmem, size = 0x10000, scoped, tag = 'scratch operand']
  %s0 = inlined_call_operand.vmem [shape: bf16[128,256], index: 0, kind: input, shape index: {}]
  %s1 = inlined_call_operand.vmem [shape: bf16[256,128], index: 1, kind: input, shape index: {}]
  %s2 = inlined_call_operand.vmem [shape: f32[128,128], index: 2, kind: output, shape index: {}]
  %s3 = sld [smem:[#allocation0]]
  $region26: #{resnet_forward.42} parent=0
    _
  %s5 = ssub.s32 1, %s3
  %s6 = scalar_select 0, %s5, %s3
  // Predicated region
  $region2: #{resnet_forward.42} parent=0 // pred_check
    _
  $region3: #{resnet_forward.42} parent=0 // pred_check_branch
    %8 = sbr.rel (0) target = $region5
  $region4: #{resnet_forward.42} parent=0 // pred_region
    _
  $region5: #{resnet_forward.42} parent=0 // pred_fallthru
    _
  // Predicated region
  $region6: #{resnet_forward.42} parent=0 // pred_check
    _
  $region7: #{resnet_forward.42} parent=0 // pred_check_branch
    %10 = sbr.rel (0) target = $region9
  $region8: #{resnet_forward.42} parent=0 // pred_region
    _
  $region9: #{resnet_forward.42} parent=0 // pred_fallthru
    _
  %p11 = scmp.eq.s32.totalorder 0, 0
  // Predicated region
  $region10: #{resnet_forward.42} parent=0 // pred_check
    %p12 = pneg %p11
  $region11: #{resnet_forward.42} parent=0 // pred_check_branch
    %14 = sbr.rel (%p12) target = $region13
  $region12: #{resnet_forward.42} parent=0 // pred_region
    %15 = vst [vmem:[#allocation2] sm:$0xff] 0.0
    %16 = vst [vmem:[#allocation2 + $0x8] sm:$0xff] 0.0
    %17 = vst [vmem:[#allocation2 + $0x10] sm:$0xff] 0.0
    %18 = vst [vmem:[#allocation2 + $0x18] sm:$0xff] 0.0
    %19 = vst [vmem:[#allocation2 + $0x20] sm:$0xff] 0.0
    %20 = vst [vmem:[#allocation2 + $0x28] sm:$0xff] 0.0
    %21 = vst [vmem:[#allocation2 + $0x30] sm:$0xff] 0.0
    %22 = vst [vmem:[#allocation2 + $0x38] sm:$0xff] 0.0
    %23 = vst [vmem:[#allocation2 + $0x40] sm:$0xff] 0.0
    %24 = vst [vmem:[#allocation2 + $0x48] sm:$0xff] 0.0
    %25 = vst [vmem:[#allocation2 + $0x50] sm:$0xff] 0.0
    %26 = vst [vmem:[#allocation2 + $0x58] sm:$0xff] 0.0
    %27 = vst [vmem:[#allocation2 + $0x60] sm:$0xff] 0.0
    %28 = vst [vmem:[#allocation2 + $0x68] sm:$0xff] 0.0
    %29 = vst [vmem:[#allocation2 + $0x70] sm:$0xff] 0.0
    %30 = vst [vmem:[#allocation2 + $0x78] sm:$0xff] 0.0
  $region13: #{resnet_forward.42} parent=0 // pred_fallthru
    _
  %v31 = vld [vmem:[#allocation2] sm:$0xff]
  %v32 = vld [vmem:[#allocation2 + $0x8] sm:$0xff]
  %v33 = vld [vmem:[#allocation2 + $0x10] sm:$0xff]
  %v34 = vld [vmem:[#allocation2 + $0x18] sm:$0xff]
  %v35 = vld [vmem:[#allocation2 + $0x20] sm:$0xff]
  %v36 = vld [vmem:[#allocation2 + $0x28] sm:$0xff]
  %v37 = vld [vmem:[#allocation2 + $0x30] sm:$0xff]
  %v38 = vld [vmem:[#allocation2 + $0x38] sm:$0xff]
  %v39 = vld [vmem:[#allocation2 + $0x40] sm:$0xff]
  %v40 = vld [vmem:[#allocation2 + $0x48] sm:$0xff]
  %v41 = vld [vmem:[#allocation2 + $0x50] sm:$0xff]
  %v42 = vld [vmem:[#allocation2 + $0x58] sm:$0xff]
  %v43 = vld [vmem:[#allocation2 + $0x60] sm:$0xff]
  %v44 = vld [vmem:[#allocation2 + $0x68] sm:$0xff]
  %v45 = vld [vmem:[#allocation2 + $0x70] sm:$0xff]
  %v46 = vld [vmem:[#allocation2 + $0x78] sm:$0xff]
  %v47 = vld [vmem:[%s0] sm:$0xff]
  %v48 = vld [vmem:[%s0 + $0x8] sm:$0xff]
  %v49 = vld [vmem:[%s0 + $0x10] sm:$0xff]
  %v50 = vld [vmem:[%s0 + $0x18] sm:$0xff]
  %v51 = vld [vmem:[%s0 + $0x20] sm:$0xff]
  %v52 = vld [vmem:[%s0 + $0x28] sm:$0xff]
  %v53 = vld [vmem:[%s0 + $0x30] sm:$0xff]
  %v54 = vld [vmem:[%s0 + $0x38] sm:$0xff]
  %v55 = vld [vmem:[%s0 + $0x40] sm:$0xff]
  %v56 = vld [vmem:[%s0 + $0x48] sm:$0xff]
  %v57 = vld [vmem:[%s0 + $0x50] sm:$0xff]
  %v58 = vld [vmem:[%s0 + $0x58] sm:$0xff]
  %v59 = vld [vmem:[%s0 + $0x60] sm:$0xff]
  %v60 = vld [vmem:[%s0 + $0x68] sm:$0xff]
  %v61 = vld [vmem:[%s0 + $0x70] sm:$0xff]
  %v62 = vld [vmem:[%s0 + $0x78] sm:$0xff]
  %v63 = vld [vmem:[%s1] sm:$0xf]
  %v64 = vld [vmem:[%s1 + $0x4] sm:$0xf]
  %v65 = vld [vmem:[%s1 + $0x8] sm:$0xf]
  %v66 = vld [vmem:[%s1 + $0xc] sm:$0xf]
  %v67 = vld [vmem:[%s1 + $0x10] sm:$0xf]
  %v68 = vld [vmem:[%s1 + $0x14] sm:$0xf]
  %v69 = vld [vmem:[%s1 + $0x18] sm:$0xf]
  %v70 = vld [vmem:[%s1 + $0x1c] sm:$0xf]
  %v71 = vld [vmem:[%s1 + $0x20] sm:$0xf]
  %v72 = vld [vmem:[%s1 + $0x24] sm:$0xf]
  %v73 = vld [vmem:[%s1 + $0x28] sm:$0xf]
  %v74 = vld [vmem:[%s1 + $0x2c] sm:$0xf]
  %v75 = vld [vmem:[%s1 + $0x30] sm:$0xf]
  %v76 = vld [vmem:[%s1 + $0x34] sm:$0xf]
  %v77 = vld [vmem:[%s1 + $0x38] sm:$0xf]
  %v78 = vld [vmem:[%s1 + $0x3c] sm:$0xf]
  %v79 = vld [vmem:[%s1 + $0x40] sm:$0xf]
  %v80 = vld [vmem:[%s1 + $0x44] sm:$0xf]
  %v81 = vld [vmem:[%s1 + $0x48] sm:$0xf]
  %v82 = vld [vmem:[%s1 + $0x4c] sm:$0xf]
  %v83 = vld [vmem:[%s1 + $0x50] sm:$0xf]
  %v84 = vld [vmem:[%s1 + $0x54] sm:$0xf]
  %v85 = vld [vmem:[%s1 + $0x58] sm:$0xf]
  %v86 = vld [vmem:[%s1 + $0x5c] sm:$0xf]
  %v87 = vld [vmem:[%s1 + $0x60] sm:$0xf]
  %v88 = vld [vmem:[%s1 + $0x64] sm:$0xf]
  %v89 = vld [vmem:[%s1 + $0x68] sm:$0xf]
  %v90 = vld [vmem:[%s1 + $0x6c] sm:$0xf]
  %v91 = vld [vmem:[%s1 + $0x70] sm:$0xf]
  %v92 = vld [vmem:[%s1 + $0x74] sm:$0xf]
  %v93 = vld [vmem:[%s1 + $0x78] sm:$0xf]
  %v94 = vld [vmem:[%s1 + $0x7c] sm:$0xf]
  %v111 = vunpack.c.l.b16 %v47
  %v112 = vunpack.c.h.b16 %v47
  %v113 = vunpack.c.l.b16 %v48
  %v114 = vunpack.c.h.b16 %v48
  %v115 = vunpack.c.l.b16 %v49
  %v116 = vunpack.c.h.b16 %v49
  %v117 = vunpack.c.l.b16 %v50
  %v118 = vunpack.c.h.b16 %v50
  %v119 = vunpack.c.l.b16 %v51
  %v120 = vunpack.c.h.b16 %v51
  %v121 = vunpack.c.l.b16 %v52
  %v122 = vunpack.c.h.b16 %v52
  %v123 = vunpack.c.l.b16 %v53
  %v124 = vunpack.c.h.b16 %v53
  %v125 = vunpack.c.l.b16 %v54
  %v126 = vunpack.c.h.b16 %v54
  %v127 = vunpack.c.l.b16 %v55
  %v128 = vunpack.c.h.b16 %v55
  %v129 = vunpack.c.l.b16 %v56
  %v130 = vunpack.c.h.b16 %v56
  %v131 = vunpack.c.l.b16 %v57
  %v132 = vunpack.c.h.b16 %v57
  %v133 = vunpack.c.l.b16 %v58
  %v134 = vunpack.c.h.b16 %v58
  %v135 = vunpack.c.l.b16 %v59
  %v136 = vunpack.c.h.b16 %v59
  %v137 = vunpack.c.l.b16 %v60
  %v138 = vunpack.c.h.b16 %v60
  %v139 = vunpack.c.l.b16 %v61
  %v140 = vunpack.c.h.b16 %v61
  %v141 = vunpack.c.l.b16 %v62
  %v142 = vunpack.c.h.b16 %v62
  %v143 = vpack.c.b16 %v113, %v111
  %v144 = vpack.c.b16 %v114, %v112
  %v145 = vpack.c.b16 %v117, %v115
  %v146 = vpack.c.b16 %v118, %v116
  %v147 = vpack.c.b16 %v121, %v119
  %v148 = vpack.c.b16 %v122, %v120
  %v149 = vpack.c.b16 %v125, %v123
  %v150 = vpack.c.b16 %v126, %v124
  %v151 = vpack.c.b16 %v129, %v127
  %v152 = vpack.c.b16 %v130, %v128
  %v153 = vpack.c.b16 %v133, %v131
  %v154 = vpack.c.b16 %v134, %v132
  %v155 = vpack.c.b16 %v137, %v135
  %v156 = vpack.c.b16 %v138, %v136
  %v157 = vpack.c.b16 %v141, %v139
  %v158 = vpack.c.b16 %v142, %v140
  %v207 = vunpack.c.l.b16 %v63
  %v208 = vunpack.c.l.b16 %v64
  %v209 = vunpack.c.l.b16 %v65
  %v210 = vunpack.c.l.b16 %v66
  %v211 = vunpack.c.l.b16 %v67
  %v212 = vunpack.c.l.b16 %v68
  %v213 = vunpack.c.l.b16 %v69
  %v214 = vunpack.c.l.b16 %v70
  %v215 = vunpack.c.l.b16 %v71
  %v216 = vunpack.c.l.b16 %v72
  %v217 = vunpack.c.l.b16 %v73
  %v218 = vunpack.c.l.b16 %v74
  %v219 = vunpack.c.l.b16 %v75
  %v220 = vunpack.c.l.b16 %v76
  %v221 = vunpack.c.l.b16 %v77
  %v222 = vunpack.c.l.b16 %v78
  %v223 = vunpack.c.l.b16 %v79
  %v224 = vunpack.c.l.b16 %v80
  %v225 = vunpack.c.l.b16 %v81
  %v226 = vunpack.c.l.b16 %v82
  %v227 = vunpack.c.l.b16 %v83
  %v228 = vunpack.c.l.b16 %v84
  %v229 = vunpack.c.l.b16 %v85
  %v230 = vunpack.c.l.b16 %v86
  %v231 = vunpack.c.l.b16 %v87
  %v232 = vunpack.c.l.b16 %v88
  %v233 = vunpack.c.l.b16 %v89
  %v234 = vunpack.c.l.b16 %v90
  %v235 = vunpack.c.l.b16 %v91
  %v236 = vunpack.c.l.b16 %v92
  %v237 = vunpack.c.l.b16 %v93
  %v238 = vunpack.c.l.b16 %v94
  %v239 = vpack.c.b16 %v208, %v207
  %v240 = vpack.c.b16 %v210, %v209
  %v241 = vpack.c.b16 %v212, %v211
  %v242 = vpack.c.b16 %v214, %v213
  %v243 = vpack.c.b16 %v216, %v215
  %v244 = vpack.c.b16 %v218, %v217
  %v245 = vpack.c.b16 %v220, %v219
  %v246 = vpack.c.b16 %v222, %v221
  %v247 = vpack.c.b16 %v224, %v223
  %v248 = vpack.c.b16 %v226, %v225
  %v249 = vpack.c.b16 %v228, %v227
  %v250 = vpack.c.b16 %v230, %v229
  %v251 = vpack.c.b16 %v232, %v231
  %v252 = vpack.c.b16 %v234, %v233
  %v253 = vpack.c.b16 %v236, %v235
  %v254 = vpack.c.b16 %v238, %v237
  %271 = vmatpush.bf16.msra.mxu0 %v246
  %272 = vmatpush.bf16.msra.mxu0 %v245
  %273 = vmatpush.bf16.msra.mxu0 %v244
  %274 = vmatpush.bf16.msra.mxu0 %v243
  %275 = vmatpush.bf16.msra.mxu0 %v242
  %276 = vmatpush.bf16.msra.mxu0 %v241
  %277 = vmatpush.bf16.msra.mxu0 %v240
  %278 = vmatpush.bf16.msra.mxu0 %v239
  %279 = vmatmul.bf16.gmra.mxu0 %v143
  %v280 = vpop.f32.mrf.mxu0
  %v281 = vadd.f32 0.0, %v280
  %v282 = vpop.f32.mrf.mxu0
  %v283 = vadd.f32 0.0, %v282
  %284 = vmatmul.bf16.gmra.mxu0 %v145
  %v285 = vpop.f32.mrf.mxu0
  %v286 = vadd.f32 0.0, %v285
  %v287 = vpop.f32.mrf.mxu0
  %v288 = vadd.f32 0.0, %v287
  %289 = vmatmul.bf16.gmra.mxu0 %v147
  %v290 = vpop.f32.mrf.mxu0
  %v291 = vadd.f32 0.0, %v290
  %v292 = vpop.f32.mrf.mxu0
  %v293 = vadd.f32 0.0, %v292
  %294 = vmatmul.bf16.gmra.mxu0 %v149
  %v295 = vpop.f32.mrf.mxu0
  %v296 = vadd.f32 0.0, %v295
  %v297 = vpop.f32.mrf.mxu0
  %v298 = vadd.f32 0.0, %v297
  %299 = vmatmul.bf16.gmra.mxu0 %v151
  %v300 = vpop.f32.mrf.mxu0
  %v301 = vadd.f32 0.0, %v300
  %v302 = vpop.f32.mrf.mxu0
  %v303 = vadd.f32 0.0, %v302
  %304 = vmatmul.bf16.gmra.mxu0 %v153
  %v305 = vpop.f32.mrf.mxu0
  %v306 = vadd.f32 0.0, %v305
  %v307 = vpop.f32.mrf.mxu0
  %v308 = vadd.f32 0.0, %v307
  %309 = vmatmul.bf16.gmra.mxu0 %v155
  %v310 = vpop.f32.mrf.mxu0
  %v311 = vadd.f32 0.0, %v310
  %v312 = vpop.f32.mrf.mxu0
  %v313 = vadd.f32 0.0, %v312
  %314 = vmatmul.bf16.gmra.mxu0 %v157
  %v315 = vpop.f32.mrf.mxu0
  %v316 = vadd.f32 0.0, %v315
  %v317 = vpop.f32.mrf.mxu0
  %v318 = vadd.f32 0.0, %v317
  %319 = vdwg.mxu0
  %320 = vmatpush.bf16.msra.mxu0 %v254
  %321 = vmatpush.bf16.msra.mxu0 %v253
  %322 = vmatpush.bf16.msra.mxu0 %v252
  %323 = vmatpush.bf16.msra.mxu0 %v251
  %324 = vmatpush.bf16.msra.mxu0 %v250
  %325 = vmatpush.bf16.msra.mxu0 %v249
  %326 = vmatpush.bf16.msra.mxu0 %v248
  %327 = vmatpush.bf16.msra.mxu0 %v247
  %328 = vmatmul.bf16.gmra.mxu0 %v144
  %v329 = vpop.f32.mrf.mxu0
  %v330 = vadd.f32 %v281, %v329
  %v331 = vpop.f32.mrf.mxu0
  %v332 = vadd.f32 %v283, %v331
  %333 = vmatmul.bf16.gmra.mxu0 %v146
  %v334 = vpop.f32.mrf.mxu0
  %v335 = vadd.f32 %v286, %v334
  %v336 = vpop.f32.mrf.mxu0
  %v337 = vadd.f32 %v288, %v336
  %338 = vmatmul.bf16.gmra.mxu0 %v148
  %v339 = vpop.f32.mrf.mxu0
  %v340 = vadd.f32 %v291, %v339
  %v341 = vpop.f32.mrf.mxu0
  %v342 = vadd.f32 %v293, %v341
  %343 = vmatmul.bf16.gmra.mxu0 %v150
  %v344 = vpop.f32.mrf.mxu0
  %v345 = vadd.f32 %v296, %v344
  %v346 = vpop.f32.mrf.mxu0
  %v347 = vadd.f32 %v298, %v346
  %348 = vmatmul.bf16.gmra.mxu0 %v152
  %v349 = vpop.f32.mrf.mxu0
  %v350 = vadd.f32 %v301, %v349
  %v351 = vpop.f32.mrf.mxu0
  %v352 = vadd.f32 %v303, %v351
  %353 = vmatmul.bf16.gmra.mxu0 %v154
  %v354 = vpop.f32.mrf.mxu0
  %v355 = vadd.f32 %v306, %v354
  %v356 = vpop.f32.mrf.mxu0
  %v357 = vadd.f32 %v308, %v356
  %358 = vmatmul.bf16.gmra.mxu0 %v156
  %v359 = vpop.f32.mrf.mxu0
  %v360 = vadd.f32 %v311, %v359
  %v361 = vpop.f32.mrf.mxu0
  %v362 = vadd.f32 %v313, %v361
  %363 = vmatmul.bf16.gmra.mxu0 %v158
  %v364 = vpop.f32.mrf.mxu0
  %v365 = vadd.f32 %v316, %v364
  %v366 = vpop.f32.mrf.mxu0
  %v367 = vadd.f32 %v318, %v366
  %368 = vdwg.mxu0
  %v369 = vadd.f32 %v31, %v330
  %v370 = vadd.f32 %v32, %v332
  %v371 = vadd.f32 %v33, %v335
  %v372 = vadd.f32 %v34, %v337
  %v373 = vadd.f32 %v35, %v340
  %v374 = vadd.f32 %v36, %v342
  %v375 = vadd.f32 %v37, %v345
  %v376 = vadd.f32 %v38, %v347
  %v377 = vadd.f32 %v39, %v350
  %v378 = vadd.f32 %v40, %v352
  %v379 = vadd.f32 %v41, %v355
  %v380 = vadd.f32 %v42, %v357
  %v381 = vadd.f32 %v43, %v360
  %v382 = vadd.f32 %v44, %v362
  %v383 = vadd.f32 %v45, %v365
  %v384 = vadd.f32 %v46, %v367
  %385 = vst [vmem:[#allocation2] sm:$0xff] %v369
  %386 = vst [vmem:[#allocation2 + $0x8] sm:$0xff] %v370
  %387 = vst [vmem:[#allocation2 + $0x10] sm:$0xff] %v371
  %388 = vst [vmem:[#allocation2 + $0x18] sm:$0xff] %v372
  %389 = vst [vmem:[#allocation2 + $0x20] sm:$0xff] %v373
  %390 = vst [vmem:[#allocation2 + $0x28] sm:$0xff] %v374
  %391 = vst [vmem:[#allocation2 + $0x30] sm:$0xff] %v375
  %392 = vst [vmem:[#allocation2 + $0x38] sm:$0xff] %v376
  %393 = vst [vmem:[#allocation2 + $0x40] sm:$0xff] %v377
  %394 = vst [vmem:[#allocation2 + $0x48] sm:$0xff] %v378
  %395 = vst [vmem:[#allocation2 + $0x50] sm:$0xff] %v379
  %396 = vst [vmem:[#allocation2 + $0x58] sm:$0xff] %v380
  %397 = vst [vmem:[#allocation2 + $0x60] sm:$0xff] %v381
  %398 = vst [vmem:[#allocation2 + $0x68] sm:$0xff] %v382
  %399 = vst [vmem:[#allocation2 + $0x70] sm:$0xff] %v383
  %400 = vst [vmem:[#allocation2 + $0x78] sm:$0xff] %v384
  // Predicated region
  $region14: #{resnet_forward.42} parent=0 // pred_check
    %p401 = pneg %p11
  $region15: #{resnet_forward.42} parent=0 // pred_check_branch
    %403 = sbr.rel (%p401) target = $region17
  $region16: #{resnet_forward.42} parent=0 // pred_region
    %v404 = vld [vmem:[#allocation2] sm:$0xff]
    %v405 = vld [vmem:[#allocation2 + $0x8] sm:$0xff]
    %v406 = vld [vmem:[#allocation2 + $0x10] sm:$0xff]
    %v407 = vld [vmem:[#allocation2 + $0x18] sm:$0xff]
    %v408 = vld [vmem:[#allocation2 + $0x20] sm:$0xff]
    %v409 = vld [vmem:[#allocation2 + $0x28] sm:$0xff]
    %v410 = vld [vmem:[#allocation2 + $0x30] sm:$0xff]
    %v411 = vld [vmem:[#allocation2 + $0x38] sm:$0xff]
    %v412 = vld [vmem:[#allocation2 + $0x40] sm:$0xff]
    %v413 = vld [vmem:[#allocation2 + $0x48] sm:$0xff]
    %v414 = vld [vmem:[#allocation2 + $0x50] sm:$0xff]
    %v415 = vld [vmem:[#allocation2 + $0x58] sm:$0xff]
    %v416 = vld [vmem:[#allocation2 + $0x60] sm:$0xff]
    %v417 = vld [vmem:[#allocation2 + $0x68] sm:$0xff]
    %v418 = vld [vmem:[#allocation2 + $0x70] sm:$0xff]
    %v419 = vld [vmem:[#allocation2 + $0x78] sm:$0xff]
    %420 = vst [vmem:[%s2] sm:$0xff] %v404
    %421 = vst [vmem:[%s2 + $0x8] sm:$0xff] %v405
    %422 = vst [vmem:[%s2 + $0x10] sm:$0xff] %v406
    %423 = vst [vmem:[%s2 + $0x18] sm:$0xff] %v407
    %424 = vst [vmem:[%s2 + $0x20] sm:$0xff] %v408
    %425 = vst [vmem:[%s2 + $0x28] sm:$0xff] %v409
    %426 = vst [vmem:[%s2 + $0x30] sm:$0xff] %v410
    %427 = vst [vmem:[%s2 + $0x38] sm:$0xff] %v411
    %428 = vst [vmem:[%s2 + $0x40] sm:$0xff] %v412
    %429 = vst [vmem:[%s2 + $0x48] sm:$0xff] %v413
    %430 = vst [vmem:[%s2 + $0x50] sm:$0xff] %v414
    %431 = vst [vmem:[%s2 + $0x58] sm:$0xff] %v415
    %432 = vst [vmem:[%s2 + $0x60] sm:$0xff] %v416
    %433 = vst [vmem:[%s2 + $0x68] sm:$0xff] %v417
    %434 = vst [vmem:[%s2 + $0x70] sm:$0xff] %v418
    %435 = vst [vmem:[%s2 + $0x78] sm:$0xff] %v419
  $region17: #{resnet_forward.42} parent=0 // pred_fallthru
    _
  // Predicated region
  $region18: #{resnet_forward.42} parent=0 // pred_check
    _
  $region19: #{resnet_forward.42} parent=0 // pred_check_branch
    %437 = sbr.rel (0) target = $region21
  $region20: #{resnet_forward.42} parent=0 // pred_region
    _
  $region21: #{resnet_forward.42} parent=0 // pred_fallthru
    _
  // Predicated region
  $region22: #{resnet_forward.42} parent=0 // pred_check
    _
  $region23: #{resnet_forward.42} parent=0 // pred_check_branch
    %439 = sbr.rel (0) target = $region25
  $region24: #{resnet_forward.42} parent=0 // pred_region
    _
  $region25: #{resnet_forward.42} parent=0 // pred_fallthru
    _

// kernel: resnet_forward.43
$region0: #{resnet_forward.43}
  #allocation0 [shape = 'u32[]', space=smem, size = 0x4, offset = 0x4, fixed_abs, tag = 'smem constant byte address 0x4 - core index']
  #allocation1 [shape = 'u32[72,128]{1,0:T(1,128)}', space=vmem, size = 0x9000, scoped, tag = 'internal scratch']
  #allocation2 [shape = 'f32[1,16]{1,0:T(1,128)}', space=vmem, size = 0x200, scoped, tag = 'scratch operand']
  #allocation3 [shape = 'f32[1,16]{1,0:T(1,128)}', space=vmem, size = 0x200, scoped, tag = 'scratch operand']
  #allocation4 [shape = 'f32[1,16]{1,0:T(1,128)}', space=vmem, size = 0x200, scoped, tag = 'scratch operand']
  %s0 = inlined_call_operand.vmem [shape: f32[16,8,16], index: 0, kind: input, shape index: {}]
  %s1 = inlined_call_operand.vmem [shape: f32[1,16], index: 1, kind: output, shape index: {0}]
  %s2 = inlined_call_operand.vmem [shape: f32[1,16], index: 2, kind: output, shape index: {1}]
  %3 = xla_tuple %s1, %s2
  %s4 = sld [smem:[#allocation0]]
  $region53: #{resnet_forward.43} parent=0
    _
  %s6 = ssub.s32 1, %s4
  %s7 = scalar_select 0, %s6, %s4
  loop: start=0, step=1, limit=18
  $region2: #{resnet_forward.43} parent=0 // loop_pre_header
    _
  $region3: #{resnet_forward.43} parent=0 // loop_header
    %s9 = sphi 0, %s13
    %p10 = scmp.ge.s32.totalorder %s9, 18
    %s19 = sphi 0, %s21
    %s22 = sphi 0, %s19
    %s23 = sphi 0, %s22
    %s39 = sphi 0, %s23
    %s43 = sphi 0, %s43
    %s45 = sphi 0, %s43
    %s46 = sphi 0, %s45
    %s60 = sphi 0, %s46
    %s64 = sphi 0, %s64
    %s66 = sphi 0, %s64
    %s67 = sphi 0, %s66
    %s81 = sphi 0, %s67
  $region4: #{resnet_forward.43} parent=0 // loop_header_branch
    %12 = sbr.rel (%p10) target = $region8
  $region5: #{resnet_forward.43} parent=0 // loop_body
    %s14 = ssub.s32 %s9, 1
    %s15 = ssub.s32 %s9, 2
    %s16 = sadd.s32 %s9, 1
    %s17 = ssub.s32 %s9, %s16
    %p18 = scmp.eq.s32.totalorder %s17, 0
    %s20 = sadd.s32 %s19, 1
    %s21 = scalar_select %p18, %s19, %s20
    %p24 = pneg %p18
    %p25 = scmp.eq.s32.totalorder %s9, 15
    %p26 = por %p24, %p25
    %p27 = scmp.ne.s32.totalorder %s19, %s22
    %p28 = scmp.eq.s32.totalorder %s9, 0
    %p29 = por %p27, %p28
    %p30 = scmp.ne.s32.totalorder %s19, %s22
    %p31 = scmp.eq.s32.totalorder %s14, 15
    %p32 = por %p30, %p31
    %p33 = scmp.ne.s32.totalorder %s22, %s23
    %p34 = scmp.eq.s32.totalorder %s14, 0
    %p35 = por %p33, %p34
    %p36 = scmp.ne.s32.totalorder %s22, %s23
    %p37 = scmp.eq.s32.totalorder %s15, 15
    %p38 = por %p36, %p37
    %p40 = scmp.ne.s32.totalorder %s23, %s39
    %p41 = scmp.eq.s32.totalorder %s15, 0
    %p42 = por %p40, %p41
    %s44 = sadd.s32 %s43, 1
    %p47 = scmp.eq.s32.totalorder %s9, 15
    %p48 = scmp.ne.s32.totalorder %s43, %s45
    %p49 = scmp.eq.s32.totalorder %s9, 0
    %p50 = por %p48, %p49
    %p51 = scmp.ne.s32.totalorder %s43, %s45
    %p52 = scmp.eq.s32.totalorder %s14, 15
    %p53 = por %p51, %p52
    %p54 = scmp.ne.s32.totalorder %s45, %s46
    %p55 = scmp.eq.s32.totalorder %s14, 0
    %p56 = por %p54, %p55
    %p57 = scmp.ne.s32.totalorder %s45, %s46
    %p58 = scmp.eq.s32.totalorder %s15, 15
    %p59 = por %p57, %p58
    %p61 = scmp.ne.s32.totalorder %s46, %s60
    %p62 = scmp.eq.s32.totalorder %s15, 0
    %p63 = por %p61, %p62
    %s65 = sadd.s32 %s64, 1
    %p68 = scmp.eq.s32.totalorder %s9, 15
    %p69 = scmp.ne.s32.totalorder %s64, %s66
    %p70 = scmp.eq.s32.totalorder %s9, 0
    %p71 = por %p69, %p70
    %p72 = scmp.ne.s32.totalorder %s64, %s66
    %p73 = scmp.eq.s32.totalorder %s14, 15
    %p74 = por %p72, %p73
    %p75 = scmp.ne.s32.totalorder %s66, %s67
    %p76 = scmp.eq.s32.totalorder %s14, 0
    %p77 = por %p75, %p76
    %p78 = scmp.ne.s32.totalorder %s66, %s67
    %p79 = scmp.eq.s32.totalorder %s15, 15
    %p80 = por %p78, %p79
    %p82 = scmp.ne.s32.totalorder %s67, %s81
    %p83 = scmp.eq.s32.totalorder %s15, 0
    %p84 = por %p82, %p83
    %p85 = scmp.le.s32.totalorder 1, %s9
    %p86 = scmp.lt.s32.totalorder %s9, 17
    %p87 = pnand %p85, %p86
    %p88 = pneg %p87
    // Predicated region
    $region9: #{resnet_forward.43} parent=5 // pred_check
      _
    $region10: #{resnet_forward.43} parent=5 // pred_check_branch
      %90 = sbr.rel (%p87) target = $region12
    $region11: #{resnet_forward.43} parent=5 // pred_region
      %s91 = ssub.s32 %s9, 1
    $region12: #{resnet_forward.43} parent=5 // pred_fallthru
      _
    %p92 = scmp.lt.s32.totalorder %s9, 16
    // Predicated region
    $region13: #{resnet_forward.43} parent=5 // pred_check
      %p93 = pneg %p92
    $region14: #{resnet_forward.43} parent=5 // pred_check_branch
      %95 = sbr.rel (%p93) target = $region16
    $region15: #{resnet_forward.43} parent=5 // pred_region
      // Predicated region
      $region17: #{resnet_forward.43} parent=15 // pred_check
        %p96 = pneg %p29
      $region18: #{resnet_forward.43} parent=15 // pred_check_branch
        %98 = sbr.rel (%p96) target = $region20
      $region19: #{resnet_forward.43} parent=15 // pred_region
        %p99 = scmp.lt.s32.totalorder %s9, 15
        %s100 = scalar_select %p99, %s9, 15
        %s101 = smul.addr %s100, 8
        %s102 = scalar_lea.vmem %s0, %s101
      $region20: #{resnet_forward.43} parent=15 // pred_fallthru
        _
    $region16: #{resnet_forward.43} parent=5 // pred_fallthru
      _
    %p103 = scmp.le.s32.totalorder 1, %s9
    %p104 = scmp.lt.s32.totalorder %s9, 17
    %p105 = pnand %p103, %p104
    %p106 = pneg %p105
    // Predicated region
    $region21: #{resnet_forward.43} parent=5 // pred_check
      _
    $region22: #{resnet_forward.43} parent=5 // pred_check_branch
      %108 = sbr.rel (%p105) target = $region24
    $region23: #{resnet_forward.43} parent=5 // pred_region
      %s109 = ssub.s32 %s9, 1
      %p110 = scmp.lt.s32.totalorder %s14, 15
      %s111 = scalar_select %p110, %s14, 15
      %s112 = smul.addr %s111, 8
      %s113 = scalar_lea.vmem %s0, %s112
      %p114 = pneg %p35
      %p115 = pneg %p32
      %p116 = pneg %p56
      %p117 = pneg %p53
      %p118 = pneg %p77
      %p119 = pneg %p74
      %p120 = scmp.lt.s32.totalorder %s14, 15
      %s121 = scalar_select %p120, %s14, 15
      %s122 = smul.addr %s121, 8
      %s123 = scalar_lea.vmem %s0, %s122
      %v124 = vld [vmem:[%s123] sm:$0xff]
      %vm125 = vcmask 130048
      %v126 = vsel %vm125, %v124, 0.0
      %v127 = vrot.slane %v126, 4
      %v128 = vadd.f32 %v126, %v127
      %v129 = vrot.slane %v128, 2
      %v130 = vadd.f32 %v128, %v129
      %v131 = vrot.slane %v130, 1
      %v132 = vadd.f32 %v130, %v131
      %v133 = vsel %vm125, %v124, -inf
      %v134 = vrot.slane %v133, 4
      %v135 = vmax.f32 %v133, %v134
      %v136 = vrot.slane %v135, 2
      %v137 = vmax.f32 %v135, %v136
      %v138 = vrot.slane %v137, 1
      %v139 = vmax.f32 %v137, %v138
      %v140 = vsel %vm125, %v124, inf
      %v141 = vrot.slane %v140, 4
      %v142 = vmin.f32 %v140, %v141
      %v143 = vrot.slane %v142, 2
      %v144 = vmin.f32 %v142, %v143
      %v145 = vrot.slane %v144, 1
      %v146 = vmin.f32 %v144, %v145
      %p147 = scmp.eq.s32.totalorder %s14, 0
      // Predicated region
      $region25: #{resnet_forward.43} parent=23 // pred_check
        %p148 = pneg %p147
      $region26: #{resnet_forward.43} parent=23 // pred_check_branch
        %150 = sbr.rel (%p148) target = $region28
      $region27: #{resnet_forward.43} parent=23 // pred_region
        %vm151 = vcmask 122880
        %152 = vst.msk [vmem:[#allocation2] sm:$0x1] %vm151, 0.0
        %153 = vst.msk [vmem:[#allocation3] sm:$0x1] %vm151, 0.0
        %154 = vst.msk [vmem:[#allocation4] sm:$0x1] %vm151, 0.0
      $region28: #{resnet_forward.43} parent=23 // pred_fallthru
        _
      %v155 = vld [vmem:[#allocation2] sm:$0x1]
      %v156 = vadd.f32 %v155, %v132
      %vm157 = vcmask 122880
      %158 = vst.msk [vmem:[#allocation2] sm:$0x1] %vm157, %v156
      %v159 = vld [vmem:[#allocation3] sm:$0x1]
      %v160 = vadd.f32 %v159, %v139
      %161 = vst.msk [vmem:[#allocation3] sm:$0x1] %vm157, %v160
      %v162 = vld [vmem:[#allocation4] sm:$0x1]
      %v163 = vadd.f32 %v162, %v146
      %164 = vst.msk [vmem:[#allocation4] sm:$0x1] %vm157, %v163
      %p165 = scmp.eq.s32.totalorder %s14, 15
      // Predicated region
      $region29: #{resnet_forward.43} parent=23 // pred_check
        %p166 = pneg %p165
      $region30: #{resnet_forward.43} parent=23 // pred_check_branch
        %168 = sbr.rel (%p166) target = $region32
      $region31: #{resnet_forward.43} parent=23 // pred_region
        %v169 = vld [vmem:[#allocation2] sm:$0x1]
        %v170 = vrcp.pop 128.0
        %v171 = vmul.f32 128.0, %v170
        %v172 = vsub.f32 1.0, %v171
        %v173 = vmul.f32 %v170, %v172
        %v174 = vadd.f32 %v170, %v173
        %vm175 = vweird.f32 %v170
        %v176 = vsel %vm175, %v170, %v174
        %v177 = vmul.f32 %v169, %v176
        %178 = vst.msk [vmem:[%s1] sm:$0x1] %vm157, %v177
        %v179 = vld [vmem:[#allocation3] sm:$0x1]
        %v180 = vld [vmem:[#allocation4] sm:$0x1]
        %v181 = vsub.f32 %v179, %v180
        %v182 = vrcp.pop 16.0
        %v183 = vmul.f32 16.0, %v182
        %v184 = vsub.f32 1.0, %v183
        %v185 = vmul.f32 %v182, %v184
        %v186 = vadd.f32 %v182, %v185
        %vm187 = vweird.f32 %v182
        %v188 = vsel %vm187, %v182, %v186
        %v189 = vmul.f32 %v181, %v188
        %v190 = vmul.f32 %v189, 0.26489452
        %v191 = vadd.f32 %v190, 1e-05
        %v192 = vrcp.pop %v191
        %v193 = vmul.f32 %v191, %v192
        %v194 = vsub.f32 1.0, %v193
        %v195 = vmul.f32 %v192, %v194
        %v196 = vadd.f32 %v192, %v195
        %vm197 = vweird.f32 %v191
        %vm198 = vweird.f32 %v192
        %vm199 = vmor %vm197, %vm198
        %v200 = vsel %vm199, %v192, %v196
        %v201 = vand.u32 2147483647, %v191
        %vm202 = vcmp.eq.f32.partialorder %v201, 8.507059e+37
        %v203 = vand.u32 %v191, 2147483648
        %v204 = vor.u32 1.1754944e-38, %v203
        %v205 = vsel %vm202, %v204, %v200
        %v206 = vmul.f32 1.0, %v205
        %207 = vst.msk [vmem:[%s2] sm:$0x1] %vm157, %v206
      $region32: #{resnet_forward.43} parent=23 // pred_fallthru
        _
      // Predicated region
      $region33: #{resnet_forward.43} parent=23 // pred_check
        %p208 = pneg %p53
      $region34: #{resnet_forward.43} parent=23 // pred_check_branch
        %210 = sbr.rel (%p208) target = $region36
      $region35: #{resnet_forward.43} parent=23 // pred_region
        _
      $region36: #{resnet_forward.43} parent=23 // pred_fallthru
        _
      // Predicated region
      $region37: #{resnet_forward.43} parent=23 // pred_check
        %p211 = pneg %p74
      $region38: #{resnet_forward.43} parent=23 // pred_check_branch
        %213 = sbr.rel (%p211) target = $region40
      $region39: #{resnet_forward.43} parent=23 // pred_region
        _
      $region40: #{resnet_forward.43} parent=23 // pred_fallthru
        _
      // Predicated region
      $region41: #{resnet_forward.43} parent=23 // pred_check
        %p214 = pneg %p53
      $region42: #{resnet_forward.43} parent=23 // pred_check_branch
        %216 = sbr.rel (%p214) target = $region44
      $region43: #{resnet_forward.43} parent=23 // pred_region
        _
      $region44: #{resnet_forward.43} parent=23 // pred_fallthru
        _
      // Predicated region
      $region45: #{resnet_forward.43} parent=23 // pred_check
        %p217 = pneg %p74
      $region46: #{resnet_forward.43} parent=23 // pred_check_branch
        %219 = sbr.rel (%p217) target = $region48
      $region47: #{resnet_forward.43} parent=23 // pred_region
        _
      $region48: #{resnet_forward.43} parent=23 // pred_fallthru
        _
    $region24: #{resnet_forward.43} parent=5 // pred_fallthru
      _
    %p220 = scmp.le.s32.totalorder 2, %s9
    // Predicated region
    $region49: #{resnet_forward.43} parent=5 // pred_check
      %p221 = pneg %p220
    $region50: #{resnet_forward.43} parent=5 // pred_check_branch
      %223 = sbr.rel (%p221) target = $region52
    $region51: #{resnet_forward.43} parent=5 // pred_region
      %s224 = ssub.s32 %s9, 2
    $region52: #{resnet_forward.43} parent=5 // pred_fallthru
      _
  $region6: #{resnet_forward.43} parent=0 // loop_footer
    %s13 = sadd.s32 1, %s9
  $region7: #{resnet_forward.43} parent=0 // loop_footer_branch
    %8 = sbr.rel target = $region3
  $region8: #{resnet_forward.43} parent=0 // loop_exit
    _

// kernel: resnet_forward.44
$region0: #{resnet_forward.44}
  #allocation0 [shape = 'u32[]', space=smem, size = 0x4, offset = 0x4, fixed_abs, tag = 'smem constant byte address 0x4 - core index']
  #allocation1 [shape = 'u32[72,128]{1,0:T(1,128)}', space=vmem, size = 0x9000, scoped, tag = 'internal scratch']
  %s0 = inlined_call_operand.vmem [shape: f32[16,128], index: 0, kind: input, shape index: {}]
  %s1 = inlined_call_operand.vmem [shape: f32[1,128], index: 1, kind: input, shape index: {}]
  %s2 = inlined_call_operand.vmem [shape: f32[1,128], index: 2, kind: input, shape index: {}]
  %s3 = inlined_call_operand.vmem [shape: f32[1,128], index: 3, kind: input, shape index: {}]
  %s4 = inlined_call_operand.vmem [shape: f32[1,128], index: 4, kind: input, shape index: {}]
  %s5 = inlined_call_operand.vmem [shape: f32[16,128], index: 5, kind: output, shape index: {}]
  %s6 = sld [smem:[#allocation0]]
  $region30: #{resnet_forward.44} parent=0
    _
  %s8 = ssub.s32 1, %s6
  %s9 = scalar_select 0, %s8, %s6
  // Predicated region
  $region2: #{resnet_forward.44} parent=0 // pred_check
    _
  $region3: #{resnet_forward.44} parent=0 // pred_check_branch
    %11 = sbr.rel (0) target = $region5
  $region4: #{resnet_forward.44} parent=0 // pred_region
    _
  $region5: #{resnet_forward.44} parent=0 // pred_fallthru
    _
  // Predicated region
  $region6: #{resnet_forward.44} parent=0 // pred_check
    _
  $region7: #{resnet_forward.44} parent=0 // pred_check_branch
    %13 = sbr.rel (0) target = $region9
  $region8: #{resnet_forward.44} parent=0 // pred_region
    _
  $region9: #{resnet_forward.44} parent=0 // pred_fallthru
    _
  // Predicated region
  $region10: #{resnet_forward.44} parent=0 // pred_check
    _
  $region11: #{resnet_forward.44} parent=0 // pred_check_branch
    %15 = sbr.rel (0) target = $region13
  $region12: #{resnet_forward.44} parent=0 // pred_region
    _
  $region13: #{resnet_forward.44} parent=0 // pred_fallthru
    _
  // Predicated region
  $region14: #{resnet_forward.44} parent=0 // pred_check
    _
  $region15: #{resnet_forward.44} parent=0 // pred_check_branch
    %17 = sbr.rel (0) target = $region17
  $region16: #{resnet_forward.44} parent=0 // pred_region
    _
  $region17: #{resnet_forward.44} parent=0 // pred_fallthru
    _
  // Predicated region
  $region18: #{resnet_forward.44} parent=0 // pred_check
    _
  $region19: #{resnet_forward.44} parent=0 // pred_check_branch
    %19 = sbr.rel (0) target = $region21
  $region20: #{resnet_forward.44} parent=0 // pred_region
    _
  $region21: #{resnet_forward.44} parent=0 // pred_fallthru
    _
  %v20 = vld [vmem:[%s0] sm:$0xff]
  %v21 = vld [vmem:[%s0 + $0x8] sm:$0xff]
  %v22 = vld [vmem:[%s1] sm:$0x1]
  %v24 = vperm.slane %v22, 0
  %v26 = vsub.f32 %v20, %v24
  %v27 = vsub.f32 %v21, %v24
  %v28 = vld [vmem:[%s2] sm:$0x1]
  %v29 = vld [vmem:[%s3] sm:$0x1]
  %v30 = vmul.f32 %v28, %v29
  %v32 = vperm.slane %v30, 0
  %v34 = vmul.f32 %v26, %v32
  %v35 = vmul.f32 %v27, %v32
  %v36 = vld [vmem:[%s4] sm:$0x1]
  %v38 = vperm.slane %v36, 0
  %v40 = vadd.f32 %v34, %v38
  %v41 = vadd.f32 %v35, %v38
  %v42 = vmax.f32 %v40, 0.0
  %v43 = vmax.f32 %v41, 0.0
  %44 = vst [vmem:[%s5] sm:$0xff] %v42
  %45 = vst [vmem:[%s5 + $0x8] sm:$0xff] %v43
  // Predicated region
  $region22: #{resnet_forward.44} parent=0 // pred_check
    _
  $region23: #{resnet_forward.44} parent=0 // pred_check_branch
    %47 = sbr.rel (0) target = $region25
  $region24: #{resnet_forward.44} parent=0 // pred_region
    _
  $region25: #{resnet_forward.44} parent=0 // pred_fallthru
    _
  // Predicated region
  $region26: #{resnet_forward.44} parent=0 // pred_check
    _
  $region27: #{resnet_forward.44} parent=0 // pred_check_branch
    %49 = sbr.rel (0) target = $region29
  $region28: #{resnet_forward.44} parent=0 // pred_region
    _
  $region29: #{resnet_forward.44} parent=0 // pred_fallthru
    _

// kernel: resnet_forward.47
$region0: #{resnet_forward.47}
  #allocation0 [shape = 'u32[]', space=smem, size = 0x4, offset = 0x4, fixed_abs, tag = 'smem constant byte address 0x4 - core index']
  #allocation1 [shape = 'u32[72,128]{1,0:T(1,128)}', space=vmem, size = 0x9000, scoped, tag = 'internal scratch']
  %s0 = inlined_call_operand.vmem [shape: f32[16,128], index: 0, kind: input, shape index: {}]
  %s1 = inlined_call_operand.vmem [shape: f32[1,128], index: 1, kind: input, shape index: {}]
  %s2 = inlined_call_operand.vmem [shape: f32[1,128], index: 2, kind: input, shape index: {}]
  %s3 = inlined_call_operand.vmem [shape: f32[1,128], index: 3, kind: input, shape index: {}]
  %s4 = inlined_call_operand.vmem [shape: f32[1,128], index: 4, kind: input, shape index: {}]
  %s5 = inlined_call_operand.vmem [shape: f32[16,128], index: 5, kind: input, shape index: {}]
  %s6 = inlined_call_operand.vmem [shape: f32[16,128], index: 6, kind: output, shape index: {}]
  %s7 = sld [smem:[#allocation0]]
  $region34: #{resnet_forward.47} parent=0
    _
  %s9 = ssub.s32 1, %s7
  %s10 = scalar_select 0, %s9, %s7
  // Predicated region
  $region2: #{resnet_forward.47} parent=0 // pred_check
    _
  $region3: #{resnet_forward.47} parent=0 // pred_check_branch
    %12 = sbr.rel (0) target = $region5
  $region4: #{resnet_forward.47} parent=0 // pred_region
    _
  $region5: #{resnet_forward.47} parent=0 // pred_fallthru
    _
  // Predicated region
  $region6: #{resnet_forward.47} parent=0 // pred_check
    _
  $region7: #{resnet_forward.47} parent=0 // pred_check_branch
    %14 = sbr.rel (0) target = $region9
  $region8: #{resnet_forward.47} parent=0 // pred_region
    _
  $region9: #{resnet_forward.47} parent=0 // pred_fallthru
    _
  // Predicated region
  $region10: #{resnet_forward.47} parent=0 // pred_check
    _
  $region11: #{resnet_forward.47} parent=0 // pred_check_branch
    %16 = sbr.rel (0) target = $region13
  $region12: #{resnet_forward.47} parent=0 // pred_region
    _
  $region13: #{resnet_forward.47} parent=0 // pred_fallthru
    _
  // Predicated region
  $region14: #{resnet_forward.47} parent=0 // pred_check
    _
  $region15: #{resnet_forward.47} parent=0 // pred_check_branch
    %18 = sbr.rel (0) target = $region17
  $region16: #{resnet_forward.47} parent=0 // pred_region
    _
  $region17: #{resnet_forward.47} parent=0 // pred_fallthru
    _
  // Predicated region
  $region18: #{resnet_forward.47} parent=0 // pred_check
    _
  $region19: #{resnet_forward.47} parent=0 // pred_check_branch
    %20 = sbr.rel (0) target = $region21
  $region20: #{resnet_forward.47} parent=0 // pred_region
    _
  $region21: #{resnet_forward.47} parent=0 // pred_fallthru
    _
  // Predicated region
  $region22: #{resnet_forward.47} parent=0 // pred_check
    _
  $region23: #{resnet_forward.47} parent=0 // pred_check_branch
    %22 = sbr.rel (0) target = $region25
  $region24: #{resnet_forward.47} parent=0 // pred_region
    _
  $region25: #{resnet_forward.47} parent=0 // pred_fallthru
    _
  %v23 = vld [vmem:[%s0] sm:$0xff]
  %v24 = vld [vmem:[%s0 + $0x8] sm:$0xff]
  %v25 = vld [vmem:[%s1] sm:$0x1]
  %v27 = vperm.slane %v25, 0
  %v29 = vsub.f32 %v23, %v27
  %v30 = vsub.f32 %v24, %v27
  %v31 = vld [vmem:[%s2] sm:$0x1]
  %v32 = vld [vmem:[%s3] sm:$0x1]
  %v33 = vmul.f32 %v31, %v32
  %v35 = vperm.slane %v33, 0
  %v37 = vmul.f32 %v29, %v35
  %v38 = vmul.f32 %v30, %v35
  %v39 = vld [vmem:[%s4] sm:$0x1]
  %v41 = vperm.slane %v39, 0
  %v43 = vadd.f32 %v37, %v41
  %v44 = vadd.f32 %v38, %v41
  %v45 = vld [vmem:[%s5] sm:$0xff]
  %v46 = vld [vmem:[%s5 + $0x8] sm:$0xff]
  %v47 = vadd.f32 %v43, %v45
  %v48 = vadd.f32 %v44, %v46
  %v49 = vmax.f32 %v47, 0.0
  %v50 = vmax.f32 %v48, 0.0
  %51 = vst [vmem:[%s6] sm:$0xff] %v49
  %52 = vst [vmem:[%s6 + $0x8] sm:$0xff] %v50
  // Predicated region
  $region26: #{resnet_forward.47} parent=0 // pred_check
    _
  $region27: #{resnet_forward.47} parent=0 // pred_check_branch
    %54 = sbr.rel (0) target = $region29
  $region28: #{resnet_forward.47} parent=0 // pred_region
    _
  $region29: #{resnet_forward.47} parent=0 // pred_fallthru
    _
  // Predicated region
  $region30: #{resnet_forward.47} parent=0 // pred_check
    _
  $region31: #{resnet_forward.47} parent=0 // pred_check_branch
    %56 = sbr.rel (0) target = $region33
  $region32: #{resnet_forward.47} parent=0 // pred_region
    _
  $region33: #{resnet_forward.47} parent=0 // pred_fallthru
    _

// kernel: resnet_forward.52
$region0: #{resnet_forward.52}
  #allocation0 [shape = 'u32[]', space=smem, size = 0x4, offset = 0x4, fixed_abs, tag = 'smem constant byte address 0x4 - core index']
  #allocation1 [shape = 'u32[72,128]{1,0:T(1,128)}', space=vmem, size = 0x9000, scoped, tag = 'internal scratch']
  #allocation2 [shape = 'f32[32,128]{1,0:T(8,128)}', space=vmem, size = 0x4000, scoped, tag = 'scratch operand']
  %s0 = inlined_call_operand.vmem [shape: bf16[32,128], index: 0, kind: input, shape index: {}]
  %s1 = inlined_call_operand.vmem [shape: bf16[128,128], index: 1, kind: input, shape index: {}]
  %s2 = inlined_call_operand.vmem [shape: f32[32,128], index: 2, kind: output, shape index: {}]
  %s3 = sld [smem:[#allocation0]]
  $region26: #{resnet_forward.52} parent=0
    _
  %s5 = ssub.s32 1, %s3
  %s6 = scalar_select 0, %s5, %s3
  // Predicated region
  $region2: #{resnet_forward.52} parent=0 // pred_check
    _
  $region3: #{resnet_forward.52} parent=0 // pred_check_branch
    %8 = sbr.rel (0) target = $region5
  $region4: #{resnet_forward.52} parent=0 // pred_region
    _
  $region5: #{resnet_forward.52} parent=0 // pred_fallthru
    _
  // Predicated region
  $region6: #{resnet_forward.52} parent=0 // pred_check
    _
  $region7: #{resnet_forward.52} parent=0 // pred_check_branch
    %10 = sbr.rel (0) target = $region9
  $region8: #{resnet_forward.52} parent=0 // pred_region
    _
  $region9: #{resnet_forward.52} parent=0 // pred_fallthru
    _
  %p11 = scmp.eq.s32.totalorder 0, 0
  // Predicated region
  $region10: #{resnet_forward.52} parent=0 // pred_check
    %p12 = pneg %p11
  $region11: #{resnet_forward.52} parent=0 // pred_check_branch
    %14 = sbr.rel (%p12) target = $region13
  $region12: #{resnet_forward.52} parent=0 // pred_region
    %15 = vst [vmem:[#allocation2] sm:$0xff] 0.0
    %16 = vst [vmem:[#allocation2 + $0x8] sm:$0xff] 0.0
    %17 = vst [vmem:[#allocation2 + $0x10] sm:$0xff] 0.0
    %18 = vst [vmem:[#allocation2 + $0x18] sm:$0xff] 0.0
  $region13: #{resnet_forward.52} parent=0 // pred_fallthru
    _
  %v19 = vld [vmem:[#allocation2] sm:$0xff]
  %v20 = vld [vmem:[#allocation2 + $0x8] sm:$0xff]
  %v21 = vld [vmem:[#allocation2 + $0x10] sm:$0xff]
  %v22 = vld [vmem:[#allocation2 + $0x18] sm:$0xff]
  %v23 = vld [vmem:[%s0] sm:$0xf]
  %v24 = vld [vmem:[%s0 + $0x4] sm:$0xf]
  %v25 = vld [vmem:[%s0 + $0x8] sm:$0xf]
  %v26 = vld [vmem:[%s0 + $0xc] sm:$0xf]
  %v27 = vld [vmem:[%s1] sm:$0xf]
  %v28 = vld [vmem:[%s1 + $0x4] sm:$0xf]
  %v29 = vld [vmem:[%s1 + $0x8] sm:$0xf]
  %v30 = vld [vmem:[%s1 + $0xc] sm:$0xf]
  %v31 = vld [vmem:[%s1 + $0x10] sm:$0xf]
  %v32 = vld [vmem:[%s1 + $0x14] sm:$0xf]
  %v33 = vld [vmem:[%s1 + $0x18] sm:$0xf]
  %v34 = vld [vmem:[%s1 + $0x1c] sm:$0xf]
  %v35 = vld [vmem:[%s1 + $0x20] sm:$0xf]
  %v36 = vld [vmem:[%s1 + $0x24] sm:$0xf]
  %v37 = vld [vmem:[%s1 + $0x28] sm:$0xf]
  %v38 = vld [vmem:[%s1 + $0x2c] sm:$0xf]
  %v39 = vld [vmem:[%s1 + $0x30] sm:$0xf]
  %v40 = vld [vmem:[%s1 + $0x34] sm:$0xf]
  %v41 = vld [vmem:[%s1 + $0x38] sm:$0xf]
  %v42 = vld [vmem:[%s1 + $0x3c] sm:$0xf]
  %v47 = vunpack.c.l.b16 %v23
  %v48 = vunpack.c.l.b16 %v24
  %v49 = vunpack.c.l.b16 %v25
  %v50 = vunpack.c.l.b16 %v26
  %v51 = vpack.c.b16 %v48, %v47
  %v52 = vpack.c.b16 %v50, %v49
  %v71 = vunpack.c.l.b16 %v27
  %v72 = vunpack.c.l.b16 %v28
  %v73 = vunpack.c.l.b16 %v29
  %v74 = vunpack.c.l.b16 %v30
  %v75 = vunpack.c.l.b16 %v31
  %v76 = vunpack.c.l.b16 %v32
  %v77 = vunpack.c.l.b16 %v33
  %v78 = vunpack.c.l.b16 %v34
  %v79 = vunpack.c.l.b16 %v35
  %v80 = vunpack.c.l.b16 %v36
  %v81 = vunpack.c.l.b16 %v37
  %v82 = vunpack.c.l.b16 %v38
  %v83 = vunpack.c.l.b16 %v39
  %v84 = vunpack.c.l.b16 %v40
  %v85 = vunpack.c.l.b16 %v41
  %v86 = vunpack.c.l.b16 %v42
  %v87 = vpack.c.b16 %v72, %v71
  %v88 = vpack.c.b16 %v74, %v73
  %v89 = vpack.c.b16 %v76, %v75
  %v90 = vpack.c.b16 %v78, %v77
  %v91 = vpack.c.b16 %v80, %v79
  %v92 = vpack.c.b16 %v82, %v81
  %v93 = vpack.c.b16 %v84, %v83
  %v94 = vpack.c.b16 %v86, %v85
  %103 = vmatpush.bf16.msra.mxu0 %v94
  %104 = vmatpush.bf16.msra.mxu0 %v93
  %105 = vmatpush.bf16.msra.mxu0 %v92
  %106 = vmatpush.bf16.msra.mxu0 %v91
  %107 = vmatpush.bf16.msra.mxu0 %v90
  %108 = vmatpush.bf16.msra.mxu0 %v89
  %109 = vmatpush.bf16.msra.mxu0 %v88
  %110 = vmatpush.bf16.msra.mxu0 %v87
  %111 = vmatmul.bf16.gmra.mxu0 %v51
  %v112 = vpop.f32.mrf.mxu0
  %v113 = vadd.f32 0.0, %v112
  %v114 = vpop.f32.mrf.mxu0
  %v115 = vadd.f32 0.0, %v114
  %116 = vmatmul.bf16.gmra.mxu0 %v52
  %v117 = vpop.f32.mrf.mxu0
  %v118 = vadd.f32 0.0, %v117
  %v119 = vpop.f32.mrf.mxu0
  %v120 = vadd.f32 0.0, %v119
  %121 = vdwg.mxu0
  %v122 = vadd.f32 %v19, %v113
  %v123 = vadd.f32 %v20, %v115
  %v124 = vadd.f32 %v21, %v118
  %v125 = vadd.f32 %v22, %v120
  %126 = vst [vmem:[#allocation2] sm:$0xff] %v122
  %127 = vst [vmem:[#allocation2 + $0x8] sm:$0xff] %v123
  %128 = vst [vmem:[#allocation2 + $0x10] sm:$0xff] %v124
  %129 = vst [vmem:[#allocation2 + $0x18] sm:$0xff] %v125
  // Predicated region
  $region14: #{resnet_forward.52} parent=0 // pred_check
    %p130 = pneg %p11
  $region15: #{resnet_forward.52} parent=0 // pred_check_branch
    %132 = sbr.rel (%p130) target = $region17
  $region16: #{resnet_forward.52} parent=0 // pred_region
    %v133 = vld [vmem:[#allocation2] sm:$0xff]
    %v134 = vld [vmem:[#allocation2 + $0x8] sm:$0xff]
    %v135 = vld [vmem:[#allocation2 + $0x10] sm:$0xff]
    %v136 = vld [vmem:[#allocation2 + $0x18] sm:$0xff]
    %137 = vst [vmem:[%s2] sm:$0xff] %v133
    %138 = vst [vmem:[%s2 + $0x8] sm:$0xff] %v134
    %139 = vst [vmem:[%s2 + $0x10] sm:$0xff] %v135
    %140 = vst [vmem:[%s2 + $0x18] sm:$0xff] %v136
  $region17: #{resnet_forward.52} parent=0 // pred_fallthru
    _
  // Predicated region
  $region18: #{resnet_forward.52} parent=0 // pred_check
    _
  $region19: #{resnet_forward.52} parent=0 // pred_check_branch
    %142 = sbr.rel (0) target = $region21
  $region20: #{resnet_forward.52} parent=0 // pred_region
    _
  $region21: #{resnet_forward.52} parent=0 // pred_fallthru
    _
  // Predicated region
  $region22: #{resnet_forward.52} parent=0 // pred_check
    _
  $region23: #{resnet_forward.52} parent=0 // pred_check_branch
    %144 = sbr.rel (0) target = $region25
  $region24: #{resnet_forward.52} parent=0 // pred_region
    _
  $region25: #{resnet_forward.52} parent=0 // pred_fallthru
    _

// kernel: resnet_forward.53
$region0: #{resnet_forward.53}
  #allocation0 [shape = 'u32[]', space=smem, size = 0x4, offset = 0x4, fixed_abs, tag = 'smem constant byte address 0x4 - core index']
  #allocation1 [shape = 'u32[72,128]{1,0:T(1,128)}', space=vmem, size = 0x9000, scoped, tag = 'internal scratch']
  #allocation2 [shape = 'f32[1,32]{1,0:T(1,128)}', space=vmem, size = 0x200, scoped, tag = 'scratch operand']
  #allocation3 [shape = 'f32[1,32]{1,0:T(1,128)}', space=vmem, size = 0x200, scoped, tag = 'scratch operand']
  #allocation4 [shape = 'f32[1,32]{1,0:T(1,128)}', space=vmem, size = 0x200, scoped, tag = 'scratch operand']
  %s0 = inlined_call_operand.vmem [shape: f32[16,2,32], index: 0, kind: input, shape index: {}]
  %s1 = inlined_call_operand.vmem [shape: f32[1,32], index: 1, kind: output, shape index: {0}]
  %s2 = inlined_call_operand.vmem [shape: f32[1,32], index: 2, kind: output, shape index: {1}]
  %3 = xla_tuple %s1, %s2
  %s4 = sld [smem:[#allocation0]]
  $region53: #{resnet_forward.53} parent=0
    _
  %s6 = ssub.s32 1, %s4
  %s7 = scalar_select 0, %s6, %s4
  loop: start=0, step=1, limit=18
  $region2: #{resnet_forward.53} parent=0 // loop_pre_header
    _
  $region3: #{resnet_forward.53} parent=0 // loop_header
    %s9 = sphi 0, %s13
    %p10 = scmp.ge.s32.totalorder %s9, 18
    %s19 = sphi 0, %s21
    %s22 = sphi 0, %s19
    %s23 = sphi 0, %s22
    %s39 = sphi 0, %s23
    %s43 = sphi 0, %s43
    %s45 = sphi 0, %s43
    %s46 = sphi 0, %s45
    %s60 = sphi 0, %s46
    %s64 = sphi 0, %s64
    %s66 = sphi 0, %s64
    %s67 = sphi 0, %s66
    %s81 = sphi 0, %s67
  $region4: #{resnet_forward.53} parent=0 // loop_header_branch
    %12 = sbr.rel (%p10) target = $region8
  $region5: #{resnet_forward.53} parent=0 // loop_body
    %s14 = ssub.s32 %s9, 1
    %s15 = ssub.s32 %s9, 2
    %s16 = sadd.s32 %s9, 1
    %s17 = ssub.s32 %s9, %s16
    %p18 = scmp.eq.s32.totalorder %s17, 0
    %s20 = sadd.s32 %s19, 1
    %s21 = scalar_select %p18, %s19, %s20
    %p24 = pneg %p18
    %p25 = scmp.eq.s32.totalorder %s9, 15
    %p26 = por %p24, %p25
    %p27 = scmp.ne.s32.totalorder %s19, %s22
    %p28 = scmp.eq.s32.totalorder %s9, 0
    %p29 = por %p27, %p28
    %p30 = scmp.ne.s32.totalorder %s19, %s22
    %p31 = scmp.eq.s32.totalorder %s14, 15
    %p32 = por %p30, %p31
    %p33 = scmp.ne.s32.totalorder %s22, %s23
    %p34 = scmp.eq.s32.totalorder %s14, 0
    %p35 = por %p33, %p34
    %p36 = scmp.ne.s32.totalorder %s22, %s23
    %p37 = scmp.eq.s32.totalorder %s15, 15
    %p38 = por %p36, %p37
    %p40 = scmp.ne.s32.totalorder %s23, %s39
    %p41 = scmp.eq.s32.totalorder %s15, 0
    %p42 = por %p40, %p41
    %s44 = sadd.s32 %s43, 1
    %p47 = scmp.eq.s32.totalorder %s9, 15
    %p48 = scmp.ne.s32.totalorder %s43, %s45
    %p49 = scmp.eq.s32.totalorder %s9, 0
    %p50 = por %p48, %p49
    %p51 = scmp.ne.s32.totalorder %s43, %s45
    %p52 = scmp.eq.s32.totalorder %s14, 15
    %p53 = por %p51, %p52
    %p54 = scmp.ne.s32.totalorder %s45, %s46
    %p55 = scmp.eq.s32.totalorder %s14, 0
    %p56 = por %p54, %p55
    %p57 = scmp.ne.s32.totalorder %s45, %s46
    %p58 = scmp.eq.s32.totalorder %s15, 15
    %p59 = por %p57, %p58
    %p61 = scmp.ne.s32.totalorder %s46, %s60
    %p62 = scmp.eq.s32.totalorder %s15, 0
    %p63 = por %p61, %p62
    %s65 = sadd.s32 %s64, 1
    %p68 = scmp.eq.s32.totalorder %s9, 15
    %p69 = scmp.ne.s32.totalorder %s64, %s66
    %p70 = scmp.eq.s32.totalorder %s9, 0
    %p71 = por %p69, %p70
    %p72 = scmp.ne.s32.totalorder %s64, %s66
    %p73 = scmp.eq.s32.totalorder %s14, 15
    %p74 = por %p72, %p73
    %p75 = scmp.ne.s32.totalorder %s66, %s67
    %p76 = scmp.eq.s32.totalorder %s14, 0
    %p77 = por %p75, %p76
    %p78 = scmp.ne.s32.totalorder %s66, %s67
    %p79 = scmp.eq.s32.totalorder %s15, 15
    %p80 = por %p78, %p79
    %p82 = scmp.ne.s32.totalorder %s67, %s81
    %p83 = scmp.eq.s32.totalorder %s15, 0
    %p84 = por %p82, %p83
    %p85 = scmp.le.s32.totalorder 1, %s9
    %p86 = scmp.lt.s32.totalorder %s9, 17
    %p87 = pnand %p85, %p86
    %p88 = pneg %p87
    // Predicated region
    $region9: #{resnet_forward.53} parent=5 // pred_check
      _
    $region10: #{resnet_forward.53} parent=5 // pred_check_branch
      %90 = sbr.rel (%p87) target = $region12
    $region11: #{resnet_forward.53} parent=5 // pred_region
      %s91 = ssub.s32 %s9, 1
    $region12: #{resnet_forward.53} parent=5 // pred_fallthru
      _
    %p92 = scmp.lt.s32.totalorder %s9, 16
    // Predicated region
    $region13: #{resnet_forward.53} parent=5 // pred_check
      %p93 = pneg %p92
    $region14: #{resnet_forward.53} parent=5 // pred_check_branch
      %95 = sbr.rel (%p93) target = $region16
    $region15: #{resnet_forward.53} parent=5 // pred_region
      // Predicated region
      $region17: #{resnet_forward.53} parent=15 // pred_check
        %p96 = pneg %p29
      $region18: #{resnet_forward.53} parent=15 // pred_check_branch
        %98 = sbr.rel (%p96) target = $region20
      $region19: #{resnet_forward.53} parent=15 // pred_region
        %p99 = scmp.lt.s32.totalorder %s9, 15
        %s100 = scalar_select %p99, %s9, 15
        %s101 = smul.addr %s100, 2
        %s102 = scalar_lea.vmem %s0, %s101
      $region20: #{resnet_forward.53} parent=15 // pred_fallthru
        _
    $region16: #{resnet_forward.53} parent=5 // pred_fallthru
      _
    %p103 = scmp.le.s32.totalorder 1, %s9
    %p104 = scmp.lt.s32.totalorder %s9, 17
    %p105 = pnand %p103, %p104
    %p106 = pneg %p105
    // Predicated region
    $region21: #{resnet_forward.53} parent=5 // pred_check
      _
    $region22: #{resnet_forward.53} parent=5 // pred_check_branch
      %108 = sbr.rel (%p105) target = $region24
    $region23: #{resnet_forward.53} parent=5 // pred_region
      %s109 = ssub.s32 %s9, 1
      %p110 = scmp.lt.s32.totalorder %s14, 15
      %s111 = scalar_select %p110, %s14, 15
      %s112 = smul.addr %s111, 2
      %s113 = scalar_lea.vmem %s0, %s112
      %p114 = pneg %p35
      %p115 = pneg %p32
      %p116 = pneg %p56
      %p117 = pneg %p53
      %p118 = pneg %p77
      %p119 = pneg %p74
      %p120 = scmp.lt.s32.totalorder %s14, 15
      %s121 = scalar_select %p120, %s14, 15
      %s122 = smul.addr %s121, 2
      %s123 = scalar_lea.vmem %s0, %s122
      %v124 = vld [vmem:[%s123] sm:$0x3]
      %vm125 = vcmask 254976
      %v126 = vsel %vm125, %v124, 0.0
      %v127 = vrot.slane %v126, 4
      %v128 = vadd.f32 %v126, %v127
      %v129 = vrot.slane %v128, 2
      %v130 = vadd.f32 %v128, %v129
      %v131 = vrot.slane %v130, 1
      %v132 = vadd.f32 %v130, %v131
      %v133 = vsel %vm125, %v124, -inf
      %v134 = vrot.slane %v133, 4
      %v135 = vmax.f32 %v133, %v134
      %v136 = vrot.slane %v135, 2
      %v137 = vmax.f32 %v135, %v136
      %v138 = vrot.slane %v137, 1
      %v139 = vmax.f32 %v137, %v138
      %v140 = vsel %vm125, %v124, inf
      %v141 = vrot.slane %v140, 4
      %v142 = vmin.f32 %v140, %v141
      %v143 = vrot.slane %v142, 2
      %v144 = vmin.f32 %v142, %v143
      %v145 = vrot.slane %v144, 1
      %v146 = vmin.f32 %v144, %v145
      %p147 = scmp.eq.s32.totalorder %s14, 0
      // Predicated region
      $region25: #{resnet_forward.53} parent=23 // pred_check
        %p148 = pneg %p147
      $region26: #{resnet_forward.53} parent=23 // pred_check_branch
        %150 = sbr.rel (%p148) target = $region28
      $region27: #{resnet_forward.53} parent=23 // pred_region
        %vm151 = vcmask 253952
        %152 = vst.msk [vmem:[#allocation2] sm:$0x1] %vm151, 0.0
        %153 = vst.msk [vmem:[#allocation3] sm:$0x1] %vm151, 0.0
        %154 = vst.msk [vmem:[#allocation4] sm:$0x1] %vm151, 0.0
      $region28: #{resnet_forward.53} parent=23 // pred_fallthru
        _
      %v155 = vld [vmem:[#allocation2] sm:$0x1]
      %v156 = vadd.f32 %v155, %v132
      %vm157 = vcmask 253952
      %158 = vst.msk [vmem:[#allocation2] sm:$0x1] %vm157, %v156
      %v159 = vld [vmem:[#allocation3] sm:$0x1]
      %v160 = vadd.f32 %v159, %v139
      %161 = vst.msk [vmem:[#allocation3] sm:$0x1] %vm157, %v160
      %v162 = vld [vmem:[#allocation4] sm:$0x1]
      %v163 = vadd.f32 %v162, %v146
      %164 = vst.msk [vmem:[#allocation4] sm:$0x1] %vm157, %v163
      %p165 = scmp.eq.s32.totalorder %s14, 15
      // Predicated region
      $region29: #{resnet_forward.53} parent=23 // pred_check
        %p166 = pneg %p165
      $region30: #{resnet_forward.53} parent=23 // pred_check_branch
        %168 = sbr.rel (%p166) target = $region32
      $region31: #{resnet_forward.53} parent=23 // pred_region
        %v169 = vld [vmem:[#allocation2] sm:$0x1]
        %v170 = vrcp.pop 32.0
        %v171 = vmul.f32 32.0, %v170
        %v172 = vsub.f32 1.0, %v171
        %v173 = vmul.f32 %v170, %v172
        %v174 = vadd.f32 %v170, %v173
        %vm175 = vweird.f32 %v170
        %v176 = vsel %vm175, %v170, %v174
        %v177 = vmul.f32 %v169, %v176
        %178 = vst.msk [vmem:[%s1] sm:$0x1] %vm157, %v177
        %v179 = vld [vmem:[#allocation3] sm:$0x1]
        %v180 = vld [vmem:[#allocation4] sm:$0x1]
        %v181 = vsub.f32 %v179, %v180
        %v182 = vrcp.pop 16.0
        %v183 = vmul.f32 16.0, %v182
        %v184 = vsub.f32 1.0, %v183
        %v185 = vmul.f32 %v182, %v184
        %v186 = vadd.f32 %v182, %v185
        %vm187 = vweird.f32 %v182
        %v188 = vsel %vm187, %v182, %v186
        %v189 = vmul.f32 %v181, %v188
        %v190 = vmul.f32 %v189, 0.45881075
        %v191 = vadd.f32 %v190, 1e-05
        %v192 = vrcp.pop %v191
        %v193 = vmul.f32 %v191, %v192
        %v194 = vsub.f32 1.0, %v193
        %v195 = vmul.f32 %v192, %v194
        %v196 = vadd.f32 %v192, %v195
        %vm197 = vweird.f32 %v191
        %vm198 = vweird.f32 %v192
        %vm199 = vmor %vm197, %vm198
        %v200 = vsel %vm199, %v192, %v196
        %v201 = vand.u32 2147483647, %v191
        %vm202 = vcmp.eq.f32.partialorder %v201, 8.507059e+37
        %v203 = vand.u32 %v191, 2147483648
        %v204 = vor.u32 1.1754944e-38, %v203
        %v205 = vsel %vm202, %v204, %v200
        %v206 = vmul.f32 1.0, %v205
        %207 = vst.msk [vmem:[%s2] sm:$0x1] %vm157, %v206
      $region32: #{resnet_forward.53} parent=23 // pred_fallthru
        _
      // Predicated region
      $region33: #{resnet_forward.53} parent=23 // pred_check
        %p208 = pneg %p53
      $region34: #{resnet_forward.53} parent=23 // pred_check_branch
        %210 = sbr.rel (%p208) target = $region36
      $region35: #{resnet_forward.53} parent=23 // pred_region
        _
      $region36: #{resnet_forward.53} parent=23 // pred_fallthru
        _
      // Predicated region
      $region37: #{resnet_forward.53} parent=23 // pred_check
        %p211 = pneg %p74
      $region38: #{resnet_forward.53} parent=23 // pred_check_branch
        %213 = sbr.rel (%p211) target = $region40
      $region39: #{resnet_forward.53} parent=23 // pred_region
        _
      $region40: #{resnet_forward.53} parent=23 // pred_fallthru
        _
      // Predicated region
      $region41: #{resnet_forward.53} parent=23 // pred_check
        %p214 = pneg %p53
      $region42: #{resnet_forward.53} parent=23 // pred_check_branch
        %216 = sbr.rel (%p214) target = $region44
      $region43: #{resnet_forward.53} parent=23 // pred_region
        _
      $region44: #{resnet_forward.53} parent=23 // pred_fallthru
        _
      // Predicated region
      $region45: #{resnet_forward.53} parent=23 // pred_check
        %p217 = pneg %p74
      $region46: #{resnet_forward.53} parent=23 // pred_check_branch
        %219 = sbr.rel (%p217) target = $region48
      $region47: #{resnet_forward.53} parent=23 // pred_region
        _
      $region48: #{resnet_forward.53} parent=23 // pred_fallthru
        _
    $region24: #{resnet_forward.53} parent=5 // pred_fallthru
      _
    %p220 = scmp.le.s32.totalorder 2, %s9
    // Predicated region
    $region49: #{resnet_forward.53} parent=5 // pred_check
      %p221 = pneg %p220
    $region50: #{resnet_forward.53} parent=5 // pred_check_branch
      %223 = sbr.rel (%p221) target = $region52
    $region51: #{resnet_forward.53} parent=5 // pred_region
      %s224 = ssub.s32 %s9, 2
    $region52: #{resnet_forward.53} parent=5 // pred_fallthru
      _
  $region6: #{resnet_forward.53} parent=0 // loop_footer
    %s13 = sadd.s32 1, %s9
  $region7: #{resnet_forward.53} parent=0 // loop_footer_branch
    %8 = sbr.rel target = $region3
  $region8: #{resnet_forward.53} parent=0 // loop_exit
    _

// kernel: resnet_forward.54
$region0: #{resnet_forward.54}
  #allocation0 [shape = 'u32[]', space=smem, size = 0x4, offset = 0x4, fixed_abs, tag = 'smem constant byte address 0x4 - core index']
  #allocation1 [shape = 'u32[72,128]{1,0:T(1,128)}', space=vmem, size = 0x9000, scoped, tag = 'internal scratch']
  %s0 = inlined_call_operand.vmem [shape: f32[8,128], index: 0, kind: input, shape index: {}]
  %s1 = inlined_call_operand.vmem [shape: f32[1,128], index: 1, kind: input, shape index: {}]
  %s2 = inlined_call_operand.vmem [shape: f32[1,128], index: 2, kind: input, shape index: {}]
  %s3 = inlined_call_operand.vmem [shape: f32[1,128], index: 3, kind: input, shape index: {}]
  %s4 = inlined_call_operand.vmem [shape: f32[1,128], index: 4, kind: input, shape index: {}]
  %s5 = inlined_call_operand.vmem [shape: f32[8,128], index: 5, kind: output, shape index: {}]
  %s6 = sld [smem:[#allocation0]]
  $region30: #{resnet_forward.54} parent=0
    _
  %s8 = ssub.s32 1, %s6
  %s9 = scalar_select 0, %s8, %s6
  // Predicated region
  $region2: #{resnet_forward.54} parent=0 // pred_check
    _
  $region3: #{resnet_forward.54} parent=0 // pred_check_branch
    %11 = sbr.rel (0) target = $region5
  $region4: #{resnet_forward.54} parent=0 // pred_region
    _
  $region5: #{resnet_forward.54} parent=0 // pred_fallthru
    _
  // Predicated region
  $region6: #{resnet_forward.54} parent=0 // pred_check
    _
  $region7: #{resnet_forward.54} parent=0 // pred_check_branch
    %13 = sbr.rel (0) target = $region9
  $region8: #{resnet_forward.54} parent=0 // pred_region
    _
  $region9: #{resnet_forward.54} parent=0 // pred_fallthru
    _
  // Predicated region
  $region10: #{resnet_forward.54} parent=0 // pred_check
    _
  $region11: #{resnet_forward.54} parent=0 // pred_check_branch
    %15 = sbr.rel (0) target = $region13
  $region12: #{resnet_forward.54} parent=0 // pred_region
    _
  $region13: #{resnet_forward.54} parent=0 // pred_fallthru
    _
  // Predicated region
  $region14: #{resnet_forward.54} parent=0 // pred_check
    _
  $region15: #{resnet_forward.54} parent=0 // pred_check_branch
    %17 = sbr.rel (0) target = $region17
  $region16: #{resnet_forward.54} parent=0 // pred_region
    _
  $region17: #{resnet_forward.54} parent=0 // pred_fallthru
    _
  // Predicated region
  $region18: #{resnet_forward.54} parent=0 // pred_check
    _
  $region19: #{resnet_forward.54} parent=0 // pred_check_branch
    %19 = sbr.rel (0) target = $region21
  $region20: #{resnet_forward.54} parent=0 // pred_region
    _
  $region21: #{resnet_forward.54} parent=0 // pred_fallthru
    _
  %v20 = vld [vmem:[%s0] sm:$0xff]
  %v21 = vld [vmem:[%s1] sm:$0x1]
  %v23 = vperm.slane %v21, 0
  %v25 = vsub.f32 %v20, %v23
  %v26 = vld [vmem:[%s2] sm:$0x1]
  %v27 = vld [vmem:[%s3] sm:$0x1]
  %v28 = vmul.f32 %v26, %v27
  %v30 = vperm.slane %v28, 0
  %v32 = vmul.f32 %v25, %v30
  %v33 = vld [vmem:[%s4] sm:$0x1]
  %v35 = vperm.slane %v33, 0
  %v37 = vadd.f32 %v32, %v35
  %38 = vst [vmem:[%s5] sm:$0xff] %v37
  // Predicated region
  $region22: #{resnet_forward.54} parent=0 // pred_check
    _
  $region23: #{resnet_forward.54} parent=0 // pred_check_branch
    %40 = sbr.rel (0) target = $region25
  $region24: #{resnet_forward.54} parent=0 // pred_region
    _
  $region25: #{resnet_forward.54} parent=0 // pred_fallthru
    _
  // Predicated region
  $region26: #{resnet_forward.54} parent=0 // pred_check
    _
  $region27: #{resnet_forward.54} parent=0 // pred_check_branch
    %42 = sbr.rel (0) target = $region29
  $region28: #{resnet_forward.54} parent=0 // pred_region
    _
  $region29: #{resnet_forward.54} parent=0 // pred_fallthru
    _

// kernel: resnet_forward.48
$region0: #{resnet_forward.48}
  #allocation0 [shape = 'u32[]', space=smem, size = 0x4, offset = 0x4, fixed_abs, tag = 'smem constant byte address 0x4 - core index']
  #allocation1 [shape = 'u32[72,128]{1,0:T(1,128)}', space=vmem, size = 0x9000, scoped, tag = 'internal scratch']
  #allocation2 [shape = 'f32[32,128]{1,0:T(8,128)}', space=vmem, size = 0x4000, scoped, tag = 'scratch operand']
  %s0 = inlined_call_operand.vmem [shape: bf16[32,256], index: 0, kind: input, shape index: {}]
  %s1 = inlined_call_operand.vmem [shape: bf16[256,128], index: 1, kind: input, shape index: {}]
  %s2 = inlined_call_operand.vmem [shape: f32[32,128], index: 2, kind: output, shape index: {}]
  %s3 = sld [smem:[#allocation0]]
  $region26: #{resnet_forward.48} parent=0
    _
  %s5 = ssub.s32 1, %s3
  %s6 = scalar_select 0, %s5, %s3
  // Predicated region
  $region2: #{resnet_forward.48} parent=0 // pred_check
    _
  $region3: #{resnet_forward.48} parent=0 // pred_check_branch
    %8 = sbr.rel (0) target = $region5
  $region4: #{resnet_forward.48} parent=0 // pred_region
    _
  $region5: #{resnet_forward.48} parent=0 // pred_fallthru
    _
  // Predicated region
  $region6: #{resnet_forward.48} parent=0 // pred_check
    _
  $region7: #{resnet_forward.48} parent=0 // pred_check_branch
    %10 = sbr.rel (0) target = $region9
  $region8: #{resnet_forward.48} parent=0 // pred_region
    _
  $region9: #{resnet_forward.48} parent=0 // pred_fallthru
    _
  %p11 = scmp.eq.s32.totalorder 0, 0
  // Predicated region
  $region10: #{resnet_forward.48} parent=0 // pred_check
    %p12 = pneg %p11
  $region11: #{resnet_forward.48} parent=0 // pred_check_branch
    %14 = sbr.rel (%p12) target = $region13
  $region12: #{resnet_forward.48} parent=0 // pred_region
    %15 = vst [vmem:[#allocation2] sm:$0xff] 0.0
    %16 = vst [vmem:[#allocation2 + $0x8] sm:$0xff] 0.0
    %17 = vst [vmem:[#allocation2 + $0x10] sm:$0xff] 0.0
    %18 = vst [vmem:[#allocation2 + $0x18] sm:$0xff] 0.0
  $region13: #{resnet_forward.48} parent=0 // pred_fallthru
    _
  %v19 = vld [vmem:[#allocation2] sm:$0xff]
  %v20 = vld [vmem:[#allocation2 + $0x8] sm:$0xff]
  %v21 = vld [vmem:[#allocation2 + $0x10] sm:$0xff]
  %v22 = vld [vmem:[#allocation2 + $0x18] sm:$0xff]
  %v23 = vld [vmem:[%s0] sm:$0xff]
  %v24 = vld [vmem:[%s0 + $0x8] sm:$0xff]
  %v25 = vld [vmem:[%s0 + $0x10] sm:$0xff]
  %v26 = vld [vmem:[%s0 + $0x18] sm:$0xff]
  %v27 = vld [vmem:[%s1] sm:$0xf]
  %v28 = vld [vmem:[%s1 + $0x4] sm:$0xf]
  %v29 = vld [vmem:[%s1 + $0x8] sm:$0xf]
  %v30 = vld [vmem:[%s1 + $0xc] sm:$0xf]
  %v31 = vld [vmem:[%s1 + $0x10] sm:$0xf]
  %v32 = vld [vmem:[%s1 + $0x14] sm:$0xf]
  %v33 = vld [vmem:[%s1 + $0x18] sm:$0xf]
  %v34 = vld [vmem:[%s1 + $0x1c] sm:$0xf]
  %v35 = vld [vmem:[%s1 + $0x20] sm:$0xf]
  %v36 = vld [vmem:[%s1 + $0x24] sm:$0xf]
  %v37 = vld [vmem:[%s1 + $0x28] sm:$0xf]
  %v38 = vld [vmem:[%s1 + $0x2c] sm:$0xf]
  %v39 = vld [vmem:[%s1 + $0x30] sm:$0xf]
  %v40 = vld [vmem:[%s1 + $0x34] sm:$0xf]
  %v41 = vld [vmem:[%s1 + $0x38] sm:$0xf]
  %v42 = vld [vmem:[%s1 + $0x3c] sm:$0xf]
  %v43 = vld [vmem:[%s1 + $0x40] sm:$0xf]
  %v44 = vld [vmem:[%s1 + $0x44] sm:$0xf]
  %v45 = vld [vmem:[%s1 + $0x48] sm:$0xf]
  %v46 = vld [vmem:[%s1 + $0x4c] sm:$0xf]
  %v47 = vld [vmem:[%s1 + $0x50] sm:$0xf]
  %v48 = vld [vmem:[%s1 + $0x54] sm:$0xf]
  %v49 = vld [vmem:[%s1 + $0x58] sm:$0xf]
  %v50 = vld [vmem:[%s1 + $0x5c] sm:$0xf]
  %v51 = vld [vmem:[%s1 + $0x60] sm:$0xf]
  %v52 = vld [vmem:[%s1 + $0x64] sm:$0xf]
  %v53 = vld [vmem:[%s1 + $0x68] sm:$0xf]
  %v54 = vld [vmem:[%s1 + $0x6c] sm:$0xf]
  %v55 = vld [vmem:[%s1 + $0x70] sm:$0xf]
  %v56 = vld [vmem:[%s1 + $0x74] sm:$0xf]
  %v57 = vld [vmem:[%s1 + $0x78] sm:$0xf]
  %v58 = vld [vmem:[%s1 + $0x7c] sm:$0xf]
  %v63 = vunpack.c.l.b16 %v23
  %v64 = vunpack.c.h.b16 %v23
  %v65 = vunpack.c.l.b16 %v24
  %v66 = vunpack.c.h.b16 %v24
  %v67 = vunpack.c.l.b16 %v25
  %v68 = vunpack.c.h.b16 %v25
  %v69 = vunpack.c.l.b16 %v26
  %v70 = vunpack.c.h.b16 %v26
  %v71 = vpack.c.b16 %v65, %v63
  %v72 = vpack.c.b16 %v66, %v64
  %v73 = vpack.c.b16 %v69, %v67
  %v74 = vpack.c.b16 %v70, %v68
  %v111 = vunpack.c.l.b16 %v27
  %v112 = vunpack.c.l.b16 %v28
  %v113 = vunpack.c.l.b16 %v29
  %v114 = vunpack.c.l.b16 %v30
  %v115 = vunpack.c.l.b16 %v31
  %v116 = vunpack.c.l.b16 %v32
  %v117 = vunpack.c.l.b16 %v33
  %v118 = vunpack.c.l.b16 %v34
  %v119 = vunpack.c.l.b16 %v35
  %v120 = vunpack.c.l.b16 %v36
  %v121 = vunpack.c.l.b16 %v37
  %v122 = vunpack.c.l.b16 %v38
  %v123 = vunpack.c.l.b16 %v39
  %v124 = vunpack.c.l.b16 %v40
  %v125 = vunpack.c.l.b16 %v41
  %v126 = vunpack.c.l.b16 %v42
  %v127 = vunpack.c.l.b16 %v43
  %v128 = vunpack.c.l.b16 %v44
  %v129 = vunpack.c.l.b16 %v45
  %v130 = vunpack.c.l.b16 %v46
  %v131 = vunpack.c.l.b16 %v47
  %v132 = vunpack.c.l.b16 %v48
  %v133 = vunpack.c.l.b16 %v49
  %v134 = vunpack.c.l.b16 %v50
  %v135 = vunpack.c.l.b16 %v51
  %v136 = vunpack.c.l.b16 %v52
  %v137 = vunpack.c.l.b16 %v53
  %v138 = vunpack.c.l.b16 %v54
  %v139 = vunpack.c.l.b16 %v55
  %v140 = vunpack.c.l.b16 %v56
  %v141 = vunpack.c.l.b16 %v57
  %v142 = vunpack.c.l.b16 %v58
  %v143 = vpack.c.b16 %v112, %v111
  %v144 = vpack.c.b16 %v114, %v113
  %v145 = vpack.c.b16 %v116, %v115
  %v146 = vpack.c.b16 %v118, %v117
  %v147 = vpack.c.b16 %v120, %v119
  %v148 = vpack.c.b16 %v122, %v121
  %v149 = vpack.c.b16 %v124, %v123
  %v150 = vpack.c.b16 %v126, %v125
  %v151 = vpack.c.b16 %v128, %v127
  %v152 = vpack.c.b16 %v130, %v129
  %v153 = vpack.c.b16 %v132, %v131
  %v154 = vpack.c.b16 %v134, %v133
  %v155 = vpack.c.b16 %v136, %v135
  %v156 = vpack.c.b16 %v138, %v137
  %v157 = vpack.c.b16 %v140, %v139
  %v158 = vpack.c.b16 %v142, %v141
  %175 = vmatpush.bf16.msra.mxu0 %v150
  %176 = vmatpush.bf16.msra.mxu0 %v149
  %177 = vmatpush.bf16.msra.mxu0 %v148
  %178 = vmatpush.bf16.msra.mxu0 %v147
  %179 = vmatpush.bf16.msra.mxu0 %v146
  %180 = vmatpush.bf16.msra.mxu0 %v145
  %181 = vmatpush.bf16.msra.mxu0 %v144
  %182 = vmatpush.bf16.msra.mxu0 %v143
  %183 = vmatmul.bf16.gmra.mxu0 %v71
  %v184 = vpop.f32.mrf.mxu0
  %v185 = vadd.f32 0.0, %v184
  %v186 = vpop.f32.mrf.mxu0
  %v187 = vadd.f32 0.0, %v186
  %188 = vmatmul.bf16.gmra.mxu0 %v73
  %v189 = vpop.f32.mrf.mxu0
  %v190 = vadd.f32 0.0, %v189
  %v191 = vpop.f32.mrf.mxu0
  %v192 = vadd.f32 0.0, %v191
  %193 = vdwg.mxu0
  %194 = vmatpush.bf16.msra.mxu0 %v158
  %195 = vmatpush.bf16.msra.mxu0 %v157
  %196 = vmatpush.bf16.msra.mxu0 %v156
  %197 = vmatpush.bf16.msra.mxu0 %v155
  %198 = vmatpush.bf16.msra.mxu0 %v154
  %199 = vmatpush.bf16.msra.mxu0 %v153
  %200 = vmatpush.bf16.msra.mxu0 %v152
  %201 = vmatpush.bf16.msra.mxu0 %v151
  %202 = vmatmul.bf16.gmra.mxu0 %v72
  %v203 = vpop.f32.mrf.mxu0
  %v204 = vadd.f32 %v185, %v203
  %v205 = vpop.f32.mrf.mxu0
  %v206 = vadd.f32 %v187, %v205
  %207 = vmatmul.bf16.gmra.mxu0 %v74
  %v208 = vpop.f32.mrf.mxu0
  %v209 = vadd.f32 %v190, %v208
  %v210 = vpop.f32.mrf.mxu0
  %v211 = vadd.f32 %v192, %v210
  %212 = vdwg.mxu0
  %v213 = vadd.f32 %v19, %v204
  %v214 = vadd.f32 %v20, %v206
  %v215 = vadd.f32 %v21, %v209
  %v216 = vadd.f32 %v22, %v211
  %217 = vst [vmem:[#allocation2] sm:$0xff] %v213
  %218 = vst [vmem:[#allocation2 + $0x8] sm:$0xff] %v214
  %219 = vst [vmem:[#allocation2 + $0x10] sm:$0xff] %v215
  %220 = vst [vmem:[#allocation2 + $0x18] sm:$0xff] %v216
  // Predicated region
  $region14: #{resnet_forward.48} parent=0 // pred_check
    %p221 = pneg %p11
  $region15: #{resnet_forward.48} parent=0 // pred_check_branch
    %223 = sbr.rel (%p221) target = $region17
  $region16: #{resnet_forward.48} parent=0 // pred_region
    %v224 = vld [vmem:[#allocation2] sm:$0xff]
    %v225 = vld [vmem:[#allocation2 + $0x8] sm:$0xff]
    %v226 = vld [vmem:[#allocation2 + $0x10] sm:$0xff]
    %v227 = vld [vmem:[#allocation2 + $0x18] sm:$0xff]
    %228 = vst [vmem:[%s2] sm:$0xff] %v224
    %229 = vst [vmem:[%s2 + $0x8] sm:$0xff] %v225
    %230 = vst [vmem:[%s2 + $0x10] sm:$0xff] %v226
    %231 = vst [vmem:[%s2 + $0x18] sm:$0xff] %v227
  $region17: #{resnet_forward.48} parent=0 // pred_fallthru
    _
  // Predicated region
  $region18: #{resnet_forward.48} parent=0 // pred_check
    _
  $region19: #{resnet_forward.48} parent=0 // pred_check_branch
    %233 = sbr.rel (0) target = $region21
  $region20: #{resnet_forward.48} parent=0 // pred_region
    _
  $region21: #{resnet_forward.48} parent=0 // pred_fallthru
    _
  // Predicated region
  $region22: #{resnet_forward.48} parent=0 // pred_check
    _
  $region23: #{resnet_forward.48} parent=0 // pred_check_branch
    %235 = sbr.rel (0) target = $region25
  $region24: #{resnet_forward.48} parent=0 // pred_region
    _
  $region25: #{resnet_forward.48} parent=0 // pred_fallthru
    _

// kernel: resnet_forward.50
$region0: #{resnet_forward.50}
  #allocation0 [shape = 'u32[]', space=smem, size = 0x4, offset = 0x4, fixed_abs, tag = 'smem constant byte address 0x4 - core index']
  #allocation1 [shape = 'u32[72,128]{1,0:T(1,128)}', space=vmem, size = 0x9000, scoped, tag = 'internal scratch']
  %s0 = inlined_call_operand.vmem [shape: f32[8,128], index: 0, kind: input, shape index: {}]
  %s1 = inlined_call_operand.vmem [shape: f32[1,128], index: 1, kind: input, shape index: {}]
  %s2 = inlined_call_operand.vmem [shape: f32[1,128], index: 2, kind: input, shape index: {}]
  %s3 = inlined_call_operand.vmem [shape: f32[1,128], index: 3, kind: input, shape index: {}]
  %s4 = inlined_call_operand.vmem [shape: f32[1,128], index: 4, kind: input, shape index: {}]
  %s5 = inlined_call_operand.vmem [shape: f32[8,128], index: 5, kind: output, shape index: {}]
  %s6 = sld [smem:[#allocation0]]
  $region30: #{resnet_forward.50} parent=0
    _
  %s8 = ssub.s32 1, %s6
  %s9 = scalar_select 0, %s8, %s6
  // Predicated region
  $region2: #{resnet_forward.50} parent=0 // pred_check
    _
  $region3: #{resnet_forward.50} parent=0 // pred_check_branch
    %11 = sbr.rel (0) target = $region5
  $region4: #{resnet_forward.50} parent=0 // pred_region
    _
  $region5: #{resnet_forward.50} parent=0 // pred_fallthru
    _
  // Predicated region
  $region6: #{resnet_forward.50} parent=0 // pred_check
    _
  $region7: #{resnet_forward.50} parent=0 // pred_check_branch
    %13 = sbr.rel (0) target = $region9
  $region8: #{resnet_forward.50} parent=0 // pred_region
    _
  $region9: #{resnet_forward.50} parent=0 // pred_fallthru
    _
  // Predicated region
  $region10: #{resnet_forward.50} parent=0 // pred_check
    _
  $region11: #{resnet_forward.50} parent=0 // pred_check_branch
    %15 = sbr.rel (0) target = $region13
  $region12: #{resnet_forward.50} parent=0 // pred_region
    _
  $region13: #{resnet_forward.50} parent=0 // pred_fallthru
    _
  // Predicated region
  $region14: #{resnet_forward.50} parent=0 // pred_check
    _
  $region15: #{resnet_forward.50} parent=0 // pred_check_branch
    %17 = sbr.rel (0) target = $region17
  $region16: #{resnet_forward.50} parent=0 // pred_region
    _
  $region17: #{resnet_forward.50} parent=0 // pred_fallthru
    _
  // Predicated region
  $region18: #{resnet_forward.50} parent=0 // pred_check
    _
  $region19: #{resnet_forward.50} parent=0 // pred_check_branch
    %19 = sbr.rel (0) target = $region21
  $region20: #{resnet_forward.50} parent=0 // pred_region
    _
  $region21: #{resnet_forward.50} parent=0 // pred_fallthru
    _
  %v20 = vld [vmem:[%s0] sm:$0xff]
  %v21 = vld [vmem:[%s1] sm:$0x1]
  %v23 = vperm.slane %v21, 0
  %v25 = vsub.f32 %v20, %v23
  %v26 = vld [vmem:[%s2] sm:$0x1]
  %v27 = vld [vmem:[%s3] sm:$0x1]
  %v28 = vmul.f32 %v26, %v27
  %v30 = vperm.slane %v28, 0
  %v32 = vmul.f32 %v25, %v30
  %v33 = vld [vmem:[%s4] sm:$0x1]
  %v35 = vperm.slane %v33, 0
  %v37 = vadd.f32 %v32, %v35
  %v38 = vmax.f32 %v37, 0.0
  %39 = vst [vmem:[%s5] sm:$0xff] %v38
  // Predicated region
  $region22: #{resnet_forward.50} parent=0 // pred_check
    _
  $region23: #{resnet_forward.50} parent=0 // pred_check_branch
    %41 = sbr.rel (0) target = $region25
  $region24: #{resnet_forward.50} parent=0 // pred_region
    _
  $region25: #{resnet_forward.50} parent=0 // pred_fallthru
    _
  // Predicated region
  $region26: #{resnet_forward.50} parent=0 // pred_check
    _
  $region27: #{resnet_forward.50} parent=0 // pred_check_branch
    %43 = sbr.rel (0) target = $region29
  $region28: #{resnet_forward.50} parent=0 // pred_region
    _
  $region29: #{resnet_forward.50} parent=0 // pred_fallthru
    _

// kernel: resnet_forward.56
$region0: #{resnet_forward.56}
  #allocation0 [shape = 'u32[]', space=smem, size = 0x4, offset = 0x4, fixed_abs, tag = 'smem constant byte address 0x4 - core index']
  #allocation1 [shape = 'u32[72,128]{1,0:T(1,128)}', space=vmem, size = 0x9000, scoped, tag = 'internal scratch']
  %s0 = inlined_call_operand.vmem [shape: f32[8,128], index: 0, kind: input, shape index: {}]
  %s1 = inlined_call_operand.vmem [shape: f32[1,128], index: 1, kind: input, shape index: {}]
  %s2 = inlined_call_operand.vmem [shape: f32[1,128], index: 2, kind: input, shape index: {}]
  %s3 = inlined_call_operand.vmem [shape: f32[1,128], index: 3, kind: input, shape index: {}]
  %s4 = inlined_call_operand.vmem [shape: f32[1,128], index: 4, kind: input, shape index: {}]
  %s5 = inlined_call_operand.vmem [shape: f32[8,128], index: 5, kind: input, shape index: {}]
  %s6 = inlined_call_operand.vmem [shape: f32[8,128], index: 6, kind: output, shape index: {}]
  %s7 = sld [smem:[#allocation0]]
  $region34: #{resnet_forward.56} parent=0
    _
  %s9 = ssub.s32 1, %s7
  %s10 = scalar_select 0, %s9, %s7
  // Predicated region
  $region2: #{resnet_forward.56} parent=0 // pred_check
    _
  $region3: #{resnet_forward.56} parent=0 // pred_check_branch
    %12 = sbr.rel (0) target = $region5
  $region4: #{resnet_forward.56} parent=0 // pred_region
    _
  $region5: #{resnet_forward.56} parent=0 // pred_fallthru
    _
  // Predicated region
  $region6: #{resnet_forward.56} parent=0 // pred_check
    _
  $region7: #{resnet_forward.56} parent=0 // pred_check_branch
    %14 = sbr.rel (0) target = $region9
  $region8: #{resnet_forward.56} parent=0 // pred_region
    _
  $region9: #{resnet_forward.56} parent=0 // pred_fallthru
    _
  // Predicated region
  $region10: #{resnet_forward.56} parent=0 // pred_check
    _
  $region11: #{resnet_forward.56} parent=0 // pred_check_branch
    %16 = sbr.rel (0) target = $region13
  $region12: #{resnet_forward.56} parent=0 // pred_region
    _
  $region13: #{resnet_forward.56} parent=0 // pred_fallthru
    _
  // Predicated region
  $region14: #{resnet_forward.56} parent=0 // pred_check
    _
  $region15: #{resnet_forward.56} parent=0 // pred_check_branch
    %18 = sbr.rel (0) target = $region17
  $region16: #{resnet_forward.56} parent=0 // pred_region
    _
  $region17: #{resnet_forward.56} parent=0 // pred_fallthru
    _
  // Predicated region
  $region18: #{resnet_forward.56} parent=0 // pred_check
    _
  $region19: #{resnet_forward.56} parent=0 // pred_check_branch
    %20 = sbr.rel (0) target = $region21
  $region20: #{resnet_forward.56} parent=0 // pred_region
    _
  $region21: #{resnet_forward.56} parent=0 // pred_fallthru
    _
  // Predicated region
  $region22: #{resnet_forward.56} parent=0 // pred_check
    _
  $region23: #{resnet_forward.56} parent=0 // pred_check_branch
    %22 = sbr.rel (0) target = $region25
  $region24: #{resnet_forward.56} parent=0 // pred_region
    _
  $region25: #{resnet_forward.56} parent=0 // pred_fallthru
    _
  %v23 = vld [vmem:[%s0] sm:$0xff]
  %v24 = vld [vmem:[%s1] sm:$0x1]
  %v26 = vperm.slane %v24, 0
  %v28 = vsub.f32 %v23, %v26
  %v29 = vld [vmem:[%s2] sm:$0x1]
  %v30 = vld [vmem:[%s3] sm:$0x1]
  %v31 = vmul.f32 %v29, %v30
  %v33 = vperm.slane %v31, 0
  %v35 = vmul.f32 %v28, %v33
  %v36 = vld [vmem:[%s4] sm:$0x1]
  %v38 = vperm.slane %v36, 0
  %v40 = vadd.f32 %v35, %v38
  %v41 = vld [vmem:[%s5] sm:$0xff]
  %v42 = vadd.f32 %v40, %v41
  %v43 = vmax.f32 %v42, 0.0
  %44 = vst [vmem:[%s6] sm:$0xff] %v43
  // Predicated region
  $region26: #{resnet_forward.56} parent=0 // pred_check
    _
  $region27: #{resnet_forward.56} parent=0 // pred_check_branch
    %46 = sbr.rel (0) target = $region29
  $region28: #{resnet_forward.56} parent=0 // pred_region
    _
  $region29: #{resnet_forward.56} parent=0 // pred_fallthru
    _
  // Predicated region
  $region30: #{resnet_forward.56} parent=0 // pred_check
    _
  $region31: #{resnet_forward.56} parent=0 // pred_check_branch
    %48 = sbr.rel (0) target = $region33
  $region32: #{resnet_forward.56} parent=0 // pred_region
    _
  $region33: #{resnet_forward.56} parent=0 // pred_fallthru
    _

// kernel: resnet_forward.51
$region0: #{resnet_forward.51}
  #allocation0 [shape = 'u32[]', space=smem, size = 0x4, offset = 0x4, fixed_abs, tag = 'smem constant byte address 0x4 - core index']
  #allocation1 [shape = 'u32[72,128]{1,0:T(1,128)}', space=vmem, size = 0x9000, scoped, tag = 'internal scratch']
  #allocation2 [shape = 'f32[32,128]{1,0:T(8,128)}', space=vmem, size = 0x4000, scoped, tag = 'scratch operand']
  %s0 = inlined_call_operand.vmem [shape: bf16[32,384], index: 0, kind: input, shape index: {}]
  %s1 = inlined_call_operand.vmem [shape: bf16[384,128], index: 1, kind: input, shape index: {}]
  %s2 = inlined_call_operand.vmem [shape: f32[32,128], index: 2, kind: output, shape index: {}]
  %s3 = sld [smem:[#allocation0]]
  $region26: #{resnet_forward.51} parent=0
    _
  %s5 = ssub.s32 1, %s3
  %s6 = scalar_select 0, %s5, %s3
  // Predicated region
  $region2: #{resnet_forward.51} parent=0 // pred_check
    _
  $region3: #{resnet_forward.51} parent=0 // pred_check_branch
    %8 = sbr.rel (0) target = $region5
  $region4: #{resnet_forward.51} parent=0 // pred_region
    _
  $region5: #{resnet_forward.51} parent=0 // pred_fallthru
    _
  // Predicated region
  $region6: #{resnet_forward.51} parent=0 // pred_check
    _
  $region7: #{resnet_forward.51} parent=0 // pred_check_branch
    %10 = sbr.rel (0) target = $region9
  $region8: #{resnet_forward.51} parent=0 // pred_region
    _
  $region9: #{resnet_forward.51} parent=0 // pred_fallthru
    _
  %p11 = scmp.eq.s32.totalorder 0, 0
  // Predicated region
  $region10: #{resnet_forward.51} parent=0 // pred_check
    %p12 = pneg %p11
  $region11: #{resnet_forward.51} parent=0 // pred_check_branch
    %14 = sbr.rel (%p12) target = $region13
  $region12: #{resnet_forward.51} parent=0 // pred_region
    %15 = vst [vmem:[#allocation2] sm:$0xff] 0.0
    %16 = vst [vmem:[#allocation2 + $0x8] sm:$0xff] 0.0
    %17 = vst [vmem:[#allocation2 + $0x10] sm:$0xff] 0.0
    %18 = vst [vmem:[#allocation2 + $0x18] sm:$0xff] 0.0
  $region13: #{resnet_forward.51} parent=0 // pred_fallthru
    _
  %v19 = vld [vmem:[#allocation2] sm:$0xff]
  %v20 = vld [vmem:[#allocation2 + $0x8] sm:$0xff]
  %v21 = vld [vmem:[#allocation2 + $0x10] sm:$0xff]
  %v22 = vld [vmem:[#allocation2 + $0x18] sm:$0xff]
  %v23 = vld [vmem:[%s0] sm:$0xff]
  %v24 = vld [vmem:[%s0 + $0x8] sm:$0xf]
  %v25 = vld [vmem:[%s0 + $0xc] sm:$0xff]
  %v26 = vld [vmem:[%s0 + $0x14] sm:$0xf]
  %v27 = vld [vmem:[%s0 + $0x18] sm:$0xff]
  %v28 = vld [vmem:[%s0 + $0x20] sm:$0xf]
  %v29 = vld [vmem:[%s0 + $0x24] sm:$0xff]
  %v30 = vld [vmem:[%s0 + $0x2c] sm:$0xf]
  %v31 = vld [vmem:[%s1] sm:$0xf]
  %v32 = vld [vmem:[%s1 + $0x4] sm:$0xf]
  %v33 = vld [vmem:[%s1 + $0x8] sm:$0xf]
  %v34 = vld [vmem:[%s1 + $0xc] sm:$0xf]
  %v35 = vld [vmem:[%s1 + $0x10] sm:$0xf]
  %v36 = vld [vmem:[%s1 + $0x14] sm:$0xf]
  %v37 = vld [vmem:[%s1 + $0x18] sm:$0xf]
  %v38 = vld [vmem:[%s1 + $0x1c] sm:$0xf]
  %v39 = vld [vmem:[%s1 + $0x20] sm:$0xf]
  %v40 = vld [vmem:[%s1 + $0x24] sm:$0xf]
  %v41 = vld [vmem:[%s1 + $0x28] sm:$0xf]
  %v42 = vld [vmem:[%s1 + $0x2c] sm:$0xf]
  %v43 = vld [vmem:[%s1 + $0x30] sm:$0xf]
  %v44 = vld [vmem:[%s1 + $0x34] sm:$0xf]
  %v45 = vld [vmem:[%s1 + $0x38] sm:$0xf]
  %v46 = vld [vmem:[%s1 + $0x3c] sm:$0xf]
  %v47 = vld [vmem:[%s1 + $0x40] sm:$0xf]
  %v48 = vld [vmem:[%s1 + $0x44] sm:$0xf]
  %v49 = vld [vmem:[%s1 + $0x48] sm:$0xf]
  %v50 = vld [vmem:[%s1 + $0x4c] sm:$0xf]
  %v51 = vld [vmem:[%s1 + $0x50] sm:$0xf]
  %v52 = vld [vmem:[%s1 + $0x54] sm:$0xf]
  %v53 = vld [vmem:[%s1 + $0x58] sm:$0xf]
  %v54 = vld [vmem:[%s1 + $0x5c] sm:$0xf]
  %v55 = vld [vmem:[%s1 + $0x60] sm:$0xf]
  %v56 = vld [vmem:[%s1 + $0x64] sm:$0xf]
  %v57 = vld [vmem:[%s1 + $0x68] sm:$0xf]
  %v58 = vld [vmem:[%s1 + $0x6c] sm:$0xf]
  %v59 = vld [vmem:[%s1 + $0x70] sm:$0xf]
  %v60 = vld [vmem:[%s1 + $0x74] sm:$0xf]
  %v61 = vld [vmem:[%s1 + $0x78] sm:$0xf]
  %v62 = vld [vmem:[%s1 + $0x7c] sm:$0xf]
  %v63 = vld [vmem:[%s1 + $0x80] sm:$0xf]
  %v64 = vld [vmem:[%s1 + $0x84] sm:$0xf]
  %v65 = vld [vmem:[%s1 + $0x88] sm:$0xf]
  %v66 = vld [vmem:[%s1 + $0x8c] sm:$0xf]
  %v67 = vld [vmem:[%s1 + $0x90] sm:$0xf]
  %v68 = vld [vmem:[%s1 + $0x94] sm:$0xf]
  %v69 = vld [vmem:[%s1 + $0x98] sm:$0xf]
  %v70 = vld [vmem:[%s1 + $0x9c] sm:$0xf]
  %v71 = vld [vmem:[%s1 + $0xa0] sm:$0xf]
  %v72 = vld [vmem:[%s1 + $0xa4] sm:$0xf]
  %v73 = vld [vmem:[%s1 + $0xa8] sm:$0xf]
  %v74 = vld [vmem:[%s1 + $0xac] sm:$0xf]
  %v75 = vld [vmem:[%s1 + $0xb0] sm:$0xf]
  %v76 = vld [vmem:[%s1 + $0xb4] sm:$0xf]
  %v77 = vld [vmem:[%s1 + $0xb8] sm:$0xf]
  %v78 = vld [vmem:[%s1 + $0xbc] sm:$0xf]
  %v87 = vunpack.c.l.b16 %v23
  %v88 = vunpack.c.h.b16 %v23
  %v89 = vunpack.c.l.b16 %v24
  %v90 = vunpack.c.l.b16 %v25
  %v91 = vunpack.c.h.b16 %v25
  %v92 = vunpack.c.l.b16 %v26
  %v93 = vunpack.c.l.b16 %v27
  %v94 = vunpack.c.h.b16 %v27
  %v95 = vunpack.c.l.b16 %v28
  %v96 = vunpack.c.l.b16 %v29
  %v97 = vunpack.c.h.b16 %v29
  %v98 = vunpack.c.l.b16 %v30
  %v99 = vpack.c.b16 %v90, %v87
  %v100 = vpack.c.b16 %v91, %v88
  %v101 = vpack.c.b16 %v92, %v89
  %v102 = vpack.c.b16 %v96, %v93
  %v103 = vpack.c.b16 %v97, %v94
  %v104 = vpack.c.b16 %v98, %v95
  %v159 = vunpack.c.l.b16 %v31
  %v160 = vunpack.c.l.b16 %v32
  %v161 = vunpack.c.l.b16 %v33
  %v162 = vunpack.c.l.b16 %v34
  %v163 = vunpack.c.l.b16 %v35
  %v164 = vunpack.c.l.b16 %v36
  %v165 = vunpack.c.l.b16 %v37
  %v166 = vunpack.c.l.b16 %v38
  %v167 = vunpack.c.l.b16 %v39
  %v168 = vunpack.c.l.b16 %v40
  %v169 = vunpack.c.l.b16 %v41
  %v170 = vunpack.c.l.b16 %v42
  %v171 = vunpack.c.l.b16 %v43
  %v172 = vunpack.c.l.b16 %v44
  %v173 = vunpack.c.l.b16 %v45
  %v174 = vunpack.c.l.b16 %v46
  %v175 = vunpack.c.l.b16 %v47
  %v176 = vunpack.c.l.b16 %v48
  %v177 = vunpack.c.l.b16 %v49
  %v178 = vunpack.c.l.b16 %v50
  %v179 = vunpack.c.l.b16 %v51
  %v180 = vunpack.c.l.b16 %v52
  %v181 = vunpack.c.l.b16 %v53
  %v182 = vunpack.c.l.b16 %v54
  %v183 = vunpack.c.l.b16 %v55
  %v184 = vunpack.c.l.b16 %v56
  %v185 = vunpack.c.l.b16 %v57
  %v186 = vunpack.c.l.b16 %v58
  %v187 = vunpack.c.l.b16 %v59
  %v188 = vunpack.c.l.b16 %v60
  %v189 = vunpack.c.l.b16 %v61
  %v190 = vunpack.c.l.b16 %v62
  %v191 = vunpack.c.l.b16 %v63
  %v192 = vunpack.c.l.b16 %v64
  %v193 = vunpack.c.l.b16 %v65
  %v194 = vunpack.c.l.b16 %v66
  %v195 = vunpack.c.l.b16 %v67
  %v196 = vunpack.c.l.b16 %v68
  %v197 = vunpack.c.l.b16 %v69
  %v198 = vunpack.c.l.b16 %v70
  %v199 = vunpack.c.l.b16 %v71
  %v200 = vunpack.c.l.b16 %v72
  %v201 = vunpack.c.l.b16 %v73
  %v202 = vunpack.c.l.b16 %v74
  %v203 = vunpack.c.l.b16 %v75
  %v204 = vunpack.c.l.b16 %v76
  %v205 = vunpack.c.l.b16 %v77
  %v206 = vunpack.c.l.b16 %v78
  %v207 = vpack.c.b16 %v160, %v159
  %v208 = vpack.c.b16 %v162, %v161
  %v209 = vpack.c.b16 %v164, %v163
  %v210 = vpack.c.b16 %v166, %v165
  %v211 = vpack.c.b16 %v168, %v167
  %v212 = vpack.c.b16 %v170, %v169
  %v213 = vpack.c.b16 %v172, %v171
  %v214 = vpack.c.b16 %v174, %v173
  %v215 = vpack.c.b16 %v176, %v175
  %v216 = vpack.c.b16 %v178, %v177
  %v217 = vpack.c.b16 %v180, %v179
  %v218 = vpack.c.b16 %v182, %v181
  %v219 = vpack.c.b16 %v184, %v183
  %v220 = vpack.c.b16 %v186, %v185
  %v221 = vpack.c.b16 %v188, %v187
  %v222 = vpack.c.b16 %v190, %v189
  %v223 = vpack.c.b16 %v192, %v191
  %v224 = vpack.c.b16 %v194, %v193
  %v225 = vpack.c.b16 %v196, %v195
  %v226 = vpack.c.b16 %v198, %v197
  %v227 = vpack.c.b16 %v200, %v199
  %v228 = vpack.c.b16 %v202, %v201
  %v229 = vpack.c.b16 %v204, %v203
  %v230 = vpack.c.b16 %v206, %v205
  %255 = vmatpush.bf16.msra.mxu0 %v214
  %256 = vmatpush.bf16.msra.mxu0 %v213
  %257 = vmatpush.bf16.msra.mxu0 %v212
  %258 = vmatpush.bf16.msra.mxu0 %v211
  %259 = vmatpush.bf16.msra.mxu0 %v210
  %260 = vmatpush.bf16.msra.mxu0 %v209
  %261 = vmatpush.bf16.msra.mxu0 %v208
  %262 = vmatpush.bf16.msra.mxu0 %v207
  %263 = vmatmul.bf16.gmra.mxu0 %v99
  %v264 = vpop.f32.mrf.mxu0
  %v265 = vadd.f32 0.0, %v264
  %v266 = vpop.f32.mrf.mxu0
  %v267 = vadd.f32 0.0, %v266
  %268 = vmatmul.bf16.gmra.mxu0 %v102
  %v269 = vpop.f32.mrf.mxu0
  %v270 = vadd.f32 0.0, %v269
  %v271 = vpop.f32.mrf.mxu0
  %v272 = vadd.f32 0.0, %v271
  %273 = vdwg.mxu0
  %274 = vmatpush.bf16.msra.mxu0 %v222
  %275 = vmatpush.bf16.msra.mxu0 %v221
  %276 = vmatpush.bf16.msra.mxu0 %v220
  %277 = vmatpush.bf16.msra.mxu0 %v219
  %278 = vmatpush.bf16.msra.mxu0 %v218
  %279 = vmatpush.bf16.msra.mxu0 %v217
  %280 = vmatpush.bf16.msra.mxu0 %v216
  %281 = vmatpush.bf16.msra.mxu0 %v215
  %282 = vmatmul.bf16.gmra.mxu0 %v100
  %v283 = vpop.f32.mrf.mxu0
  %v284 = vadd.f32 %v265, %v283
  %v285 = vpop.f32.mrf.mxu0
  %v286 = vadd.f32 %v267, %v285
  %287 = vmatmul.bf16.gmra.mxu0 %v103
  %v288 = vpop.f32.mrf.mxu0
  %v289 = vadd.f32 %v270, %v288
  %v290 = vpop.f32.mrf.mxu0
  %v291 = vadd.f32 %v272, %v290
  %292 = vdwg.mxu0
  %293 = vmatpush.bf16.msra.mxu0 %v230
  %294 = vmatpush.bf16.msra.mxu0 %v229
  %295 = vmatpush.bf16.msra.mxu0 %v228
  %296 = vmatpush.bf16.msra.mxu0 %v227
  %297 = vmatpush.bf16.msra.mxu0 %v226
  %298 = vmatpush.bf16.msra.mxu0 %v225
  %299 = vmatpush.bf16.msra.mxu0 %v224
  %300 = vmatpush.bf16.msra.mxu0 %v223
  %301 = vmatmul.bf16.gmra.mxu0 %v101
  %v302 = vpop.f32.mrf.mxu0
  %v303 = vadd.f32 %v284, %v302
  %v304 = vpop.f32.mrf.mxu0
  %v305 = vadd.f32 %v286, %v304
  %306 = vmatmul.bf16.gmra.mxu0 %v104
  %v307 = vpop.f32.mrf.mxu0
  %v308 = vadd.f32 %v289, %v307
  %v309 = vpop.f32.mrf.mxu0
  %v310 = vadd.f32 %v291, %v309
  %311 = vdwg.mxu0
  %v312 = vadd.f32 %v19, %v303
  %v313 = vadd.f32 %v20, %v305
  %v314 = vadd.f32 %v21, %v308
  %v315 = vadd.f32 %v22, %v310
  %316 = vst [vmem:[#allocation2] sm:$0xff] %v312
  %317 = vst [vmem:[#allocation2 + $0x8] sm:$0xff] %v313
  %318 = vst [vmem:[#allocation2 + $0x10] sm:$0xff] %v314
  %319 = vst [vmem:[#allocation2 + $0x18] sm:$0xff] %v315
  // Predicated region
  $region14: #{resnet_forward.51} parent=0 // pred_check
    %p320 = pneg %p11
  $region15: #{resnet_forward.51} parent=0 // pred_check_branch
    %322 = sbr.rel (%p320) target = $region17
  $region16: #{resnet_forward.51} parent=0 // pred_region
    %v323 = vld [vmem:[#allocation2] sm:$0xff]
    %v324 = vld [vmem:[#allocation2 + $0x8] sm:$0xff]
    %v325 = vld [vmem:[#allocation2 + $0x10] sm:$0xff]
    %v326 = vld [vmem:[#allocation2 + $0x18] sm:$0xff]
    %327 = vst [vmem:[%s2] sm:$0xff] %v323
    %328 = vst [vmem:[%s2 + $0x8] sm:$0xff] %v324
    %329 = vst [vmem:[%s2 + $0x10] sm:$0xff] %v325
    %330 = vst [vmem:[%s2 + $0x18] sm:$0xff] %v326
  $region17: #{resnet_forward.51} parent=0 // pred_fallthru
    _
  // Predicated region
  $region18: #{resnet_forward.51} parent=0 // pred_check
    _
  $region19: #{resnet_forward.51} parent=0 // pred_check_branch
    %332 = sbr.rel (0) target = $region21
  $region20: #{resnet_forward.51} parent=0 // pred_region
    _
  $region21: #{resnet_forward.51} parent=0 // pred_fallthru
    _
  // Predicated region
  $region22: #{resnet_forward.51} parent=0 // pred_check
    _
  $region23: #{resnet_forward.51} parent=0 // pred_check_branch
    %334 = sbr.rel (0) target = $region25
  $region24: #{resnet_forward.51} parent=0 // pred_region
    _
  $region25: #{resnet_forward.51} parent=0 // pred_fallthru
    _

// kernel: resnet_forward.61
$region0: #{resnet_forward.61}
  #allocation0 [shape = 'u32[]', space=smem, size = 0x4, offset = 0x4, fixed_abs, tag = 'smem constant byte address 0x4 - core index']
  #allocation1 [shape = 'u32[72,128]{1,0:T(1,128)}', space=vmem, size = 0x9000, scoped, tag = 'internal scratch']
  #allocation2 [shape = 'f32[16,128]{1,0:T(8,128)}', space=vmem, size = 0x2000, scoped, tag = 'scratch operand']
  %s0 = inlined_call_operand.vmem [shape: bf16[16,128], index: 0, kind: input, shape index: {}]
  %s1 = inlined_call_operand.vmem [shape: bf16[128,128], index: 1, kind: input, shape index: {}]
  %s2 = inlined_call_operand.vmem [shape: f32[16,128], index: 2, kind: output, shape index: {}]
  %s3 = sld [smem:[#allocation0]]
  $region26: #{resnet_forward.61} parent=0
    _
  %s5 = ssub.s32 1, %s3
  %s6 = scalar_select 0, %s5, %s3
  // Predicated region
  $region2: #{resnet_forward.61} parent=0 // pred_check
    _
  $region3: #{resnet_forward.61} parent=0 // pred_check_branch
    %8 = sbr.rel (0) target = $region5
  $region4: #{resnet_forward.61} parent=0 // pred_region
    _
  $region5: #{resnet_forward.61} parent=0 // pred_fallthru
    _
  // Predicated region
  $region6: #{resnet_forward.61} parent=0 // pred_check
    _
  $region7: #{resnet_forward.61} parent=0 // pred_check_branch
    %10 = sbr.rel (0) target = $region9
  $region8: #{resnet_forward.61} parent=0 // pred_region
    _
  $region9: #{resnet_forward.61} parent=0 // pred_fallthru
    _
  %p11 = scmp.eq.s32.totalorder 0, 0
  // Predicated region
  $region10: #{resnet_forward.61} parent=0 // pred_check
    %p12 = pneg %p11
  $region11: #{resnet_forward.61} parent=0 // pred_check_branch
    %14 = sbr.rel (%p12) target = $region13
  $region12: #{resnet_forward.61} parent=0 // pred_region
    %15 = vst [vmem:[#allocation2] sm:$0xff] 0.0
    %16 = vst [vmem:[#allocation2 + $0x8] sm:$0xff] 0.0
  $region13: #{resnet_forward.61} parent=0 // pred_fallthru
    _
  %v17 = vld [vmem:[#allocation2] sm:$0xff]
  %v18 = vld [vmem:[#allocation2 + $0x8] sm:$0xff]
  %v19 = vld [vmem:[%s0] sm:$0xf]
  %v20 = vld [vmem:[%s0 + $0x4] sm:$0xf]
  %v21 = vld [vmem:[%s1] sm:$0xf]
  %v22 = vld [vmem:[%s1 + $0x4] sm:$0xf]
  %v23 = vld [vmem:[%s1 + $0x8] sm:$0xf]
  %v24 = vld [vmem:[%s1 + $0xc] sm:$0xf]
  %v25 = vld [vmem:[%s1 + $0x10] sm:$0xf]
  %v26 = vld [vmem:[%s1 + $0x14] sm:$0xf]
  %v27 = vld [vmem:[%s1 + $0x18] sm:$0xf]
  %v28 = vld [vmem:[%s1 + $0x1c] sm:$0xf]
  %v29 = vld [vmem:[%s1 + $0x20] sm:$0xf]
  %v30 = vld [vmem:[%s1 + $0x24] sm:$0xf]
  %v31 = vld [vmem:[%s1 + $0x28] sm:$0xf]
  %v32 = vld [vmem:[%s1 + $0x2c] sm:$0xf]
  %v33 = vld [vmem:[%s1 + $0x30] sm:$0xf]
  %v34 = vld [vmem:[%s1 + $0x34] sm:$0xf]
  %v35 = vld [vmem:[%s1 + $0x38] sm:$0xf]
  %v36 = vld [vmem:[%s1 + $0x3c] sm:$0xf]
  %v39 = vunpack.c.l.b16 %v19
  %v40 = vunpack.c.l.b16 %v20
  %v41 = vpack.c.b16 %v40, %v39
  %v59 = vunpack.c.l.b16 %v21
  %v60 = vunpack.c.l.b16 %v22
  %v61 = vunpack.c.l.b16 %v23
  %v62 = vunpack.c.l.b16 %v24
  %v63 = vunpack.c.l.b16 %v25
  %v64 = vunpack.c.l.b16 %v26
  %v65 = vunpack.c.l.b16 %v27
  %v66 = vunpack.c.l.b16 %v28
  %v67 = vunpack.c.l.b16 %v29
  %v68 = vunpack.c.l.b16 %v30
  %v69 = vunpack.c.l.b16 %v31
  %v70 = vunpack.c.l.b16 %v32
  %v71 = vunpack.c.l.b16 %v33
  %v72 = vunpack.c.l.b16 %v34
  %v73 = vunpack.c.l.b16 %v35
  %v74 = vunpack.c.l.b16 %v36
  %v75 = vpack.c.b16 %v60, %v59
  %v76 = vpack.c.b16 %v62, %v61
  %v77 = vpack.c.b16 %v64, %v63
  %v78 = vpack.c.b16 %v66, %v65
  %v79 = vpack.c.b16 %v68, %v67
  %v80 = vpack.c.b16 %v70, %v69
  %v81 = vpack.c.b16 %v72, %v71
  %v82 = vpack.c.b16 %v74, %v73
  %91 = vmatpush.bf16.msra.mxu0 %v82
  %92 = vmatpush.bf16.msra.mxu0 %v81
  %93 = vmatpush.bf16.msra.mxu0 %v80
  %94 = vmatpush.bf16.msra.mxu0 %v79
  %95 = vmatpush.bf16.msra.mxu0 %v78
  %96 = vmatpush.bf16.msra.mxu0 %v77
  %97 = vmatpush.bf16.msra.mxu0 %v76
  %98 = vmatpush.bf16.msra.mxu0 %v75
  %99 = vmatmul.bf16.gmra.mxu0 %v41
  %v100 = vpop.f32.mrf.mxu0
  %v101 = vadd.f32 0.0, %v100
  %v102 = vpop.f32.mrf.mxu0
  %v103 = vadd.f32 0.0, %v102
  %104 = vdwg.mxu0
  %v105 = vadd.f32 %v17, %v101
  %v106 = vadd.f32 %v18, %v103
  %107 = vst [vmem:[#allocation2] sm:$0xff] %v105
  %108 = vst [vmem:[#allocation2 + $0x8] sm:$0xff] %v106
  // Predicated region
  $region14: #{resnet_forward.61} parent=0 // pred_check
    %p109 = pneg %p11
  $region15: #{resnet_forward.61} parent=0 // pred_check_branch
    %111 = sbr.rel (%p109) target = $region17
  $region16: #{resnet_forward.61} parent=0 // pred_region
    %v112 = vld [vmem:[#allocation2] sm:$0xff]
    %v113 = vld [vmem:[#allocation2 + $0x8] sm:$0xff]
    %114 = vst [vmem:[%s2] sm:$0xff] %v112
    %115 = vst [vmem:[%s2 + $0x8] sm:$0xff] %v113
  $region17: #{resnet_forward.61} parent=0 // pred_fallthru
    _
  // Predicated region
  $region18: #{resnet_forward.61} parent=0 // pred_check
    _
  $region19: #{resnet_forward.61} parent=0 // pred_check_branch
    %117 = sbr.rel (0) target = $region21
  $region20: #{resnet_forward.61} parent=0 // pred_region
    _
  $region21: #{resnet_forward.61} parent=0 // pred_fallthru
    _
  // Predicated region
  $region22: #{resnet_forward.61} parent=0 // pred_check
    _
  $region23: #{resnet_forward.61} parent=0 // pred_check_branch
    %119 = sbr.rel (0) target = $region25
  $region24: #{resnet_forward.61} parent=0 // pred_region
    _
  $region25: #{resnet_forward.61} parent=0 // pred_fallthru
    _

// kernel: resnet_forward.62
$region0: #{resnet_forward.62}
  #allocation0 [shape = 'u32[]', space=smem, size = 0x4, offset = 0x4, fixed_abs, tag = 'smem constant byte address 0x4 - core index']
  #allocation1 [shape = 'u32[72,128]{1,0:T(1,128)}', space=vmem, size = 0x9000, scoped, tag = 'internal scratch']
  #allocation2 [shape = 'f32[1,64]{1,0:T(1,128)}', space=vmem, size = 0x200, scoped, tag = 'scratch operand']
  #allocation3 [shape = 'f32[1,64]{1,0:T(1,128)}', space=vmem, size = 0x200, scoped, tag = 'scratch operand']
  #allocation4 [shape = 'f32[1,64]{1,0:T(1,128)}', space=vmem, size = 0x200, scoped, tag = 'scratch operand']
  %s0 = inlined_call_operand.vmem [shape: f32[4,2,64], index: 0, kind: input, shape index: {}]
  %s1 = inlined_call_operand.vmem [shape: f32[1,64], index: 1, kind: output, shape index: {0}]
  %s2 = inlined_call_operand.vmem [shape: f32[1,64], index: 2, kind: output, shape index: {1}]
  %3 = xla_tuple %s1, %s2
  %s4 = sld [smem:[#allocation0]]
  $region53: #{resnet_forward.62} parent=0
    _
  %s6 = ssub.s32 1, %s4
  %s7 = scalar_select 0, %s6, %s4
  loop: start=0, step=1, limit=6
  $region2: #{resnet_forward.62} parent=0 // loop_pre_header
    _
  $region3: #{resnet_forward.62} parent=0 // loop_header
    %s9 = sphi 0, %s13
    %p10 = scmp.ge.s32.totalorder %s9, 6
    %s19 = sphi 0, %s21
    %s22 = sphi 0, %s19
    %s23 = sphi 0, %s22
    %s39 = sphi 0, %s23
    %s43 = sphi 0, %s43
    %s45 = sphi 0, %s43
    %s46 = sphi 0, %s45
    %s60 = sphi 0, %s46
    %s64 = sphi 0, %s64
    %s66 = sphi 0, %s64
    %s67 = sphi 0, %s66
    %s81 = sphi 0, %s67
  $region4: #{resnet_forward.62} parent=0 // loop_header_branch
    %12 = sbr.rel (%p10) target = $region8
  $region5: #{resnet_forward.62} parent=0 // loop_body
    %s14 = ssub.s32 %s9, 1
    %s15 = ssub.s32 %s9, 2
    %s16 = sadd.s32 %s9, 1
    %s17 = ssub.s32 %s9, %s16
    %p18 = scmp.eq.s32.totalorder %s17, 0
    %s20 = sadd.s32 %s19, 1
    %s21 = scalar_select %p18, %s19, %s20
    %p24 = pneg %p18
    %p25 = scmp.eq.s32.totalorder %s9, 3
    %p26 = por %p24, %p25
    %p27 = scmp.ne.s32.totalorder %s19, %s22
    %p28 = scmp.eq.s32.totalorder %s9, 0
    %p29 = por %p27, %p28
    %p30 = scmp.ne.s32.totalorder %s19, %s22
    %p31 = scmp.eq.s32.totalorder %s14, 3
    %p32 = por %p30, %p31
    %p33 = scmp.ne.s32.totalorder %s22, %s23
    %p34 = scmp.eq.s32.totalorder %s14, 0
    %p35 = por %p33, %p34
    %p36 = scmp.ne.s32.totalorder %s22, %s23
    %p37 = scmp.eq.s32.totalorder %s15, 3
    %p38 = por %p36, %p37
    %p40 = scmp.ne.s32.totalorder %s23, %s39
    %p41 = scmp.eq.s32.totalorder %s15, 0
    %p42 = por %p40, %p41
    %s44 = sadd.s32 %s43, 1
    %p47 = scmp.eq.s32.totalorder %s9, 3
    %p48 = scmp.ne.s32.totalorder %s43, %s45
    %p49 = scmp.eq.s32.totalorder %s9, 0
    %p50 = por %p48, %p49
    %p51 = scmp.ne.s32.totalorder %s43, %s45
    %p52 = scmp.eq.s32.totalorder %s14, 3
    %p53 = por %p51, %p52
    %p54 = scmp.ne.s32.totalorder %s45, %s46
    %p55 = scmp.eq.s32.totalorder %s14, 0
    %p56 = por %p54, %p55
    %p57 = scmp.ne.s32.totalorder %s45, %s46
    %p58 = scmp.eq.s32.totalorder %s15, 3
    %p59 = por %p57, %p58
    %p61 = scmp.ne.s32.totalorder %s46, %s60
    %p62 = scmp.eq.s32.totalorder %s15, 0
    %p63 = por %p61, %p62
    %s65 = sadd.s32 %s64, 1
    %p68 = scmp.eq.s32.totalorder %s9, 3
    %p69 = scmp.ne.s32.totalorder %s64, %s66
    %p70 = scmp.eq.s32.totalorder %s9, 0
    %p71 = por %p69, %p70
    %p72 = scmp.ne.s32.totalorder %s64, %s66
    %p73 = scmp.eq.s32.totalorder %s14, 3
    %p74 = por %p72, %p73
    %p75 = scmp.ne.s32.totalorder %s66, %s67
    %p76 = scmp.eq.s32.totalorder %s14, 0
    %p77 = por %p75, %p76
    %p78 = scmp.ne.s32.totalorder %s66, %s67
    %p79 = scmp.eq.s32.totalorder %s15, 3
    %p80 = por %p78, %p79
    %p82 = scmp.ne.s32.totalorder %s67, %s81
    %p83 = scmp.eq.s32.totalorder %s15, 0
    %p84 = por %p82, %p83
    %p85 = scmp.le.s32.totalorder 1, %s9
    %p86 = scmp.lt.s32.totalorder %s9, 5
    %p87 = pnand %p85, %p86
    %p88 = pneg %p87
    // Predicated region
    $region9: #{resnet_forward.62} parent=5 // pred_check
      _
    $region10: #{resnet_forward.62} parent=5 // pred_check_branch
      %90 = sbr.rel (%p87) target = $region12
    $region11: #{resnet_forward.62} parent=5 // pred_region
      %s91 = ssub.s32 %s9, 1
    $region12: #{resnet_forward.62} parent=5 // pred_fallthru
      _
    %p92 = scmp.lt.s32.totalorder %s9, 4
    // Predicated region
    $region13: #{resnet_forward.62} parent=5 // pred_check
      %p93 = pneg %p92
    $region14: #{resnet_forward.62} parent=5 // pred_check_branch
      %95 = sbr.rel (%p93) target = $region16
    $region15: #{resnet_forward.62} parent=5 // pred_region
      // Predicated region
      $region17: #{resnet_forward.62} parent=15 // pred_check
        %p96 = pneg %p29
      $region18: #{resnet_forward.62} parent=15 // pred_check_branch
        %98 = sbr.rel (%p96) target = $region20
      $region19: #{resnet_forward.62} parent=15 // pred_region
        %p99 = scmp.lt.s32.totalorder %s9, 3
        %s100 = scalar_select %p99, %s9, 3
        %s101 = smul.addr %s100, 2
        %s102 = scalar_lea.vmem %s0, %s101
      $region20: #{resnet_forward.62} parent=15 // pred_fallthru
        _
    $region16: #{resnet_forward.62} parent=5 // pred_fallthru
      _
    %p103 = scmp.le.s32.totalorder 1, %s9
    %p104 = scmp.lt.s32.totalorder %s9, 5
    %p105 = pnand %p103, %p104
    %p106 = pneg %p105
    // Predicated region
    $region21: #{resnet_forward.62} parent=5 // pred_check
      _
    $region22: #{resnet_forward.62} parent=5 // pred_check_branch
      %108 = sbr.rel (%p105) target = $region24
    $region23: #{resnet_forward.62} parent=5 // pred_region
      %s109 = ssub.s32 %s9, 1
      %p110 = scmp.lt.s32.totalorder %s14, 3
      %s111 = scalar_select %p110, %s14, 3
      %s112 = smul.addr %s111, 2
      %s113 = scalar_lea.vmem %s0, %s112
      %p114 = pneg %p35
      %p115 = pneg %p32
      %p116 = pneg %p56
      %p117 = pneg %p53
      %p118 = pneg %p77
      %p119 = pneg %p74
      %p120 = scmp.lt.s32.totalorder %s14, 3
      %s121 = scalar_select %p120, %s14, 3
      %s122 = smul.addr %s121, 2
      %s123 = scalar_lea.vmem %s0, %s122
      %v124 = vld [vmem:[%s123] sm:$0x3]
      %vm125 = vcmask 517120
      %v126 = vsel %vm125, %v124, 0.0
      %v127 = vrot.slane %v126, 4
      %v128 = vadd.f32 %v126, %v127
      %v129 = vrot.slane %v128, 2
      %v130 = vadd.f32 %v128, %v129
      %v131 = vrot.slane %v130, 1
      %v132 = vadd.f32 %v130, %v131
      %v133 = vsel %vm125, %v124, -inf
      %v134 = vrot.slane %v133, 4
      %v135 = vmax.f32 %v133, %v134
      %v136 = vrot.slane %v135, 2
      %v137 = vmax.f32 %v135, %v136
      %v138 = vrot.slane %v137, 1
      %v139 = vmax.f32 %v137, %v138
      %v140 = vsel %vm125, %v124, inf
      %v141 = vrot.slane %v140, 4
      %v142 = vmin.f32 %v140, %v141
      %v143 = vrot.slane %v142, 2
      %v144 = vmin.f32 %v142, %v143
      %v145 = vrot.slane %v144, 1
      %v146 = vmin.f32 %v144, %v145
      %p147 = scmp.eq.s32.totalorder %s14, 0
      // Predicated region
      $region25: #{resnet_forward.62} parent=23 // pred_check
        %p148 = pneg %p147
      $region26: #{resnet_forward.62} parent=23 // pred_check_branch
        %150 = sbr.rel (%p148) target = $region28
      $region27: #{resnet_forward.62} parent=23 // pred_region
        %vm151 = vcmask 516096
        %152 = vst.msk [vmem:[#allocation2] sm:$0x1] %vm151, 0.0
        %153 = vst.msk [vmem:[#allocation3] sm:$0x1] %vm151, 0.0
        %154 = vst.msk [vmem:[#allocation4] sm:$0x1] %vm151, 0.0
      $region28: #{resnet_forward.62} parent=23 // pred_fallthru
        _
      %v155 = vld [vmem:[#allocation2] sm:$0x1]
      %v156 = vadd.f32 %v155, %v132
      %vm157 = vcmask 516096
      %158 = vst.msk [vmem:[#allocation2] sm:$0x1] %vm157, %v156
      %v159 = vld [vmem:[#allocation3] sm:$0x1]
      %v160 = vadd.f32 %v159, %v139
      %161 = vst.msk [vmem:[#allocation3] sm:$0x1] %vm157, %v160
      %v162 = vld [vmem:[#allocation4] sm:$0x1]
      %v163 = vadd.f32 %v162, %v146
      %164 = vst.msk [vmem:[#allocation4] sm:$0x1] %vm157, %v163
      %p165 = scmp.eq.s32.totalorder %s14, 3
      // Predicated region
      $region29: #{resnet_forward.62} parent=23 // pred_check
        %p166 = pneg %p165
      $region30: #{resnet_forward.62} parent=23 // pred_check_branch
        %168 = sbr.rel (%p166) target = $region32
      $region31: #{resnet_forward.62} parent=23 // pred_region
        %v169 = vld [vmem:[#allocation2] sm:$0x1]
        %v170 = vrcp.pop 8.0
        %v171 = vmul.f32 8.0, %v170
        %v172 = vsub.f32 1.0, %v171
        %v173 = vmul.f32 %v170, %v172
        %v174 = vadd.f32 %v170, %v173
        %vm175 = vweird.f32 %v170
        %v176 = vsel %vm175, %v170, %v174
        %v177 = vmul.f32 %v169, %v176
        %178 = vst.msk [vmem:[%s1] sm:$0x1] %vm157, %v177
        %v179 = vld [vmem:[#allocation3] sm:$0x1]
        %v180 = vld [vmem:[#allocation4] sm:$0x1]
        %v181 = vsub.f32 %v179, %v180
        %v182 = vrcp.pop 4.0
        %v183 = vmul.f32 4.0, %v182
        %v184 = vsub.f32 1.0, %v183
        %v185 = vmul.f32 %v182, %v184
        %v186 = vadd.f32 %v182, %v185
        %vm187 = vweird.f32 %v182
        %v188 = vsel %vm187, %v182, %v186
        %v189 = vmul.f32 %v181, %v188
        %v190 = vmul.f32 %v189, 0.45881075
        %v191 = vadd.f32 %v190, 1e-05
        %v192 = vrcp.pop %v191
        %v193 = vmul.f32 %v191, %v192
        %v194 = vsub.f32 1.0, %v193
        %v195 = vmul.f32 %v192, %v194
        %v196 = vadd.f32 %v192, %v195
        %vm197 = vweird.f32 %v191
        %vm198 = vweird.f32 %v192
        %vm199 = vmor %vm197, %vm198
        %v200 = vsel %vm199, %v192, %v196
        %v201 = vand.u32 2147483647, %v191
        %vm202 = vcmp.eq.f32.partialorder %v201, 8.507059e+37
        %v203 = vand.u32 %v191, 2147483648
        %v204 = vor.u32 1.1754944e-38, %v203
        %v205 = vsel %vm202, %v204, %v200
        %v206 = vmul.f32 1.0, %v205
        %207 = vst.msk [vmem:[%s2] sm:$0x1] %vm157, %v206
      $region32: #{resnet_forward.62} parent=23 // pred_fallthru
        _
      // Predicated region
      $region33: #{resnet_forward.62} parent=23 // pred_check
        %p208 = pneg %p53
      $region34: #{resnet_forward.62} parent=23 // pred_check_branch
        %210 = sbr.rel (%p208) target = $region36
      $region35: #{resnet_forward.62} parent=23 // pred_region
        _
      $region36: #{resnet_forward.62} parent=23 // pred_fallthru
        _
      // Predicated region
      $region37: #{resnet_forward.62} parent=23 // pred_check
        %p211 = pneg %p74
      $region38: #{resnet_forward.62} parent=23 // pred_check_branch
        %213 = sbr.rel (%p211) target = $region40
      $region39: #{resnet_forward.62} parent=23 // pred_region
        _
      $region40: #{resnet_forward.62} parent=23 // pred_fallthru
        _
      // Predicated region
      $region41: #{resnet_forward.62} parent=23 // pred_check
        %p214 = pneg %p53
      $region42: #{resnet_forward.62} parent=23 // pred_check_branch
        %216 = sbr.rel (%p214) target = $region44
      $region43: #{resnet_forward.62} parent=23 // pred_region
        _
      $region44: #{resnet_forward.62} parent=23 // pred_fallthru
        _
      // Predicated region
      $region45: #{resnet_forward.62} parent=23 // pred_check
        %p217 = pneg %p74
      $region46: #{resnet_forward.62} parent=23 // pred_check_branch
        %219 = sbr.rel (%p217) target = $region48
      $region47: #{resnet_forward.62} parent=23 // pred_region
        _
      $region48: #{resnet_forward.62} parent=23 // pred_fallthru
        _
    $region24: #{resnet_forward.62} parent=5 // pred_fallthru
      _
    %p220 = scmp.le.s32.totalorder 2, %s9
    // Predicated region
    $region49: #{resnet_forward.62} parent=5 // pred_check
      %p221 = pneg %p220
    $region50: #{resnet_forward.62} parent=5 // pred_check_branch
      %223 = sbr.rel (%p221) target = $region52
    $region51: #{resnet_forward.62} parent=5 // pred_region
      %s224 = ssub.s32 %s9, 2
    $region52: #{resnet_forward.62} parent=5 // pred_fallthru
      _
  $region6: #{resnet_forward.62} parent=0 // loop_footer
    %s13 = sadd.s32 1, %s9
  $region7: #{resnet_forward.62} parent=0 // loop_footer_branch
    %8 = sbr.rel target = $region3
  $region8: #{resnet_forward.62} parent=0 // loop_exit
    _

// kernel: resnet_forward.57
$region0: #{resnet_forward.57}
  #allocation0 [shape = 'u32[]', space=smem, size = 0x4, offset = 0x4, fixed_abs, tag = 'smem constant byte address 0x4 - core index']
  #allocation1 [shape = 'u32[72,128]{1,0:T(1,128)}', space=vmem, size = 0x9000, scoped, tag = 'internal scratch']
  #allocation2 [shape = 'f32[16,128]{1,0:T(8,128)}', space=vmem, size = 0x2000, scoped, tag = 'scratch operand']
  %s0 = inlined_call_operand.vmem [shape: bf16[16,384], index: 0, kind: input, shape index: {}]
  %s1 = inlined_call_operand.vmem [shape: bf16[384,128], index: 1, kind: input, shape index: {}]
  %s2 = inlined_call_operand.vmem [shape: f32[16,128], index: 2, kind: output, shape index: {}]
  %s3 = sld [smem:[#allocation0]]
  $region26: #{resnet_forward.57} parent=0
    _
  %s5 = ssub.s32 1, %s3
  %s6 = scalar_select 0, %s5, %s3
  // Predicated region
  $region2: #{resnet_forward.57} parent=0 // pred_check
    _
  $region3: #{resnet_forward.57} parent=0 // pred_check_branch
    %8 = sbr.rel (0) target = $region5
  $region4: #{resnet_forward.57} parent=0 // pred_region
    _
  $region5: #{resnet_forward.57} parent=0 // pred_fallthru
    _
  // Predicated region
  $region6: #{resnet_forward.57} parent=0 // pred_check
    _
  $region7: #{resnet_forward.57} parent=0 // pred_check_branch
    %10 = sbr.rel (0) target = $region9
  $region8: #{resnet_forward.57} parent=0 // pred_region
    _
  $region9: #{resnet_forward.57} parent=0 // pred_fallthru
    _
  %p11 = scmp.eq.s32.totalorder 0, 0
  // Predicated region
  $region10: #{resnet_forward.57} parent=0 // pred_check
    %p12 = pneg %p11
  $region11: #{resnet_forward.57} parent=0 // pred_check_branch
    %14 = sbr.rel (%p12) target = $region13
  $region12: #{resnet_forward.57} parent=0 // pred_region
    %15 = vst [vmem:[#allocation2] sm:$0xff] 0.0
    %16 = vst [vmem:[#allocation2 + $0x8] sm:$0xff] 0.0
  $region13: #{resnet_forward.57} parent=0 // pred_fallthru
    _
  %v17 = vld [vmem:[#allocation2] sm:$0xff]
  %v18 = vld [vmem:[#allocation2 + $0x8] sm:$0xff]
  %v19 = vld [vmem:[%s0] sm:$0xff]
  %v20 = vld [vmem:[%s0 + $0x8] sm:$0xf]
  %v21 = vld [vmem:[%s0 + $0xc] sm:$0xff]
  %v22 = vld [vmem:[%s0 + $0x14] sm:$0xf]
  %v23 = vld [vmem:[%s1] sm:$0xf]
  %v24 = vld [vmem:[%s1 + $0x4] sm:$0xf]
  %v25 = vld [vmem:[%s1 + $0x8] sm:$0xf]
  %v26 = vld [vmem:[%s1 + $0xc] sm:$0xf]
  %v27 = vld [vmem:[%s1 + $0x10] sm:$0xf]
  %v28 = vld [vmem:[%s1 + $0x14] sm:$0xf]
  %v29 = vld [vmem:[%s1 + $0x18] sm:$0xf]
  %v30 = vld [vmem:[%s1 + $0x1c] sm:$0xf]
  %v31 = vld [vmem:[%s1 + $0x20] sm:$0xf]
  %v32 = vld [vmem:[%s1 + $0x24] sm:$0xf]
  %v33 = vld [vmem:[%s1 + $0x28] sm:$0xf]
  %v34 = vld [vmem:[%s1 + $0x2c] sm:$0xf]
  %v35 = vld [vmem:[%s1 + $0x30] sm:$0xf]
  %v36 = vld [vmem:[%s1 + $0x34] sm:$0xf]
  %v37 = vld [vmem:[%s1 + $0x38] sm:$0xf]
  %v38 = vld [vmem:[%s1 + $0x3c] sm:$0xf]
  %v39 = vld [vmem:[%s1 + $0x40] sm:$0xf]
  %v40 = vld [vmem:[%s1 + $0x44] sm:$0xf]
  %v41 = vld [vmem:[%s1 + $0x48] sm:$0xf]
  %v42 = vld [vmem:[%s1 + $0x4c] sm:$0xf]
  %v43 = vld [vmem:[%s1 + $0x50] sm:$0xf]
  %v44 = vld [vmem:[%s1 + $0x54] sm:$0xf]
  %v45 = vld [vmem:[%s1 + $0x58] sm:$0xf]
  %v46 = vld [vmem:[%s1 + $0x5c] sm:$0xf]
  %v47 = vld [vmem:[%s1 + $0x60] sm:$0xf]
  %v48 = vld [vmem:[%s1 + $0x64] sm:$0xf]
  %v49 = vld [vmem:[%s1 + $0x68] sm:$0xf]
  %v50 = vld [vmem:[%s1 + $0x6c] sm:$0xf]
  %v51 = vld [vmem:[%s1 + $0x70] sm:$0xf]
  %v52 = vld [vmem:[%s1 + $0x74] sm:$0xf]
  %v53 = vld [vmem:[%s1 + $0x78] sm:$0xf]
  %v54 = vld [vmem:[%s1 + $0x7c] sm:$0xf]
  %v55 = vld [vmem:[%s1 + $0x80] sm:$0xf]
  %v56 = vld [vmem:[%s1 + $0x84] sm:$0xf]
  %v57 = vld [vmem:[%s1 + $0x88] sm:$0xf]
  %v58 = vld [vmem:[%s1 + $0x8c] sm:$0xf]
  %v59 = vld [vmem:[%s1 + $0x90] sm:$0xf]
  %v60 = vld [vmem:[%s1 + $0x94] sm:$0xf]
  %v61 = vld [vmem:[%s1 + $0x98] sm:$0xf]
  %v62 = vld [vmem:[%s1 + $0x9c] sm:$0xf]
  %v63 = vld [vmem:[%s1 + $0xa0] sm:$0xf]
  %v64 = vld [vmem:[%s1 + $0xa4] sm:$0xf]
  %v65 = vld [vmem:[%s1 + $0xa8] sm:$0xf]
  %v66 = vld [vmem:[%s1 + $0xac] sm:$0xf]
  %v67 = vld [vmem:[%s1 + $0xb0] sm:$0xf]
  %v68 = vld [vmem:[%s1 + $0xb4] sm:$0xf]
  %v69 = vld [vmem:[%s1 + $0xb8] sm:$0xf]
  %v70 = vld [vmem:[%s1 + $0xbc] sm:$0xf]
  %v75 = vunpack.c.l.b16 %v19
  %v76 = vunpack.c.h.b16 %v19
  %v77 = vunpack.c.l.b16 %v20
  %v78 = vunpack.c.l.b16 %v21
  %v79 = vunpack.c.h.b16 %v21
  %v80 = vunpack.c.l.b16 %v22
  %v81 = vpack.c.b16 %v78, %v75
  %v82 = vpack.c.b16 %v79, %v76
  %v83 = vpack.c.b16 %v80, %v77
  %v135 = vunpack.c.l.b16 %v23
  %v136 = vunpack.c.l.b16 %v24
  %v137 = vunpack.c.l.b16 %v25
  %v138 = vunpack.c.l.b16 %v26
  %v139 = vunpack.c.l.b16 %v27
  %v140 = vunpack.c.l.b16 %v28
  %v141 = vunpack.c.l.b16 %v29
  %v142 = vunpack.c.l.b16 %v30
  %v143 = vunpack.c.l.b16 %v31
  %v144 = vunpack.c.l.b16 %v32
  %v145 = vunpack.c.l.b16 %v33
  %v146 = vunpack.c.l.b16 %v34
  %v147 = vunpack.c.l.b16 %v35
  %v148 = vunpack.c.l.b16 %v36
  %v149 = vunpack.c.l.b16 %v37
  %v150 = vunpack.c.l.b16 %v38
  %v151 = vunpack.c.l.b16 %v39
  %v152 = vunpack.c.l.b16 %v40
  %v153 = vunpack.c.l.b16 %v41
  %v154 = vunpack.c.l.b16 %v42
  %v155 = vunpack.c.l.b16 %v43
  %v156 = vunpack.c.l.b16 %v44
  %v157 = vunpack.c.l.b16 %v45
  %v158 = vunpack.c.l.b16 %v46
  %v159 = vunpack.c.l.b16 %v47
  %v160 = vunpack.c.l.b16 %v48
  %v161 = vunpack.c.l.b16 %v49
  %v162 = vunpack.c.l.b16 %v50
  %v163 = vunpack.c.l.b16 %v51
  %v164 = vunpack.c.l.b16 %v52
  %v165 = vunpack.c.l.b16 %v53
  %v166 = vunpack.c.l.b16 %v54
  %v167 = vunpack.c.l.b16 %v55
  %v168 = vunpack.c.l.b16 %v56
  %v169 = vunpack.c.l.b16 %v57
  %v170 = vunpack.c.l.b16 %v58
  %v171 = vunpack.c.l.b16 %v59
  %v172 = vunpack.c.l.b16 %v60
  %v173 = vunpack.c.l.b16 %v61
  %v174 = vunpack.c.l.b16 %v62
  %v175 = vunpack.c.l.b16 %v63
  %v176 = vunpack.c.l.b16 %v64
  %v177 = vunpack.c.l.b16 %v65
  %v178 = vunpack.c.l.b16 %v66
  %v179 = vunpack.c.l.b16 %v67
  %v180 = vunpack.c.l.b16 %v68
  %v181 = vunpack.c.l.b16 %v69
  %v182 = vunpack.c.l.b16 %v70
  %v183 = vpack.c.b16 %v136, %v135
  %v184 = vpack.c.b16 %v138, %v137
  %v185 = vpack.c.b16 %v140, %v139
  %v186 = vpack.c.b16 %v142, %v141
  %v187 = vpack.c.b16 %v144, %v143
  %v188 = vpack.c.b16 %v146, %v145
  %v189 = vpack.c.b16 %v148, %v147
  %v190 = vpack.c.b16 %v150, %v149
  %v191 = vpack.c.b16 %v152, %v151
  %v192 = vpack.c.b16 %v154, %v153
  %v193 = vpack.c.b16 %v156, %v155
  %v194 = vpack.c.b16 %v158, %v157
  %v195 = vpack.c.b16 %v160, %v159
  %v196 = vpack.c.b16 %v162, %v161
  %v197 = vpack.c.b16 %v164, %v163
  %v198 = vpack.c.b16 %v166, %v165
  %v199 = vpack.c.b16 %v168, %v167
  %v200 = vpack.c.b16 %v170, %v169
  %v201 = vpack.c.b16 %v172, %v171
  %v202 = vpack.c.b16 %v174, %v173
  %v203 = vpack.c.b16 %v176, %v175
  %v204 = vpack.c.b16 %v178, %v177
  %v205 = vpack.c.b16 %v180, %v179
  %v206 = vpack.c.b16 %v182, %v181
  %231 = vmatpush.bf16.msra.mxu0 %v190
  %232 = vmatpush.bf16.msra.mxu0 %v189
  %233 = vmatpush.bf16.msra.mxu0 %v188
  %234 = vmatpush.bf16.msra.mxu0 %v187
  %235 = vmatpush.bf16.msra.mxu0 %v186
  %236 = vmatpush.bf16.msra.mxu0 %v185
  %237 = vmatpush.bf16.msra.mxu0 %v184
  %238 = vmatpush.bf16.msra.mxu0 %v183
  %239 = vmatmul.bf16.gmra.mxu0 %v81
  %v240 = vpop.f32.mrf.mxu0
  %v241 = vadd.f32 0.0, %v240
  %v242 = vpop.f32.mrf.mxu0
  %v243 = vadd.f32 0.0, %v242
  %244 = vdwg.mxu0
  %245 = vmatpush.bf16.msra.mxu0 %v198
  %246 = vmatpush.bf16.msra.mxu0 %v197
  %247 = vmatpush.bf16.msra.mxu0 %v196
  %248 = vmatpush.bf16.msra.mxu0 %v195
  %249 = vmatpush.bf16.msra.mxu0 %v194
  %250 = vmatpush.bf16.msra.mxu0 %v193
  %251 = vmatpush.bf16.msra.mxu0 %v192
  %252 = vmatpush.bf16.msra.mxu0 %v191
  %253 = vmatmul.bf16.gmra.mxu0 %v82
  %v254 = vpop.f32.mrf.mxu0
  %v255 = vadd.f32 %v241, %v254
  %v256 = vpop.f32.mrf.mxu0
  %v257 = vadd.f32 %v243, %v256
  %258 = vdwg.mxu0
  %259 = vmatpush.bf16.msra.mxu0 %v206
  %260 = vmatpush.bf16.msra.mxu0 %v205
  %261 = vmatpush.bf16.msra.mxu0 %v204
  %262 = vmatpush.bf16.msra.mxu0 %v203
  %263 = vmatpush.bf16.msra.mxu0 %v202
  %264 = vmatpush.bf16.msra.mxu0 %v201
  %265 = vmatpush.bf16.msra.mxu0 %v200
  %266 = vmatpush.bf16.msra.mxu0 %v199
  %267 = vmatmul.bf16.gmra.mxu0 %v83
  %v268 = vpop.f32.mrf.mxu0
  %v269 = vadd.f32 %v255, %v268
  %v270 = vpop.f32.mrf.mxu0
  %v271 = vadd.f32 %v257, %v270
  %272 = vdwg.mxu0
  %v273 = vadd.f32 %v17, %v269
  %v274 = vadd.f32 %v18, %v271
  %275 = vst [vmem:[#allocation2] sm:$0xff] %v273
  %276 = vst [vmem:[#allocation2 + $0x8] sm:$0xff] %v274
  // Predicated region
  $region14: #{resnet_forward.57} parent=0 // pred_check
    %p277 = pneg %p11
  $region15: #{resnet_forward.57} parent=0 // pred_check_branch
    %279 = sbr.rel (%p277) target = $region17
  $region16: #{resnet_forward.57} parent=0 // pred_region
    %v280 = vld [vmem:[#allocation2] sm:$0xff]
    %v281 = vld [vmem:[#allocation2 + $0x8] sm:$0xff]
    %282 = vst [vmem:[%s2] sm:$0xff] %v280
    %283 = vst [vmem:[%s2 + $0x8] sm:$0xff] %v281
  $region17: #{resnet_forward.57} parent=0 // pred_fallthru
    _
  // Predicated region
  $region18: #{resnet_forward.57} parent=0 // pred_check
    _
  $region19: #{resnet_forward.57} parent=0 // pred_check_branch
    %285 = sbr.rel (0) target = $region21
  $region20: #{resnet_forward.57} parent=0 // pred_region
    _
  $region21: #{resnet_forward.57} parent=0 // pred_fallthru
    _
  // Predicated region
  $region22: #{resnet_forward.57} parent=0 // pred_check
    _
  $region23: #{resnet_forward.57} parent=0 // pred_check_branch
    %287 = sbr.rel (0) target = $region25
  $region24: #{resnet_forward.57} parent=0 // pred_region
    _
  $region25: #{resnet_forward.57} parent=0 // pred_fallthru
    _

// kernel: resnet_forward.60
$region0: #{resnet_forward.60}
  #allocation0 [shape = 'u32[]', space=smem, size = 0x4, offset = 0x4, fixed_abs, tag = 'smem constant byte address 0x4 - core index']
  #allocation1 [shape = 'u32[72,128]{1,0:T(1,128)}', space=vmem, size = 0x9000, scoped, tag = 'internal scratch']
  #allocation2 [shape = 'f32[16,128]{1,0:T(8,128)}', space=vmem, size = 0x2000, scoped, tag = 'scratch operand']
  %s0 = inlined_call_operand.vmem [shape: bf16[16,1024], index: 0, kind: input, shape index: {}]
  %s1 = inlined_call_operand.vmem [shape: bf16[1024,128], index: 1, kind: input, shape index: {}]
  %s2 = inlined_call_operand.vmem [shape: f32[16,128], index: 2, kind: output, shape index: {}]
  %s3 = sld [smem:[#allocation0]]
  $region72: #{resnet_forward.60} parent=0
    _
  %s5 = ssub.s32 1, %s3
  %s6 = scalar_select 0, %s5, %s3
  $region1: #{resnet_forward.60} parent=0
    #allocation3 [shape = 'u8[32768]{0}', space=vmem, size = 0x8000, scoped, tag = 'input window, operand 0']
    loop: start=0, step=1, limit=4
    $region2: #{resnet_forward.60} parent=1 // loop_pre_header
      _
    $region3: #{resnet_forward.60} parent=1 // loop_header
      %s8 = sphi 0, %s12
      %p9 = scmp.ge.s32.totalorder %s8, 4
      %s15 = sphi 0, %s34
      %s16 = sphi 0, %s30
      %s17 = sphi 0, %s26
      %s18 = sphi 0, %s15
      %s19 = sphi 0, %s16
      %s20 = sphi 0, %s17
      %s21 = sphi 0, %s18
      %s22 = sphi 0, %s19
      %s23 = sphi 0, %s20
      %s39 = sphi 0, %s41
      %s42 = sphi 0, %s39
      %s43 = sphi 0, %s42
      %s59 = sphi 0, %s43
      %s67 = sphi 0, %s69
      %s70 = sphi 0, %s67
      %s71 = sphi 0, %s70
      %s87 = sphi 0, %s71
      %s95 = sphi 0, %s97
      %s98 = sphi 0, %s95
      %s99 = sphi 0, %s98
      %s115 = sphi 0, %s99
    $region4: #{resnet_forward.60} parent=1 // loop_header_branch
      %11 = sbr.rel (%p9) target = $region8
    $region5: #{resnet_forward.60} parent=1 // loop_body
      %s13 = ssub.s32 %s8, 1
      %s14 = ssub.s32 %s8, 2
      %s24 = sadd.s32 1, %s17
      %p25 = scmp.ge.s32.totalorder %s24, 2
      %s26 = scalar_select %p25, 0, %s24
      %s27 = sadd.s32 1, %s16
      %s28 = scalar_select %p25, %s27, %s16
      %p29 = scmp.ge.s32.totalorder %s28, 1
      %s30 = scalar_select %p29, 0, %s28
      %s31 = sadd.s32 1, %s15
      %s32 = scalar_select %p29, %s31, %s15
      %p33 = scmp.ge.s32.totalorder %s32, 1
      %s34 = scalar_select %p33, 0, %s32
      %s35 = ssub.s32 %s15, %s34
      %s36 = ssub.s32 %s17, %s26
      %s37 = sor.u32 %s35, %s36
      %p38 = scmp.eq.s32.totalorder %s37, 0
      %s40 = sadd.s32 %s39, 1
      %s41 = scalar_select %p38, %s39, %s40
      %p44 = pneg %p38
      %p45 = scmp.eq.s32.totalorder %s8, 1
      %p46 = por %p44, %p45
      %p47 = scmp.ne.s32.totalorder %s39, %s42
      %p48 = scmp.eq.s32.totalorder %s8, 0
      %p49 = por %p47, %p48
      %p50 = scmp.ne.s32.totalorder %s39, %s42
      %p51 = scmp.eq.s32.totalorder %s13, 1
      %p52 = por %p50, %p51
      %p53 = scmp.ne.s32.totalorder %s42, %s43
      %p54 = scmp.eq.s32.totalorder %s13, 0
      %p55 = por %p53, %p54
      %p56 = scmp.ne.s32.totalorder %s42, %s43
      %p57 = scmp.eq.s32.totalorder %s14, 1
      %p58 = por %p56, %p57
      %p60 = scmp.ne.s32.totalorder %s43, %s59
      %p61 = scmp.eq.s32.totalorder %s14, 0
      %p62 = por %p60, %p61
      %s63 = ssub.s32 %s17, %s26
      %s64 = ssub.s32 %s16, %s30
      %s65 = sor.u32 %s63, %s64
      %p66 = scmp.eq.s32.totalorder %s65, 0
      %s68 = sadd.s32 %s67, 1
      %s69 = scalar_select %p66, %s67, %s68
      %p72 = pneg %p66
      %p73 = scmp.eq.s32.totalorder %s8, 1
      %p74 = por %p72, %p73
      %p75 = scmp.ne.s32.totalorder %s67, %s70
      %p76 = scmp.eq.s32.totalorder %s8, 0
      %p77 = por %p75, %p76
      %p78 = scmp.ne.s32.totalorder %s67, %s70
      %p79 = scmp.eq.s32.totalorder %s13, 1
      %p80 = por %p78, %p79
      %p81 = scmp.ne.s32.totalorder %s70, %s71
      %p82 = scmp.eq.s32.totalorder %s13, 0
      %p83 = por %p81, %p82
      %p84 = scmp.ne.s32.totalorder %s70, %s71
      %p85 = scmp.eq.s32.totalorder %s14, 1
      %p86 = por %p84, %p85
      %p88 = scmp.ne.s32.totalorder %s71, %s87
      %p89 = scmp.eq.s32.totalorder %s14, 0
      %p90 = por %p88, %p89
      %s91 = ssub.s32 %s15, %s34
      %s92 = ssub.s32 %s16, %s30
      %s93 = sor.u32 %s91, %s92
      %p94 = scmp.eq.s32.totalorder %s93, 0
      %s96 = sadd.s32 %s95, 1
      %s97 = scalar_select %p94, %s95, %s96
      %p100 = pneg %p94
      %p101 = scmp.eq.s32.totalorder %s8, 1
      %p102 = por %p100, %p101
      %p103 = scmp.ne.s32.totalorder %s95, %s98
      %p104 = scmp.eq.s32.totalorder %s8, 0
      %p105 = por %p103, %p104
      %p106 = scmp.ne.s32.totalorder %s95, %s98
      %p107 = scmp.eq.s32.totalorder %s13, 1
      %p108 = por %p106, %p107
      %p109 = scmp.ne.s32.totalorder %s98, %s99
      %p110 = scmp.eq.s32.totalorder %s13, 0
      %p111 = por %p109, %p110
      %p112 = scmp.ne.s32.totalorder %s98, %s99
      %p113 = scmp.eq.s32.totalorder %s14, 1
      %p114 = por %p112, %p113
      %p116 = scmp.ne.s32.totalorder %s99, %s115
      %p117 = scmp.eq.s32.totalorder %s14, 0
      %p118 = por %p116, %p117
      %p119 = scmp.le.s32.totalorder 1, %s8
      %p120 = scmp.lt.s32.totalorder %s8, 3
      %p121 = pnand %p119, %p120
      %p122 = pneg %p121
      // Predicated region
      $region9: #{resnet_forward.60} parent=5 // pred_check
        _
      $region10: #{resnet_forward.60} parent=5 // pred_check_branch
        %124 = sbr.rel (%p121) target = $region12
      $region11: #{resnet_forward.60} parent=5 // pred_region
        %s125 = ssub.s32 %s8, 1
      $region12: #{resnet_forward.60} parent=5 // pred_fallthru
        _
      %p126 = scmp.lt.s32.totalorder %s8, 2
      // Predicated region
      $region13: #{resnet_forward.60} parent=5 // pred_check
        %p127 = pneg %p126
      $region14: #{resnet_forward.60} parent=5 // pred_check_branch
        %129 = sbr.rel (%p127) target = $region16
      $region15: #{resnet_forward.60} parent=5 // pred_region
        // Predicated region
        $region17: #{resnet_forward.60} parent=15 // pred_check
          %p130 = pneg %p49
        $region18: #{resnet_forward.60} parent=15 // pred_check_branch
          %132 = sbr.rel (%p130) target = $region20
        $region19: #{resnet_forward.60} parent=15 // pred_region
          %s133 = sand.u32 %s39, 1
          %s134 = sand.u32 %s39, 1
          %s135 = smul.addr %s134, 32
          %s136 = scalar_lea.vmem [#allocation3], %s135
          %s137 = smul.u32 2, %s15
          %s138 = smul.u32 4, %s17
          %s139 = smul.addr %s137, 8
          %s140 = sadd.s32 %s138, %s139
          %s141 = smul.addr %s140, 4
          %s142 = scalar_lea.vmem %s0, %s141
          // Predicated region
          $region21: #{resnet_forward.60} parent=19 // pred_check
            _
          $region22: #{resnet_forward.60} parent=19 // pred_check_branch
            %144 = sbr.rel (0) target = $region24
          $region23: #{resnet_forward.60} parent=19 // pred_region
            // Predicated region
            $region25: #{resnet_forward.60} parent=23 // pred_check
              _
            $region26: #{resnet_forward.60} parent=23 // pred_check_branch
              %146 = sbr.rel (0) target = $region28
            $region27: #{resnet_forward.60} parent=23 // pred_region
              loop: start=0, step=1, limit=1
              $region29: #{resnet_forward.60} parent=27 // loop_pre_header
                _
              $region30: #{resnet_forward.60} parent=27 // loop_header
                %s148 = sphi 0, %s152
                %p149 = scmp.ge.s32.totalorder %s148, 1
                %s153 = sphi %s142, %s142
                %s154 = sphi %s136, %s136
              $region31: #{resnet_forward.60} parent=27 // loop_header_branch
                %151 = sbr.rel (%p149) target = $region35
              $region32: #{resnet_forward.60} parent=27 // loop_body
                %v155 = vld [vmem:[%s153] sm:$0xff]
                %156 = vst [vmem:[%s154] sm:$0xff] %v155
                %v157 = vld [vmem:[%s153 + $0x8] sm:$0xff]
                %158 = vst [vmem:[%s154 + $0x8] sm:$0xff] %v157
                %v159 = vld [vmem:[%s153 + $0x20] sm:$0xff]
                %160 = vst [vmem:[%s154 + $0x10] sm:$0xff] %v159
                %v161 = vld [vmem:[%s153 + $0x28] sm:$0xff]
                %162 = vst [vmem:[%s154 + $0x18] sm:$0xff] %v161
              $region33: #{resnet_forward.60} parent=27 // loop_footer
                %s152 = sadd.s32 1, %s148
              $region34: #{resnet_forward.60} parent=27 // loop_footer_branch
                %147 = sbr.rel target = $region30
              $region35: #{resnet_forward.60} parent=27 // loop_exit
                _
            $region28: #{resnet_forward.60} parent=23 // pred_fallthru
              _
            // Predicated region
            $region36: #{resnet_forward.60} parent=23 // pred_check
              _
            $region37: #{resnet_forward.60} parent=23 // pred_check_branch
              %164 = sbr.rel target = $region39
            $region38: #{resnet_forward.60} parent=23 // pred_region
              _
            $region39: #{resnet_forward.60} parent=23 // pred_fallthru
              _
          $region24: #{resnet_forward.60} parent=19 // pred_fallthru
            _
          %165 = vnop
        $region20: #{resnet_forward.60} parent=15 // pred_fallthru
          _
        // Predicated region
        $region40: #{resnet_forward.60} parent=15 // pred_check
          %p166 = pneg %p77
        $region41: #{resnet_forward.60} parent=15 // pred_check_branch
          %168 = sbr.rel (%p166) target = $region43
        $region42: #{resnet_forward.60} parent=15 // pred_region
          %s169 = smul.u32 64, %s17
          %p170 = scmp.lt.s32.totalorder %s169, 127
          %s171 = scalar_select %p170, %s169, 127
          %p172 = scmp.lt.s32.totalorder %s16, 0
          %s173 = scalar_select %p172, %s16, 0
          %s174 = sadd.s32 %s173, %s171
          %s175 = smul.addr %s174, 4
          %s176 = scalar_lea.vmem %s1, %s175
          %s177 = smul.u32 64, %s17
        $region43: #{resnet_forward.60} parent=15 // pred_fallthru
          _
      $region16: #{resnet_forward.60} parent=5 // pred_fallthru
        _
      %p178 = scmp.le.s32.totalorder 1, %s8
      %p179 = scmp.lt.s32.totalorder %s8, 3
      %p180 = pnand %p178, %p179
      %p181 = pneg %p180
      // Predicated region
      $region44: #{resnet_forward.60} parent=5 // pred_check
        _
      $region45: #{resnet_forward.60} parent=5 // pred_check_branch
        %183 = sbr.rel (%p180) target = $region47
      $region46: #{resnet_forward.60} parent=5 // pred_region
        %s184 = ssub.s32 %s8, 1
        %s185 = sand.u32 %s42, 1
        %s186 = sand.u32 %s42, 1
        %s187 = smul.addr %s186, 32
        %s188 = scalar_lea.vmem [#allocation3], %s187
        // Predicated region
        $region48: #{resnet_forward.60} parent=46 // pred_check
          %p189 = pneg %p55
        $region49: #{resnet_forward.60} parent=46 // pred_check_branch
          %191 = sbr.rel (%p189) target = $region51
        $region50: #{resnet_forward.60} parent=46 // pred_region
          _
        $region51: #{resnet_forward.60} parent=46 // pred_fallthru
          _
        %s192 = sand.u32 %s42, 1
        %s193 = sand.u32 %s42, 1
        %s194 = smul.addr %s193, 32
        %s195 = scalar_lea.vmem [#allocation3], %s194
        %p196 = pneg %p55
        %p197 = pneg %p52
        %s198 = smul.u32 64, %s20
        %p199 = scmp.lt.s32.totalorder %s198, 127
        %s200 = scalar_select %p199, %s198, 127
        %p201 = scmp.lt.s32.totalorder %s19, 0
        %s202 = scalar_select %p201, %s19, 0
        %s203 = sadd.s32 %s202, %s200
        %s204 = smul.addr %s203, 4
        %s205 = scalar_lea.vmem %s1, %s204
        %p206 = pneg %p83
        %p207 = pneg %p80
        %p208 = pneg %p111
        %p209 = pneg %p108
        %s210 = smul.u32 2, %s18
        %p211 = scmp.lt.s32.totalorder %s210, 1
        %s212 = scalar_select %p211, %s210, 1
        %p213 = scmp.lt.s32.totalorder %s19, 0
        %s214 = scalar_select %p213, %s19, 0
        %s215 = sadd.s32 %s214, %s212
        %s216 = smul.addr %s215, 8
        %s217 = scalar_lea.vmem %s2, %s216
        %s218 = smul.u32 2, %s18
        %s219 = smul.u32 4, %s20
        %s220 = smul.u32 64, %s20
        %p221 = scmp.lt.s32.totalorder %s220, 127
        %s222 = scalar_select %p221, %s220, 127
        %p223 = scmp.lt.s32.totalorder %s19, 0
        %s224 = scalar_select %p223, %s19, 0
        %s225 = sadd.s32 %s224, %s222
        %s226 = smul.addr %s225, 4
        %s227 = scalar_lea.vmem %s1, %s226
        %s228 = smul.u32 64, %s20
        %s229 = smul.u32 2, %s18
        %p230 = scmp.lt.s32.totalorder %s229, 1
        %s231 = scalar_select %p230, %s229, 1
        %p232 = scmp.lt.s32.totalorder %s19, 0
        %s233 = scalar_select %p232, %s19, 0
        %s234 = sadd.s32 %s233, %s231
        %s235 = smul.addr %s234, 8
        %s236 = scalar_lea.vmem %s2, %s235
        %s237 = smul.u32 2, %s18
        %p238 = scmp.eq.s32.totalorder %s20, 0
        // Predicated region
        $region52: #{resnet_forward.60} parent=46 // pred_check
          %p239 = pneg %p238
        $region53: #{resnet_forward.60} parent=46 // pred_check_branch
          %241 = sbr.rel (%p239) target = $region55
        $region54: #{resnet_forward.60} parent=46 // pred_region
          %242 = vst [vmem:[#allocation2] sm:$0xff] 0.0
          %243 = vst [vmem:[#allocation2 + $0x8] sm:$0xff] 0.0
        $region55: #{resnet_forward.60} parent=46 // pred_fallthru
          _
        %v244 = vld [vmem:[#allocation2] sm:$0xff]
        %v245 = vld [vmem:[#allocation2 + $0x8] sm:$0xff]
        %v246 = vld [vmem:[%s188] sm:$0xff]
        %v247 = vld [vmem:[%s188 + $0x8] sm:$0xff]
        %v248 = vld [vmem:[%s188 + $0x10] sm:$0xff]
        %v249 = vld [vmem:[%s188 + $0x18] sm:$0xff]
        %v250 = vld [vmem:[%s227] sm:$0xf]
        %v251 = vld [vmem:[%s227 + $0x4] sm:$0xf]
        %v252 = vld [vmem:[%s227 + $0x8] sm:$0xf]
        %v253 = vld [vmem:[%s227 + $0xc] sm:$0xf]
        %v254 = vld [vmem:[%s227 + $0x10] sm:$0xf]
        %v255 = vld [vmem:[%s227 + $0x14] sm:$0xf]
        %v256 = vld [vmem:[%s227 + $0x18] sm:$0xf]
        %v257 = vld [vmem:[%s227 + $0x1c] sm:$0xf]
        %v258 = vld [vmem:[%s227 + $0x20] sm:$0xf]
        %v259 = vld [vmem:[%s227 + $0x24] sm:$0xf]
        %v260 = vld [vmem:[%s227 + $0x28] sm:$0xf]
        %v261 = vld [vmem:[%s227 + $0x2c] sm:$0xf]
        %v262 = vld [vmem:[%s227 + $0x30] sm:$0xf]
        %v263 = vld [vmem:[%s227 + $0x34] sm:$0xf]
        %v264 = vld [vmem:[%s227 + $0x38] sm:$0xf]
        %v265 = vld [vmem:[%s227 + $0x3c] sm:$0xf]
        %v266 = vld [vmem:[%s227 + $0x40] sm:$0xf]
        %v267 = vld [vmem:[%s227 + $0x44] sm:$0xf]
        %v268 = vld [vmem:[%s227 + $0x48] sm:$0xf]
        %v269 = vld [vmem:[%s227 + $0x4c] sm:$0xf]
        %v270 = vld [vmem:[%s227 + $0x50] sm:$0xf]
        %v271 = vld [vmem:[%s227 + $0x54] sm:$0xf]
        %v272 = vld [vmem:[%s227 + $0x58] sm:$0xf]
        %v273 = vld [vmem:[%s227 + $0x5c] sm:$0xf]
        %v274 = vld [vmem:[%s227 + $0x60] sm:$0xf]
        %v275 = vld [vmem:[%s227 + $0x64] sm:$0xf]
        %v276 = vld [vmem:[%s227 + $0x68] sm:$0xf]
        %v277 = vld [vmem:[%s227 + $0x6c] sm:$0xf]
        %v278 = vld [vmem:[%s227 + $0x70] sm:$0xf]
        %v279 = vld [vmem:[%s227 + $0x74] sm:$0xf]
        %v280 = vld [vmem:[%s227 + $0x78] sm:$0xf]
        %v281 = vld [vmem:[%s227 + $0x7c] sm:$0xf]
        %v282 = vld [vmem:[%s227 + $0x80] sm:$0xf]
        %v283 = vld [vmem:[%s227 + $0x84] sm:$0xf]
        %v284 = vld [vmem:[%s227 + $0x88] sm:$0xf]
        %v285 = vld [vmem:[%s227 + $0x8c] sm:$0xf]
        %v286 = vld [vmem:[%s227 + $0x90] sm:$0xf]
        %v287 = vld [vmem:[%s227 + $0x94] sm:$0xf]
        %v288 = vld [vmem:[%s227 + $0x98] sm:$0xf]
        %v289 = vld [vmem:[%s227 + $0x9c] sm:$0xf]
        %v290 = vld [vmem:[%s227 + $0xa0] sm:$0xf]
        %v291 = vld [vmem:[%s227 + $0xa4] sm:$0xf]
        %v292 = vld [vmem:[%s227 + $0xa8] sm:$0xf]
        %v293 = vld [vmem:[%s227 + $0xac] sm:$0xf]
        %v294 = vld [vmem:[%s227 + $0xb0] sm:$0xf]
        %v295 = vld [vmem:[%s227 + $0xb4] sm:$0xf]
        %v296 = vld [vmem:[%s227 + $0xb8] sm:$0xf]
        %v297 = vld [vmem:[%s227 + $0xbc] sm:$0xf]
        %v298 = vld [vmem:[%s227 + $0xc0] sm:$0xf]
        %v299 = vld [vmem:[%s227 + $0xc4] sm:$0xf]
        %v300 = vld [vmem:[%s227 + $0xc8] sm:$0xf]
        %v301 = vld [vmem:[%s227 + $0xcc] sm:$0xf]
        %v302 = vld [vmem:[%s227 + $0xd0] sm:$0xf]
        %v303 = vld [vmem:[%s227 + $0xd4] sm:$0xf]
        %v304 = vld [vmem:[%s227 + $0xd8] sm:$0xf]
        %v305 = vld [vmem:[%s227 + $0xdc] sm:$0xf]
        %v306 = vld [vmem:[%s227 + $0xe0] sm:$0xf]
        %v307 = vld [vmem:[%s227 + $0xe4] sm:$0xf]
        %v308 = vld [vmem:[%s227 + $0xe8] sm:$0xf]
        %v309 = vld [vmem:[%s227 + $0xec] sm:$0xf]
        %v310 = vld [vmem:[%s227 + $0xf0] sm:$0xf]
        %v311 = vld [vmem:[%s227 + $0xf4] sm:$0xf]
        %v312 = vld [vmem:[%s227 + $0xf8] sm:$0xf]
        %v313 = vld [vmem:[%s227 + $0xfc] sm:$0xf]
        %v318 = vunpack.c.l.b16 %v246
        %v319 = vunpack.c.h.b16 %v246
        %v320 = vunpack.c.l.b16 %v247
        %v321 = vunpack.c.h.b16 %v247
        %v322 = vunpack.c.l.b16 %v248
        %v323 = vunpack.c.h.b16 %v248
        %v324 = vunpack.c.l.b16 %v249
        %v325 = vunpack.c.h.b16 %v249
        %v326 = vpack.c.b16 %v322, %v318
        %v327 = vpack.c.b16 %v323, %v319
        %v328 = vpack.c.b16 %v324, %v320
        %v329 = vpack.c.b16 %v325, %v321
        %v398 = vunpack.c.l.b16 %v250
        %v399 = vunpack.c.l.b16 %v251
        %v400 = vunpack.c.l.b16 %v252
        %v401 = vunpack.c.l.b16 %v253
        %v402 = vunpack.c.l.b16 %v254
        %v403 = vunpack.c.l.b16 %v255
        %v404 = vunpack.c.l.b16 %v256
        %v405 = vunpack.c.l.b16 %v257
        %v406 = vunpack.c.l.b16 %v258
        %v407 = vunpack.c.l.b16 %v259
        %v408 = vunpack.c.l.b16 %v260
        %v409 = vunpack.c.l.b16 %v261
        %v410 = vunpack.c.l.b16 %v262
        %v411 = vunpack.c.l.b16 %v263
        %v412 = vunpack.c.l.b16 %v264
        %v413 = vunpack.c.l.b16 %v265
        %v414 = vunpack.c.l.b16 %v266
        %v415 = vunpack.c.l.b16 %v267
        %v416 = vunpack.c.l.b16 %v268
        %v417 = vunpack.c.l.b16 %v269
        %v418 = vunpack.c.l.b16 %v270
        %v419 = vunpack.c.l.b16 %v271
        %v420 = vunpack.c.l.b16 %v272
        %v421 = vunpack.c.l.b16 %v273
        %v422 = vunpack.c.l.b16 %v274
        %v423 = vunpack.c.l.b16 %v275
        %v424 = vunpack.c.l.b16 %v276
        %v425 = vunpack.c.l.b16 %v277
        %v426 = vunpack.c.l.b16 %v278
        %v427 = vunpack.c.l.b16 %v279
        %v428 = vunpack.c.l.b16 %v280
        %v429 = vunpack.c.l.b16 %v281
        %v430 = vunpack.c.l.b16 %v282
        %v431 = vunpack.c.l.b16 %v283
        %v432 = vunpack.c.l.b16 %v284
        %v433 = vunpack.c.l.b16 %v285
        %v434 = vunpack.c.l.b16 %v286
        %v435 = vunpack.c.l.b16 %v287
        %v436 = vunpack.c.l.b16 %v288
        %v437 = vunpack.c.l.b16 %v289
        %v438 = vunpack.c.l.b16 %v290
        %v439 = vunpack.c.l.b16 %v291
        %v440 = vunpack.c.l.b16 %v292
        %v441 = vunpack.c.l.b16 %v293
        %v442 = vunpack.c.l.b16 %v294
        %v443 = vunpack.c.l.b16 %v295
        %v444 = vunpack.c.l.b16 %v296
        %v445 = vunpack.c.l.b16 %v297
        %v446 = vunpack.c.l.b16 %v298
        %v447 = vunpack.c.l.b16 %v299
        %v448 = vunpack.c.l.b16 %v300
        %v449 = vunpack.c.l.b16 %v301
        %v450 = vunpack.c.l.b16 %v302
        %v451 = vunpack.c.l.b16 %v303
        %v452 = vunpack.c.l.b16 %v304
        %v453 = vunpack.c.l.b16 %v305
        %v454 = vunpack.c.l.b16 %v306
        %v455 = vunpack.c.l.b16 %v307
        %v456 = vunpack.c.l.b16 %v308
        %v457 = vunpack.c.l.b16 %v309
        %v458 = vunpack.c.l.b16 %v310
        %v459 = vunpack.c.l.b16 %v311
        %v460 = vunpack.c.l.b16 %v312
        %v461 = vunpack.c.l.b16 %v313
        %v462 = vpack.c.b16 %v399, %v398
        %v463 = vpack.c.b16 %v401, %v400
        %v464 = vpack.c.b16 %v403, %v402
        %v465 = vpack.c.b16 %v405, %v404
        %v466 = vpack.c.b16 %v407, %v406
        %v467 = vpack.c.b16 %v409, %v408
        %v468 = vpack.c.b16 %v411, %v410
        %v469 = vpack.c.b16 %v413, %v412
        %v470 = vpack.c.b16 %v415, %v414
        %v471 = vpack.c.b16 %v417, %v416
        %v472 = vpack.c.b16 %v419, %v418
        %v473 = vpack.c.b16 %v421, %v420
        %v474 = vpack.c.b16 %v423, %v422
        %v475 = vpack.c.b16 %v425, %v424
        %v476 = vpack.c.b16 %v427, %v426
        %v477 = vpack.c.b16 %v429, %v428
        %v478 = vpack.c.b16 %v431, %v430
        %v479 = vpack.c.b16 %v433, %v432
        %v480 = vpack.c.b16 %v435, %v434
        %v481 = vpack.c.b16 %v437, %v436
        %v482 = vpack.c.b16 %v439, %v438
        %v483 = vpack.c.b16 %v441, %v440
        %v484 = vpack.c.b16 %v443, %v442
        %v485 = vpack.c.b16 %v445, %v444
        %v486 = vpack.c.b16 %v447, %v446
        %v487 = vpack.c.b16 %v449, %v448
        %v488 = vpack.c.b16 %v451, %v450
        %v489 = vpack.c.b16 %v453, %v452
        %v490 = vpack.c.b16 %v455, %v454
        %v491 = vpack.c.b16 %v457, %v456
        %v492 = vpack.c.b16 %v459, %v458
        %v493 = vpack.c.b16 %v461, %v460
        %526 = vmatpush.bf16.msra.mxu0 %v469
        %527 = vmatpush.bf16.msra.mxu0 %v468
        %528 = vmatpush.bf16.msra.mxu0 %v467
        %529 = vmatpush.bf16.msra.mxu0 %v466
        %530 = vmatpush.bf16.msra.mxu0 %v465
        %531 = vmatpush.bf16.msra.mxu0 %v464
        %532 = vmatpush.bf16.msra.mxu0 %v463
        %533 = vmatpush.bf16.msra.mxu0 %v462
        %534 = vmatmul.bf16.gmra.mxu0 %v326
        %v535 = vpop.f32.mrf.mxu0
        %v536 = vadd.f32 0.0, %v535
        %v537 = vpop.f32.mrf.mxu0
        %v538 = vadd.f32 0.0, %v537
        %539 = vdwg.mxu0
        %540 = vmatpush.bf16.msra.mxu0 %v477
        %541 = vmatpush.bf16.msra.mxu0 %v476
        %542 = vmatpush.bf16.msra.mxu0 %v475
        %543 = vmatpush.bf16.msra.mxu0 %v474
        %544 = vmatpush.bf16.msra.mxu0 %v473
        %545 = vmatpush.bf16.msra.mxu0 %v472
        %546 = vmatpush.bf16.msra.mxu0 %v471
        %547 = vmatpush.bf16.msra.mxu0 %v470
        %548 = vmatmul.bf16.gmra.mxu0 %v327
        %v549 = vpop.f32.mrf.mxu0
        %v550 = vadd.f32 %v536, %v549
        %v551 = vpop.f32.mrf.mxu0
        %v552 = vadd.f32 %v538, %v551
        %553 = vdwg.mxu0
        %554 = vmatpush.bf16.msra.mxu0 %v485
        %555 = vmatpush.bf16.msra.mxu0 %v484
        %556 = vmatpush.bf16.msra.mxu0 %v483
        %557 = vmatpush.bf16.msra.mxu0 %v482
        %558 = vmatpush.bf16.msra.mxu0 %v481
        %559 = vmatpush.bf16.msra.mxu0 %v480
        %560 = vmatpush.bf16.msra.mxu0 %v479
        %561 = vmatpush.bf16.msra.mxu0 %v478
        %562 = vmatmul.bf16.gmra.mxu0 %v328
        %v563 = vpop.f32.mrf.mxu0
        %v564 = vadd.f32 %v550, %v563
        %v565 = vpop.f32.mrf.mxu0
        %v566 = vadd.f32 %v552, %v565
        %567 = vdwg.mxu0
        %568 = vmatpush.bf16.msra.mxu0 %v493
        %569 = vmatpush.bf16.msra.mxu0 %v492
        %570 = vmatpush.bf16.msra.mxu0 %v491
        %571 = vmatpush.bf16.msra.mxu0 %v490
        %572 = vmatpush.bf16.msra.mxu0 %v489
        %573 = vmatpush.bf16.msra.mxu0 %v488
        %574 = vmatpush.bf16.msra.mxu0 %v487
        %575 = vmatpush.bf16.msra.mxu0 %v486
        %576 = vmatmul.bf16.gmra.mxu0 %v329
        %v577 = vpop.f32.mrf.mxu0
        %v578 = vadd.f32 %v564, %v577
        %v579 = vpop.f32.mrf.mxu0
        %v580 = vadd.f32 %v566, %v579
        %581 = vdwg.mxu0
        %v582 = vadd.f32 %v244, %v578
        %v583 = vadd.f32 %v245, %v580
        %584 = vst [vmem:[#allocation2] sm:$0xff] %v582
        %585 = vst [vmem:[#allocation2 + $0x8] sm:$0xff] %v583
        %p586 = scmp.eq.s32.totalorder %s20, 1
        // Predicated region
        $region56: #{resnet_forward.60} parent=46 // pred_check
          %p587 = pneg %p586
        $region57: #{resnet_forward.60} parent=46 // pred_check_branch
          %589 = sbr.rel (%p587) target = $region59
        $region58: #{resnet_forward.60} parent=46 // pred_region
          %v590 = vld [vmem:[#allocation2] sm:$0xff]
          %v591 = vld [vmem:[#allocation2 + $0x8] sm:$0xff]
          %592 = vst [vmem:[%s236] sm:$0xff] %v590
          %593 = vst [vmem:[%s236 + $0x8] sm:$0xff] %v591
        $region59: #{resnet_forward.60} parent=46 // pred_fallthru
          _
        %s594 = smul.u32 2, %s18
        %p595 = scmp.lt.s32.totalorder %s594, 1
        %s596 = scalar_select %p595, %s594, 1
        %p597 = scmp.lt.s32.totalorder %s19, 0
        %s598 = scalar_select %p597, %s19, 0
        %s599 = sadd.s32 %s598, %s596
        %s600 = smul.addr %s599, 8
        %s601 = scalar_lea.vmem %s2, %s600
        // Predicated region
        $region60: #{resnet_forward.60} parent=46 // pred_check
          %p602 = pneg %p108
        $region61: #{resnet_forward.60} parent=46 // pred_check_branch
          %604 = sbr.rel (%p602) target = $region63
        $region62: #{resnet_forward.60} parent=46 // pred_region
          %s605 = smul.u32 2, %s18
        $region63: #{resnet_forward.60} parent=46 // pred_fallthru
          _
        // Predicated region
        $region64: #{resnet_forward.60} parent=46 // pred_check
          %p606 = pneg %p108
        $region65: #{resnet_forward.60} parent=46 // pred_check_branch
          %608 = sbr.rel (%p606) target = $region67
        $region66: #{resnet_forward.60} parent=46 // pred_region
          %s609 = smul.u32 2, %s18
          %p610 = scmp.lt.s32.totalorder %s609, 1
          %s611 = scalar_select %p610, %s609, 1
          %p612 = scmp.lt.s32.totalorder %s19, 0
          %s613 = scalar_select %p612, %s19, 0
          %s614 = sadd.s32 %s613, %s611
          %s615 = smul.addr %s614, 8
          %s616 = scalar_lea.vmem %s2, %s615
        $region67: #{resnet_forward.60} parent=46 // pred_fallthru
          _
      $region47: #{resnet_forward.60} parent=5 // pred_fallthru
        _
      %p617 = scmp.le.s32.totalorder 2, %s8
      // Predicated region
      $region68: #{resnet_forward.60} parent=5 // pred_check
        %p618 = pneg %p617
      $region69: #{resnet_forward.60} parent=5 // pred_check_branch
        %620 = sbr.rel (%p618) target = $region71
      $region70: #{resnet_forward.60} parent=5 // pred_region
        %s621 = ssub.s32 %s8, 2
      $region71: #{resnet_forward.60} parent=5 // pred_fallthru
        _
    $region6: #{resnet_forward.60} parent=1 // loop_footer
      %s12 = sadd.s32 1, %s8
    $region7: #{resnet_forward.60} parent=1 // loop_footer_branch
      %7 = sbr.rel target = $region3
    $region8: #{resnet_forward.60} parent=1 // loop_exit
      _

// kernel: resnet_forward.71
$region0: #{resnet_forward.71}
  #allocation0 [shape = 'u32[]', space=smem, size = 0x4, offset = 0x4, fixed_abs, tag = 'smem constant byte address 0x4 - core index']
  #allocation1 [shape = 'u32[72,128]{1,0:T(1,128)}', space=vmem, size = 0x9000, scoped, tag = 'internal scratch']
  #allocation2 [shape = 'f32[1,128]{1,0:T(1,128)}', space=vmem, size = 0x200, scoped, tag = 'scratch operand']
  #allocation3 [shape = 'f32[1,128]{1,0:T(1,128)}', space=vmem, size = 0x200, scoped, tag = 'scratch operand']
  #allocation4 [shape = 'f32[1,128]{1,0:T(1,128)}', space=vmem, size = 0x200, scoped, tag = 'scratch operand']
  %s0 = inlined_call_operand.vmem [shape: f32[1,2,128], index: 0, kind: input, shape index: {}]
  %s1 = inlined_call_operand.vmem [shape: f32[1,128], index: 1, kind: output, shape index: {0}]
  %s2 = inlined_call_operand.vmem [shape: f32[1,128], index: 2, kind: output, shape index: {1}]
  %3 = xla_tuple %s1, %s2
  %s4 = sld [smem:[#allocation0]]
  $region30: #{resnet_forward.71} parent=0
    _
  %s6 = ssub.s32 1, %s4
  %s7 = scalar_select 0, %s6, %s4
  // Predicated region
  $region2: #{resnet_forward.71} parent=0 // pred_check
    _
  $region3: #{resnet_forward.71} parent=0 // pred_check_branch
    %9 = sbr.rel (0) target = $region5
  $region4: #{resnet_forward.71} parent=0 // pred_region
    _
  $region5: #{resnet_forward.71} parent=0 // pred_fallthru
    _
  %v10 = vld [vmem:[%s0] sm:$0x3]
  %vm11 = vcmask 1041408
  %v12 = vsel %vm11, %v10, 0.0
  %v13 = vrot.slane %v12, 4
  %v14 = vadd.f32 %v12, %v13
  %v15 = vrot.slane %v14, 2
  %v16 = vadd.f32 %v14, %v15
  %v17 = vrot.slane %v16, 1
  %v18 = vadd.f32 %v16, %v17
  %v19 = vsel %vm11, %v10, -inf
  %v20 = vrot.slane %v19, 4
  %v21 = vmax.f32 %v19, %v20
  %v22 = vrot.slane %v21, 2
  %v23 = vmax.f32 %v21, %v22
  %v24 = vrot.slane %v23, 1
  %v25 = vmax.f32 %v23, %v24
  %v26 = vsel %vm11, %v10, inf
  %v27 = vrot.slane %v26, 4
  %v28 = vmin.f32 %v26, %v27
  %v29 = vrot.slane %v28, 2
  %v30 = vmin.f32 %v28, %v29
  %v31 = vrot.slane %v30, 1
  %v32 = vmin.f32 %v30, %v31
  %p33 = scmp.eq.s32.totalorder 0, 0
  // Predicated region
  $region6: #{resnet_forward.71} parent=0 // pred_check
    %p34 = pneg %p33
  $region7: #{resnet_forward.71} parent=0 // pred_check_branch
    %36 = sbr.rel (%p34) target = $region9
  $region8: #{resnet_forward.71} parent=0 // pred_region
    %37 = vst [vmem:[#allocation2] sm:$0x1] 0.0
    %38 = vst [vmem:[#allocation3] sm:$0x1] 0.0
    %39 = vst [vmem:[#allocation4] sm:$0x1] 0.0
  $region9: #{resnet_forward.71} parent=0 // pred_fallthru
    _
  %v40 = vld [vmem:[#allocation2] sm:$0x1]
  %v41 = vadd.f32 %v40, %v18
  %42 = vst [vmem:[#allocation2] sm:$0x1] %v41
  %v43 = vld [vmem:[#allocation3] sm:$0x1]
  %v44 = vadd.f32 %v43, %v25
  %45 = vst [vmem:[#allocation3] sm:$0x1] %v44
  %v46 = vld [vmem:[#allocation4] sm:$0x1]
  %v47 = vadd.f32 %v46, %v32
  %48 = vst [vmem:[#allocation4] sm:$0x1] %v47
  // Predicated region
  $region10: #{resnet_forward.71} parent=0 // pred_check
    %p49 = pneg %p33
  $region11: #{resnet_forward.71} parent=0 // pred_check_branch
    %51 = sbr.rel (%p49) target = $region13
  $region12: #{resnet_forward.71} parent=0 // pred_region
    %v52 = vld [vmem:[#allocation2] sm:$0x1]
    %v53 = vrcp.pop 2.0
    %v54 = vmul.f32 2.0, %v53
    %v55 = vsub.f32 1.0, %v54
    %v56 = vmul.f32 %v53, %v55
    %v57 = vadd.f32 %v53, %v56
    %vm58 = vweird.f32 %v53
    %v59 = vsel %vm58, %v53, %v57
    %v60 = vmul.f32 %v52, %v59
    %61 = vst [vmem:[%s1] sm:$0x1] %v60
    %v62 = vld [vmem:[#allocation3] sm:$0x1]
    %v63 = vld [vmem:[#allocation4] sm:$0x1]
    %v64 = vsub.f32 %v62, %v63
    %v65 = vmul.f32 %v64, 0.45881075
    %v66 = vadd.f32 %v65, 1e-05
    %v67 = vrcp.pop %v66
    %v68 = vmul.f32 %v66, %v67
    %v69 = vsub.f32 1.0, %v68
    %v70 = vmul.f32 %v67, %v69
    %v71 = vadd.f32 %v67, %v70
    %vm72 = vweird.f32 %v66
    %vm73 = vweird.f32 %v67
    %vm74 = vmor %vm72, %vm73
    %v75 = vsel %vm74, %v67, %v71
    %v76 = vand.u32 2147483647, %v66
    %vm77 = vcmp.eq.f32.partialorder %v76, 8.507059e+37
    %v78 = vand.u32 %v66, 2147483648
    %v79 = vor.u32 1.1754944e-38, %v78
    %v80 = vsel %vm77, %v79, %v75
    %v81 = vmul.f32 1.0, %v80
    %82 = vst [vmem:[%s2] sm:$0x1] %v81
  $region13: #{resnet_forward.71} parent=0 // pred_fallthru
    _
  // Predicated region
  $region14: #{resnet_forward.71} parent=0 // pred_check
    _
  $region15: #{resnet_forward.71} parent=0 // pred_check_branch
    %84 = sbr.rel (0) target = $region17
  $region16: #{resnet_forward.71} parent=0 // pred_region
    _
  $region17: #{resnet_forward.71} parent=0 // pred_fallthru
    _
  // Predicated region
  $region18: #{resnet_forward.71} parent=0 // pred_check
    _
  $region19: #{resnet_forward.71} parent=0 // pred_check_branch
    %86 = sbr.rel (0) target = $region21
  $region20: #{resnet_forward.71} parent=0 // pred_region
    _
  $region21: #{resnet_forward.71} parent=0 // pred_fallthru
    _
  // Predicated region
  $region22: #{resnet_forward.71} parent=0 // pred_check
    _
  $region23: #{resnet_forward.71} parent=0 // pred_check_branch
    %88 = sbr.rel (0) target = $region25
  $region24: #{resnet_forward.71} parent=0 // pred_region
    _
  $region25: #{resnet_forward.71} parent=0 // pred_fallthru
    _
  // Predicated region
  $region26: #{resnet_forward.71} parent=0 // pred_check
    _
  $region27: #{resnet_forward.71} parent=0 // pred_check_branch
    %90 = sbr.rel (0) target = $region29
  $region28: #{resnet_forward.71} parent=0 // pred_region
    _
  $region29: #{resnet_forward.71} parent=0 // pred_fallthru
    _

// kernel: resnet_forward.75
$region0: #{resnet_forward.75}
  #allocation0 [shape = 'u32[]', space=smem, size = 0x4, offset = 0x4, fixed_abs, tag = 'smem constant byte address 0x4 - core index']
  #allocation1 [shape = 'u32[72,128]{1,0:T(1,128)}', space=vmem, size = 0x9000, scoped, tag = 'internal scratch']
  #allocation2 [shape = 'f32[16,128]{1,0:T(8,128)}', space=vmem, size = 0x2000, scoped, tag = 'scratch operand']
  %s0 = inlined_call_operand.vmem [shape: bf16[16,128], index: 0, kind: input, shape index: {}]
  %s1 = inlined_call_operand.vmem [shape: bf16[128,128], index: 1, kind: input, shape index: {}]
  %s2 = inlined_call_operand.vmem [shape: f32[1,128], index: 2, kind: input, shape index: {}]
  %s3 = inlined_call_operand.vmem [shape: f32[16,128], index: 3, kind: output, shape index: {}]
  %s4 = sld [smem:[#allocation0]]
  $region30: #{resnet_forward.75} parent=0
    _
  %s6 = ssub.s32 1, %s4
  %s7 = scalar_select 0, %s6, %s4
  // Predicated region
  $region2: #{resnet_forward.75} parent=0 // pred_check
    _
  $region3: #{resnet_forward.75} parent=0 // pred_check_branch
    %9 = sbr.rel (0) target = $region5
  $region4: #{resnet_forward.75} parent=0 // pred_region
    _
  $region5: #{resnet_forward.75} parent=0 // pred_fallthru
    _
  // Predicated region
  $region6: #{resnet_forward.75} parent=0 // pred_check
    _
  $region7: #{resnet_forward.75} parent=0 // pred_check_branch
    %11 = sbr.rel (0) target = $region9
  $region8: #{resnet_forward.75} parent=0 // pred_region
    _
  $region9: #{resnet_forward.75} parent=0 // pred_fallthru
    _
  // Predicated region
  $region10: #{resnet_forward.75} parent=0 // pred_check
    _
  $region11: #{resnet_forward.75} parent=0 // pred_check_branch
    %13 = sbr.rel (0) target = $region13
  $region12: #{resnet_forward.75} parent=0 // pred_region
    _
  $region13: #{resnet_forward.75} parent=0 // pred_fallthru
    _
  %p14 = scmp.eq.s32.totalorder 0, 0
  // Predicated region
  $region14: #{resnet_forward.75} parent=0 // pred_check
    %p15 = pneg %p14
  $region15: #{resnet_forward.75} parent=0 // pred_check_branch
    %17 = sbr.rel (%p15) target = $region17
  $region16: #{resnet_forward.75} parent=0 // pred_region
    %18 = vst [vmem:[#allocation2] sm:$0xff] 0.0
    %19 = vst [vmem:[#allocation2 + $0x8] sm:$0xff] 0.0
  $region17: #{resnet_forward.75} parent=0 // pred_fallthru
    _
  %v20 = vld [vmem:[#allocation2] sm:$0xff]
  %v21 = vld [vmem:[#allocation2 + $0x8] sm:$0xff]
  %v22 = vld [vmem:[%s0] sm:$0xf]
  %v23 = vld [vmem:[%s0 + $0x4] sm:$0xf]
  %v24 = vld [vmem:[%s1] sm:$0xf]
  %v25 = vld [vmem:[%s1 + $0x4] sm:$0xf]
  %v26 = vld [vmem:[%s1 + $0x8] sm:$0xf]
  %v27 = vld [vmem:[%s1 + $0xc] sm:$0xf]
  %v28 = vld [vmem:[%s1 + $0x10] sm:$0xf]
  %v29 = vld [vmem:[%s1 + $0x14] sm:$0xf]
  %v30 = vld [vmem:[%s1 + $0x18] sm:$0xf]
  %v31 = vld [vmem:[%s1 + $0x1c] sm:$0xf]
  %v32 = vld [vmem:[%s1 + $0x20] sm:$0xf]
  %v33 = vld [vmem:[%s1 + $0x24] sm:$0xf]
  %v34 = vld [vmem:[%s1 + $0x28] sm:$0xf]
  %v35 = vld [vmem:[%s1 + $0x2c] sm:$0xf]
  %v36 = vld [vmem:[%s1 + $0x30] sm:$0xf]
  %v37 = vld [vmem:[%s1 + $0x34] sm:$0xf]
  %v38 = vld [vmem:[%s1 + $0x38] sm:$0xf]
  %v39 = vld [vmem:[%s1 + $0x3c] sm:$0xf]
  %v42 = vunpack.c.l.b16 %v22
  %v43 = vunpack.c.l.b16 %v23
  %v44 = vpack.c.b16 %v43, %v42
  %v62 = vunpack.c.l.b16 %v24
  %v63 = vunpack.c.l.b16 %v25
  %v64 = vunpack.c.l.b16 %v26
  %v65 = vunpack.c.l.b16 %v27
  %v66 = vunpack.c.l.b16 %v28
  %v67 = vunpack.c.l.b16 %v29
  %v68 = vunpack.c.l.b16 %v30
  %v69 = vunpack.c.l.b16 %v31
  %v70 = vunpack.c.l.b16 %v32
  %v71 = vunpack.c.l.b16 %v33
  %v72 = vunpack.c.l.b16 %v34
  %v73 = vunpack.c.l.b16 %v35
  %v74 = vunpack.c.l.b16 %v36
  %v75 = vunpack.c.l.b16 %v37
  %v76 = vunpack.c.l.b16 %v38
  %v77 = vunpack.c.l.b16 %v39
  %v78 = vpack.c.b16 %v63, %v62
  %v79 = vpack.c.b16 %v65, %v64
  %v80 = vpack.c.b16 %v67, %v66
  %v81 = vpack.c.b16 %v69, %v68
  %v82 = vpack.c.b16 %v71, %v70
  %v83 = vpack.c.b16 %v73, %v72
  %v84 = vpack.c.b16 %v75, %v74
  %v85 = vpack.c.b16 %v77, %v76
  %94 = vmatpush.bf16.msra.mxu0 %v85
  %95 = vmatpush.bf16.msra.mxu0 %v84
  %96 = vmatpush.bf16.msra.mxu0 %v83
  %97 = vmatpush.bf16.msra.mxu0 %v82
  %98 = vmatpush.bf16.msra.mxu0 %v81
  %99 = vmatpush.bf16.msra.mxu0 %v80
  %100 = vmatpush.bf16.msra.mxu0 %v79
  %101 = vmatpush.bf16.msra.mxu0 %v78
  %102 = vmatmul.bf16.gmra.mxu0 %v44
  %v103 = vpop.f32.mrf.mxu0
  %v104 = vadd.f32 0.0, %v103
  %v105 = vpop.f32.mrf.mxu0
  %v106 = vadd.f32 0.0, %v105
  %107 = vdwg.mxu0
  %v108 = vadd.f32 %v20, %v104
  %v109 = vadd.f32 %v21, %v106
  %110 = vst [vmem:[#allocation2] sm:$0xff] %v108
  %111 = vst [vmem:[#allocation2 + $0x8] sm:$0xff] %v109
  // Predicated region
  $region18: #{resnet_forward.75} parent=0 // pred_check
    %p112 = pneg %p14
  $region19: #{resnet_forward.75} parent=0 // pred_check_branch
    %114 = sbr.rel (%p112) target = $region21
  $region20: #{resnet_forward.75} parent=0 // pred_region
    %v115 = vld [vmem:[#allocation2] sm:$0xff]
    %v116 = vld [vmem:[#allocation2 + $0x8] sm:$0xff]
    %v117 = vld [vmem:[%s2] sm:$0x1]
    %v119 = vperm.slane %v117, 0
    %v121 = vadd.f32 %v115, %v119
    %v122 = vadd.f32 %v116, %v119
    %123 = vst [vmem:[%s3] sm:$0xff] %v121
    %124 = vst [vmem:[%s3 + $0x8] sm:$0xff] %v122
  $region21: #{resnet_forward.75} parent=0 // pred_fallthru
    _
  // Predicated region
  $region22: #{resnet_forward.75} parent=0 // pred_check
    _
  $region23: #{resnet_forward.75} parent=0 // pred_check_branch
    %126 = sbr.rel (0) target = $region25
  $region24: #{resnet_forward.75} parent=0 // pred_region
    _
  $region25: #{resnet_forward.75} parent=0 // pred_fallthru
    _
  // Predicated region
  $region26: #{resnet_forward.75} parent=0 // pred_check
    _
  $region27: #{resnet_forward.75} parent=0 // pred_check_branch
    %128 = sbr.rel (0) target = $region29
  $region28: #{resnet_forward.75} parent=0 // pred_region
    _
  $region29: #{resnet_forward.75} parent=0 // pred_fallthru
    _

// kernel: resnet_forward.69
$region0: #{resnet_forward.69}
  #allocation0 [shape = 'u32[]', space=smem, size = 0x4, offset = 0x4, fixed_abs, tag = 'smem constant byte address 0x4 - core index']
  #allocation1 [shape = 'u32[72,128]{1,0:T(1,128)}', space=vmem, size = 0x9000, scoped, tag = 'internal scratch']
  #allocation2 [shape = 'f32[16,128]{1,0:T(8,128)}', space=vmem, size = 0x2000, scoped, tag = 'scratch operand']
  %s0 = inlined_call_operand.vmem [shape: bf16[16,1536], index: 0, kind: input, shape index: {}]
  %s1 = inlined_call_operand.vmem [shape: bf16[1536,128], index: 1, kind: input, shape index: {}]
  %s2 = inlined_call_operand.vmem [shape: f32[16,128], index: 2, kind: output, shape index: {}]
  %s3 = sld [smem:[#allocation0]]
  $region72: #{resnet_forward.69} parent=0
    _
  %s5 = ssub.s32 1, %s3
  %s6 = scalar_select 0, %s5, %s3
  $region1: #{resnet_forward.69} parent=0
    #allocation3 [shape = 'u8[32768]{0}', space=vmem, size = 0x8000, scoped, tag = 'input window, operand 0']
    loop: start=0, step=1, limit=5
    $region2: #{resnet_forward.69} parent=1 // loop_pre_header
      _
    $region3: #{resnet_forward.69} parent=1 // loop_header
      %s8 = sphi 0, %s12
      %p9 = scmp.ge.s32.totalorder %s8, 5
      %s15 = sphi 0, %s34
      %s16 = sphi 0, %s30
      %s17 = sphi 0, %s26
      %s18 = sphi 0, %s15
      %s19 = sphi 0, %s16
      %s20 = sphi 0, %s17
      %s21 = sphi 0, %s18
      %s22 = sphi 0, %s19
      %s23 = sphi 0, %s20
      %s39 = sphi 0, %s41
      %s42 = sphi 0, %s39
      %s43 = sphi 0, %s42
      %s59 = sphi 0, %s43
      %s67 = sphi 0, %s69
      %s70 = sphi 0, %s67
      %s71 = sphi 0, %s70
      %s87 = sphi 0, %s71
      %s95 = sphi 0, %s97
      %s98 = sphi 0, %s95
      %s99 = sphi 0, %s98
      %s115 = sphi 0, %s99
    $region4: #{resnet_forward.69} parent=1 // loop_header_branch
      %11 = sbr.rel (%p9) target = $region8
    $region5: #{resnet_forward.69} parent=1 // loop_body
      %s13 = ssub.s32 %s8, 1
      %s14 = ssub.s32 %s8, 2
      %s24 = sadd.s32 1, %s17
      %p25 = scmp.ge.s32.totalorder %s24, 3
      %s26 = scalar_select %p25, 0, %s24
      %s27 = sadd.s32 1, %s16
      %s28 = scalar_select %p25, %s27, %s16
      %p29 = scmp.ge.s32.totalorder %s28, 1
      %s30 = scalar_select %p29, 0, %s28
      %s31 = sadd.s32 1, %s15
      %s32 = scalar_select %p29, %s31, %s15
      %p33 = scmp.ge.s32.totalorder %s32, 1
      %s34 = scalar_select %p33, 0, %s32
      %s35 = ssub.s32 %s15, %s34
      %s36 = ssub.s32 %s17, %s26
      %s37 = sor.u32 %s35, %s36
      %p38 = scmp.eq.s32.totalorder %s37, 0
      %s40 = sadd.s32 %s39, 1
      %s41 = scalar_select %p38, %s39, %s40
      %p44 = pneg %p38
      %p45 = scmp.eq.s32.totalorder %s8, 2
      %p46 = por %p44, %p45
      %p47 = scmp.ne.s32.totalorder %s39, %s42
      %p48 = scmp.eq.s32.totalorder %s8, 0
      %p49 = por %p47, %p48
      %p50 = scmp.ne.s32.totalorder %s39, %s42
      %p51 = scmp.eq.s32.totalorder %s13, 2
      %p52 = por %p50, %p51
      %p53 = scmp.ne.s32.totalorder %s42, %s43
      %p54 = scmp.eq.s32.totalorder %s13, 0
      %p55 = por %p53, %p54
      %p56 = scmp.ne.s32.totalorder %s42, %s43
      %p57 = scmp.eq.s32.totalorder %s14, 2
      %p58 = por %p56, %p57
      %p60 = scmp.ne.s32.totalorder %s43, %s59
      %p61 = scmp.eq.s32.totalorder %s14, 0
      %p62 = por %p60, %p61
      %s63 = ssub.s32 %s17, %s26
      %s64 = ssub.s32 %s16, %s30
      %s65 = sor.u32 %s63, %s64
      %p66 = scmp.eq.s32.totalorder %s65, 0
      %s68 = sadd.s32 %s67, 1
      %s69 = scalar_select %p66, %s67, %s68
      %p72 = pneg %p66
      %p73 = scmp.eq.s32.totalorder %s8, 2
      %p74 = por %p72, %p73
      %p75 = scmp.ne.s32.totalorder %s67, %s70
      %p76 = scmp.eq.s32.totalorder %s8, 0
      %p77 = por %p75, %p76
      %p78 = scmp.ne.s32.totalorder %s67, %s70
      %p79 = scmp.eq.s32.totalorder %s13, 2
      %p80 = por %p78, %p79
      %p81 = scmp.ne.s32.totalorder %s70, %s71
      %p82 = scmp.eq.s32.totalorder %s13, 0
      %p83 = por %p81, %p82
      %p84 = scmp.ne.s32.totalorder %s70, %s71
      %p85 = scmp.eq.s32.totalorder %s14, 2
      %p86 = por %p84, %p85
      %p88 = scmp.ne.s32.totalorder %s71, %s87
      %p89 = scmp.eq.s32.totalorder %s14, 0
      %p90 = por %p88, %p89
      %s91 = ssub.s32 %s15, %s34
      %s92 = ssub.s32 %s16, %s30
      %s93 = sor.u32 %s91, %s92
      %p94 = scmp.eq.s32.totalorder %s93, 0
      %s96 = sadd.s32 %s95, 1
      %s97 = scalar_select %p94, %s95, %s96
      %p100 = pneg %p94
      %p101 = scmp.eq.s32.totalorder %s8, 2
      %p102 = por %p100, %p101
      %p103 = scmp.ne.s32.totalorder %s95, %s98
      %p104 = scmp.eq.s32.totalorder %s8, 0
      %p105 = por %p103, %p104
      %p106 = scmp.ne.s32.totalorder %s95, %s98
      %p107 = scmp.eq.s32.totalorder %s13, 2
      %p108 = por %p106, %p107
      %p109 = scmp.ne.s32.totalorder %s98, %s99
      %p110 = scmp.eq.s32.totalorder %s13, 0
      %p111 = por %p109, %p110
      %p112 = scmp.ne.s32.totalorder %s98, %s99
      %p113 = scmp.eq.s32.totalorder %s14, 2
      %p114 = por %p112, %p113
      %p116 = scmp.ne.s32.totalorder %s99, %s115
      %p117 = scmp.eq.s32.totalorder %s14, 0
      %p118 = por %p116, %p117
      %p119 = scmp.le.s32.totalorder 1, %s8
      %p120 = scmp.lt.s32.totalorder %s8, 4
      %p121 = pnand %p119, %p120
      %p122 = pneg %p121
      // Predicated region
      $region9: #{resnet_forward.69} parent=5 // pred_check
        _
      $region10: #{resnet_forward.69} parent=5 // pred_check_branch
        %124 = sbr.rel (%p121) target = $region12
      $region11: #{resnet_forward.69} parent=5 // pred_region
        %s125 = ssub.s32 %s8, 1
      $region12: #{resnet_forward.69} parent=5 // pred_fallthru
        _
      %p126 = scmp.lt.s32.totalorder %s8, 3
      // Predicated region
      $region13: #{resnet_forward.69} parent=5 // pred_check
        %p127 = pneg %p126
      $region14: #{resnet_forward.69} parent=5 // pred_check_branch
        %129 = sbr.rel (%p127) target = $region16
      $region15: #{resnet_forward.69} parent=5 // pred_region
        // Predicated region
        $region17: #{resnet_forward.69} parent=15 // pred_check
          %p130 = pneg %p49
        $region18: #{resnet_forward.69} parent=15 // pred_check_branch
          %132 = sbr.rel (%p130) target = $region20
        $region19: #{resnet_forward.69} parent=15 // pred_region
          %s133 = sand.u32 %s39, 1
          %s134 = sand.u32 %s39, 1
          %s135 = smul.addr %s134, 32
          %s136 = scalar_lea.vmem [#allocation3], %s135
          %s137 = smul.u32 2, %s15
          %s138 = smul.u32 4, %s17
          %s139 = smul.addr %s137, 12
          %s140 = sadd.s32 %s138, %s139
          %s141 = smul.addr %s140, 4
          %s142 = scalar_lea.vmem %s0, %s141
          // Predicated region
          $region21: #{resnet_forward.69} parent=19 // pred_check
            _
          $region22: #{resnet_forward.69} parent=19 // pred_check_branch
            %144 = sbr.rel (0) target = $region24
          $region23: #{resnet_forward.69} parent=19 // pred_region
            // Predicated region
            $region25: #{resnet_forward.69} parent=23 // pred_check
              _
            $region26: #{resnet_forward.69} parent=23 // pred_check_branch
              %146 = sbr.rel (0) target = $region28
            $region27: #{resnet_forward.69} parent=23 // pred_region
              loop: start=0, step=1, limit=1
              $region29: #{resnet_forward.69} parent=27 // loop_pre_header
                _
              $region30: #{resnet_forward.69} parent=27 // loop_header
                %s148 = sphi 0, %s152
                %p149 = scmp.ge.s32.totalorder %s148, 1
                %s153 = sphi %s142, %s142
                %s154 = sphi %s136, %s136
              $region31: #{resnet_forward.69} parent=27 // loop_header_branch
                %151 = sbr.rel (%p149) target = $region35
              $region32: #{resnet_forward.69} parent=27 // loop_body
                %v155 = vld [vmem:[%s153] sm:$0xff]
                %156 = vst [vmem:[%s154] sm:$0xff] %v155
                %v157 = vld [vmem:[%s153 + $0x8] sm:$0xff]
                %158 = vst [vmem:[%s154 + $0x8] sm:$0xff] %v157
                %v159 = vld [vmem:[%s153 + $0x30] sm:$0xff]
                %160 = vst [vmem:[%s154 + $0x10] sm:$0xff] %v159
                %v161 = vld [vmem:[%s153 + $0x38] sm:$0xff]
                %162 = vst [vmem:[%s154 + $0x18] sm:$0xff] %v161
              $region33: #{resnet_forward.69} parent=27 // loop_footer
                %s152 = sadd.s32 1, %s148
              $region34: #{resnet_forward.69} parent=27 // loop_footer_branch
                %147 = sbr.rel target = $region30
              $region35: #{resnet_forward.69} parent=27 // loop_exit
                _
            $region28: #{resnet_forward.69} parent=23 // pred_fallthru
              _
            // Predicated region
            $region36: #{resnet_forward.69} parent=23 // pred_check
              _
            $region37: #{resnet_forward.69} parent=23 // pred_check_branch
              %164 = sbr.rel target = $region39
            $region38: #{resnet_forward.69} parent=23 // pred_region
              _
            $region39: #{resnet_forward.69} parent=23 // pred_fallthru
              _
          $region24: #{resnet_forward.69} parent=19 // pred_fallthru
            _
          %165 = vnop
        $region20: #{resnet_forward.69} parent=15 // pred_fallthru
          _
        // Predicated region
        $region40: #{resnet_forward.69} parent=15 // pred_check
          %p166 = pneg %p77
        $region41: #{resnet_forward.69} parent=15 // pred_check_branch
          %168 = sbr.rel (%p166) target = $region43
        $region42: #{resnet_forward.69} parent=15 // pred_region
          %s169 = smul.u32 64, %s17
          %p170 = scmp.lt.s32.totalorder %s169, 191
          %s171 = scalar_select %p170, %s169, 191
          %p172 = scmp.lt.s32.totalorder %s16, 0
          %s173 = scalar_select %p172, %s16, 0
          %s174 = sadd.s32 %s173, %s171
          %s175 = smul.addr %s174, 4
          %s176 = scalar_lea.vmem %s1, %s175
          %s177 = smul.u32 64, %s17
        $region43: #{resnet_forward.69} parent=15 // pred_fallthru
          _
      $region16: #{resnet_forward.69} parent=5 // pred_fallthru
        _
      %p178 = scmp.le.s32.totalorder 1, %s8
      %p179 = scmp.lt.s32.totalorder %s8, 4
      %p180 = pnand %p178, %p179
      %p181 = pneg %p180
      // Predicated region
      $region44: #{resnet_forward.69} parent=5 // pred_check
        _
      $region45: #{resnet_forward.69} parent=5 // pred_check_branch
        %183 = sbr.rel (%p180) target = $region47
      $region46: #{resnet_forward.69} parent=5 // pred_region
        %s184 = ssub.s32 %s8, 1
        %s185 = sand.u32 %s42, 1
        %s186 = sand.u32 %s42, 1
        %s187 = smul.addr %s186, 32
        %s188 = scalar_lea.vmem [#allocation3], %s187
        // Predicated region
        $region48: #{resnet_forward.69} parent=46 // pred_check
          %p189 = pneg %p55
        $region49: #{resnet_forward.69} parent=46 // pred_check_branch
          %191 = sbr.rel (%p189) target = $region51
        $region50: #{resnet_forward.69} parent=46 // pred_region
          _
        $region51: #{resnet_forward.69} parent=46 // pred_fallthru
          _
        %s192 = sand.u32 %s42, 1
        %s193 = sand.u32 %s42, 1
        %s194 = smul.addr %s193, 32
        %s195 = scalar_lea.vmem [#allocation3], %s194
        %p196 = pneg %p55
        %p197 = pneg %p52
        %s198 = smul.u32 64, %s20
        %p199 = scmp.lt.s32.totalorder %s198, 191
        %s200 = scalar_select %p199, %s198, 191
        %p201 = scmp.lt.s32.totalorder %s19, 0
        %s202 = scalar_select %p201, %s19, 0
        %s203 = sadd.s32 %s202, %s200
        %s204 = smul.addr %s203, 4
        %s205 = scalar_lea.vmem %s1, %s204
        %p206 = pneg %p83
        %p207 = pneg %p80
        %p208 = pneg %p111
        %p209 = pneg %p108
        %s210 = smul.u32 2, %s18
        %p211 = scmp.lt.s32.totalorder %s210, 1
        %s212 = scalar_select %p211, %s210, 1
        %p213 = scmp.lt.s32.totalorder %s19, 0
        %s214 = scalar_select %p213, %s19, 0
        %s215 = sadd.s32 %s214, %s212
        %s216 = smul.addr %s215, 8
        %s217 = scalar_lea.vmem %s2, %s216
        %s218 = smul.u32 2, %s18
        %s219 = smul.u32 4, %s20
        %s220 = smul.u32 64, %s20
        %p221 = scmp.lt.s32.totalorder %s220, 191
        %s222 = scalar_select %p221, %s220, 191
        %p223 = scmp.lt.s32.totalorder %s19, 0
        %s224 = scalar_select %p223, %s19, 0
        %s225 = sadd.s32 %s224, %s222
        %s226 = smul.addr %s225, 4
        %s227 = scalar_lea.vmem %s1, %s226
        %s228 = smul.u32 64, %s20
        %s229 = smul.u32 2, %s18
        %p230 = scmp.lt.s32.totalorder %s229, 1
        %s231 = scalar_select %p230, %s229, 1
        %p232 = scmp.lt.s32.totalorder %s19, 0
        %s233 = scalar_select %p232, %s19, 0
        %s234 = sadd.s32 %s233, %s231
        %s235 = smul.addr %s234, 8
        %s236 = scalar_lea.vmem %s2, %s235
        %s237 = smul.u32 2, %s18
        %p238 = scmp.eq.s32.totalorder %s20, 0
        // Predicated region
        $region52: #{resnet_forward.69} parent=46 // pred_check
          %p239 = pneg %p238
        $region53: #{resnet_forward.69} parent=46 // pred_check_branch
          %241 = sbr.rel (%p239) target = $region55
        $region54: #{resnet_forward.69} parent=46 // pred_region
          %242 = vst [vmem:[#allocation2] sm:$0xff] 0.0
          %243 = vst [vmem:[#allocation2 + $0x8] sm:$0xff] 0.0
        $region55: #{resnet_forward.69} parent=46 // pred_fallthru
          _
        %v244 = vld [vmem:[#allocation2] sm:$0xff]
        %v245 = vld [vmem:[#allocation2 + $0x8] sm:$0xff]
        %v246 = vld [vmem:[%s188] sm:$0xff]
        %v247 = vld [vmem:[%s188 + $0x8] sm:$0xff]
        %v248 = vld [vmem:[%s188 + $0x10] sm:$0xff]
        %v249 = vld [vmem:[%s188 + $0x18] sm:$0xff]
        %v250 = vld [vmem:[%s227] sm:$0xf]
        %v251 = vld [vmem:[%s227 + $0x4] sm:$0xf]
        %v252 = vld [vmem:[%s227 + $0x8] sm:$0xf]
        %v253 = vld [vmem:[%s227 + $0xc] sm:$0xf]
        %v254 = vld [vmem:[%s227 + $0x10] sm:$0xf]
        %v255 = vld [vmem:[%s227 + $0x14] sm:$0xf]
        %v256 = vld [vmem:[%s227 + $0x18] sm:$0xf]
        %v257 = vld [vmem:[%s227 + $0x1c] sm:$0xf]
        %v258 = vld [vmem:[%s227 + $0x20] sm:$0xf]
        %v259 = vld [vmem:[%s227 + $0x24] sm:$0xf]
        %v260 = vld [vmem:[%s227 + $0x28] sm:$0xf]
        %v261 = vld [vmem:[%s227 + $0x2c] sm:$0xf]
        %v262 = vld [vmem:[%s227 + $0x30] sm:$0xf]
        %v263 = vld [vmem:[%s227 + $0x34] sm:$0xf]
        %v264 = vld [vmem:[%s227 + $0x38] sm:$0xf]
        %v265 = vld [vmem:[%s227 + $0x3c] sm:$0xf]
        %v266 = vld [vmem:[%s227 + $0x40] sm:$0xf]
        %v267 = vld [vmem:[%s227 + $0x44] sm:$0xf]
        %v268 = vld [vmem:[%s227 + $0x48] sm:$0xf]
        %v269 = vld [vmem:[%s227 + $0x4c] sm:$0xf]
        %v270 = vld [vmem:[%s227 + $0x50] sm:$0xf]
        %v271 = vld [vmem:[%s227 + $0x54] sm:$0xf]
        %v272 = vld [vmem:[%s227 + $0x58] sm:$0xf]
        %v273 = vld [vmem:[%s227 + $0x5c] sm:$0xf]
        %v274 = vld [vmem:[%s227 + $0x60] sm:$0xf]
        %v275 = vld [vmem:[%s227 + $0x64] sm:$0xf]
        %v276 = vld [vmem:[%s227 + $0x68] sm:$0xf]
        %v277 = vld [vmem:[%s227 + $0x6c] sm:$0xf]
        %v278 = vld [vmem:[%s227 + $0x70] sm:$0xf]
        %v279 = vld [vmem:[%s227 + $0x74] sm:$0xf]
        %v280 = vld [vmem:[%s227 + $0x78] sm:$0xf]
        %v281 = vld [vmem:[%s227 + $0x7c] sm:$0xf]
        %v282 = vld [vmem:[%s227 + $0x80] sm:$0xf]
        %v283 = vld [vmem:[%s227 + $0x84] sm:$0xf]
        %v284 = vld [vmem:[%s227 + $0x88] sm:$0xf]
        %v285 = vld [vmem:[%s227 + $0x8c] sm:$0xf]
        %v286 = vld [vmem:[%s227 + $0x90] sm:$0xf]
        %v287 = vld [vmem:[%s227 + $0x94] sm:$0xf]
        %v288 = vld [vmem:[%s227 + $0x98] sm:$0xf]
        %v289 = vld [vmem:[%s227 + $0x9c] sm:$0xf]
        %v290 = vld [vmem:[%s227 + $0xa0] sm:$0xf]
        %v291 = vld [vmem:[%s227 + $0xa4] sm:$0xf]
        %v292 = vld [vmem:[%s227 + $0xa8] sm:$0xf]
        %v293 = vld [vmem:[%s227 + $0xac] sm:$0xf]
        %v294 = vld [vmem:[%s227 + $0xb0] sm:$0xf]
        %v295 = vld [vmem:[%s227 + $0xb4] sm:$0xf]
        %v296 = vld [vmem:[%s227 + $0xb8] sm:$0xf]
        %v297 = vld [vmem:[%s227 + $0xbc] sm:$0xf]
        %v298 = vld [vmem:[%s227 + $0xc0] sm:$0xf]
        %v299 = vld [vmem:[%s227 + $0xc4] sm:$0xf]
        %v300 = vld [vmem:[%s227 + $0xc8] sm:$0xf]
        %v301 = vld [vmem:[%s227 + $0xcc] sm:$0xf]
        %v302 = vld [vmem:[%s227 + $0xd0] sm:$0xf]
        %v303 = vld [vmem:[%s227 + $0xd4] sm:$0xf]
        %v304 = vld [vmem:[%s227 + $0xd8] sm:$0xf]
        %v305 = vld [vmem:[%s227 + $0xdc] sm:$0xf]
        %v306 = vld [vmem:[%s227 + $0xe0] sm:$0xf]
        %v307 = vld [vmem:[%s227 + $0xe4] sm:$0xf]
        %v308 = vld [vmem:[%s227 + $0xe8] sm:$0xf]
        %v309 = vld [vmem:[%s227 + $0xec] sm:$0xf]
        %v310 = vld [vmem:[%s227 + $0xf0] sm:$0xf]
        %v311 = vld [vmem:[%s227 + $0xf4] sm:$0xf]
        %v312 = vld [vmem:[%s227 + $0xf8] sm:$0xf]
        %v313 = vld [vmem:[%s227 + $0xfc] sm:$0xf]
        %v318 = vunpack.c.l.b16 %v246
        %v319 = vunpack.c.h.b16 %v246
        %v320 = vunpack.c.l.b16 %v247
        %v321 = vunpack.c.h.b16 %v247
        %v322 = vunpack.c.l.b16 %v248
        %v323 = vunpack.c.h.b16 %v248
        %v324 = vunpack.c.l.b16 %v249
        %v325 = vunpack.c.h.b16 %v249
        %v326 = vpack.c.b16 %v322, %v318
        %v327 = vpack.c.b16 %v323, %v319
        %v328 = vpack.c.b16 %v324, %v320
        %v329 = vpack.c.b16 %v325, %v321
        %v398 = vunpack.c.l.b16 %v250
        %v399 = vunpack.c.l.b16 %v251
        %v400 = vunpack.c.l.b16 %v252
        %v401 = vunpack.c.l.b16 %v253
        %v402 = vunpack.c.l.b16 %v254
        %v403 = vunpack.c.l.b16 %v255
        %v404 = vunpack.c.l.b16 %v256
        %v405 = vunpack.c.l.b16 %v257
        %v406 = vunpack.c.l.b16 %v258
        %v407 = vunpack.c.l.b16 %v259
        %v408 = vunpack.c.l.b16 %v260
        %v409 = vunpack.c.l.b16 %v261
        %v410 = vunpack.c.l.b16 %v262
        %v411 = vunpack.c.l.b16 %v263
        %v412 = vunpack.c.l.b16 %v264
        %v413 = vunpack.c.l.b16 %v265
        %v414 = vunpack.c.l.b16 %v266
        %v415 = vunpack.c.l.b16 %v267
        %v416 = vunpack.c.l.b16 %v268
        %v417 = vunpack.c.l.b16 %v269
        %v418 = vunpack.c.l.b16 %v270
        %v419 = vunpack.c.l.b16 %v271
        %v420 = vunpack.c.l.b16 %v272
        %v421 = vunpack.c.l.b16 %v273
        %v422 = vunpack.c.l.b16 %v274
        %v423 = vunpack.c.l.b16 %v275
        %v424 = vunpack.c.l.b16 %v276
        %v425 = vunpack.c.l.b16 %v277
        %v426 = vunpack.c.l.b16 %v278
        %v427 = vunpack.c.l.b16 %v279
        %v428 = vunpack.c.l.b16 %v280
        %v429 = vunpack.c.l.b16 %v281
        %v430 = vunpack.c.l.b16 %v282
        %v431 = vunpack.c.l.b16 %v283
        %v432 = vunpack.c.l.b16 %v284
        %v433 = vunpack.c.l.b16 %v285
        %v434 = vunpack.c.l.b16 %v286
        %v435 = vunpack.c.l.b16 %v287
        %v436 = vunpack.c.l.b16 %v288
        %v437 = vunpack.c.l.b16 %v289
        %v438 = vunpack.c.l.b16 %v290
        %v439 = vunpack.c.l.b16 %v291
        %v440 = vunpack.c.l.b16 %v292
        %v441 = vunpack.c.l.b16 %v293
        %v442 = vunpack.c.l.b16 %v294
        %v443 = vunpack.c.l.b16 %v295
        %v444 = vunpack.c.l.b16 %v296
        %v445 = vunpack.c.l.b16 %v297
        %v446 = vunpack.c.l.b16 %v298
        %v447 = vunpack.c.l.b16 %v299
        %v448 = vunpack.c.l.b16 %v300
        %v449 = vunpack.c.l.b16 %v301
        %v450 = vunpack.c.l.b16 %v302
        %v451 = vunpack.c.l.b16 %v303
        %v452 = vunpack.c.l.b16 %v304
        %v453 = vunpack.c.l.b16 %v305
        %v454 = vunpack.c.l.b16 %v306
        %v455 = vunpack.c.l.b16 %v307
        %v456 = vunpack.c.l.b16 %v308
        %v457 = vunpack.c.l.b16 %v309
        %v458 = vunpack.c.l.b16 %v310
        %v459 = vunpack.c.l.b16 %v311
        %v460 = vunpack.c.l.b16 %v312
        %v461 = vunpack.c.l.b16 %v313
        %v462 = vpack.c.b16 %v399, %v398
        %v463 = vpack.c.b16 %v401, %v400
        %v464 = vpack.c.b16 %v403, %v402
        %v465 = vpack.c.b16 %v405, %v404
        %v466 = vpack.c.b16 %v407, %v406
        %v467 = vpack.c.b16 %v409, %v408
        %v468 = vpack.c.b16 %v411, %v410
        %v469 = vpack.c.b16 %v413, %v412
        %v470 = vpack.c.b16 %v415, %v414
        %v471 = vpack.c.b16 %v417, %v416
        %v472 = vpack.c.b16 %v419, %v418
        %v473 = vpack.c.b16 %v421, %v420
        %v474 = vpack.c.b16 %v423, %v422
        %v475 = vpack.c.b16 %v425, %v424
        %v476 = vpack.c.b16 %v427, %v426
        %v477 = vpack.c.b16 %v429, %v428
        %v478 = vpack.c.b16 %v431, %v430
        %v479 = vpack.c.b16 %v433, %v432
        %v480 = vpack.c.b16 %v435, %v434
        %v481 = vpack.c.b16 %v437, %v436
        %v482 = vpack.c.b16 %v439, %v438
        %v483 = vpack.c.b16 %v441, %v440
        %v484 = vpack.c.b16 %v443, %v442
        %v485 = vpack.c.b16 %v445, %v444
        %v486 = vpack.c.b16 %v447, %v446
        %v487 = vpack.c.b16 %v449, %v448
        %v488 = vpack.c.b16 %v451, %v450
        %v489 = vpack.c.b16 %v453, %v452
        %v490 = vpack.c.b16 %v455, %v454
        %v491 = vpack.c.b16 %v457, %v456
        %v492 = vpack.c.b16 %v459, %v458
        %v493 = vpack.c.b16 %v461, %v460
        %526 = vmatpush.bf16.msra.mxu0 %v469
        %527 = vmatpush.bf16.msra.mxu0 %v468
        %528 = vmatpush.bf16.msra.mxu0 %v467
        %529 = vmatpush.bf16.msra.mxu0 %v466
        %530 = vmatpush.bf16.msra.mxu0 %v465
        %531 = vmatpush.bf16.msra.mxu0 %v464
        %532 = vmatpush.bf16.msra.mxu0 %v463
        %533 = vmatpush.bf16.msra.mxu0 %v462
        %534 = vmatmul.bf16.gmra.mxu0 %v326
        %v535 = vpop.f32.mrf.mxu0
        %v536 = vadd.f32 0.0, %v535
        %v537 = vpop.f32.mrf.mxu0
        %v538 = vadd.f32 0.0, %v537
        %539 = vdwg.mxu0
        %540 = vmatpush.bf16.msra.mxu0 %v477
        %541 = vmatpush.bf16.msra.mxu0 %v476
        %542 = vmatpush.bf16.msra.mxu0 %v475
        %543 = vmatpush.bf16.msra.mxu0 %v474
        %544 = vmatpush.bf16.msra.mxu0 %v473
        %545 = vmatpush.bf16.msra.mxu0 %v472
        %546 = vmatpush.bf16.msra.mxu0 %v471
        %547 = vmatpush.bf16.msra.mxu0 %v470
        %548 = vmatmul.bf16.gmra.mxu0 %v327
        %v549 = vpop.f32.mrf.mxu0
        %v550 = vadd.f32 %v536, %v549
        %v551 = vpop.f32.mrf.mxu0
        %v552 = vadd.f32 %v538, %v551
        %553 = vdwg.mxu0
        %554 = vmatpush.bf16.msra.mxu0 %v485
        %555 = vmatpush.bf16.msra.mxu0 %v484
        %556 = vmatpush.bf16.msra.mxu0 %v483
        %557 = vmatpush.bf16.msra.mxu0 %v482
        %558 = vmatpush.bf16.msra.mxu0 %v481
        %559 = vmatpush.bf16.msra.mxu0 %v480
        %560 = vmatpush.bf16.msra.mxu0 %v479
        %561 = vmatpush.bf16.msra.mxu0 %v478
        %562 = vmatmul.bf16.gmra.mxu0 %v328
        %v563 = vpop.f32.mrf.mxu0
        %v564 = vadd.f32 %v550, %v563
        %v565 = vpop.f32.mrf.mxu0
        %v566 = vadd.f32 %v552, %v565
        %567 = vdwg.mxu0
        %568 = vmatpush.bf16.msra.mxu0 %v493
        %569 = vmatpush.bf16.msra.mxu0 %v492
        %570 = vmatpush.bf16.msra.mxu0 %v491
        %571 = vmatpush.bf16.msra.mxu0 %v490
        %572 = vmatpush.bf16.msra.mxu0 %v489
        %573 = vmatpush.bf16.msra.mxu0 %v488
        %574 = vmatpush.bf16.msra.mxu0 %v487
        %575 = vmatpush.bf16.msra.mxu0 %v486
        %576 = vmatmul.bf16.gmra.mxu0 %v329
        %v577 = vpop.f32.mrf.mxu0
        %v578 = vadd.f32 %v564, %v577
        %v579 = vpop.f32.mrf.mxu0
        %v580 = vadd.f32 %v566, %v579
        %581 = vdwg.mxu0
        %v582 = vadd.f32 %v244, %v578
        %v583 = vadd.f32 %v245, %v580
        %584 = vst [vmem:[#allocation2] sm:$0xff] %v582
        %585 = vst [vmem:[#allocation2 + $0x8] sm:$0xff] %v583
        %p586 = scmp.eq.s32.totalorder %s20, 2
        // Predicated region
        $region56: #{resnet_forward.69} parent=46 // pred_check
          %p587 = pneg %p586
        $region57: #{resnet_forward.69} parent=46 // pred_check_branch
          %589 = sbr.rel (%p587) target = $region59
        $region58: #{resnet_forward.69} parent=46 // pred_region
          %v590 = vld [vmem:[#allocation2] sm:$0xff]
          %v591 = vld [vmem:[#allocation2 + $0x8] sm:$0xff]
          %592 = vst [vmem:[%s236] sm:$0xff] %v590
          %593 = vst [vmem:[%s236 + $0x8] sm:$0xff] %v591
        $region59: #{resnet_forward.69} parent=46 // pred_fallthru
          _
        %s594 = smul.u32 2, %s18
        %p595 = scmp.lt.s32.totalorder %s594, 1
        %s596 = scalar_select %p595, %s594, 1
        %p597 = scmp.lt.s32.totalorder %s19, 0
        %s598 = scalar_select %p597, %s19, 0
        %s599 = sadd.s32 %s598, %s596
        %s600 = smul.addr %s599, 8
        %s601 = scalar_lea.vmem %s2, %s600
        // Predicated region
        $region60: #{resnet_forward.69} parent=46 // pred_check
          %p602 = pneg %p108
        $region61: #{resnet_forward.69} parent=46 // pred_check_branch
          %604 = sbr.rel (%p602) target = $region63
        $region62: #{resnet_forward.69} parent=46 // pred_region
          %s605 = smul.u32 2, %s18
        $region63: #{resnet_forward.69} parent=46 // pred_fallthru
          _
        // Predicated region
        $region64: #{resnet_forward.69} parent=46 // pred_check
          %p606 = pneg %p108
        $region65: #{resnet_forward.69} parent=46 // pred_check_branch
          %608 = sbr.rel (%p606) target = $region67
        $region66: #{resnet_forward.69} parent=46 // pred_region
          %s609 = smul.u32 2, %s18
          %p610 = scmp.lt.s32.totalorder %s609, 1
          %s611 = scalar_select %p610, %s609, 1
          %p612 = scmp.lt.s32.totalorder %s19, 0
          %s613 = scalar_select %p612, %s19, 0
          %s614 = sadd.s32 %s613, %s611
          %s615 = smul.addr %s614, 8
          %s616 = scalar_lea.vmem %s2, %s615
        $region67: #{resnet_forward.69} parent=46 // pred_fallthru
          _
      $region47: #{resnet_forward.69} parent=5 // pred_fallthru
        _
      %p617 = scmp.le.s32.totalorder 2, %s8
      // Predicated region
      $region68: #{resnet_forward.69} parent=5 // pred_check
        %p618 = pneg %p617
      $region69: #{resnet_forward.69} parent=5 // pred_check_branch
        %620 = sbr.rel (%p618) target = $region71
      $region70: #{resnet_forward.69} parent=5 // pred_region
        %s621 = ssub.s32 %s8, 2
      $region71: #{resnet_forward.69} parent=5 // pred_fallthru
        _
    $region6: #{resnet_forward.69} parent=1 // loop_footer
      %s12 = sadd.s32 1, %s8
    $region7: #{resnet_forward.69} parent=1 // loop_footer_branch
      %7 = sbr.rel target = $region3
    $region8: #{resnet_forward.69} parent=1 // loop_exit
      _

</llo_original>
